<compile_context>
chip_gen: v6e
topology: v6e:2x2x1
jax: 0.10.0
libtpu: 0.0.40
codegen_flags: <defaults>
</compile_context>

<pallas_src>
import jax
import jax.numpy as jnp
from jax.experimental import pallas as pl
from jax.experimental.pallas import tpu as pltpu


# ---------------------------------------------------------------------------
# Fully fused forward kernel (one batch block of `bm` images per program)
# ---------------------------------------------------------------------------
def _fused_forward_kernel(x_ref, w1_ref, b1_ref, w2_ref, b2_ref,
                          w3_ref, b3_ref, w4_ref, b4_ref, o_ref):
    # x_ref : (28, bm, 28) input block, layout (H, batch, W); W on lanes.
    # w1_ref: (84, 832)    conv1 banded weights: rows (ky, w), cols (j, oc).
    # b1_ref: (1, 32)   w2_ref: (288, 64)   b2_ref: (1, 64)
    # w3_ref: (1600, 128)  b3_ref: (1, 128)  w4_ref: (128, 10)  b4_ref: (1, 10)
    # o_ref : (bm, 10)
    _, bm, _ = x_ref.shape

    # ---- conv1: single banded MXU matmul over the whole batch block --------
    xv = x_ref[...]                                              # (28, bm, 28)
    # X3[i, b, ky*28 + w] = x[b, i+ky, w]
    x3 = jnp.concatenate([xv[0:26], xv[1:27], xv[2:28]], axis=-1)  # (26,bm,84)
    y1 = jnp.dot(x3.reshape(26 * bm, 84), w1_ref[...],
                 preferred_element_type=jnp.float32)             # (26*bm, 832)
    y1 = y1.reshape(26, bm, 832)                                 # [i, b, (j,oc)]

    # ---- maxpool 2x2, then bias + ReLU (they commute with the max) ---------
    y1 = y1.reshape(13, 2, bm, 832)
    rowmax = jnp.maximum(y1[:, 0], y1[:, 1])                     # (13, bm, 832)
    b1 = b1_ref[...]                                             # (1, 32)
    cols = []
    for q in range(13):                                          # pool j pairs
        even = rowmax[:, :, (2 * q) * 32:(2 * q + 1) * 32]       # j = 2q
        odd = rowmax[:, :, (2 * q + 1) * 32:(2 * q + 2) * 32]    # j = 2q + 1
        cols.append(jnp.maximum(jnp.maximum(even, odd) + b1, 0.0))
    a1 = jnp.stack(cols, axis=1)                                 # (13,13,bm,32)

    # ---- conv2: single im2col matmul (bm*121, 288) @ (288, 64) -------------
    taps = [a1[ky:ky + 11, kx:kx + 11]                           # major-dim slices
            for ky in range(3) for kx in range(3)]
    patches = jnp.concatenate(taps, axis=-1)                     # (11,11,bm,288)
    y2 = jnp.dot(patches.reshape(11 * 11 * bm, 288), w2_ref[...],
                 preferred_element_type=jnp.float32)             # (bm*121, 64)
    y2 = y2.reshape(11, 11, bm, 64)                              # [i', j', b, oc]

    # ---- maxpool 2x2 (floor: drop row/col 10), then bias + ReLU ------------
    t = y2[0:10].reshape(5, 2, 11, bm, 64)
    t = jnp.maximum(t[:, 0], t[:, 1])                            # (5, 11, bm, 64)
    t = t[:, 0:10].reshape(5, 5, 2, bm, 64)
    t = jnp.maximum(t[:, :, 0], t[:, :, 1])                      # (5, 5, bm, 64)
    a2 = jnp.maximum(t + b2_ref[...], 0.0)                       # (5, 5, bm, 64)

    # ---- flatten (h, w, c) -> fc1 -> ReLU -> fc2 ----------------------------
    flat = jnp.concatenate([a2[h, w] for h in range(5) for w in range(5)],
                           axis=-1)                              # (bm, 1600)
    h1 = jnp.dot(flat, w3_ref[...], preferred_element_type=jnp.float32)
    h1 = jnp.maximum(h1 + b3_ref[...], 0.0)                      # (bm, 128)
    out = jnp.dot(h1, w4_ref[...], preferred_element_type=jnp.float32)
    o_ref[...] = (out + b4_ref[...]).astype(o_ref.dtype)         # (bm, 10)


# ---------------------------------------------------------------------------
# Forward pass (keeps nn.Module semantics; input boundary is NCHW like PyTorch)
# ---------------------------------------------------------------------------
def custom_model_forward(params, x, *, block_batch=8):
    """x: (B, 1, 28, 28) float32 NCHW -> logits (B, 10)."""
    bm = block_batch
    assert bm % 8 == 0, "block_batch must be a multiple of 8 (sublane tile)"
    B = x.shape[0]
    b_pad = ((B + bm - 1) // bm) * bm

    # NCHW (C=1) -> (H, B, W): batch on sublanes, W on lanes inside the kernel.
    xs = x.astype(jnp.float32).reshape(B, 28, 28)
    if b_pad != B:
        xs = jnp.pad(xs, ((0, b_pad - B), (0, 0), (0, 0)))
    x_hbw = jnp.transpose(xs, (1, 0, 2))                         # (28, B_pad, 28)

    out = pl.pallas_call(
        _fused_forward_kernel,
        out_shape=jax.ShapeDtypeStruct((b_pad, 10), jnp.float32),
        grid=(b_pad // bm,),
        in_specs=[
            pl.BlockSpec((28, bm, 28), lambda g: (0, g, 0)),     # input block
            pl.BlockSpec((84, 832), lambda g: (0, 0)),           # conv1 band
            pl.BlockSpec((1, 32), lambda g: (0, 0)),             # conv1 bias
            pl.BlockSpec((288, 64), lambda g: (0, 0)),           # conv2 im2col w
            pl.BlockSpec((1, 64), lambda g: (0, 0)),             # conv2 bias
            pl.BlockSpec((1600, 128), lambda g: (0, 0)),         # fc1 w
            pl.BlockSpec((1, 128), lambda g: (0, 0)),            # fc1 bias
            pl.BlockSpec((128, 10), lambda g: (0, 0)),           # fc2 w
            pl.BlockSpec((1, 10), lambda g: (0, 0)),             # fc2 bias
        ],
        out_specs=pl.BlockSpec((bm, 10), lambda g: (g, 0)),
        compiler_params=pltpu.CompilerParams(
            dimension_semantics=("parallel",)),
    )(x_hbw, params["conv1_band"], params["conv1_b"],
      params["conv2_w"], params["conv2_b"],
      params["fc1_w"], params["fc1_b"],
      params["fc2_w"], params["fc2_b"])
    return out[:B]


# ---------------------------------------------------------------------------
# Parameters: PyTorch-style init, then a one-time kernel-layout prep
# ---------------------------------------------------------------------------
def init_params(key):
    """PyTorch-like uniform(-1/sqrt(fan_in), 1/sqrt(fan_in)) init, PyTorch layouts."""
    ks = jax.random.split(key, 8)

    def u(k, shape, fan_in):
        bound = 1.0 / jnp.sqrt(jnp.float32(fan_in))
        return jax.random.uniform(k, shape, jnp.float32, -bound, bound)

    return {
        "conv1_w": u(ks[0], (32, 1, 3, 3), 1 * 9),
        "conv1_b": u(ks[1], (32,), 1 * 9),
        "conv2_w": u(ks[2], (64, 32, 3, 3), 32 * 9),
        "conv2_b": u(ks[3], (64,), 32 * 9),
        "fc1_w": u(ks[4], (64 * 5 * 5, 128), 64 * 5 * 5),
        "fc1_b": u(ks[5], (128,), 64 * 5 * 5),
        "fc2_w": u(ks[6], (128, 10), 128),
        "fc2_b": u(ks[7], (10,), 128),
    }


def _conv1_band_matrix(w1_kkc):
    """(3,3,32) [ky,kx,oc] -> (84, 26*32) banded matrix so that conv1 output
    row i (all 26 cols x 32 channels) = concat(x rows i..i+2) @ band.
    band[ky*28 + w, j*32 + oc] = w1[ky, w - j, oc] if 0 <= w - j <= 2 else 0."""
    rows = []
    for ky in range(3):
        acc = jnp.zeros((28, 26, 32), jnp.float32)
        for kx in range(3):
            sel = jnp.eye(28, 26, k=-kx, dtype=jnp.float32)   # [w, j] = 1 iff w == j + kx
            acc = acc + sel[:, :, None] * w1_kkc[ky, kx][None, None, :]
        rows.append(acc.reshape(28, 26 * 32))
    return jnp.concatenate(rows, axis=0)                      # (84, 832)


def prepare_params(params):
    """One-time relayout of PyTorch-style params into kernel-friendly layouts."""
    # conv1: (OC,1,3,3) -> (3,3,OC) -> banded (84, 832) matrix (rows (ky,w)).
    w1 = jnp.transpose(params["conv1_w"], (2, 3, 1, 0))[:, :, 0, :]
    # conv2: (OC,C,3,3) -> (3,3,C,OC) -> im2col (9*32, 64), row = ky*96+kx*32+c.
    w2 = jnp.transpose(params["conv2_w"], (2, 3, 1, 0)).reshape(288, 64)
    # fc1 rows: PyTorch flattens (c,h,w); the kernel flattens (h,w,c).
    f1 = (params["fc1_w"].reshape(64, 5, 5, 128)
          .transpose(1, 2, 0, 3).reshape(64 * 5 * 5, 128))
    return {
        "conv1_band": _conv1_band_matrix(w1),
        "conv1_b": params["conv1_b"].reshape(1, 32),
        "conv2_w": w2,
        "conv2_b": params["conv2_b"].reshape(1, 64),
        "fc1_w": f1,
        "fc1_b": params["fc1_b"].reshape(1, 128),
        "fc2_w": params["fc2_w"],
        "fc2_b": params["fc2_b"].reshape(1, 10),
    }


if __name__ == "__main__":
    key = jax.random.PRNGKey(0)
    pkey, xkey = jax.random.split(key)
    params = prepare_params(init_params(pkey))        # one-time weight relayout
    # 28x28 input so the flattened feature count is 64*5*5 = nn.Linear's fan-in.
    x = jax.random.normal(xkey, (2, 1, 28, 28), jnp.float32)

    out = jax.jit(custom_model_forward)(params, x)
    out = jax.block_until_ready(out)
    assert out.shape == (2, 10) and out.dtype == jnp.float32
    print("KERNEL_OK")
</pallas_src>

<mosaic_0001>
module attributes {stable_mosaic.version = 11 : i64} {
  func.func @_fused_forward_kernel(%arg0: i32, %arg1: memref<28x8x28xf32, #tpu.memory_space<vmem>>, %arg2: memref<84x832xf32, #tpu.memory_space<vmem>>, %arg3: memref<1x32xf32, #tpu.memory_space<vmem>>, %arg4: memref<288x64xf32, #tpu.memory_space<vmem>>, %arg5: memref<1x64xf32, #tpu.memory_space<vmem>>, %arg6: memref<1600x128xf32, #tpu.memory_space<vmem>>, %arg7: memref<1x128xf32, #tpu.memory_space<vmem>>, %arg8: memref<128x10xf32, #tpu.memory_space<vmem>>, %arg9: memref<1x10xf32, #tpu.memory_space<vmem>>, %arg10: memref<8x10xf32, #tpu.memory_space<vmem>>) attributes {dimension_semantics = [#tpu.dimension_semantics<parallel>], iteration_bounds = array<i64: 1>, scalar_prefetch = 0 : i64, scratch_operands = 0 : i64, tpu.core_type = #tpu.core_type<tc>, window_params = [{transform_indices = @transform_0, window_bounds = array<i64: 28, 8, 28>}, {pipeline_mode = #tpu.pipeline_mode<synchronous>, transform_indices = @transform_1, window_bounds = array<i64: 84, 832>}, {pipeline_mode = #tpu.pipeline_mode<synchronous>, transform_indices = @transform_2, window_bounds = array<i64: 1, 32>}, {pipeline_mode = #tpu.pipeline_mode<synchronous>, transform_indices = @transform_3, window_bounds = array<i64: 288, 64>}, {pipeline_mode = #tpu.pipeline_mode<synchronous>, transform_indices = @transform_4, window_bounds = array<i64: 1, 64>}, {pipeline_mode = #tpu.pipeline_mode<synchronous>, transform_indices = @transform_5, window_bounds = array<i64: 1600, 128>}, {pipeline_mode = #tpu.pipeline_mode<synchronous>, transform_indices = @transform_6, window_bounds = array<i64: 1, 128>}, {pipeline_mode = #tpu.pipeline_mode<synchronous>, transform_indices = @transform_7, window_bounds = array<i64: 128, 10>}, {pipeline_mode = #tpu.pipeline_mode<synchronous>, transform_indices = @transform_8, window_bounds = array<i64: 1, 10>}, {transform_indices = @transform_9, window_bounds = array<i64: 8, 10>}]} {
    %c0 = arith.constant 0 : index
    %c0_0 = arith.constant 0 : index
    %c0_1 = arith.constant 0 : index
    %0 = vector.load %arg1[%c0, %c0_0, %c0_1] : memref<28x8x28xf32, #tpu.memory_space<vmem>>, vector<28x8x28xf32>
    %1 = vector.extract_strided_slice %0 {offsets = [0, 0, 0], sizes = [26, 8, 28], strides = [1, 1, 1]} : vector<28x8x28xf32> to vector<26x8x28xf32>
    %2 = vector.extract_strided_slice %0 {offsets = [1, 0, 0], sizes = [26, 8, 28], strides = [1, 1, 1]} : vector<28x8x28xf32> to vector<26x8x28xf32>
    %3 = vector.extract_strided_slice %0 {offsets = [2, 0, 0], sizes = [26, 8, 28], strides = [1, 1, 1]} : vector<28x8x28xf32> to vector<26x8x28xf32>
    %4 = tpu.concatenate %1, %2, %3 in 2 : vector<26x8x28xf32>, vector<26x8x28xf32>, vector<26x8x28xf32> -> vector<26x8x84xf32>
    %5 = vector.shape_cast %4 : vector<26x8x84xf32> to vector<208x84xf32>
    %c0_2 = arith.constant 0 : index
    %c0_3 = arith.constant 0 : index
    %6 = vector.load %arg2[%c0_2, %c0_3] : memref<84x832xf32, #tpu.memory_space<vmem>>, vector<84x832xf32>
    %cst = arith.constant dense<0.000000e+00> : vector<208x832xf32>
    %7 = tpu.matmul %5, %6, %cst {dimension_numbers = #tpu.dot_dimension_numbers<[1], [0], [0], [1], [0, 0, 1, 1], [], []>} : vector<208x84xf32>, vector<84x832xf32>, vector<208x832xf32> -> vector<208x832xf32>
    %8 = vector.shape_cast %7 : vector<208x832xf32> to vector<26x8x832xf32>
    %9 = vector.shape_cast %8 : vector<26x8x832xf32> to vector<13x2x8x832xf32>
    %10 = vector.extract_strided_slice %9 {offsets = [0, 0, 0, 0], sizes = [13, 1, 8, 832], strides = [1, 1, 1, 1]} : vector<13x2x8x832xf32> to vector<13x1x8x832xf32>
    %11 = vector.shape_cast %10 : vector<13x1x8x832xf32> to vector<13x8x832xf32>
    %12 = vector.extract_strided_slice %9 {offsets = [0, 1, 0, 0], sizes = [13, 1, 8, 832], strides = [1, 1, 1, 1]} : vector<13x2x8x832xf32> to vector<13x1x8x832xf32>
    %13 = vector.shape_cast %12 : vector<13x1x8x832xf32> to vector<13x8x832xf32>
    %14 = arith.maximumf %11, %13 : vector<13x8x832xf32>
    %c0_4 = arith.constant 0 : index
    %c0_5 = arith.constant 0 : index
    %15 = vector.load %arg3[%c0_4, %c0_5] : memref<1x32xf32, #tpu.memory_space<vmem>>, vector<1x32xf32>
    %16 = vector.extract_strided_slice %14 {offsets = [0, 0, 0], sizes = [13, 8, 32], strides = [1, 1, 1]} : vector<13x8x832xf32> to vector<13x8x32xf32>
    %17 = vector.extract_strided_slice %14 {offsets = [0, 0, 32], sizes = [13, 8, 32], strides = [1, 1, 1]} : vector<13x8x832xf32> to vector<13x8x32xf32>
    %18 = arith.maximumf %16, %17 : vector<13x8x32xf32>
    %19 = vector.shape_cast %15 : vector<1x32xf32> to vector<1x1x32xf32>
    %20 = vector.broadcast %19 : vector<1x1x32xf32> to vector<13x8x32xf32>
    %21 = arith.addf %18, %20 : vector<13x8x32xf32>
    %cst_6 = arith.constant 0.000000e+00 : f32
    %22 = vector.broadcast %cst_6 : f32 to vector<13x8x32xf32>
    %23 = arith.maximumf %21, %22 : vector<13x8x32xf32>
    %24 = vector.extract_strided_slice %14 {offsets = [0, 0, 64], sizes = [13, 8, 32], strides = [1, 1, 1]} : vector<13x8x832xf32> to vector<13x8x32xf32>
    %25 = vector.extract_strided_slice %14 {offsets = [0, 0, 96], sizes = [13, 8, 32], strides = [1, 1, 1]} : vector<13x8x832xf32> to vector<13x8x32xf32>
    %26 = arith.maximumf %24, %25 : vector<13x8x32xf32>
    %27 = vector.shape_cast %15 : vector<1x32xf32> to vector<1x1x32xf32>
    %28 = vector.broadcast %27 : vector<1x1x32xf32> to vector<13x8x32xf32>
    %29 = arith.addf %26, %28 : vector<13x8x32xf32>
    %cst_7 = arith.constant 0.000000e+00 : f32
    %30 = vector.broadcast %cst_7 : f32 to vector<13x8x32xf32>
    %31 = arith.maximumf %29, %30 : vector<13x8x32xf32>
    %32 = vector.extract_strided_slice %14 {offsets = [0, 0, 128], sizes = [13, 8, 32], strides = [1, 1, 1]} : vector<13x8x832xf32> to vector<13x8x32xf32>
    %33 = vector.extract_strided_slice %14 {offsets = [0, 0, 160], sizes = [13, 8, 32], strides = [1, 1, 1]} : vector<13x8x832xf32> to vector<13x8x32xf32>
    %34 = arith.maximumf %32, %33 : vector<13x8x32xf32>
    %35 = vector.shape_cast %15 : vector<1x32xf32> to vector<1x1x32xf32>
    %36 = vector.broadcast %35 : vector<1x1x32xf32> to vector<13x8x32xf32>
    %37 = arith.addf %34, %36 : vector<13x8x32xf32>
    %cst_8 = arith.constant 0.000000e+00 : f32
    %38 = vector.broadcast %cst_8 : f32 to vector<13x8x32xf32>
    %39 = arith.maximumf %37, %38 : vector<13x8x32xf32>
    %40 = vector.extract_strided_slice %14 {offsets = [0, 0, 192], sizes = [13, 8, 32], strides = [1, 1, 1]} : vector<13x8x832xf32> to vector<13x8x32xf32>
    %41 = vector.extract_strided_slice %14 {offsets = [0, 0, 224], sizes = [13, 8, 32], strides = [1, 1, 1]} : vector<13x8x832xf32> to vector<13x8x32xf32>
    %42 = arith.maximumf %40, %41 : vector<13x8x32xf32>
    %43 = vector.shape_cast %15 : vector<1x32xf32> to vector<1x1x32xf32>
    %44 = vector.broadcast %43 : vector<1x1x32xf32> to vector<13x8x32xf32>
    %45 = arith.addf %42, %44 : vector<13x8x32xf32>
    %cst_9 = arith.constant 0.000000e+00 : f32
    %46 = vector.broadcast %cst_9 : f32 to vector<13x8x32xf32>
    %47 = arith.maximumf %45, %46 : vector<13x8x32xf32>
    %48 = vector.extract_strided_slice %14 {offsets = [0, 0, 256], sizes = [13, 8, 32], strides = [1, 1, 1]} : vector<13x8x832xf32> to vector<13x8x32xf32>
    %49 = vector.extract_strided_slice %14 {offsets = [0, 0, 288], sizes = [13, 8, 32], strides = [1, 1, 1]} : vector<13x8x832xf32> to vector<13x8x32xf32>
    %50 = arith.maximumf %48, %49 : vector<13x8x32xf32>
    %51 = vector.shape_cast %15 : vector<1x32xf32> to vector<1x1x32xf32>
    %52 = vector.broadcast %51 : vector<1x1x32xf32> to vector<13x8x32xf32>
    %53 = arith.addf %50, %52 : vector<13x8x32xf32>
    %cst_10 = arith.constant 0.000000e+00 : f32
    %54 = vector.broadcast %cst_10 : f32 to vector<13x8x32xf32>
    %55 = arith.maximumf %53, %54 : vector<13x8x32xf32>
    %56 = vector.extract_strided_slice %14 {offsets = [0, 0, 320], sizes = [13, 8, 32], strides = [1, 1, 1]} : vector<13x8x832xf32> to vector<13x8x32xf32>
    %57 = vector.extract_strided_slice %14 {offsets = [0, 0, 352], sizes = [13, 8, 32], strides = [1, 1, 1]} : vector<13x8x832xf32> to vector<13x8x32xf32>
    %58 = arith.maximumf %56, %57 : vector<13x8x32xf32>
    %59 = vector.shape_cast %15 : vector<1x32xf32> to vector<1x1x32xf32>
    %60 = vector.broadcast %59 : vector<1x1x32xf32> to vector<13x8x32xf32>
    %61 = arith.addf %58, %60 : vector<13x8x32xf32>
    %cst_11 = arith.constant 0.000000e+00 : f32
    %62 = vector.broadcast %cst_11 : f32 to vector<13x8x32xf32>
    %63 = arith.maximumf %61, %62 : vector<13x8x32xf32>
    %64 = vector.extract_strided_slice %14 {offsets = [0, 0, 384], sizes = [13, 8, 32], strides = [1, 1, 1]} : vector<13x8x832xf32> to vector<13x8x32xf32>
    %65 = vector.extract_strided_slice %14 {offsets = [0, 0, 416], sizes = [13, 8, 32], strides = [1, 1, 1]} : vector<13x8x832xf32> to vector<13x8x32xf32>
    %66 = arith.maximumf %64, %65 : vector<13x8x32xf32>
    %67 = vector.shape_cast %15 : vector<1x32xf32> to vector<1x1x32xf32>
    %68 = vector.broadcast %67 : vector<1x1x32xf32> to vector<13x8x32xf32>
    %69 = arith.addf %66, %68 : vector<13x8x32xf32>
    %cst_12 = arith.constant 0.000000e+00 : f32
    %70 = vector.broadcast %cst_12 : f32 to vector<13x8x32xf32>
    %71 = arith.maximumf %69, %70 : vector<13x8x32xf32>
    %72 = vector.extract_strided_slice %14 {offsets = [0, 0, 448], sizes = [13, 8, 32], strides = [1, 1, 1]} : vector<13x8x832xf32> to vector<13x8x32xf32>
    %73 = vector.extract_strided_slice %14 {offsets = [0, 0, 480], sizes = [13, 8, 32], strides = [1, 1, 1]} : vector<13x8x832xf32> to vector<13x8x32xf32>
    %74 = arith.maximumf %72, %73 : vector<13x8x32xf32>
    %75 = vector.shape_cast %15 : vector<1x32xf32> to vector<1x1x32xf32>
    %76 = vector.broadcast %75 : vector<1x1x32xf32> to vector<13x8x32xf32>
    %77 = arith.addf %74, %76 : vector<13x8x32xf32>
    %cst_13 = arith.constant 0.000000e+00 : f32
    %78 = vector.broadcast %cst_13 : f32 to vector<13x8x32xf32>
    %79 = arith.maximumf %77, %78 : vector<13x8x32xf32>
    %80 = vector.extract_strided_slice %14 {offsets = [0, 0, 512], sizes = [13, 8, 32], strides = [1, 1, 1]} : vector<13x8x832xf32> to vector<13x8x32xf32>
    %81 = vector.extract_strided_slice %14 {offsets = [0, 0, 544], sizes = [13, 8, 32], strides = [1, 1, 1]} : vector<13x8x832xf32> to vector<13x8x32xf32>
    %82 = arith.maximumf %80, %81 : vector<13x8x32xf32>
    %83 = vector.shape_cast %15 : vector<1x32xf32> to vector<1x1x32xf32>
    %84 = vector.broadcast %83 : vector<1x1x32xf32> to vector<13x8x32xf32>
    %85 = arith.addf %82, %84 : vector<13x8x32xf32>
    %cst_14 = arith.constant 0.000000e+00 : f32
    %86 = vector.broadcast %cst_14 : f32 to vector<13x8x32xf32>
    %87 = arith.maximumf %85, %86 : vector<13x8x32xf32>
    %88 = vector.extract_strided_slice %14 {offsets = [0, 0, 576], sizes = [13, 8, 32], strides = [1, 1, 1]} : vector<13x8x832xf32> to vector<13x8x32xf32>
    %89 = vector.extract_strided_slice %14 {offsets = [0, 0, 608], sizes = [13, 8, 32], strides = [1, 1, 1]} : vector<13x8x832xf32> to vector<13x8x32xf32>
    %90 = arith.maximumf %88, %89 : vector<13x8x32xf32>
    %91 = vector.shape_cast %15 : vector<1x32xf32> to vector<1x1x32xf32>
    %92 = vector.broadcast %91 : vector<1x1x32xf32> to vector<13x8x32xf32>
    %93 = arith.addf %90, %92 : vector<13x8x32xf32>
    %cst_15 = arith.constant 0.000000e+00 : f32
    %94 = vector.broadcast %cst_15 : f32 to vector<13x8x32xf32>
    %95 = arith.maximumf %93, %94 : vector<13x8x32xf32>
    %96 = vector.extract_strided_slice %14 {offsets = [0, 0, 640], sizes = [13, 8, 32], strides = [1, 1, 1]} : vector<13x8x832xf32> to vector<13x8x32xf32>
    %97 = vector.extract_strided_slice %14 {offsets = [0, 0, 672], sizes = [13, 8, 32], strides = [1, 1, 1]} : vector<13x8x832xf32> to vector<13x8x32xf32>
    %98 = arith.maximumf %96, %97 : vector<13x8x32xf32>
    %99 = vector.shape_cast %15 : vector<1x32xf32> to vector<1x1x32xf32>
    %100 = vector.broadcast %99 : vector<1x1x32xf32> to vector<13x8x32xf32>
    %101 = arith.addf %98, %100 : vector<13x8x32xf32>
    %cst_16 = arith.constant 0.000000e+00 : f32
    %102 = vector.broadcast %cst_16 : f32 to vector<13x8x32xf32>
    %103 = arith.maximumf %101, %102 : vector<13x8x32xf32>
    %104 = vector.extract_strided_slice %14 {offsets = [0, 0, 704], sizes = [13, 8, 32], strides = [1, 1, 1]} : vector<13x8x832xf32> to vector<13x8x32xf32>
    %105 = vector.extract_strided_slice %14 {offsets = [0, 0, 736], sizes = [13, 8, 32], strides = [1, 1, 1]} : vector<13x8x832xf32> to vector<13x8x32xf32>
    %106 = arith.maximumf %104, %105 : vector<13x8x32xf32>
    %107 = vector.shape_cast %15 : vector<1x32xf32> to vector<1x1x32xf32>
    %108 = vector.broadcast %107 : vector<1x1x32xf32> to vector<13x8x32xf32>
    %109 = arith.addf %106, %108 : vector<13x8x32xf32>
    %cst_17 = arith.constant 0.000000e+00 : f32
    %110 = vector.broadcast %cst_17 : f32 to vector<13x8x32xf32>
    %111 = arith.maximumf %109, %110 : vector<13x8x32xf32>
    %112 = vector.extract_strided_slice %14 {offsets = [0, 0, 768], sizes = [13, 8, 32], strides = [1, 1, 1]} : vector<13x8x832xf32> to vector<13x8x32xf32>
    %113 = vector.extract_strided_slice %14 {offsets = [0, 0, 800], sizes = [13, 8, 32], strides = [1, 1, 1]} : vector<13x8x832xf32> to vector<13x8x32xf32>
    %114 = arith.maximumf %112, %113 : vector<13x8x32xf32>
    %115 = vector.shape_cast %15 : vector<1x32xf32> to vector<1x1x32xf32>
    %116 = vector.broadcast %115 : vector<1x1x32xf32> to vector<13x8x32xf32>
    %117 = arith.addf %114, %116 : vector<13x8x32xf32>
    %cst_18 = arith.constant 0.000000e+00 : f32
    %118 = vector.broadcast %cst_18 : f32 to vector<13x8x32xf32>
    %119 = arith.maximumf %117, %118 : vector<13x8x32xf32>
    %120 = vector.shape_cast %23 : vector<13x8x32xf32> to vector<13x1x8x32xf32>
    %121 = vector.shape_cast %31 : vector<13x8x32xf32> to vector<13x1x8x32xf32>
    %122 = vector.shape_cast %39 : vector<13x8x32xf32> to vector<13x1x8x32xf32>
    %123 = vector.shape_cast %47 : vector<13x8x32xf32> to vector<13x1x8x32xf32>
    %124 = vector.shape_cast %55 : vector<13x8x32xf32> to vector<13x1x8x32xf32>
    %125 = vector.shape_cast %63 : vector<13x8x32xf32> to vector<13x1x8x32xf32>
    %126 = vector.shape_cast %71 : vector<13x8x32xf32> to vector<13x1x8x32xf32>
    %127 = vector.shape_cast %79 : vector<13x8x32xf32> to vector<13x1x8x32xf32>
    %128 = vector.shape_cast %87 : vector<13x8x32xf32> to vector<13x1x8x32xf32>
    %129 = vector.shape_cast %95 : vector<13x8x32xf32> to vector<13x1x8x32xf32>
    %130 = vector.shape_cast %103 : vector<13x8x32xf32> to vector<13x1x8x32xf32>
    %131 = vector.shape_cast %111 : vector<13x8x32xf32> to vector<13x1x8x32xf32>
    %132 = vector.shape_cast %119 : vector<13x8x32xf32> to vector<13x1x8x32xf32>
    %133 = tpu.concatenate %120, %121, %122, %123, %124, %125, %126, %127, %128, %129, %130, %131, %132 in 1 : vector<13x1x8x32xf32>, vector<13x1x8x32xf32>, vector<13x1x8x32xf32>, vector<13x1x8x32xf32>, vector<13x1x8x32xf32>, vector<13x1x8x32xf32>, vector<13x1x8x32xf32>, vector<13x1x8x32xf32>, vector<13x1x8x32xf32>, vector<13x1x8x32xf32>, vector<13x1x8x32xf32>, vector<13x1x8x32xf32>, vector<13x1x8x32xf32> -> vector<13x13x8x32xf32>
    %134 = vector.extract_strided_slice %133 {offsets = [0, 0, 0, 0], sizes = [11, 11, 8, 32], strides = [1, 1, 1, 1]} : vector<13x13x8x32xf32> to vector<11x11x8x32xf32>
    %135 = vector.extract_strided_slice %133 {offsets = [0, 1, 0, 0], sizes = [11, 11, 8, 32], strides = [1, 1, 1, 1]} : vector<13x13x8x32xf32> to vector<11x11x8x32xf32>
    %136 = vector.extract_strided_slice %133 {offsets = [0, 2, 0, 0], sizes = [11, 11, 8, 32], strides = [1, 1, 1, 1]} : vector<13x13x8x32xf32> to vector<11x11x8x32xf32>
    %137 = vector.extract_strided_slice %133 {offsets = [1, 0, 0, 0], sizes = [11, 11, 8, 32], strides = [1, 1, 1, 1]} : vector<13x13x8x32xf32> to vector<11x11x8x32xf32>
    %138 = vector.extract_strided_slice %133 {offsets = [1, 1, 0, 0], sizes = [11, 11, 8, 32], strides = [1, 1, 1, 1]} : vector<13x13x8x32xf32> to vector<11x11x8x32xf32>
    %139 = vector.extract_strided_slice %133 {offsets = [1, 2, 0, 0], sizes = [11, 11, 8, 32], strides = [1, 1, 1, 1]} : vector<13x13x8x32xf32> to vector<11x11x8x32xf32>
    %140 = vector.extract_strided_slice %133 {offsets = [2, 0, 0, 0], sizes = [11, 11, 8, 32], strides = [1, 1, 1, 1]} : vector<13x13x8x32xf32> to vector<11x11x8x32xf32>
    %141 = vector.extract_strided_slice %133 {offsets = [2, 1, 0, 0], sizes = [11, 11, 8, 32], strides = [1, 1, 1, 1]} : vector<13x13x8x32xf32> to vector<11x11x8x32xf32>
    %142 = vector.extract_strided_slice %133 {offsets = [2, 2, 0, 0], sizes = [11, 11, 8, 32], strides = [1, 1, 1, 1]} : vector<13x13x8x32xf32> to vector<11x11x8x32xf32>
    %143 = tpu.concatenate %134, %135, %136, %137, %138, %139, %140, %141, %142 in 3 : vector<11x11x8x32xf32>, vector<11x11x8x32xf32>, vector<11x11x8x32xf32>, vector<11x11x8x32xf32>, vector<11x11x8x32xf32>, vector<11x11x8x32xf32>, vector<11x11x8x32xf32>, vector<11x11x8x32xf32>, vector<11x11x8x32xf32> -> vector<11x11x8x288xf32>
    %144 = vector.shape_cast %143 : vector<11x11x8x288xf32> to vector<968x288xf32>
    %c0_19 = arith.constant 0 : index
    %c0_20 = arith.constant 0 : index
    %145 = vector.load %arg4[%c0_19, %c0_20] : memref<288x64xf32, #tpu.memory_space<vmem>>, vector<288x64xf32>
    %cst_21 = arith.constant dense<0.000000e+00> : vector<968x64xf32>
    %146 = tpu.matmul %144, %145, %cst_21 {dimension_numbers = #tpu.dot_dimension_numbers<[1], [0], [0], [1], [0, 0, 1, 1], [], []>} : vector<968x288xf32>, vector<288x64xf32>, vector<968x64xf32> -> vector<968x64xf32>
    %147 = vector.shape_cast %146 : vector<968x64xf32> to vector<11x11x8x64xf32>
    %148 = vector.extract_strided_slice %147 {offsets = [0, 0, 0, 0], sizes = [10, 11, 8, 64], strides = [1, 1, 1, 1]} : vector<11x11x8x64xf32> to vector<10x11x8x64xf32>
    %149 = vector.shape_cast %148 : vector<10x11x8x64xf32> to vector<5x2x11x8x64xf32>
    %150 = vector.extract_strided_slice %149 {offsets = [0, 0, 0, 0, 0], sizes = [5, 1, 11, 8, 64], strides = [1, 1, 1, 1, 1]} : vector<5x2x11x8x64xf32> to vector<5x1x11x8x64xf32>
    %151 = vector.shape_cast %150 : vector<5x1x11x8x64xf32> to vector<5x11x8x64xf32>
    %152 = vector.extract_strided_slice %149 {offsets = [0, 1, 0, 0, 0], sizes = [5, 1, 11, 8, 64], strides = [1, 1, 1, 1, 1]} : vector<5x2x11x8x64xf32> to vector<5x1x11x8x64xf32>
    %153 = vector.shape_cast %152 : vector<5x1x11x8x64xf32> to vector<5x11x8x64xf32>
    %154 = arith.maximumf %151, %153 : vector<5x11x8x64xf32>
    %155 = vector.extract_strided_slice %154 {offsets = [0, 0, 0, 0], sizes = [5, 10, 8, 64], strides = [1, 1, 1, 1]} : vector<5x11x8x64xf32> to vector<5x10x8x64xf32>
    %156 = vector.shape_cast %155 : vector<5x10x8x64xf32> to vector<5x5x2x8x64xf32>
    %157 = vector.extract_strided_slice %156 {offsets = [0, 0, 0, 0, 0], sizes = [5, 5, 1, 8, 64], strides = [1, 1, 1, 1, 1]} : vector<5x5x2x8x64xf32> to vector<5x5x1x8x64xf32>
    %158 = vector.shape_cast %157 : vector<5x5x1x8x64xf32> to vector<5x5x8x64xf32>
    %159 = vector.extract_strided_slice %156 {offsets = [0, 0, 1, 0, 0], sizes = [5, 5, 1, 8, 64], strides = [1, 1, 1, 1, 1]} : vector<5x5x2x8x64xf32> to vector<5x5x1x8x64xf32>
    %160 = vector.shape_cast %159 : vector<5x5x1x8x64xf32> to vector<5x5x8x64xf32>
    %161 = arith.maximumf %158, %160 : vector<5x5x8x64xf32>
    %c0_22 = arith.constant 0 : index
    %c0_23 = arith.constant 0 : index
    %162 = vector.load %arg5[%c0_22, %c0_23] : memref<1x64xf32, #tpu.memory_space<vmem>>, vector<1x64xf32>
    %163 = vector.shape_cast %162 : vector<1x64xf32> to vector<1x1x1x64xf32>
    %164 = vector.broadcast %163 : vector<1x1x1x64xf32> to vector<5x5x8x64xf32>
    %165 = arith.addf %161, %164 : vector<5x5x8x64xf32>
    %cst_24 = arith.constant 0.000000e+00 : f32
    %166 = vector.broadcast %cst_24 : f32 to vector<5x5x8x64xf32>
    %167 = arith.maximumf %165, %166 : vector<5x5x8x64xf32>
    %168 = vector.extract_strided_slice %167 {offsets = [0, 0, 0, 0], sizes = [1, 1, 8, 64], strides = [1, 1, 1, 1]} : vector<5x5x8x64xf32> to vector<1x1x8x64xf32>
    %169 = vector.shape_cast %168 : vector<1x1x8x64xf32> to vector<8x64xf32>
    %170 = vector.extract_strided_slice %167 {offsets = [0, 1, 0, 0], sizes = [1, 1, 8, 64], strides = [1, 1, 1, 1]} : vector<5x5x8x64xf32> to vector<1x1x8x64xf32>
    %171 = vector.shape_cast %170 : vector<1x1x8x64xf32> to vector<8x64xf32>
    %172 = vector.extract_strided_slice %167 {offsets = [0, 2, 0, 0], sizes = [1, 1, 8, 64], strides = [1, 1, 1, 1]} : vector<5x5x8x64xf32> to vector<1x1x8x64xf32>
    %173 = vector.shape_cast %172 : vector<1x1x8x64xf32> to vector<8x64xf32>
    %174 = vector.extract_strided_slice %167 {offsets = [0, 3, 0, 0], sizes = [1, 1, 8, 64], strides = [1, 1, 1, 1]} : vector<5x5x8x64xf32> to vector<1x1x8x64xf32>
    %175 = vector.shape_cast %174 : vector<1x1x8x64xf32> to vector<8x64xf32>
    %176 = vector.extract_strided_slice %167 {offsets = [0, 4, 0, 0], sizes = [1, 1, 8, 64], strides = [1, 1, 1, 1]} : vector<5x5x8x64xf32> to vector<1x1x8x64xf32>
    %177 = vector.shape_cast %176 : vector<1x1x8x64xf32> to vector<8x64xf32>
    %178 = vector.extract_strided_slice %167 {offsets = [1, 0, 0, 0], sizes = [1, 1, 8, 64], strides = [1, 1, 1, 1]} : vector<5x5x8x64xf32> to vector<1x1x8x64xf32>
    %179 = vector.shape_cast %178 : vector<1x1x8x64xf32> to vector<8x64xf32>
    %180 = vector.extract_strided_slice %167 {offsets = [1, 1, 0, 0], sizes = [1, 1, 8, 64], strides = [1, 1, 1, 1]} : vector<5x5x8x64xf32> to vector<1x1x8x64xf32>
    %181 = vector.shape_cast %180 : vector<1x1x8x64xf32> to vector<8x64xf32>
    %182 = vector.extract_strided_slice %167 {offsets = [1, 2, 0, 0], sizes = [1, 1, 8, 64], strides = [1, 1, 1, 1]} : vector<5x5x8x64xf32> to vector<1x1x8x64xf32>
    %183 = vector.shape_cast %182 : vector<1x1x8x64xf32> to vector<8x64xf32>
    %184 = vector.extract_strided_slice %167 {offsets = [1, 3, 0, 0], sizes = [1, 1, 8, 64], strides = [1, 1, 1, 1]} : vector<5x5x8x64xf32> to vector<1x1x8x64xf32>
    %185 = vector.shape_cast %184 : vector<1x1x8x64xf32> to vector<8x64xf32>
    %186 = vector.extract_strided_slice %167 {offsets = [1, 4, 0, 0], sizes = [1, 1, 8, 64], strides = [1, 1, 1, 1]} : vector<5x5x8x64xf32> to vector<1x1x8x64xf32>
    %187 = vector.shape_cast %186 : vector<1x1x8x64xf32> to vector<8x64xf32>
    %188 = vector.extract_strided_slice %167 {offsets = [2, 0, 0, 0], sizes = [1, 1, 8, 64], strides = [1, 1, 1, 1]} : vector<5x5x8x64xf32> to vector<1x1x8x64xf32>
    %189 = vector.shape_cast %188 : vector<1x1x8x64xf32> to vector<8x64xf32>
    %190 = vector.extract_strided_slice %167 {offsets = [2, 1, 0, 0], sizes = [1, 1, 8, 64], strides = [1, 1, 1, 1]} : vector<5x5x8x64xf32> to vector<1x1x8x64xf32>
    %191 = vector.shape_cast %190 : vector<1x1x8x64xf32> to vector<8x64xf32>
    %192 = vector.extract_strided_slice %167 {offsets = [2, 2, 0, 0], sizes = [1, 1, 8, 64], strides = [1, 1, 1, 1]} : vector<5x5x8x64xf32> to vector<1x1x8x64xf32>
    %193 = vector.shape_cast %192 : vector<1x1x8x64xf32> to vector<8x64xf32>
    %194 = vector.extract_strided_slice %167 {offsets = [2, 3, 0, 0], sizes = [1, 1, 8, 64], strides = [1, 1, 1, 1]} : vector<5x5x8x64xf32> to vector<1x1x8x64xf32>
    %195 = vector.shape_cast %194 : vector<1x1x8x64xf32> to vector<8x64xf32>
    %196 = vector.extract_strided_slice %167 {offsets = [2, 4, 0, 0], sizes = [1, 1, 8, 64], strides = [1, 1, 1, 1]} : vector<5x5x8x64xf32> to vector<1x1x8x64xf32>
    %197 = vector.shape_cast %196 : vector<1x1x8x64xf32> to vector<8x64xf32>
    %198 = vector.extract_strided_slice %167 {offsets = [3, 0, 0, 0], sizes = [1, 1, 8, 64], strides = [1, 1, 1, 1]} : vector<5x5x8x64xf32> to vector<1x1x8x64xf32>
    %199 = vector.shape_cast %198 : vector<1x1x8x64xf32> to vector<8x64xf32>
    %200 = vector.extract_strided_slice %167 {offsets = [3, 1, 0, 0], sizes = [1, 1, 8, 64], strides = [1, 1, 1, 1]} : vector<5x5x8x64xf32> to vector<1x1x8x64xf32>
    %201 = vector.shape_cast %200 : vector<1x1x8x64xf32> to vector<8x64xf32>
    %202 = vector.extract_strided_slice %167 {offsets = [3, 2, 0, 0], sizes = [1, 1, 8, 64], strides = [1, 1, 1, 1]} : vector<5x5x8x64xf32> to vector<1x1x8x64xf32>
    %203 = vector.shape_cast %202 : vector<1x1x8x64xf32> to vector<8x64xf32>
    %204 = vector.extract_strided_slice %167 {offsets = [3, 3, 0, 0], sizes = [1, 1, 8, 64], strides = [1, 1, 1, 1]} : vector<5x5x8x64xf32> to vector<1x1x8x64xf32>
    %205 = vector.shape_cast %204 : vector<1x1x8x64xf32> to vector<8x64xf32>
    %206 = vector.extract_strided_slice %167 {offsets = [3, 4, 0, 0], sizes = [1, 1, 8, 64], strides = [1, 1, 1, 1]} : vector<5x5x8x64xf32> to vector<1x1x8x64xf32>
    %207 = vector.shape_cast %206 : vector<1x1x8x64xf32> to vector<8x64xf32>
    %208 = vector.extract_strided_slice %167 {offsets = [4, 0, 0, 0], sizes = [1, 1, 8, 64], strides = [1, 1, 1, 1]} : vector<5x5x8x64xf32> to vector<1x1x8x64xf32>
    %209 = vector.shape_cast %208 : vector<1x1x8x64xf32> to vector<8x64xf32>
    %210 = vector.extract_strided_slice %167 {offsets = [4, 1, 0, 0], sizes = [1, 1, 8, 64], strides = [1, 1, 1, 1]} : vector<5x5x8x64xf32> to vector<1x1x8x64xf32>
    %211 = vector.shape_cast %210 : vector<1x1x8x64xf32> to vector<8x64xf32>
    %212 = vector.extract_strided_slice %167 {offsets = [4, 2, 0, 0], sizes = [1, 1, 8, 64], strides = [1, 1, 1, 1]} : vector<5x5x8x64xf32> to vector<1x1x8x64xf32>
    %213 = vector.shape_cast %212 : vector<1x1x8x64xf32> to vector<8x64xf32>
    %214 = vector.extract_strided_slice %167 {offsets = [4, 3, 0, 0], sizes = [1, 1, 8, 64], strides = [1, 1, 1, 1]} : vector<5x5x8x64xf32> to vector<1x1x8x64xf32>
    %215 = vector.shape_cast %214 : vector<1x1x8x64xf32> to vector<8x64xf32>
    %216 = vector.extract_strided_slice %167 {offsets = [4, 4, 0, 0], sizes = [1, 1, 8, 64], strides = [1, 1, 1, 1]} : vector<5x5x8x64xf32> to vector<1x1x8x64xf32>
    %217 = vector.shape_cast %216 : vector<1x1x8x64xf32> to vector<8x64xf32>
    %218 = tpu.concatenate %169, %171, %173, %175, %177, %179, %181, %183, %185, %187, %189, %191, %193, %195, %197, %199 in 1 : vector<8x64xf32>, vector<8x64xf32>, vector<8x64xf32>, vector<8x64xf32>, vector<8x64xf32>, vector<8x64xf32>, vector<8x64xf32>, vector<8x64xf32>, vector<8x64xf32>, vector<8x64xf32>, vector<8x64xf32>, vector<8x64xf32>, vector<8x64xf32>, vector<8x64xf32>, vector<8x64xf32>, vector<8x64xf32> -> vector<8x1024xf32>
    %219 = tpu.concatenate %201, %203, %205, %207, %209, %211, %213, %215, %217 in 1 : vector<8x64xf32>, vector<8x64xf32>, vector<8x64xf32>, vector<8x64xf32>, vector<8x64xf32>, vector<8x64xf32>, vector<8x64xf32>, vector<8x64xf32>, vector<8x64xf32> -> vector<8x576xf32>
    %220 = tpu.concatenate %218, %219 in 1 : vector<8x1024xf32>, vector<8x576xf32> -> vector<8x1600xf32>
    %c0_25 = arith.constant 0 : index
    %c0_26 = arith.constant 0 : index
    %221 = vector.load %arg6[%c0_25, %c0_26] : memref<1600x128xf32, #tpu.memory_space<vmem>>, vector<1600x128xf32>
    %cst_27 = arith.constant dense<0.000000e+00> : vector<8x128xf32>
    %222 = tpu.matmul %220, %221, %cst_27 {dimension_numbers = #tpu.dot_dimension_numbers<[1], [0], [0], [1], [0, 0, 1, 1], [], []>} : vector<8x1600xf32>, vector<1600x128xf32>, vector<8x128xf32> -> vector<8x128xf32>
    %c0_28 = arith.constant 0 : index
    %c0_29 = arith.constant 0 : index
    %223 = vector.load %arg7[%c0_28, %c0_29] : memref<1x128xf32, #tpu.memory_space<vmem>>, vector<1x128xf32>
    %224 = vector.broadcast %223 : vector<1x128xf32> to vector<8x128xf32>
    %225 = arith.addf %222, %224 : vector<8x128xf32>
    %cst_30 = arith.constant 0.000000e+00 : f32
    %226 = vector.broadcast %cst_30 : f32 to vector<8x128xf32>
    %227 = arith.maximumf %225, %226 : vector<8x128xf32>
    %c0_31 = arith.constant 0 : index
    %c0_32 = arith.constant 0 : index
    %228 = vector.load %arg8[%c0_31, %c0_32] : memref<128x10xf32, #tpu.memory_space<vmem>>, vector<128x10xf32>
    %cst_33 = arith.constant dense<0.000000e+00> : vector<8x10xf32>
    %229 = tpu.matmul %227, %228, %cst_33 {dimension_numbers = #tpu.dot_dimension_numbers<[1], [0], [0], [1], [0, 0, 1, 1], [], []>} : vector<8x128xf32>, vector<128x10xf32>, vector<8x10xf32> -> vector<8x10xf32>
    %c0_34 = arith.constant 0 : index
    %c0_35 = arith.constant 0 : index
    %230 = vector.load %arg9[%c0_34, %c0_35] : memref<1x10xf32, #tpu.memory_space<vmem>>, vector<1x10xf32>
    %231 = vector.broadcast %230 : vector<1x10xf32> to vector<8x10xf32>
    %232 = arith.addf %229, %231 : vector<8x10xf32>
    %c0_36 = arith.constant 0 : index
    %c0_37 = arith.constant 0 : index
    %233 = vector.load %arg10[%c0_36, %c0_37] : memref<8x10xf32, #tpu.memory_space<vmem>>, vector<8x10xf32>
    tpu.vector_store %arg10[%c0_36, %c0_37], %232 {strides = array<i32>} : memref<8x10xf32, #tpu.memory_space<vmem>>, vector<8x10xf32>,
    return
  }
  func.func @transform_0(%arg0: i32) -> (i32, i32, i32) {
    %c0_i32 = arith.constant 0 : i32
    %c0_i32_0 = arith.constant 0 : i32
    %c0_i32_1 = arith.constant 0 : i32
    return %c0_i32, %arg0, %c0_i32_0 : i32, i32, i32
  }
  func.func @transform_1(%arg0: i32) -> (i32, i32) {
    %c0_i32 = arith.constant 0 : i32
    %c0_i32_0 = arith.constant 0 : i32
    %c0_i32_1 = arith.constant 0 : i32
    return %c0_i32, %c0_i32_0 : i32, i32
  }
  func.func @transform_2(%arg0: i32) -> (i32, i32) {
    %c0_i32 = arith.constant 0 : i32
    %c0_i32_0 = arith.constant 0 : i32
    %c0_i32_1 = arith.constant 0 : i32
    return %c0_i32, %c0_i32_0 : i32, i32
  }
  func.func @transform_3(%arg0: i32) -> (i32, i32) {
    %c0_i32 = arith.constant 0 : i32
    %c0_i32_0 = arith.constant 0 : i32
    %c0_i32_1 = arith.constant 0 : i32
    return %c0_i32, %c0_i32_0 : i32, i32
  }
  func.func @transform_4(%arg0: i32) -> (i32, i32) {
    %c0_i32 = arith.constant 0 : i32
    %c0_i32_0 = arith.constant 0 : i32
    %c0_i32_1 = arith.constant 0 : i32
    return %c0_i32, %c0_i32_0 : i32, i32
  }
  func.func @transform_5(%arg0: i32) -> (i32, i32) {
    %c0_i32 = arith.constant 0 : i32
    %c0_i32_0 = arith.constant 0 : i32
    %c0_i32_1 = arith.constant 0 : i32
    return %c0_i32, %c0_i32_0 : i32, i32
  }
  func.func @transform_6(%arg0: i32) -> (i32, i32) {
    %c0_i32 = arith.constant 0 : i32
    %c0_i32_0 = arith.constant 0 : i32
    %c0_i32_1 = arith.constant 0 : i32
    return %c0_i32, %c0_i32_0 : i32, i32
  }
  func.func @transform_7(%arg0: i32) -> (i32, i32) {
    %c0_i32 = arith.constant 0 : i32
    %c0_i32_0 = arith.constant 0 : i32
    %c0_i32_1 = arith.constant 0 : i32
    return %c0_i32, %c0_i32_0 : i32, i32
  }
  func.func @transform_8(%arg0: i32) -> (i32, i32) {
    %c0_i32 = arith.constant 0 : i32
    %c0_i32_0 = arith.constant 0 : i32
    %c0_i32_1 = arith.constant 0 : i32
    return %c0_i32, %c0_i32_0 : i32, i32
  }
  func.func @transform_9(%arg0: i32) -> (i32, i32) {
    %c0_i32 = arith.constant 0 : i32
    %c0_i32_0 = arith.constant 0 : i32
    return %arg0, %c0_i32 : i32, i32
  }
}

</mosaic_0001>

<llo_original>
// kernel: custom_model_forward.1
$region0: #{custom_model_forward.1}
  #allocation0 [shape = 'u32[]', space=smem, size = 0x4, offset = 0x4, fixed_abs, tag = 'smem constant byte address 0x4 - core index']
  #allocation1 [shape = 'u32[144,128]{1,0:T(1,128)}', space=vmem, size = 0x12000, scoped, tag = 'internal scratch']
  %s0 = inlined_call_operand.vmem [shape: f32[28,8,28], index: 0, kind: input, shape index: {}]
  %s1 = inlined_call_operand.vmem [shape: f32[84,832], index: 1, kind: input, shape index: {}]
  %s2 = inlined_call_operand.vmem [shape: f32[1,32], index: 2, kind: input, shape index: {}]
  %s3 = inlined_call_operand.vmem [shape: f32[288,64], index: 3, kind: input, shape index: {}]
  %s4 = inlined_call_operand.vmem [shape: f32[1,64], index: 4, kind: input, shape index: {}]
  %s5 = inlined_call_operand.hbm [shape: f32[1600,128], index: 5, kind: input, shape index: {}]
  %s6 = inlined_call_operand.vmem [shape: f32[1,128], index: 6, kind: input, shape index: {}]
  %s7 = inlined_call_operand.vmem [shape: f32[128,10], index: 7, kind: input, shape index: {}]
  %s8 = inlined_call_operand.vmem [shape: f32[1,10], index: 8, kind: input, shape index: {}]
  %s9 = inlined_call_operand.vmem [shape: f32[8,10], index: 9, kind: output, shape index: {}]
  %s10 = sld [smem:[#allocation0]]
  $region50: #{custom_model_forward.1} parent=0
    _
  %s12 = ssub.s32 1, %s10
  %s13 = scalar_select 0, %s12, %s10
  $region1: #{custom_model_forward.1} parent=0
    #allocation2 [shape = 'u8[819200]{0}', space=vmem, size = 0xc8000, scoped, tag = 'input window, operand 5, single buffered']
    #allocation3 [shape = 's32[1]{0}', space=sflag, size = 0x4, scoped, tag = 'scoped memory for custom_model_forward.1']
    %14 = vsyncpa [#allocation3], 0
    // Predicated region
    $region2: #{custom_model_forward.1} parent=1 // pred_check
      _
    $region3: #{custom_model_forward.1} parent=1 // pred_check_branch
      %16 = sbr.rel (0) target = $region5
    $region4: #{custom_model_forward.1} parent=1 // pred_region
      _
    $region5: #{custom_model_forward.1} parent=1 // pred_fallthru
      _
    // Predicated region
    $region6: #{custom_model_forward.1} parent=1 // pred_check
      _
    $region7: #{custom_model_forward.1} parent=1 // pred_check_branch
      %18 = sbr.rel (0) target = $region9
    $region8: #{custom_model_forward.1} parent=1 // pred_region
      _
    $region9: #{custom_model_forward.1} parent=1 // pred_fallthru
      _
    // Predicated region
    $region10: #{custom_model_forward.1} parent=1 // pred_check
      _
    $region11: #{custom_model_forward.1} parent=1 // pred_check_branch
      %20 = sbr.rel (0) target = $region13
    $region12: #{custom_model_forward.1} parent=1 // pred_region
      _
    $region13: #{custom_model_forward.1} parent=1 // pred_fallthru
      _
    // Predicated region
    $region14: #{custom_model_forward.1} parent=1 // pred_check
      _
    $region15: #{custom_model_forward.1} parent=1 // pred_check_branch
      %22 = sbr.rel (0) target = $region17
    $region16: #{custom_model_forward.1} parent=1 // pred_region
      _
    $region17: #{custom_model_forward.1} parent=1 // pred_fallthru
      _
    // Predicated region
    $region18: #{custom_model_forward.1} parent=1 // pred_check
      _
    $region19: #{custom_model_forward.1} parent=1 // pred_check_branch
      %24 = sbr.rel (0) target = $region21
    $region20: #{custom_model_forward.1} parent=1 // pred_region
      _
    $region21: #{custom_model_forward.1} parent=1 // pred_fallthru
      _
    // Predicated region
    $region22: #{custom_model_forward.1} parent=1 // pred_check
      _
    $region23: #{custom_model_forward.1} parent=1 // pred_check_branch
      %26 = sbr.rel (0) target = $region25
    $region24: #{custom_model_forward.1} parent=1 // pred_region
      %s28 = ssub.s32 25600, 25600
      %29 = vsyncadd [#allocation3], %s28
      %s30 = sshll.u32 [#allocation2], 4
      %s31 = int_to_ptr.vmem [resolvable:$true] %s30
      %36 = dma.hbm_to_vmem [thread:$0]  %s5, 25600, %s31, [#allocation3], 128, 128, 8
    $region25: #{custom_model_forward.1} parent=1 // pred_fallthru
      _
    // Predicated region
    $region26: #{custom_model_forward.1} parent=1 // pred_check
      _
    $region27: #{custom_model_forward.1} parent=1 // pred_check_branch
      %38 = sbr.rel (0) target = $region29
    $region28: #{custom_model_forward.1} parent=1 // pred_region
      _
    $region29: #{custom_model_forward.1} parent=1 // pred_fallthru
      _
    // Predicated region
    $region30: #{custom_model_forward.1} parent=1 // pred_check
      _
    $region31: #{custom_model_forward.1} parent=1 // pred_check_branch
      %40 = sbr.rel (0) target = $region33
    $region32: #{custom_model_forward.1} parent=1 // pred_region
      _
    $region33: #{custom_model_forward.1} parent=1 // pred_fallthru
      _
    // Predicated region
    $region34: #{custom_model_forward.1} parent=1 // pred_check
      _
    $region35: #{custom_model_forward.1} parent=1 // pred_check_branch
      %42 = sbr.rel (0) target = $region37
    $region36: #{custom_model_forward.1} parent=1 // pred_region
      _
    $region37: #{custom_model_forward.1} parent=1 // pred_fallthru
      _
    // Predicated region
    $region38: #{custom_model_forward.1} parent=1 // pred_check
      _
    $region39: #{custom_model_forward.1} parent=1 // pred_check_branch
      %44 = sbr.rel (0) target = $region41
    $region40: #{custom_model_forward.1} parent=1 // pred_region
      %45 = dma.done [#allocation3], 25600
    $region41: #{custom_model_forward.1} parent=1 // pred_fallthru
      _
    %v46 = vld [vmem:[%s0] sm:$0xff]
    %v47 = vld [vmem:[%s0 + $0x8] sm:$0xff]
    %v48 = vld [vmem:[%s0 + $0x10] sm:$0xff]
    %v49 = vld [vmem:[%s0 + $0x18] sm:$0xff]
    %v50 = vld [vmem:[%s0 + $0x20] sm:$0xff]
    %v51 = vld [vmem:[%s0 + $0x28] sm:$0xff]
    %v52 = vld [vmem:[%s0 + $0x30] sm:$0xff]
    %v53 = vld [vmem:[%s0 + $0x38] sm:$0xff]
    %v54 = vld [vmem:[%s0 + $0x40] sm:$0xff]
    %v55 = vld [vmem:[%s0 + $0x48] sm:$0xff]
    %v56 = vld [vmem:[%s0 + $0x50] sm:$0xff]
    %v57 = vld [vmem:[%s0 + $0x58] sm:$0xff]
    %v58 = vld [vmem:[%s0 + $0x60] sm:$0xff]
    %v59 = vld [vmem:[%s0 + $0x68] sm:$0xff]
    %v60 = vld [vmem:[%s0 + $0x70] sm:$0xff]
    %v61 = vld [vmem:[%s0 + $0x78] sm:$0xff]
    %v62 = vld [vmem:[%s0 + $0x80] sm:$0xff]
    %v63 = vld [vmem:[%s0 + $0x88] sm:$0xff]
    %v64 = vld [vmem:[%s0 + $0x90] sm:$0xff]
    %v65 = vld [vmem:[%s0 + $0x98] sm:$0xff]
    %v66 = vld [vmem:[%s0 + $0xa0] sm:$0xff]
    %v67 = vld [vmem:[%s0 + $0xa8] sm:$0xff]
    %v68 = vld [vmem:[%s0 + $0xb0] sm:$0xff]
    %v69 = vld [vmem:[%s0 + $0xb8] sm:$0xff]
    %v70 = vld [vmem:[%s0 + $0xc0] sm:$0xff]
    %v71 = vld [vmem:[%s0 + $0xc8] sm:$0xff]
    %v72 = vld [vmem:[%s0 + $0xd0] sm:$0xff]
    %v73 = vld [vmem:[%s0 + $0xd8] sm:$0xff]
    %100 = vrot.lane.b32.xlu0 %v47, 28
    %v101 = vpop.permute.xlu0 %100
    %102 = vrot.lane.b32.xlu0 %v48, 28
    %v103 = vpop.permute.xlu0 %102
    %104 = vrot.lane.b32.xlu0 %v49, 28
    %v105 = vpop.permute.xlu0 %104
    %106 = vrot.lane.b32.xlu0 %v50, 28
    %v107 = vpop.permute.xlu0 %106
    %108 = vrot.lane.b32.xlu0 %v51, 28
    %v109 = vpop.permute.xlu0 %108
    %110 = vrot.lane.b32.xlu0 %v52, 28
    %v111 = vpop.permute.xlu0 %110
    %112 = vrot.lane.b32.xlu0 %v53, 28
    %v113 = vpop.permute.xlu0 %112
    %114 = vrot.lane.b32.xlu0 %v54, 28
    %v115 = vpop.permute.xlu0 %114
    %116 = vrot.lane.b32.xlu0 %v55, 28
    %v117 = vpop.permute.xlu0 %116
    %118 = vrot.lane.b32.xlu0 %v56, 28
    %v119 = vpop.permute.xlu0 %118
    %120 = vrot.lane.b32.xlu0 %v57, 28
    %v121 = vpop.permute.xlu0 %120
    %122 = vrot.lane.b32.xlu0 %v58, 28
    %v123 = vpop.permute.xlu0 %122
    %124 = vrot.lane.b32.xlu0 %v59, 28
    %v125 = vpop.permute.xlu0 %124
    %126 = vrot.lane.b32.xlu0 %v60, 28
    %v127 = vpop.permute.xlu0 %126
    %128 = vrot.lane.b32.xlu0 %v61, 28
    %v129 = vpop.permute.xlu0 %128
    %130 = vrot.lane.b32.xlu0 %v62, 28
    %v131 = vpop.permute.xlu0 %130
    %132 = vrot.lane.b32.xlu0 %v63, 28
    %v133 = vpop.permute.xlu0 %132
    %134 = vrot.lane.b32.xlu0 %v64, 28
    %v135 = vpop.permute.xlu0 %134
    %136 = vrot.lane.b32.xlu0 %v65, 28
    %v137 = vpop.permute.xlu0 %136
    %138 = vrot.lane.b32.xlu0 %v66, 28
    %v139 = vpop.permute.xlu0 %138
    %140 = vrot.lane.b32.xlu0 %v67, 28
    %v141 = vpop.permute.xlu0 %140
    %142 = vrot.lane.b32.xlu0 %v68, 28
    %v143 = vpop.permute.xlu0 %142
    %144 = vrot.lane.b32.xlu0 %v69, 28
    %v145 = vpop.permute.xlu0 %144
    %146 = vrot.lane.b32.xlu0 %v70, 28
    %v147 = vpop.permute.xlu0 %146
    %148 = vrot.lane.b32.xlu0 %v71, 28
    %v149 = vpop.permute.xlu0 %148
    %150 = vrot.lane.b32.xlu0 %v72, 28
    %v151 = vpop.permute.xlu0 %150
    %179 = vrot.lane.b32.xlu0 %v48, 56
    %v180 = vpop.permute.xlu0 %179
    %181 = vrot.lane.b32.xlu0 %v49, 56
    %v182 = vpop.permute.xlu0 %181
    %183 = vrot.lane.b32.xlu0 %v50, 56
    %v184 = vpop.permute.xlu0 %183
    %185 = vrot.lane.b32.xlu0 %v51, 56
    %v186 = vpop.permute.xlu0 %185
    %187 = vrot.lane.b32.xlu0 %v52, 56
    %v188 = vpop.permute.xlu0 %187
    %189 = vrot.lane.b32.xlu0 %v53, 56
    %v190 = vpop.permute.xlu0 %189
    %191 = vrot.lane.b32.xlu0 %v54, 56
    %v192 = vpop.permute.xlu0 %191
    %193 = vrot.lane.b32.xlu0 %v55, 56
    %v194 = vpop.permute.xlu0 %193
    %195 = vrot.lane.b32.xlu0 %v56, 56
    %v196 = vpop.permute.xlu0 %195
    %197 = vrot.lane.b32.xlu0 %v57, 56
    %v198 = vpop.permute.xlu0 %197
    %199 = vrot.lane.b32.xlu0 %v58, 56
    %v200 = vpop.permute.xlu0 %199
    %201 = vrot.lane.b32.xlu0 %v59, 56
    %v202 = vpop.permute.xlu0 %201
    %203 = vrot.lane.b32.xlu0 %v60, 56
    %v204 = vpop.permute.xlu0 %203
    %205 = vrot.lane.b32.xlu0 %v61, 56
    %v206 = vpop.permute.xlu0 %205
    %207 = vrot.lane.b32.xlu0 %v62, 56
    %v208 = vpop.permute.xlu0 %207
    %209 = vrot.lane.b32.xlu0 %v63, 56
    %v210 = vpop.permute.xlu0 %209
    %211 = vrot.lane.b32.xlu0 %v64, 56
    %v212 = vpop.permute.xlu0 %211
    %213 = vrot.lane.b32.xlu0 %v65, 56
    %v214 = vpop.permute.xlu0 %213
    %215 = vrot.lane.b32.xlu0 %v66, 56
    %v216 = vpop.permute.xlu0 %215
    %217 = vrot.lane.b32.xlu0 %v67, 56
    %v218 = vpop.permute.xlu0 %217
    %219 = vrot.lane.b32.xlu0 %v68, 56
    %v220 = vpop.permute.xlu0 %219
    %221 = vrot.lane.b32.xlu0 %v69, 56
    %v222 = vpop.permute.xlu0 %221
    %223 = vrot.lane.b32.xlu0 %v70, 56
    %v224 = vpop.permute.xlu0 %223
    %225 = vrot.lane.b32.xlu0 %v71, 56
    %v226 = vpop.permute.xlu0 %225
    %227 = vrot.lane.b32.xlu0 %v72, 56
    %v228 = vpop.permute.xlu0 %227
    %229 = vrot.lane.b32.xlu0 %v73, 56
    %v230 = vpop.permute.xlu0 %229
    %vm257 = vcmask 228352
    %v258 = vsel %vm257, %v46, %v101
    %v259 = vsel %vm257, %v47, %v103
    %v260 = vsel %vm257, %v48, %v105
    %v261 = vsel %vm257, %v49, %v107
    %v262 = vsel %vm257, %v50, %v109
    %v263 = vsel %vm257, %v51, %v111
    %v264 = vsel %vm257, %v52, %v113
    %v265 = vsel %vm257, %v53, %v115
    %v266 = vsel %vm257, %v54, %v117
    %v267 = vsel %vm257, %v55, %v119
    %v268 = vsel %vm257, %v56, %v121
    %v269 = vsel %vm257, %v57, %v123
    %v270 = vsel %vm257, %v58, %v125
    %v271 = vsel %vm257, %v59, %v127
    %v272 = vsel %vm257, %v60, %v129
    %v273 = vsel %vm257, %v61, %v131
    %v274 = vsel %vm257, %v62, %v133
    %v275 = vsel %vm257, %v63, %v135
    %v276 = vsel %vm257, %v64, %v137
    %v277 = vsel %vm257, %v65, %v139
    %v278 = vsel %vm257, %v66, %v141
    %v279 = vsel %vm257, %v67, %v143
    %v280 = vsel %vm257, %v68, %v145
    %v281 = vsel %vm257, %v69, %v147
    %v282 = vsel %vm257, %v70, %v149
    %v283 = vsel %vm257, %v71, %v151
    %vm284 = vcmask 457728
    %v285 = vsel %vm284, %v258, %v180
    %v286 = vsel %vm284, %v259, %v182
    %v287 = vsel %vm284, %v260, %v184
    %v288 = vsel %vm284, %v261, %v186
    %v289 = vsel %vm284, %v262, %v188
    %v290 = vsel %vm284, %v263, %v190
    %v291 = vsel %vm284, %v264, %v192
    %v292 = vsel %vm284, %v265, %v194
    %v293 = vsel %vm284, %v266, %v196
    %v294 = vsel %vm284, %v267, %v198
    %v295 = vsel %vm284, %v268, %v200
    %v296 = vsel %vm284, %v269, %v202
    %v297 = vsel %vm284, %v270, %v204
    %v298 = vsel %vm284, %v271, %v206
    %v299 = vsel %vm284, %v272, %v208
    %v300 = vsel %vm284, %v273, %v210
    %v301 = vsel %vm284, %v274, %v212
    %v302 = vsel %vm284, %v275, %v214
    %v303 = vsel %vm284, %v276, %v216
    %v304 = vsel %vm284, %v277, %v218
    %v305 = vsel %vm284, %v278, %v220
    %v306 = vsel %vm284, %v279, %v222
    %v307 = vsel %vm284, %v280, %v224
    %v308 = vsel %vm284, %v281, %v226
    %v309 = vsel %vm284, %v282, %v228
    %v310 = vsel %vm284, %v283, %v230
    %v311 = vld [vmem:[%s1] sm:$0xff]
    %v312 = vld [vmem:[%s1 + $0x8] sm:$0xff]
    %v313 = vld [vmem:[%s1 + $0x10] sm:$0xff]
    %v314 = vld [vmem:[%s1 + $0x18] sm:$0xff]
    %v315 = vld [vmem:[%s1 + $0x20] sm:$0xff]
    %v316 = vld [vmem:[%s1 + $0x28] sm:$0xff]
    %v317 = vld [vmem:[%s1 + $0x30] sm:$0xff]
    %v318 = vld [vmem:[%s1 + $0x38] sm:$0xff]
    %v319 = vld [vmem:[%s1 + $0x40] sm:$0xff]
    %v320 = vld [vmem:[%s1 + $0x48] sm:$0xff]
    %v321 = vld [vmem:[%s1 + $0x50] sm:$0xff]
    %v322 = vld [vmem:[%s1 + $0x58] sm:$0xff]
    %v323 = vld [vmem:[%s1 + $0x60] sm:$0xff]
    %v324 = vld [vmem:[%s1 + $0x68] sm:$0xff]
    %v325 = vld [vmem:[%s1 + $0x70] sm:$0xff]
    %v326 = vld [vmem:[%s1 + $0x78] sm:$0xff]
    %v327 = vld [vmem:[%s1 + $0x80] sm:$0xff]
    %v328 = vld [vmem:[%s1 + $0x88] sm:$0xff]
    %v329 = vld [vmem:[%s1 + $0x90] sm:$0xff]
    %v330 = vld [vmem:[%s1 + $0x98] sm:$0xff]
    %v331 = vld [vmem:[%s1 + $0xa0] sm:$0xff]
    %v332 = vld [vmem:[%s1 + $0xa8] sm:$0xff]
    %v333 = vld [vmem:[%s1 + $0xb0] sm:$0xff]
    %v334 = vld [vmem:[%s1 + $0xb8] sm:$0xff]
    %v335 = vld [vmem:[%s1 + $0xc0] sm:$0xff]
    %v336 = vld [vmem:[%s1 + $0xc8] sm:$0xff]
    %v337 = vld [vmem:[%s1 + $0xd0] sm:$0xff]
    %v338 = vld [vmem:[%s1 + $0xd8] sm:$0xff]
    %v339 = vld [vmem:[%s1 + $0xe0] sm:$0xff]
    %v340 = vld [vmem:[%s1 + $0xe8] sm:$0xff]
    %v341 = vld [vmem:[%s1 + $0xf0] sm:$0xff]
    %v342 = vld [vmem:[%s1 + $0xf8] sm:$0xff]
    %v343 = vld [vmem:[%s1 + $0x100] sm:$0xff]
    %v344 = vld [vmem:[%s1 + $0x108] sm:$0xff]
    %v345 = vld [vmem:[%s1 + $0x110] sm:$0xff]
    %v346 = vld [vmem:[%s1 + $0x118] sm:$0xff]
    %v347 = vld [vmem:[%s1 + $0x120] sm:$0xff]
    %v348 = vld [vmem:[%s1 + $0x128] sm:$0xff]
    %v349 = vld [vmem:[%s1 + $0x130] sm:$0xff]
    %v350 = vld [vmem:[%s1 + $0x138] sm:$0xff]
    %v351 = vld [vmem:[%s1 + $0x140] sm:$0xff]
    %v352 = vld [vmem:[%s1 + $0x148] sm:$0xff]
    %v353 = vld [vmem:[%s1 + $0x150] sm:$0xff]
    %v354 = vld [vmem:[%s1 + $0x158] sm:$0xff]
    %v355 = vld [vmem:[%s1 + $0x160] sm:$0xff]
    %v356 = vld [vmem:[%s1 + $0x168] sm:$0xff]
    %v357 = vld [vmem:[%s1 + $0x170] sm:$0xff]
    %v358 = vld [vmem:[%s1 + $0x178] sm:$0xff]
    %v359 = vld [vmem:[%s1 + $0x180] sm:$0xff]
    %v360 = vld [vmem:[%s1 + $0x188] sm:$0xff]
    %v361 = vld [vmem:[%s1 + $0x190] sm:$0xff]
    %v362 = vld [vmem:[%s1 + $0x198] sm:$0xff]
    %v363 = vld [vmem:[%s1 + $0x1a0] sm:$0xff]
    %v364 = vld [vmem:[%s1 + $0x1a8] sm:$0xff]
    %v365 = vld [vmem:[%s1 + $0x1b0] sm:$0xff]
    %v366 = vld [vmem:[%s1 + $0x1b8] sm:$0xff]
    %v367 = vld [vmem:[%s1 + $0x1c0] sm:$0xff]
    %v368 = vld [vmem:[%s1 + $0x1c8] sm:$0xff]
    %v369 = vld [vmem:[%s1 + $0x1d0] sm:$0xff]
    %v370 = vld [vmem:[%s1 + $0x1d8] sm:$0xff]
    %v371 = vld [vmem:[%s1 + $0x1e0] sm:$0xff]
    %v372 = vld [vmem:[%s1 + $0x1e8] sm:$0xff]
    %v373 = vld [vmem:[%s1 + $0x1f0] sm:$0xff]
    %v374 = vld [vmem:[%s1 + $0x1f8] sm:$0xff]
    %v375 = vld [vmem:[%s1 + $0x200] sm:$0xff]
    %v376 = vld [vmem:[%s1 + $0x208] sm:$0xff]
    %v377 = vld [vmem:[%s1 + $0x210] sm:$0xff]
    %v378 = vld [vmem:[%s1 + $0x218] sm:$0xff]
    %v379 = vld [vmem:[%s1 + $0x220] sm:$0xff]
    %v380 = vld [vmem:[%s1 + $0x228] sm:$0xff]
    %v381 = vld [vmem:[%s1 + $0x230] sm:$0xf]
    %v382 = vld [vmem:[%s1 + $0x238] sm:$0xf]
    %v383 = vld [vmem:[%s1 + $0x240] sm:$0xf]
    %v384 = vld [vmem:[%s1 + $0x248] sm:$0xf]
    %v385 = vld [vmem:[%s1 + $0x250] sm:$0xf]
    %v386 = vld [vmem:[%s1 + $0x258] sm:$0xf]
    %v387 = vld [vmem:[%s1 + $0x260] sm:$0xf]
    %vm388 = vcmask 687104
    %v390 = vsel %vm388, %v285, 0
    %v393 = vsel %vm388, %v286, 0
    %v396 = vsel %vm388, %v287, 0
    %v399 = vsel %vm388, %v288, 0
    %v402 = vsel %vm388, %v289, 0
    %v405 = vsel %vm388, %v290, 0
    %v408 = vsel %vm388, %v291, 0
    %v411 = vsel %vm388, %v292, 0
    %v414 = vsel %vm388, %v293, 0
    %v417 = vsel %vm388, %v294, 0
    %v420 = vsel %vm388, %v295, 0
    %v423 = vsel %vm388, %v296, 0
    %v426 = vsel %vm388, %v297, 0
    %v429 = vsel %vm388, %v298, 0
    %v432 = vsel %vm388, %v299, 0
    %v435 = vsel %vm388, %v300, 0
    %v438 = vsel %vm388, %v301, 0
    %v441 = vsel %vm388, %v302, 0
    %v444 = vsel %vm388, %v303, 0
    %v447 = vsel %vm388, %v304, 0
    %v450 = vsel %vm388, %v305, 0
    %v453 = vsel %vm388, %v306, 0
    %v456 = vsel %vm388, %v307, 0
    %v459 = vsel %vm388, %v308, 0
    %v462 = vsel %vm388, %v309, 0
    %v465 = vsel %vm388, %v310, 0
    %vm467 = vcmask 1043456
    %v469 = vsel %vm467, %v381, 0
    %v472 = vsel %vm467, %v382, 0
    %v475 = vsel %vm467, %v383, 0
    %v478 = vsel %vm467, %v384, 0
    %v481 = vsel %vm467, %v385, 0
    %v484 = vsel %vm467, %v386, 0
    %v487 = vsel %vm467, %v387, 0
    %489 = vmatprep.subr.mxu0 0.0
    %490 = vmatpush1.msra.mxu0 0.0
    %491 = vmatprep.subr.mxu0 0.0
    %492 = vmatpush1.msra.mxu0 0.0
    %493 = vmatprep.subr.mxu0 0.0
    %494 = vmatpush1.msra.mxu0 0.0
    %495 = vmatprep.subr.mxu0 0.0
    %496 = vmatpush1.msra.mxu0 0.0
    %497 = vmatprep.subr.mxu0 0.0
    %498 = vmatpush1.msra.mxu0 0.0
    %499 = vmatprep.subr.mxu0 %v472
    %500 = vmatpush1.msra.mxu0 %v469
    %501 = vmatprep.subr.mxu0 %v375
    %502 = vmatpush1.msra.mxu0 %v374
    %503 = vmatprep.subr.mxu0 %v368
    %504 = vmatpush1.msra.mxu0 %v367
    %505 = vmatprep.subr.mxu0 %v361
    %506 = vmatpush1.msra.mxu0 %v360
    %507 = vmatprep.subr.mxu0 %v354
    %508 = vmatpush1.msra.mxu0 %v353
    %509 = vmatprep.subr.mxu0 %v347
    %510 = vmatpush1.msra.mxu0 %v346
    %511 = vmatprep.subr.mxu0 %v340
    %512 = vmatpush1.msra.mxu0 %v339
    %513 = vmatprep.subr.mxu0 %v333
    %514 = vmatpush1.msra.mxu0 %v332
    %515 = vmatprep.subr.mxu0 %v326
    %516 = vmatpush1.msra.mxu0 %v325
    %517 = vmatprep.subr.mxu0 %v319
    %518 = vmatpush1.msra.mxu0 %v318
    %519 = vmatprep.subr.mxu0 %v312
    %520 = vmatpush1.msra.mxu0 %v311
    %521 = vmatprep.subr.mxu0 0.0
    %522 = vmatpush2.msra.mxu0 0.0
    %523 = vmatprep.subr.mxu0 0.0
    %524 = vmatpush2.msra.mxu0 0.0
    %525 = vmatprep.subr.mxu0 0.0
    %526 = vmatpush2.msra.mxu0 0.0
    %527 = vmatprep.subr.mxu0 0.0
    %528 = vmatpush2.msra.mxu0 0.0
    %529 = vmatprep.subr.mxu0 0.0
    %530 = vmatpush2.msra.mxu0 0.0
    %531 = vmatprep.subr.mxu0 0.0
    %532 = vmatpush2.msra.mxu0 0.0
    %533 = vmatprep.subr.mxu0 0.0
    %534 = vmatpush2.msra.mxu0 0.0
    %535 = vmatprep.subr.mxu0 0.0
    %536 = vmatpush2.msra.mxu0 0.0
    %537 = vmatprep.subr.mxu0 0.0
    %538 = vmatpush2.msra.mxu0 0.0
    %539 = vmatprep.subr.mxu0 0.0
    %540 = vmatpush2.msra.mxu0 0.0
    %541 = vmatprep.subr.mxu0 0.0
    %542 = vmatpush2.msra.mxu0 0.0
    %543 = vmatprep.subr.mxu0 0.0
    %544 = vmatpush2.msra.mxu0 0.0
    %545 = vmatprep.subr.mxu0 0.0
    %546 = vmatpush2.msra.mxu0 0.0
    %547 = vmatprep.subr.mxu0 0.0
    %548 = vmatpush2.msra.mxu0 0.0
    %549 = vmatprep.subr.mxu0 0.0
    %550 = vmatpush2.msra.mxu0 0.0
    %551 = vmatprep.subr.mxu0 0.0
    %552 = vmatpush2.msra.mxu0 0.0
    %553 = vmatprep.mubr.f32.mxu0 0.0
    %554 = vmatmul.mubr.f32.gmra.mxu0 %v390
    %v555 = vpop.f32.mrf.mxu0
    %v556 = vadd.f32 0.0, %v555
    %v557 = vpop.f32.mrf.mxu0
    %v558 = vadd.f32 0.0, %v557
    %559 = vmatprep.mubr.f32.mxu0 0.0
    %560 = vmatmul.mubr.f32.gmra.mxu0 %v393
    %v561 = vpop.f32.mrf.mxu0
    %v562 = vadd.f32 0.0, %v561
    %v563 = vpop.f32.mrf.mxu0
    %v564 = vadd.f32 0.0, %v563
    %565 = vmatprep.mubr.f32.mxu0 0.0
    %566 = vmatmul.mubr.f32.gmra.mxu0 %v396
    %v567 = vpop.f32.mrf.mxu0
    %v568 = vadd.f32 0.0, %v567
    %v569 = vpop.f32.mrf.mxu0
    %v570 = vadd.f32 0.0, %v569
    %571 = vmatprep.mubr.f32.mxu0 0.0
    %572 = vmatmul.mubr.f32.gmra.mxu0 %v399
    %v573 = vpop.f32.mrf.mxu0
    %v574 = vadd.f32 0.0, %v573
    %v575 = vpop.f32.mrf.mxu0
    %v576 = vadd.f32 0.0, %v575
    %577 = vmatprep.mubr.f32.mxu0 0.0
    %578 = vmatmul.mubr.f32.gmra.mxu0 %v402
    %v579 = vpop.f32.mrf.mxu0
    %v580 = vadd.f32 0.0, %v579
    %v581 = vpop.f32.mrf.mxu0
    %v582 = vadd.f32 0.0, %v581
    %583 = vmatprep.mubr.f32.mxu0 0.0
    %584 = vmatmul.mubr.f32.gmra.mxu0 %v405
    %v585 = vpop.f32.mrf.mxu0
    %v586 = vadd.f32 0.0, %v585
    %v587 = vpop.f32.mrf.mxu0
    %v588 = vadd.f32 0.0, %v587
    %589 = vmatprep.mubr.f32.mxu0 0.0
    %590 = vmatmul.mubr.f32.gmra.mxu0 %v408
    %v591 = vpop.f32.mrf.mxu0
    %v592 = vadd.f32 0.0, %v591
    %v593 = vpop.f32.mrf.mxu0
    %v594 = vadd.f32 0.0, %v593
    %595 = vmatprep.mubr.f32.mxu0 0.0
    %596 = vmatmul.mubr.f32.gmra.mxu0 %v411
    %v597 = vpop.f32.mrf.mxu0
    %v598 = vadd.f32 0.0, %v597
    %v599 = vpop.f32.mrf.mxu0
    %v600 = vadd.f32 0.0, %v599
    %601 = vmatprep.mubr.f32.mxu0 0.0
    %602 = vmatmul.mubr.f32.gmra.mxu0 %v414
    %v603 = vpop.f32.mrf.mxu0
    %v604 = vadd.f32 0.0, %v603
    %v605 = vpop.f32.mrf.mxu0
    %v606 = vadd.f32 0.0, %v605
    %607 = vmatprep.mubr.f32.mxu0 0.0
    %608 = vmatmul.mubr.f32.gmra.mxu0 %v417
    %v609 = vpop.f32.mrf.mxu0
    %v610 = vadd.f32 0.0, %v609
    %v611 = vpop.f32.mrf.mxu0
    %v612 = vadd.f32 0.0, %v611
    %613 = vmatprep.mubr.f32.mxu0 0.0
    %614 = vmatmul.mubr.f32.gmra.mxu0 %v420
    %v615 = vpop.f32.mrf.mxu0
    %v616 = vadd.f32 0.0, %v615
    %v617 = vpop.f32.mrf.mxu0
    %v618 = vadd.f32 0.0, %v617
    %619 = vmatprep.mubr.f32.mxu0 0.0
    %620 = vmatmul.mubr.f32.gmra.mxu0 %v423
    %v621 = vpop.f32.mrf.mxu0
    %v622 = vadd.f32 0.0, %v621
    %v623 = vpop.f32.mrf.mxu0
    %v624 = vadd.f32 0.0, %v623
    %625 = vmatprep.mubr.f32.mxu0 0.0
    %626 = vmatmul.mubr.f32.gmra.mxu0 %v426
    %v627 = vpop.f32.mrf.mxu0
    %v628 = vadd.f32 0.0, %v627
    %v629 = vpop.f32.mrf.mxu0
    %v630 = vadd.f32 0.0, %v629
    %631 = vmatprep.mubr.f32.mxu0 0.0
    %632 = vmatmul.mubr.f32.gmra.mxu0 %v429
    %v633 = vpop.f32.mrf.mxu0
    %v634 = vadd.f32 0.0, %v633
    %v635 = vpop.f32.mrf.mxu0
    %v636 = vadd.f32 0.0, %v635
    %637 = vmatprep.mubr.f32.mxu0 0.0
    %638 = vmatmul.mubr.f32.gmra.mxu0 %v432
    %v639 = vpop.f32.mrf.mxu0
    %v640 = vadd.f32 0.0, %v639
    %v641 = vpop.f32.mrf.mxu0
    %v642 = vadd.f32 0.0, %v641
    %643 = vmatprep.mubr.f32.mxu0 0.0
    %644 = vmatmul.mubr.f32.gmra.mxu0 %v435
    %v645 = vpop.f32.mrf.mxu0
    %v646 = vadd.f32 0.0, %v645
    %v647 = vpop.f32.mrf.mxu0
    %v648 = vadd.f32 0.0, %v647
    %649 = vmatprep.mubr.f32.mxu0 0.0
    %650 = vmatmul.mubr.f32.gmra.mxu0 %v438
    %v651 = vpop.f32.mrf.mxu0
    %v652 = vadd.f32 0.0, %v651
    %v653 = vpop.f32.mrf.mxu0
    %v654 = vadd.f32 0.0, %v653
    %655 = vmatprep.mubr.f32.mxu0 0.0
    %656 = vmatmul.mubr.f32.gmra.mxu0 %v441
    %v657 = vpop.f32.mrf.mxu0
    %v658 = vadd.f32 0.0, %v657
    %v659 = vpop.f32.mrf.mxu0
    %v660 = vadd.f32 0.0, %v659
    %661 = vmatprep.mubr.f32.mxu0 0.0
    %662 = vmatmul.mubr.f32.gmra.mxu0 %v444
    %v663 = vpop.f32.mrf.mxu0
    %v664 = vadd.f32 0.0, %v663
    %v665 = vpop.f32.mrf.mxu0
    %v666 = vadd.f32 0.0, %v665
    %667 = vmatprep.mubr.f32.mxu0 0.0
    %668 = vmatmul.mubr.f32.gmra.mxu0 %v447
    %v669 = vpop.f32.mrf.mxu0
    %v670 = vadd.f32 0.0, %v669
    %v671 = vpop.f32.mrf.mxu0
    %v672 = vadd.f32 0.0, %v671
    %673 = vmatprep.mubr.f32.mxu0 0.0
    %674 = vmatmul.mubr.f32.gmra.mxu0 %v450
    %v675 = vpop.f32.mrf.mxu0
    %v676 = vadd.f32 0.0, %v675
    %v677 = vpop.f32.mrf.mxu0
    %v678 = vadd.f32 0.0, %v677
    %679 = vmatprep.mubr.f32.mxu0 0.0
    %680 = vmatmul.mubr.f32.gmra.mxu0 %v453
    %v681 = vpop.f32.mrf.mxu0
    %v682 = vadd.f32 0.0, %v681
    %v683 = vpop.f32.mrf.mxu0
    %v684 = vadd.f32 0.0, %v683
    %685 = vmatprep.mubr.f32.mxu0 0.0
    %686 = vmatmul.mubr.f32.gmra.mxu0 %v456
    %v687 = vpop.f32.mrf.mxu0
    %v688 = vadd.f32 0.0, %v687
    %v689 = vpop.f32.mrf.mxu0
    %v690 = vadd.f32 0.0, %v689
    %691 = vmatprep.mubr.f32.mxu0 0.0
    %692 = vmatmul.mubr.f32.gmra.mxu0 %v459
    %v693 = vpop.f32.mrf.mxu0
    %v694 = vadd.f32 0.0, %v693
    %v695 = vpop.f32.mrf.mxu0
    %v696 = vadd.f32 0.0, %v695
    %697 = vmatprep.mubr.f32.mxu0 0.0
    %698 = vmatmul.mubr.f32.gmra.mxu0 %v462
    %v699 = vpop.f32.mrf.mxu0
    %v700 = vadd.f32 0.0, %v699
    %v701 = vpop.f32.mrf.mxu0
    %v702 = vadd.f32 0.0, %v701
    %703 = vmatprep.mubr.f32.mxu0 0.0
    %704 = vmatmul.mubr.f32.gmra.mxu0 %v465
    %v705 = vpop.f32.mrf.mxu0
    %v706 = vadd.f32 0.0, %v705
    %v707 = vpop.f32.mrf.mxu0
    %v708 = vadd.f32 0.0, %v707
    %709 = vdwg.mxu0
    %710 = vmatprep.subr.mxu0 0.0
    %711 = vmatpush1.msra.mxu0 0.0
    %712 = vmatprep.subr.mxu0 0.0
    %713 = vmatpush1.msra.mxu0 0.0
    %714 = vmatprep.subr.mxu0 0.0
    %715 = vmatpush1.msra.mxu0 0.0
    %716 = vmatprep.subr.mxu0 0.0
    %717 = vmatpush1.msra.mxu0 0.0
    %718 = vmatprep.subr.mxu0 0.0
    %719 = vmatpush1.msra.mxu0 0.0
    %720 = vmatprep.subr.mxu0 %v478
    %721 = vmatpush1.msra.mxu0 %v475
    %722 = vmatprep.subr.mxu0 %v377
    %723 = vmatpush1.msra.mxu0 %v376
    %724 = vmatprep.subr.mxu0 %v370
    %725 = vmatpush1.msra.mxu0 %v369
    %726 = vmatprep.subr.mxu0 %v363
    %727 = vmatpush1.msra.mxu0 %v362
    %728 = vmatprep.subr.mxu0 %v356
    %729 = vmatpush1.msra.mxu0 %v355
    %730 = vmatprep.subr.mxu0 %v349
    %731 = vmatpush1.msra.mxu0 %v348
    %732 = vmatprep.subr.mxu0 %v342
    %733 = vmatpush1.msra.mxu0 %v341
    %734 = vmatprep.subr.mxu0 %v335
    %735 = vmatpush1.msra.mxu0 %v334
    %736 = vmatprep.subr.mxu0 %v328
    %737 = vmatpush1.msra.mxu0 %v327
    %738 = vmatprep.subr.mxu0 %v321
    %739 = vmatpush1.msra.mxu0 %v320
    %740 = vmatprep.subr.mxu0 %v314
    %741 = vmatpush1.msra.mxu0 %v313
    %742 = vmatprep.subr.mxu0 0.0
    %743 = vmatpush2.msra.mxu0 0.0
    %744 = vmatprep.subr.mxu0 0.0
    %745 = vmatpush2.msra.mxu0 0.0
    %746 = vmatprep.subr.mxu0 0.0
    %747 = vmatpush2.msra.mxu0 0.0
    %748 = vmatprep.subr.mxu0 0.0
    %749 = vmatpush2.msra.mxu0 0.0
    %750 = vmatprep.subr.mxu0 0.0
    %751 = vmatpush2.msra.mxu0 0.0
    %752 = vmatprep.subr.mxu0 0.0
    %753 = vmatpush2.msra.mxu0 0.0
    %754 = vmatprep.subr.mxu0 0.0
    %755 = vmatpush2.msra.mxu0 0.0
    %756 = vmatprep.subr.mxu0 0.0
    %757 = vmatpush2.msra.mxu0 0.0
    %758 = vmatprep.subr.mxu0 0.0
    %759 = vmatpush2.msra.mxu0 0.0
    %760 = vmatprep.subr.mxu0 0.0
    %761 = vmatpush2.msra.mxu0 0.0
    %762 = vmatprep.subr.mxu0 0.0
    %763 = vmatpush2.msra.mxu0 0.0
    %764 = vmatprep.subr.mxu0 0.0
    %765 = vmatpush2.msra.mxu0 0.0
    %766 = vmatprep.subr.mxu0 0.0
    %767 = vmatpush2.msra.mxu0 0.0
    %768 = vmatprep.subr.mxu0 0.0
    %769 = vmatpush2.msra.mxu0 0.0
    %770 = vmatprep.subr.mxu0 0.0
    %771 = vmatpush2.msra.mxu0 0.0
    %772 = vmatprep.subr.mxu0 0.0
    %773 = vmatpush2.msra.mxu0 0.0
    %774 = vmatprep.mubr.f32.mxu0 0.0
    %775 = vmatmul.mubr.f32.gmra.mxu0 %v390
    %v776 = vpop.f32.mrf.mxu0
    %v777 = vadd.f32 0.0, %v776
    %v778 = vpop.f32.mrf.mxu0
    %v779 = vadd.f32 0.0, %v778
    %780 = vmatprep.mubr.f32.mxu0 0.0
    %781 = vmatmul.mubr.f32.gmra.mxu0 %v393
    %v782 = vpop.f32.mrf.mxu0
    %v783 = vadd.f32 0.0, %v782
    %v784 = vpop.f32.mrf.mxu0
    %v785 = vadd.f32 0.0, %v784
    %786 = vmatprep.mubr.f32.mxu0 0.0
    %787 = vmatmul.mubr.f32.gmra.mxu0 %v396
    %v788 = vpop.f32.mrf.mxu0
    %v789 = vadd.f32 0.0, %v788
    %v790 = vpop.f32.mrf.mxu0
    %v791 = vadd.f32 0.0, %v790
    %792 = vmatprep.mubr.f32.mxu0 0.0
    %793 = vmatmul.mubr.f32.gmra.mxu0 %v399
    %v794 = vpop.f32.mrf.mxu0
    %v795 = vadd.f32 0.0, %v794
    %v796 = vpop.f32.mrf.mxu0
    %v797 = vadd.f32 0.0, %v796
    %798 = vmatprep.mubr.f32.mxu0 0.0
    %799 = vmatmul.mubr.f32.gmra.mxu0 %v402
    %v800 = vpop.f32.mrf.mxu0
    %v801 = vadd.f32 0.0, %v800
    %v802 = vpop.f32.mrf.mxu0
    %v803 = vadd.f32 0.0, %v802
    %804 = vmatprep.mubr.f32.mxu0 0.0
    %805 = vmatmul.mubr.f32.gmra.mxu0 %v405
    %v806 = vpop.f32.mrf.mxu0
    %v807 = vadd.f32 0.0, %v806
    %v808 = vpop.f32.mrf.mxu0
    %v809 = vadd.f32 0.0, %v808
    %810 = vmatprep.mubr.f32.mxu0 0.0
    %811 = vmatmul.mubr.f32.gmra.mxu0 %v408
    %v812 = vpop.f32.mrf.mxu0
    %v813 = vadd.f32 0.0, %v812
    %v814 = vpop.f32.mrf.mxu0
    %v815 = vadd.f32 0.0, %v814
    %816 = vmatprep.mubr.f32.mxu0 0.0
    %817 = vmatmul.mubr.f32.gmra.mxu0 %v411
    %v818 = vpop.f32.mrf.mxu0
    %v819 = vadd.f32 0.0, %v818
    %v820 = vpop.f32.mrf.mxu0
    %v821 = vadd.f32 0.0, %v820
    %822 = vmatprep.mubr.f32.mxu0 0.0
    %823 = vmatmul.mubr.f32.gmra.mxu0 %v414
    %v824 = vpop.f32.mrf.mxu0
    %v825 = vadd.f32 0.0, %v824
    %v826 = vpop.f32.mrf.mxu0
    %v827 = vadd.f32 0.0, %v826
    %828 = vmatprep.mubr.f32.mxu0 0.0
    %829 = vmatmul.mubr.f32.gmra.mxu0 %v417
    %v830 = vpop.f32.mrf.mxu0
    %v831 = vadd.f32 0.0, %v830
    %v832 = vpop.f32.mrf.mxu0
    %v833 = vadd.f32 0.0, %v832
    %834 = vmatprep.mubr.f32.mxu0 0.0
    %835 = vmatmul.mubr.f32.gmra.mxu0 %v420
    %v836 = vpop.f32.mrf.mxu0
    %v837 = vadd.f32 0.0, %v836
    %v838 = vpop.f32.mrf.mxu0
    %v839 = vadd.f32 0.0, %v838
    %840 = vmatprep.mubr.f32.mxu0 0.0
    %841 = vmatmul.mubr.f32.gmra.mxu0 %v423
    %v842 = vpop.f32.mrf.mxu0
    %v843 = vadd.f32 0.0, %v842
    %v844 = vpop.f32.mrf.mxu0
    %v845 = vadd.f32 0.0, %v844
    %846 = vmatprep.mubr.f32.mxu0 0.0
    %847 = vmatmul.mubr.f32.gmra.mxu0 %v426
    %v848 = vpop.f32.mrf.mxu0
    %v849 = vadd.f32 0.0, %v848
    %v850 = vpop.f32.mrf.mxu0
    %v851 = vadd.f32 0.0, %v850
    %852 = vmatprep.mubr.f32.mxu0 0.0
    %853 = vmatmul.mubr.f32.gmra.mxu0 %v429
    %v854 = vpop.f32.mrf.mxu0
    %v855 = vadd.f32 0.0, %v854
    %v856 = vpop.f32.mrf.mxu0
    %v857 = vadd.f32 0.0, %v856
    %858 = vmatprep.mubr.f32.mxu0 0.0
    %859 = vmatmul.mubr.f32.gmra.mxu0 %v432
    %v860 = vpop.f32.mrf.mxu0
    %v861 = vadd.f32 0.0, %v860
    %v862 = vpop.f32.mrf.mxu0
    %v863 = vadd.f32 0.0, %v862
    %864 = vmatprep.mubr.f32.mxu0 0.0
    %865 = vmatmul.mubr.f32.gmra.mxu0 %v435
    %v866 = vpop.f32.mrf.mxu0
    %v867 = vadd.f32 0.0, %v866
    %v868 = vpop.f32.mrf.mxu0
    %v869 = vadd.f32 0.0, %v868
    %870 = vmatprep.mubr.f32.mxu0 0.0
    %871 = vmatmul.mubr.f32.gmra.mxu0 %v438
    %v872 = vpop.f32.mrf.mxu0
    %v873 = vadd.f32 0.0, %v872
    %v874 = vpop.f32.mrf.mxu0
    %v875 = vadd.f32 0.0, %v874
    %876 = vmatprep.mubr.f32.mxu0 0.0
    %877 = vmatmul.mubr.f32.gmra.mxu0 %v441
    %v878 = vpop.f32.mrf.mxu0
    %v879 = vadd.f32 0.0, %v878
    %v880 = vpop.f32.mrf.mxu0
    %v881 = vadd.f32 0.0, %v880
    %882 = vmatprep.mubr.f32.mxu0 0.0
    %883 = vmatmul.mubr.f32.gmra.mxu0 %v444
    %v884 = vpop.f32.mrf.mxu0
    %v885 = vadd.f32 0.0, %v884
    %v886 = vpop.f32.mrf.mxu0
    %v887 = vadd.f32 0.0, %v886
    %888 = vmatprep.mubr.f32.mxu0 0.0
    %889 = vmatmul.mubr.f32.gmra.mxu0 %v447
    %v890 = vpop.f32.mrf.mxu0
    %v891 = vadd.f32 0.0, %v890
    %v892 = vpop.f32.mrf.mxu0
    %v893 = vadd.f32 0.0, %v892
    %894 = vmatprep.mubr.f32.mxu0 0.0
    %895 = vmatmul.mubr.f32.gmra.mxu0 %v450
    %v896 = vpop.f32.mrf.mxu0
    %v897 = vadd.f32 0.0, %v896
    %v898 = vpop.f32.mrf.mxu0
    %v899 = vadd.f32 0.0, %v898
    %900 = vmatprep.mubr.f32.mxu0 0.0
    %901 = vmatmul.mubr.f32.gmra.mxu0 %v453
    %v902 = vpop.f32.mrf.mxu0
    %v903 = vadd.f32 0.0, %v902
    %v904 = vpop.f32.mrf.mxu0
    %v905 = vadd.f32 0.0, %v904
    %906 = vmatprep.mubr.f32.mxu0 0.0
    %907 = vmatmul.mubr.f32.gmra.mxu0 %v456
    %v908 = vpop.f32.mrf.mxu0
    %v909 = vadd.f32 0.0, %v908
    %v910 = vpop.f32.mrf.mxu0
    %v911 = vadd.f32 0.0, %v910
    %912 = vmatprep.mubr.f32.mxu0 0.0
    %913 = vmatmul.mubr.f32.gmra.mxu0 %v459
    %v914 = vpop.f32.mrf.mxu0
    %v915 = vadd.f32 0.0, %v914
    %v916 = vpop.f32.mrf.mxu0
    %v917 = vadd.f32 0.0, %v916
    %918 = vmatprep.mubr.f32.mxu0 0.0
    %919 = vmatmul.mubr.f32.gmra.mxu0 %v462
    %v920 = vpop.f32.mrf.mxu0
    %v921 = vadd.f32 0.0, %v920
    %v922 = vpop.f32.mrf.mxu0
    %v923 = vadd.f32 0.0, %v922
    %924 = vmatprep.mubr.f32.mxu0 0.0
    %925 = vmatmul.mubr.f32.gmra.mxu0 %v465
    %v926 = vpop.f32.mrf.mxu0
    %v927 = vadd.f32 0.0, %v926
    %v928 = vpop.f32.mrf.mxu0
    %v929 = vadd.f32 0.0, %v928
    %930 = vdwg.mxu0
    %931 = vmatprep.subr.mxu0 0.0
    %932 = vmatpush1.msra.mxu0 0.0
    %933 = vmatprep.subr.mxu0 0.0
    %934 = vmatpush1.msra.mxu0 0.0
    %935 = vmatprep.subr.mxu0 0.0
    %936 = vmatpush1.msra.mxu0 0.0
    %937 = vmatprep.subr.mxu0 0.0
    %938 = vmatpush1.msra.mxu0 0.0
    %939 = vmatprep.subr.mxu0 0.0
    %940 = vmatpush1.msra.mxu0 0.0
    %941 = vmatprep.subr.mxu0 %v484
    %942 = vmatpush1.msra.mxu0 %v481
    %943 = vmatprep.subr.mxu0 %v379
    %944 = vmatpush1.msra.mxu0 %v378
    %945 = vmatprep.subr.mxu0 %v372
    %946 = vmatpush1.msra.mxu0 %v371
    %947 = vmatprep.subr.mxu0 %v365
    %948 = vmatpush1.msra.mxu0 %v364
    %949 = vmatprep.subr.mxu0 %v358
    %950 = vmatpush1.msra.mxu0 %v357
    %951 = vmatprep.subr.mxu0 %v351
    %952 = vmatpush1.msra.mxu0 %v350
    %953 = vmatprep.subr.mxu0 %v344
    %954 = vmatpush1.msra.mxu0 %v343
    %955 = vmatprep.subr.mxu0 %v337
    %956 = vmatpush1.msra.mxu0 %v336
    %957 = vmatprep.subr.mxu0 %v330
    %958 = vmatpush1.msra.mxu0 %v329
    %959 = vmatprep.subr.mxu0 %v323
    %960 = vmatpush1.msra.mxu0 %v322
    %961 = vmatprep.subr.mxu0 %v316
    %962 = vmatpush1.msra.mxu0 %v315
    %963 = vmatprep.subr.mxu0 0.0
    %964 = vmatpush2.msra.mxu0 0.0
    %965 = vmatprep.subr.mxu0 0.0
    %966 = vmatpush2.msra.mxu0 0.0
    %967 = vmatprep.subr.mxu0 0.0
    %968 = vmatpush2.msra.mxu0 0.0
    %969 = vmatprep.subr.mxu0 0.0
    %970 = vmatpush2.msra.mxu0 0.0
    %971 = vmatprep.subr.mxu0 0.0
    %972 = vmatpush2.msra.mxu0 0.0
    %973 = vmatprep.subr.mxu0 0.0
    %974 = vmatpush2.msra.mxu0 0.0
    %975 = vmatprep.subr.mxu0 0.0
    %976 = vmatpush2.msra.mxu0 0.0
    %977 = vmatprep.subr.mxu0 0.0
    %978 = vmatpush2.msra.mxu0 0.0
    %979 = vmatprep.subr.mxu0 0.0
    %980 = vmatpush2.msra.mxu0 0.0
    %981 = vmatprep.subr.mxu0 0.0
    %982 = vmatpush2.msra.mxu0 0.0
    %983 = vmatprep.subr.mxu0 0.0
    %984 = vmatpush2.msra.mxu0 0.0
    %985 = vmatprep.subr.mxu0 0.0
    %986 = vmatpush2.msra.mxu0 0.0
    %987 = vmatprep.subr.mxu0 0.0
    %988 = vmatpush2.msra.mxu0 0.0
    %989 = vmatprep.subr.mxu0 0.0
    %990 = vmatpush2.msra.mxu0 0.0
    %991 = vmatprep.subr.mxu0 0.0
    %992 = vmatpush2.msra.mxu0 0.0
    %993 = vmatprep.subr.mxu0 0.0
    %994 = vmatpush2.msra.mxu0 0.0
    %995 = vmatprep.mubr.f32.mxu0 0.0
    %996 = vmatmul.mubr.f32.gmra.mxu0 %v390
    %v997 = vpop.f32.mrf.mxu0
    %v998 = vadd.f32 0.0, %v997
    %v999 = vpop.f32.mrf.mxu0
    %v1000 = vadd.f32 0.0, %v999
    %1001 = vmatprep.mubr.f32.mxu0 0.0
    %1002 = vmatmul.mubr.f32.gmra.mxu0 %v393
    %v1003 = vpop.f32.mrf.mxu0
    %v1004 = vadd.f32 0.0, %v1003
    %v1005 = vpop.f32.mrf.mxu0
    %v1006 = vadd.f32 0.0, %v1005
    %1007 = vmatprep.mubr.f32.mxu0 0.0
    %1008 = vmatmul.mubr.f32.gmra.mxu0 %v396
    %v1009 = vpop.f32.mrf.mxu0
    %v1010 = vadd.f32 0.0, %v1009
    %v1011 = vpop.f32.mrf.mxu0
    %v1012 = vadd.f32 0.0, %v1011
    %1013 = vmatprep.mubr.f32.mxu0 0.0
    %1014 = vmatmul.mubr.f32.gmra.mxu0 %v399
    %v1015 = vpop.f32.mrf.mxu0
    %v1016 = vadd.f32 0.0, %v1015
    %v1017 = vpop.f32.mrf.mxu0
    %v1018 = vadd.f32 0.0, %v1017
    %1019 = vmatprep.mubr.f32.mxu0 0.0
    %1020 = vmatmul.mubr.f32.gmra.mxu0 %v402
    %v1021 = vpop.f32.mrf.mxu0
    %v1022 = vadd.f32 0.0, %v1021
    %v1023 = vpop.f32.mrf.mxu0
    %v1024 = vadd.f32 0.0, %v1023
    %1025 = vmatprep.mubr.f32.mxu0 0.0
    %1026 = vmatmul.mubr.f32.gmra.mxu0 %v405
    %v1027 = vpop.f32.mrf.mxu0
    %v1028 = vadd.f32 0.0, %v1027
    %v1029 = vpop.f32.mrf.mxu0
    %v1030 = vadd.f32 0.0, %v1029
    %1031 = vmatprep.mubr.f32.mxu0 0.0
    %1032 = vmatmul.mubr.f32.gmra.mxu0 %v408
    %v1033 = vpop.f32.mrf.mxu0
    %v1034 = vadd.f32 0.0, %v1033
    %v1035 = vpop.f32.mrf.mxu0
    %v1036 = vadd.f32 0.0, %v1035
    %1037 = vmatprep.mubr.f32.mxu0 0.0
    %1038 = vmatmul.mubr.f32.gmra.mxu0 %v411
    %v1039 = vpop.f32.mrf.mxu0
    %v1040 = vadd.f32 0.0, %v1039
    %v1041 = vpop.f32.mrf.mxu0
    %v1042 = vadd.f32 0.0, %v1041
    %1043 = vmatprep.mubr.f32.mxu0 0.0
    %1044 = vmatmul.mubr.f32.gmra.mxu0 %v414
    %v1045 = vpop.f32.mrf.mxu0
    %v1046 = vadd.f32 0.0, %v1045
    %v1047 = vpop.f32.mrf.mxu0
    %v1048 = vadd.f32 0.0, %v1047
    %1049 = vmatprep.mubr.f32.mxu0 0.0
    %1050 = vmatmul.mubr.f32.gmra.mxu0 %v417
    %v1051 = vpop.f32.mrf.mxu0
    %v1052 = vadd.f32 0.0, %v1051
    %v1053 = vpop.f32.mrf.mxu0
    %v1054 = vadd.f32 0.0, %v1053
    %1055 = vmatprep.mubr.f32.mxu0 0.0
    %1056 = vmatmul.mubr.f32.gmra.mxu0 %v420
    %v1057 = vpop.f32.mrf.mxu0
    %v1058 = vadd.f32 0.0, %v1057
    %v1059 = vpop.f32.mrf.mxu0
    %v1060 = vadd.f32 0.0, %v1059
    %1061 = vmatprep.mubr.f32.mxu0 0.0
    %1062 = vmatmul.mubr.f32.gmra.mxu0 %v423
    %v1063 = vpop.f32.mrf.mxu0
    %v1064 = vadd.f32 0.0, %v1063
    %v1065 = vpop.f32.mrf.mxu0
    %v1066 = vadd.f32 0.0, %v1065
    %1067 = vmatprep.mubr.f32.mxu0 0.0
    %1068 = vmatmul.mubr.f32.gmra.mxu0 %v426
    %v1069 = vpop.f32.mrf.mxu0
    %v1070 = vadd.f32 0.0, %v1069
    %v1071 = vpop.f32.mrf.mxu0
    %v1072 = vadd.f32 0.0, %v1071
    %1073 = vmatprep.mubr.f32.mxu0 0.0
    %1074 = vmatmul.mubr.f32.gmra.mxu0 %v429
    %v1075 = vpop.f32.mrf.mxu0
    %v1076 = vadd.f32 0.0, %v1075
    %v1077 = vpop.f32.mrf.mxu0
    %v1078 = vadd.f32 0.0, %v1077
    %1079 = vmatprep.mubr.f32.mxu0 0.0
    %1080 = vmatmul.mubr.f32.gmra.mxu0 %v432
    %v1081 = vpop.f32.mrf.mxu0
    %v1082 = vadd.f32 0.0, %v1081
    %v1083 = vpop.f32.mrf.mxu0
    %v1084 = vadd.f32 0.0, %v1083
    %1085 = vmatprep.mubr.f32.mxu0 0.0
    %1086 = vmatmul.mubr.f32.gmra.mxu0 %v435
    %v1087 = vpop.f32.mrf.mxu0
    %v1088 = vadd.f32 0.0, %v1087
    %v1089 = vpop.f32.mrf.mxu0
    %v1090 = vadd.f32 0.0, %v1089
    %1091 = vmatprep.mubr.f32.mxu0 0.0
    %1092 = vmatmul.mubr.f32.gmra.mxu0 %v438
    %v1093 = vpop.f32.mrf.mxu0
    %v1094 = vadd.f32 0.0, %v1093
    %v1095 = vpop.f32.mrf.mxu0
    %v1096 = vadd.f32 0.0, %v1095
    %1097 = vmatprep.mubr.f32.mxu0 0.0
    %1098 = vmatmul.mubr.f32.gmra.mxu0 %v441
    %v1099 = vpop.f32.mrf.mxu0
    %v1100 = vadd.f32 0.0, %v1099
    %v1101 = vpop.f32.mrf.mxu0
    %v1102 = vadd.f32 0.0, %v1101
    %1103 = vmatprep.mubr.f32.mxu0 0.0
    %1104 = vmatmul.mubr.f32.gmra.mxu0 %v444
    %v1105 = vpop.f32.mrf.mxu0
    %v1106 = vadd.f32 0.0, %v1105
    %v1107 = vpop.f32.mrf.mxu0
    %v1108 = vadd.f32 0.0, %v1107
    %1109 = vmatprep.mubr.f32.mxu0 0.0
    %1110 = vmatmul.mubr.f32.gmra.mxu0 %v447
    %v1111 = vpop.f32.mrf.mxu0
    %v1112 = vadd.f32 0.0, %v1111
    %v1113 = vpop.f32.mrf.mxu0
    %v1114 = vadd.f32 0.0, %v1113
    %1115 = vmatprep.mubr.f32.mxu0 0.0
    %1116 = vmatmul.mubr.f32.gmra.mxu0 %v450
    %v1117 = vpop.f32.mrf.mxu0
    %v1118 = vadd.f32 0.0, %v1117
    %v1119 = vpop.f32.mrf.mxu0
    %v1120 = vadd.f32 0.0, %v1119
    %1121 = vmatprep.mubr.f32.mxu0 0.0
    %1122 = vmatmul.mubr.f32.gmra.mxu0 %v453
    %v1123 = vpop.f32.mrf.mxu0
    %v1124 = vadd.f32 0.0, %v1123
    %v1125 = vpop.f32.mrf.mxu0
    %v1126 = vadd.f32 0.0, %v1125
    %1127 = vmatprep.mubr.f32.mxu0 0.0
    %1128 = vmatmul.mubr.f32.gmra.mxu0 %v456
    %v1129 = vpop.f32.mrf.mxu0
    %v1130 = vadd.f32 0.0, %v1129
    %v1131 = vpop.f32.mrf.mxu0
    %v1132 = vadd.f32 0.0, %v1131
    %1133 = vmatprep.mubr.f32.mxu0 0.0
    %1134 = vmatmul.mubr.f32.gmra.mxu0 %v459
    %v1135 = vpop.f32.mrf.mxu0
    %v1136 = vadd.f32 0.0, %v1135
    %v1137 = vpop.f32.mrf.mxu0
    %v1138 = vadd.f32 0.0, %v1137
    %1139 = vmatprep.mubr.f32.mxu0 0.0
    %1140 = vmatmul.mubr.f32.gmra.mxu0 %v462
    %v1141 = vpop.f32.mrf.mxu0
    %v1142 = vadd.f32 0.0, %v1141
    %v1143 = vpop.f32.mrf.mxu0
    %v1144 = vadd.f32 0.0, %v1143
    %1145 = vmatprep.mubr.f32.mxu0 0.0
    %1146 = vmatmul.mubr.f32.gmra.mxu0 %v465
    %v1147 = vpop.f32.mrf.mxu0
    %v1148 = vadd.f32 0.0, %v1147
    %v1149 = vpop.f32.mrf.mxu0
    %v1150 = vadd.f32 0.0, %v1149
    %1151 = vdwg.mxu0
    %1152 = vmatprep.subr.mxu0 0.0
    %1153 = vmatpush1.msra.mxu0 0.0
    %1154 = vmatprep.subr.mxu0 0.0
    %1155 = vmatpush1.msra.mxu0 0.0
    %1156 = vmatprep.subr.mxu0 0.0
    %1157 = vmatpush1.msra.mxu0 0.0
    %1158 = vmatprep.subr.mxu0 0.0
    %1159 = vmatpush1.msra.mxu0 0.0
    %1160 = vmatprep.subr.mxu0 0.0
    %1161 = vmatpush1.msra.mxu0 0.0
    %1162 = vmatprep.subr.mxu0 0.0
    %1163 = vmatpush1.msra.mxu0 %v487
    %1164 = vmatprep.subr.mxu0 0.0
    %1165 = vmatpush1.msra.mxu0 %v380
    %1166 = vmatprep.subr.mxu0 0.0
    %1167 = vmatpush1.msra.mxu0 %v373
    %1168 = vmatprep.subr.mxu0 0.0
    %1169 = vmatpush1.msra.mxu0 %v366
    %1170 = vmatprep.subr.mxu0 0.0
    %1171 = vmatpush1.msra.mxu0 %v359
    %1172 = vmatprep.subr.mxu0 0.0
    %1173 = vmatpush1.msra.mxu0 %v352
    %1174 = vmatprep.subr.mxu0 0.0
    %1175 = vmatpush1.msra.mxu0 %v345
    %1176 = vmatprep.subr.mxu0 0.0
    %1177 = vmatpush1.msra.mxu0 %v338
    %1178 = vmatprep.subr.mxu0 0.0
    %1179 = vmatpush1.msra.mxu0 %v331
    %1180 = vmatprep.subr.mxu0 0.0
    %1181 = vmatpush1.msra.mxu0 %v324
    %1182 = vmatprep.subr.mxu0 0.0
    %1183 = vmatpush1.msra.mxu0 %v317
    %1184 = vmatprep.subr.mxu0 0.0
    %1185 = vmatpush2.msra.mxu0 0.0
    %1186 = vmatprep.subr.mxu0 0.0
    %1187 = vmatpush2.msra.mxu0 0.0
    %1188 = vmatprep.subr.mxu0 0.0
    %1189 = vmatpush2.msra.mxu0 0.0
    %1190 = vmatprep.subr.mxu0 0.0
    %1191 = vmatpush2.msra.mxu0 0.0
    %1192 = vmatprep.subr.mxu0 0.0
    %1193 = vmatpush2.msra.mxu0 0.0
    %1194 = vmatprep.subr.mxu0 0.0
    %1195 = vmatpush2.msra.mxu0 0.0
    %1196 = vmatprep.subr.mxu0 0.0
    %1197 = vmatpush2.msra.mxu0 0.0
    %1198 = vmatprep.subr.mxu0 0.0
    %1199 = vmatpush2.msra.mxu0 0.0
    %1200 = vmatprep.subr.mxu0 0.0
    %1201 = vmatpush2.msra.mxu0 0.0
    %1202 = vmatprep.subr.mxu0 0.0
    %1203 = vmatpush2.msra.mxu0 0.0
    %1204 = vmatprep.subr.mxu0 0.0
    %1205 = vmatpush2.msra.mxu0 0.0
    %1206 = vmatprep.subr.mxu0 0.0
    %1207 = vmatpush2.msra.mxu0 0.0
    %1208 = vmatprep.subr.mxu0 0.0
    %1209 = vmatpush2.msra.mxu0 0.0
    %1210 = vmatprep.subr.mxu0 0.0
    %1211 = vmatpush2.msra.mxu0 0.0
    %1212 = vmatprep.subr.mxu0 0.0
    %1213 = vmatpush2.msra.mxu0 0.0
    %1214 = vmatprep.subr.mxu0 0.0
    %1215 = vmatpush2.msra.mxu0 0.0
    %1216 = vmatprep.mubr.f32.mxu0 0.0
    %1217 = vmatmul.mubr.f32.gmra.mxu0 %v390
    %v1218 = vpop.f32.mrf.mxu0
    %v1219 = vadd.f32 0.0, %v1218
    %v1220 = vpop.f32.mrf.mxu0
    %1221 = vmatprep.mubr.f32.mxu0 0.0
    %1222 = vmatmul.mubr.f32.gmra.mxu0 %v393
    %v1223 = vpop.f32.mrf.mxu0
    %v1224 = vadd.f32 0.0, %v1223
    %v1225 = vpop.f32.mrf.mxu0
    %1226 = vmatprep.mubr.f32.mxu0 0.0
    %1227 = vmatmul.mubr.f32.gmra.mxu0 %v396
    %v1228 = vpop.f32.mrf.mxu0
    %v1229 = vadd.f32 0.0, %v1228
    %v1230 = vpop.f32.mrf.mxu0
    %1231 = vmatprep.mubr.f32.mxu0 0.0
    %1232 = vmatmul.mubr.f32.gmra.mxu0 %v399
    %v1233 = vpop.f32.mrf.mxu0
    %v1234 = vadd.f32 0.0, %v1233
    %v1235 = vpop.f32.mrf.mxu0
    %1236 = vmatprep.mubr.f32.mxu0 0.0
    %1237 = vmatmul.mubr.f32.gmra.mxu0 %v402
    %v1238 = vpop.f32.mrf.mxu0
    %v1239 = vadd.f32 0.0, %v1238
    %v1240 = vpop.f32.mrf.mxu0
    %1241 = vmatprep.mubr.f32.mxu0 0.0
    %1242 = vmatmul.mubr.f32.gmra.mxu0 %v405
    %v1243 = vpop.f32.mrf.mxu0
    %v1244 = vadd.f32 0.0, %v1243
    %v1245 = vpop.f32.mrf.mxu0
    %1246 = vmatprep.mubr.f32.mxu0 0.0
    %1247 = vmatmul.mubr.f32.gmra.mxu0 %v408
    %v1248 = vpop.f32.mrf.mxu0
    %v1249 = vadd.f32 0.0, %v1248
    %v1250 = vpop.f32.mrf.mxu0
    %1251 = vmatprep.mubr.f32.mxu0 0.0
    %1252 = vmatmul.mubr.f32.gmra.mxu0 %v411
    %v1253 = vpop.f32.mrf.mxu0
    %v1254 = vadd.f32 0.0, %v1253
    %v1255 = vpop.f32.mrf.mxu0
    %1256 = vmatprep.mubr.f32.mxu0 0.0
    %1257 = vmatmul.mubr.f32.gmra.mxu0 %v414
    %v1258 = vpop.f32.mrf.mxu0
    %v1259 = vadd.f32 0.0, %v1258
    %v1260 = vpop.f32.mrf.mxu0
    %1261 = vmatprep.mubr.f32.mxu0 0.0
    %1262 = vmatmul.mubr.f32.gmra.mxu0 %v417
    %v1263 = vpop.f32.mrf.mxu0
    %v1264 = vadd.f32 0.0, %v1263
    %v1265 = vpop.f32.mrf.mxu0
    %1266 = vmatprep.mubr.f32.mxu0 0.0
    %1267 = vmatmul.mubr.f32.gmra.mxu0 %v420
    %v1268 = vpop.f32.mrf.mxu0
    %v1269 = vadd.f32 0.0, %v1268
    %v1270 = vpop.f32.mrf.mxu0
    %1271 = vmatprep.mubr.f32.mxu0 0.0
    %1272 = vmatmul.mubr.f32.gmra.mxu0 %v423
    %v1273 = vpop.f32.mrf.mxu0
    %v1274 = vadd.f32 0.0, %v1273
    %v1275 = vpop.f32.mrf.mxu0
    %1276 = vmatprep.mubr.f32.mxu0 0.0
    %1277 = vmatmul.mubr.f32.gmra.mxu0 %v426
    %v1278 = vpop.f32.mrf.mxu0
    %v1279 = vadd.f32 0.0, %v1278
    %v1280 = vpop.f32.mrf.mxu0
    %1281 = vmatprep.mubr.f32.mxu0 0.0
    %1282 = vmatmul.mubr.f32.gmra.mxu0 %v429
    %v1283 = vpop.f32.mrf.mxu0
    %v1284 = vadd.f32 0.0, %v1283
    %v1285 = vpop.f32.mrf.mxu0
    %1286 = vmatprep.mubr.f32.mxu0 0.0
    %1287 = vmatmul.mubr.f32.gmra.mxu0 %v432
    %v1288 = vpop.f32.mrf.mxu0
    %v1289 = vadd.f32 0.0, %v1288
    %v1290 = vpop.f32.mrf.mxu0
    %1291 = vmatprep.mubr.f32.mxu0 0.0
    %1292 = vmatmul.mubr.f32.gmra.mxu0 %v435
    %v1293 = vpop.f32.mrf.mxu0
    %v1294 = vadd.f32 0.0, %v1293
    %v1295 = vpop.f32.mrf.mxu0
    %1296 = vmatprep.mubr.f32.mxu0 0.0
    %1297 = vmatmul.mubr.f32.gmra.mxu0 %v438
    %v1298 = vpop.f32.mrf.mxu0
    %v1299 = vadd.f32 0.0, %v1298
    %v1300 = vpop.f32.mrf.mxu0
    %1301 = vmatprep.mubr.f32.mxu0 0.0
    %1302 = vmatmul.mubr.f32.gmra.mxu0 %v441
    %v1303 = vpop.f32.mrf.mxu0
    %v1304 = vadd.f32 0.0, %v1303
    %v1305 = vpop.f32.mrf.mxu0
    %1306 = vmatprep.mubr.f32.mxu0 0.0
    %1307 = vmatmul.mubr.f32.gmra.mxu0 %v444
    %v1308 = vpop.f32.mrf.mxu0
    %v1309 = vadd.f32 0.0, %v1308
    %v1310 = vpop.f32.mrf.mxu0
    %1311 = vmatprep.mubr.f32.mxu0 0.0
    %1312 = vmatmul.mubr.f32.gmra.mxu0 %v447
    %v1313 = vpop.f32.mrf.mxu0
    %v1314 = vadd.f32 0.0, %v1313
    %v1315 = vpop.f32.mrf.mxu0
    %1316 = vmatprep.mubr.f32.mxu0 0.0
    %1317 = vmatmul.mubr.f32.gmra.mxu0 %v450
    %v1318 = vpop.f32.mrf.mxu0
    %v1319 = vadd.f32 0.0, %v1318
    %v1320 = vpop.f32.mrf.mxu0
    %1321 = vmatprep.mubr.f32.mxu0 0.0
    %1322 = vmatmul.mubr.f32.gmra.mxu0 %v453
    %v1323 = vpop.f32.mrf.mxu0
    %v1324 = vadd.f32 0.0, %v1323
    %v1325 = vpop.f32.mrf.mxu0
    %1326 = vmatprep.mubr.f32.mxu0 0.0
    %1327 = vmatmul.mubr.f32.gmra.mxu0 %v456
    %v1328 = vpop.f32.mrf.mxu0
    %v1329 = vadd.f32 0.0, %v1328
    %v1330 = vpop.f32.mrf.mxu0
    %1331 = vmatprep.mubr.f32.mxu0 0.0
    %1332 = vmatmul.mubr.f32.gmra.mxu0 %v459
    %v1333 = vpop.f32.mrf.mxu0
    %v1334 = vadd.f32 0.0, %v1333
    %v1335 = vpop.f32.mrf.mxu0
    %1336 = vmatprep.mubr.f32.mxu0 0.0
    %1337 = vmatmul.mubr.f32.gmra.mxu0 %v462
    %v1338 = vpop.f32.mrf.mxu0
    %v1339 = vadd.f32 0.0, %v1338
    %v1340 = vpop.f32.mrf.mxu0
    %1341 = vmatprep.mubr.f32.mxu0 0.0
    %1342 = vmatmul.mubr.f32.gmra.mxu0 %v465
    %v1343 = vpop.f32.mrf.mxu0
    %v1344 = vadd.f32 0.0, %v1343
    %v1345 = vpop.f32.mrf.mxu0
    %1346 = vdwg.mxu0
    %v1347 = vmax.f32 %v556, %v562
    %v1348 = vmax.f32 %v558, %v564
    %v1349 = vmax.f32 %v777, %v783
    %v1350 = vmax.f32 %v779, %v785
    %v1351 = vmax.f32 %v998, %v1004
    %v1352 = vmax.f32 %v1000, %v1006
    %v1353 = vmax.f32 %v1219, %v1224
    %v1354 = vmax.f32 %v568, %v574
    %v1355 = vmax.f32 %v570, %v576
    %v1356 = vmax.f32 %v789, %v795
    %v1357 = vmax.f32 %v791, %v797
    %v1358 = vmax.f32 %v1010, %v1016
    %v1359 = vmax.f32 %v1012, %v1018
    %v1360 = vmax.f32 %v1229, %v1234
    %v1361 = vmax.f32 %v580, %v586
    %v1362 = vmax.f32 %v582, %v588
    %v1363 = vmax.f32 %v801, %v807
    %v1364 = vmax.f32 %v803, %v809
    %v1365 = vmax.f32 %v1022, %v1028
    %v1366 = vmax.f32 %v1024, %v1030
    %v1367 = vmax.f32 %v1239, %v1244
    %v1368 = vmax.f32 %v592, %v598
    %v1369 = vmax.f32 %v594, %v600
    %v1370 = vmax.f32 %v813, %v819
    %v1371 = vmax.f32 %v815, %v821
    %v1372 = vmax.f32 %v1034, %v1040
    %v1373 = vmax.f32 %v1036, %v1042
    %v1374 = vmax.f32 %v1249, %v1254
    %v1375 = vmax.f32 %v604, %v610
    %v1376 = vmax.f32 %v606, %v612
    %v1377 = vmax.f32 %v825, %v831
    %v1378 = vmax.f32 %v827, %v833
    %v1379 = vmax.f32 %v1046, %v1052
    %v1380 = vmax.f32 %v1048, %v1054
    %v1381 = vmax.f32 %v1259, %v1264
    %v1382 = vmax.f32 %v616, %v622
    %v1383 = vmax.f32 %v618, %v624
    %v1384 = vmax.f32 %v837, %v843
    %v1385 = vmax.f32 %v839, %v845
    %v1386 = vmax.f32 %v1058, %v1064
    %v1387 = vmax.f32 %v1060, %v1066
    %v1388 = vmax.f32 %v1269, %v1274
    %v1389 = vmax.f32 %v628, %v634
    %v1390 = vmax.f32 %v630, %v636
    %v1391 = vmax.f32 %v849, %v855
    %v1392 = vmax.f32 %v851, %v857
    %v1393 = vmax.f32 %v1070, %v1076
    %v1394 = vmax.f32 %v1072, %v1078
    %v1395 = vmax.f32 %v1279, %v1284
    %v1396 = vmax.f32 %v640, %v646
    %v1397 = vmax.f32 %v642, %v648
    %v1398 = vmax.f32 %v861, %v867
    %v1399 = vmax.f32 %v863, %v869
    %v1400 = vmax.f32 %v1082, %v1088
    %v1401 = vmax.f32 %v1084, %v1090
    %v1402 = vmax.f32 %v1289, %v1294
    %v1403 = vmax.f32 %v652, %v658
    %v1404 = vmax.f32 %v654, %v660
    %v1405 = vmax.f32 %v873, %v879
    %v1406 = vmax.f32 %v875, %v881
    %v1407 = vmax.f32 %v1094, %v1100
    %v1408 = vmax.f32 %v1096, %v1102
    %v1409 = vmax.f32 %v1299, %v1304
    %v1410 = vmax.f32 %v664, %v670
    %v1411 = vmax.f32 %v666, %v672
    %v1412 = vmax.f32 %v885, %v891
    %v1413 = vmax.f32 %v887, %v893
    %v1414 = vmax.f32 %v1106, %v1112
    %v1415 = vmax.f32 %v1108, %v1114
    %v1416 = vmax.f32 %v1309, %v1314
    %v1417 = vmax.f32 %v676, %v682
    %v1418 = vmax.f32 %v678, %v684
    %v1419 = vmax.f32 %v897, %v903
    %v1420 = vmax.f32 %v899, %v905
    %v1421 = vmax.f32 %v1118, %v1124
    %v1422 = vmax.f32 %v1120, %v1126
    %v1423 = vmax.f32 %v1319, %v1324
    %v1424 = vmax.f32 %v688, %v694
    %v1425 = vmax.f32 %v690, %v696
    %v1426 = vmax.f32 %v909, %v915
    %v1427 = vmax.f32 %v911, %v917
    %v1428 = vmax.f32 %v1130, %v1136
    %v1429 = vmax.f32 %v1132, %v1138
    %v1430 = vmax.f32 %v1329, %v1334
    %v1431 = vmax.f32 %v700, %v706
    %v1432 = vmax.f32 %v702, %v708
    %v1433 = vmax.f32 %v921, %v927
    %v1434 = vmax.f32 %v923, %v929
    %v1435 = vmax.f32 %v1142, %v1148
    %v1436 = vmax.f32 %v1144, %v1150
    %v1437 = vmax.f32 %v1339, %v1344
    %v1438 = vld [vmem:[%s2] sm:$0x1]
    %1452 = vrot.lane.b32.xlu0 %v1347, 96
    %v1453 = vpop.permute.xlu0 %1452
    %1454 = vrot.lane.b32.xlu0 %v1354, 96
    %v1455 = vpop.permute.xlu0 %1454
    %1456 = vrot.lane.b32.xlu0 %v1361, 96
    %v1457 = vpop.permute.xlu0 %1456
    %1458 = vrot.lane.b32.xlu0 %v1368, 96
    %v1459 = vpop.permute.xlu0 %1458
    %1460 = vrot.lane.b32.xlu0 %v1375, 96
    %v1461 = vpop.permute.xlu0 %1460
    %1462 = vrot.lane.b32.xlu0 %v1382, 96
    %v1463 = vpop.permute.xlu0 %1462
    %1464 = vrot.lane.b32.xlu0 %v1389, 96
    %v1465 = vpop.permute.xlu0 %1464
    %1466 = vrot.lane.b32.xlu0 %v1396, 96
    %v1467 = vpop.permute.xlu0 %1466
    %1468 = vrot.lane.b32.xlu0 %v1403, 96
    %v1469 = vpop.permute.xlu0 %1468
    %1470 = vrot.lane.b32.xlu0 %v1410, 96
    %v1471 = vpop.permute.xlu0 %1470
    %1472 = vrot.lane.b32.xlu0 %v1417, 96
    %v1473 = vpop.permute.xlu0 %1472
    %1474 = vrot.lane.b32.xlu0 %v1424, 96
    %v1475 = vpop.permute.xlu0 %1474
    %1476 = vrot.lane.b32.xlu0 %v1431, 96
    %v1477 = vpop.permute.xlu0 %1476
    %v1491 = vmax.f32 %v1347, %v1453
    %v1492 = vmax.f32 %v1354, %v1455
    %v1493 = vmax.f32 %v1361, %v1457
    %v1494 = vmax.f32 %v1368, %v1459
    %v1495 = vmax.f32 %v1375, %v1461
    %v1496 = vmax.f32 %v1382, %v1463
    %v1497 = vmax.f32 %v1389, %v1465
    %v1498 = vmax.f32 %v1396, %v1467
    %v1499 = vmax.f32 %v1403, %v1469
    %v1500 = vmax.f32 %v1410, %v1471
    %v1501 = vmax.f32 %v1417, %v1473
    %v1502 = vmax.f32 %v1424, %v1475
    %v1503 = vmax.f32 %v1431, %v1477
    %v1505 = vlaneseq
    %v1506 = vshrl.u32 %v1505, 7
    %v1507 = vsub.s32 0, %v1506
    %v1508 = vrot.slane %v1438, %v1507
    %v1510 = vadd.f32 %v1491, %v1508
    %v1511 = vadd.f32 %v1492, %v1508
    %v1512 = vadd.f32 %v1493, %v1508
    %v1513 = vadd.f32 %v1494, %v1508
    %v1514 = vadd.f32 %v1495, %v1508
    %v1515 = vadd.f32 %v1496, %v1508
    %v1516 = vadd.f32 %v1497, %v1508
    %v1517 = vadd.f32 %v1498, %v1508
    %v1518 = vadd.f32 %v1499, %v1508
    %v1519 = vadd.f32 %v1500, %v1508
    %v1520 = vadd.f32 %v1501, %v1508
    %v1521 = vadd.f32 %v1502, %v1508
    %v1522 = vadd.f32 %v1503, %v1508
    %v1523 = vmax.f32 %v1510, 0.0
    %v1524 = vmax.f32 %v1511, 0.0
    %v1525 = vmax.f32 %v1512, 0.0
    %v1526 = vmax.f32 %v1513, 0.0
    %v1527 = vmax.f32 %v1514, 0.0
    %v1528 = vmax.f32 %v1515, 0.0
    %v1529 = vmax.f32 %v1516, 0.0
    %v1530 = vmax.f32 %v1517, 0.0
    %v1531 = vmax.f32 %v1518, 0.0
    %v1532 = vmax.f32 %v1519, 0.0
    %v1533 = vmax.f32 %v1520, 0.0
    %v1534 = vmax.f32 %v1521, 0.0
    %v1535 = vmax.f32 %v1522, 0.0
    %1536 = vrot.lane.b32.xlu0 %v1508, 64
    %v1537 = vpop.permute.xlu0 %1536
    %v1539 = vadd.f32 %v1491, %v1537
    %v1540 = vadd.f32 %v1492, %v1537
    %v1541 = vadd.f32 %v1493, %v1537
    %v1542 = vadd.f32 %v1494, %v1537
    %v1543 = vadd.f32 %v1495, %v1537
    %v1544 = vadd.f32 %v1496, %v1537
    %v1545 = vadd.f32 %v1497, %v1537
    %v1546 = vadd.f32 %v1498, %v1537
    %v1547 = vadd.f32 %v1499, %v1537
    %v1548 = vadd.f32 %v1500, %v1537
    %v1549 = vadd.f32 %v1501, %v1537
    %v1550 = vadd.f32 %v1502, %v1537
    %v1551 = vadd.f32 %v1503, %v1537
    %v1552 = vmax.f32 %v1539, 0.0
    %v1553 = vmax.f32 %v1540, 0.0
    %v1554 = vmax.f32 %v1541, 0.0
    %v1555 = vmax.f32 %v1542, 0.0
    %v1556 = vmax.f32 %v1543, 0.0
    %v1557 = vmax.f32 %v1544, 0.0
    %v1558 = vmax.f32 %v1545, 0.0
    %v1559 = vmax.f32 %v1546, 0.0
    %v1560 = vmax.f32 %v1547, 0.0
    %v1561 = vmax.f32 %v1548, 0.0
    %v1562 = vmax.f32 %v1549, 0.0
    %v1563 = vmax.f32 %v1550, 0.0
    %v1564 = vmax.f32 %v1551, 0.0
    %1578 = vrot.lane.b32.xlu0 %v1348, 96
    %v1579 = vpop.permute.xlu0 %1578
    %1580 = vrot.lane.b32.xlu0 %v1355, 96
    %v1581 = vpop.permute.xlu0 %1580
    %1582 = vrot.lane.b32.xlu0 %v1362, 96
    %v1583 = vpop.permute.xlu0 %1582
    %1584 = vrot.lane.b32.xlu0 %v1369, 96
    %v1585 = vpop.permute.xlu0 %1584
    %1586 = vrot.lane.b32.xlu0 %v1376, 96
    %v1587 = vpop.permute.xlu0 %1586
    %1588 = vrot.lane.b32.xlu0 %v1383, 96
    %v1589 = vpop.permute.xlu0 %1588
    %1590 = vrot.lane.b32.xlu0 %v1390, 96
    %v1591 = vpop.permute.xlu0 %1590
    %1592 = vrot.lane.b32.xlu0 %v1397, 96
    %v1593 = vpop.permute.xlu0 %1592
    %1594 = vrot.lane.b32.xlu0 %v1404, 96
    %v1595 = vpop.permute.xlu0 %1594
    %1596 = vrot.lane.b32.xlu0 %v1411, 96
    %v1597 = vpop.permute.xlu0 %1596
    %1598 = vrot.lane.b32.xlu0 %v1418, 96
    %v1599 = vpop.permute.xlu0 %1598
    %1600 = vrot.lane.b32.xlu0 %v1425, 96
    %v1601 = vpop.permute.xlu0 %1600
    %1602 = vrot.lane.b32.xlu0 %v1432, 96
    %v1603 = vpop.permute.xlu0 %1602
    %v1617 = vmax.f32 %v1348, %v1579
    %v1618 = vmax.f32 %v1355, %v1581
    %v1619 = vmax.f32 %v1362, %v1583
    %v1620 = vmax.f32 %v1369, %v1585
    %v1621 = vmax.f32 %v1376, %v1587
    %v1622 = vmax.f32 %v1383, %v1589
    %v1623 = vmax.f32 %v1390, %v1591
    %v1624 = vmax.f32 %v1397, %v1593
    %v1625 = vmax.f32 %v1404, %v1595
    %v1626 = vmax.f32 %v1411, %v1597
    %v1627 = vmax.f32 %v1418, %v1599
    %v1628 = vmax.f32 %v1425, %v1601
    %v1629 = vmax.f32 %v1432, %v1603
    %v1630 = vadd.f32 %v1617, %v1508
    %v1631 = vadd.f32 %v1618, %v1508
    %v1632 = vadd.f32 %v1619, %v1508
    %v1633 = vadd.f32 %v1620, %v1508
    %v1634 = vadd.f32 %v1621, %v1508
    %v1635 = vadd.f32 %v1622, %v1508
    %v1636 = vadd.f32 %v1623, %v1508
    %v1637 = vadd.f32 %v1624, %v1508
    %v1638 = vadd.f32 %v1625, %v1508
    %v1639 = vadd.f32 %v1626, %v1508
    %v1640 = vadd.f32 %v1627, %v1508
    %v1641 = vadd.f32 %v1628, %v1508
    %v1642 = vadd.f32 %v1629, %v1508
    %v1643 = vmax.f32 %v1630, 0.0
    %v1644 = vmax.f32 %v1631, 0.0
    %v1645 = vmax.f32 %v1632, 0.0
    %v1646 = vmax.f32 %v1633, 0.0
    %v1647 = vmax.f32 %v1634, 0.0
    %v1648 = vmax.f32 %v1635, 0.0
    %v1649 = vmax.f32 %v1636, 0.0
    %v1650 = vmax.f32 %v1637, 0.0
    %v1651 = vmax.f32 %v1638, 0.0
    %v1652 = vmax.f32 %v1639, 0.0
    %v1653 = vmax.f32 %v1640, 0.0
    %v1654 = vmax.f32 %v1641, 0.0
    %v1655 = vmax.f32 %v1642, 0.0
    %v1656 = vadd.f32 %v1617, %v1537
    %v1657 = vadd.f32 %v1618, %v1537
    %v1658 = vadd.f32 %v1619, %v1537
    %v1659 = vadd.f32 %v1620, %v1537
    %v1660 = vadd.f32 %v1621, %v1537
    %v1661 = vadd.f32 %v1622, %v1537
    %v1662 = vadd.f32 %v1623, %v1537
    %v1663 = vadd.f32 %v1624, %v1537
    %v1664 = vadd.f32 %v1625, %v1537
    %v1665 = vadd.f32 %v1626, %v1537
    %v1666 = vadd.f32 %v1627, %v1537
    %v1667 = vadd.f32 %v1628, %v1537
    %v1668 = vadd.f32 %v1629, %v1537
    %v1669 = vmax.f32 %v1656, 0.0
    %v1670 = vmax.f32 %v1657, 0.0
    %v1671 = vmax.f32 %v1658, 0.0
    %v1672 = vmax.f32 %v1659, 0.0
    %v1673 = vmax.f32 %v1660, 0.0
    %v1674 = vmax.f32 %v1661, 0.0
    %v1675 = vmax.f32 %v1662, 0.0
    %v1676 = vmax.f32 %v1663, 0.0
    %v1677 = vmax.f32 %v1664, 0.0
    %v1678 = vmax.f32 %v1665, 0.0
    %v1679 = vmax.f32 %v1666, 0.0
    %v1680 = vmax.f32 %v1667, 0.0
    %v1681 = vmax.f32 %v1668, 0.0
    %1695 = vrot.lane.b32.xlu0 %v1349, 96
    %v1696 = vpop.permute.xlu0 %1695
    %1697 = vrot.lane.b32.xlu0 %v1356, 96
    %v1698 = vpop.permute.xlu0 %1697
    %1699 = vrot.lane.b32.xlu0 %v1363, 96
    %v1700 = vpop.permute.xlu0 %1699
    %1701 = vrot.lane.b32.xlu0 %v1370, 96
    %v1702 = vpop.permute.xlu0 %1701
    %1703 = vrot.lane.b32.xlu0 %v1377, 96
    %v1704 = vpop.permute.xlu0 %1703
    %1705 = vrot.lane.b32.xlu0 %v1384, 96
    %v1706 = vpop.permute.xlu0 %1705
    %1707 = vrot.lane.b32.xlu0 %v1391, 96
    %v1708 = vpop.permute.xlu0 %1707
    %1709 = vrot.lane.b32.xlu0 %v1398, 96
    %v1710 = vpop.permute.xlu0 %1709
    %1711 = vrot.lane.b32.xlu0 %v1405, 96
    %v1712 = vpop.permute.xlu0 %1711
    %1713 = vrot.lane.b32.xlu0 %v1412, 96
    %v1714 = vpop.permute.xlu0 %1713
    %1715 = vrot.lane.b32.xlu0 %v1419, 96
    %v1716 = vpop.permute.xlu0 %1715
    %1717 = vrot.lane.b32.xlu0 %v1426, 96
    %v1718 = vpop.permute.xlu0 %1717
    %1719 = vrot.lane.b32.xlu0 %v1433, 96
    %v1720 = vpop.permute.xlu0 %1719
    %v1734 = vmax.f32 %v1349, %v1696
    %v1735 = vmax.f32 %v1356, %v1698
    %v1736 = vmax.f32 %v1363, %v1700
    %v1737 = vmax.f32 %v1370, %v1702
    %v1738 = vmax.f32 %v1377, %v1704
    %v1739 = vmax.f32 %v1384, %v1706
    %v1740 = vmax.f32 %v1391, %v1708
    %v1741 = vmax.f32 %v1398, %v1710
    %v1742 = vmax.f32 %v1405, %v1712
    %v1743 = vmax.f32 %v1412, %v1714
    %v1744 = vmax.f32 %v1419, %v1716
    %v1745 = vmax.f32 %v1426, %v1718
    %v1746 = vmax.f32 %v1433, %v1720
    %v1747 = vadd.f32 %v1734, %v1508
    %v1748 = vadd.f32 %v1735, %v1508
    %v1749 = vadd.f32 %v1736, %v1508
    %v1750 = vadd.f32 %v1737, %v1508
    %v1751 = vadd.f32 %v1738, %v1508
    %v1752 = vadd.f32 %v1739, %v1508
    %v1753 = vadd.f32 %v1740, %v1508
    %v1754 = vadd.f32 %v1741, %v1508
    %v1755 = vadd.f32 %v1742, %v1508
    %v1756 = vadd.f32 %v1743, %v1508
    %v1757 = vadd.f32 %v1744, %v1508
    %v1758 = vadd.f32 %v1745, %v1508
    %v1759 = vadd.f32 %v1746, %v1508
    %v1760 = vmax.f32 %v1747, 0.0
    %v1761 = vmax.f32 %v1748, 0.0
    %v1762 = vmax.f32 %v1749, 0.0
    %v1763 = vmax.f32 %v1750, 0.0
    %v1764 = vmax.f32 %v1751, 0.0
    %v1765 = vmax.f32 %v1752, 0.0
    %v1766 = vmax.f32 %v1753, 0.0
    %v1767 = vmax.f32 %v1754, 0.0
    %v1768 = vmax.f32 %v1755, 0.0
    %v1769 = vmax.f32 %v1756, 0.0
    %v1770 = vmax.f32 %v1757, 0.0
    %v1771 = vmax.f32 %v1758, 0.0
    %v1772 = vmax.f32 %v1759, 0.0
    %v1773 = vadd.f32 %v1734, %v1537
    %v1774 = vadd.f32 %v1735, %v1537
    %v1775 = vadd.f32 %v1736, %v1537
    %v1776 = vadd.f32 %v1737, %v1537
    %v1777 = vadd.f32 %v1738, %v1537
    %v1778 = vadd.f32 %v1739, %v1537
    %v1779 = vadd.f32 %v1740, %v1537
    %v1780 = vadd.f32 %v1741, %v1537
    %v1781 = vadd.f32 %v1742, %v1537
    %v1782 = vadd.f32 %v1743, %v1537
    %v1783 = vadd.f32 %v1744, %v1537
    %v1784 = vadd.f32 %v1745, %v1537
    %v1785 = vadd.f32 %v1746, %v1537
    %v1786 = vmax.f32 %v1773, 0.0
    %v1787 = vmax.f32 %v1774, 0.0
    %v1788 = vmax.f32 %v1775, 0.0
    %v1789 = vmax.f32 %v1776, 0.0
    %v1790 = vmax.f32 %v1777, 0.0
    %v1791 = vmax.f32 %v1778, 0.0
    %v1792 = vmax.f32 %v1779, 0.0
    %v1793 = vmax.f32 %v1780, 0.0
    %v1794 = vmax.f32 %v1781, 0.0
    %v1795 = vmax.f32 %v1782, 0.0
    %v1796 = vmax.f32 %v1783, 0.0
    %v1797 = vmax.f32 %v1784, 0.0
    %v1798 = vmax.f32 %v1785, 0.0
    %1812 = vrot.lane.b32.xlu0 %v1350, 96
    %v1813 = vpop.permute.xlu0 %1812
    %1814 = vrot.lane.b32.xlu0 %v1357, 96
    %v1815 = vpop.permute.xlu0 %1814
    %1816 = vrot.lane.b32.xlu0 %v1364, 96
    %v1817 = vpop.permute.xlu0 %1816
    %1818 = vrot.lane.b32.xlu0 %v1371, 96
    %v1819 = vpop.permute.xlu0 %1818
    %1820 = vrot.lane.b32.xlu0 %v1378, 96
    %v1821 = vpop.permute.xlu0 %1820
    %1822 = vrot.lane.b32.xlu0 %v1385, 96
    %v1823 = vpop.permute.xlu0 %1822
    %1824 = vrot.lane.b32.xlu0 %v1392, 96
    %v1825 = vpop.permute.xlu0 %1824
    %1826 = vrot.lane.b32.xlu0 %v1399, 96
    %v1827 = vpop.permute.xlu0 %1826
    %1828 = vrot.lane.b32.xlu0 %v1406, 96
    %v1829 = vpop.permute.xlu0 %1828
    %1830 = vrot.lane.b32.xlu0 %v1413, 96
    %v1831 = vpop.permute.xlu0 %1830
    %1832 = vrot.lane.b32.xlu0 %v1420, 96
    %v1833 = vpop.permute.xlu0 %1832
    %1834 = vrot.lane.b32.xlu0 %v1427, 96
    %v1835 = vpop.permute.xlu0 %1834
    %1836 = vrot.lane.b32.xlu0 %v1434, 96
    %v1837 = vpop.permute.xlu0 %1836
    %v1851 = vmax.f32 %v1350, %v1813
    %v1852 = vmax.f32 %v1357, %v1815
    %v1853 = vmax.f32 %v1364, %v1817
    %v1854 = vmax.f32 %v1371, %v1819
    %v1855 = vmax.f32 %v1378, %v1821
    %v1856 = vmax.f32 %v1385, %v1823
    %v1857 = vmax.f32 %v1392, %v1825
    %v1858 = vmax.f32 %v1399, %v1827
    %v1859 = vmax.f32 %v1406, %v1829
    %v1860 = vmax.f32 %v1413, %v1831
    %v1861 = vmax.f32 %v1420, %v1833
    %v1862 = vmax.f32 %v1427, %v1835
    %v1863 = vmax.f32 %v1434, %v1837
    %v1864 = vadd.f32 %v1851, %v1508
    %v1865 = vadd.f32 %v1852, %v1508
    %v1866 = vadd.f32 %v1853, %v1508
    %v1867 = vadd.f32 %v1854, %v1508
    %v1868 = vadd.f32 %v1855, %v1508
    %v1869 = vadd.f32 %v1856, %v1508
    %v1870 = vadd.f32 %v1857, %v1508
    %v1871 = vadd.f32 %v1858, %v1508
    %v1872 = vadd.f32 %v1859, %v1508
    %v1873 = vadd.f32 %v1860, %v1508
    %v1874 = vadd.f32 %v1861, %v1508
    %v1875 = vadd.f32 %v1862, %v1508
    %v1876 = vadd.f32 %v1863, %v1508
    %v1877 = vmax.f32 %v1864, 0.0
    %v1878 = vmax.f32 %v1865, 0.0
    %v1879 = vmax.f32 %v1866, 0.0
    %v1880 = vmax.f32 %v1867, 0.0
    %v1881 = vmax.f32 %v1868, 0.0
    %v1882 = vmax.f32 %v1869, 0.0
    %v1883 = vmax.f32 %v1870, 0.0
    %v1884 = vmax.f32 %v1871, 0.0
    %v1885 = vmax.f32 %v1872, 0.0
    %v1886 = vmax.f32 %v1873, 0.0
    %v1887 = vmax.f32 %v1874, 0.0
    %v1888 = vmax.f32 %v1875, 0.0
    %v1889 = vmax.f32 %v1876, 0.0
    %v1890 = vadd.f32 %v1851, %v1537
    %v1891 = vadd.f32 %v1852, %v1537
    %v1892 = vadd.f32 %v1853, %v1537
    %v1893 = vadd.f32 %v1854, %v1537
    %v1894 = vadd.f32 %v1855, %v1537
    %v1895 = vadd.f32 %v1856, %v1537
    %v1896 = vadd.f32 %v1857, %v1537
    %v1897 = vadd.f32 %v1858, %v1537
    %v1898 = vadd.f32 %v1859, %v1537
    %v1899 = vadd.f32 %v1860, %v1537
    %v1900 = vadd.f32 %v1861, %v1537
    %v1901 = vadd.f32 %v1862, %v1537
    %v1902 = vadd.f32 %v1863, %v1537
    %v1903 = vmax.f32 %v1890, 0.0
    %v1904 = vmax.f32 %v1891, 0.0
    %v1905 = vmax.f32 %v1892, 0.0
    %v1906 = vmax.f32 %v1893, 0.0
    %v1907 = vmax.f32 %v1894, 0.0
    %v1908 = vmax.f32 %v1895, 0.0
    %v1909 = vmax.f32 %v1896, 0.0
    %v1910 = vmax.f32 %v1897, 0.0
    %v1911 = vmax.f32 %v1898, 0.0
    %v1912 = vmax.f32 %v1899, 0.0
    %v1913 = vmax.f32 %v1900, 0.0
    %v1914 = vmax.f32 %v1901, 0.0
    %v1915 = vmax.f32 %v1902, 0.0
    %1929 = vrot.lane.b32.xlu0 %v1351, 96
    %v1930 = vpop.permute.xlu0 %1929
    %1931 = vrot.lane.b32.xlu0 %v1358, 96
    %v1932 = vpop.permute.xlu0 %1931
    %1933 = vrot.lane.b32.xlu0 %v1365, 96
    %v1934 = vpop.permute.xlu0 %1933
    %1935 = vrot.lane.b32.xlu0 %v1372, 96
    %v1936 = vpop.permute.xlu0 %1935
    %1937 = vrot.lane.b32.xlu0 %v1379, 96
    %v1938 = vpop.permute.xlu0 %1937
    %1939 = vrot.lane.b32.xlu0 %v1386, 96
    %v1940 = vpop.permute.xlu0 %1939
    %1941 = vrot.lane.b32.xlu0 %v1393, 96
    %v1942 = vpop.permute.xlu0 %1941
    %1943 = vrot.lane.b32.xlu0 %v1400, 96
    %v1944 = vpop.permute.xlu0 %1943
    %1945 = vrot.lane.b32.xlu0 %v1407, 96
    %v1946 = vpop.permute.xlu0 %1945
    %1947 = vrot.lane.b32.xlu0 %v1414, 96
    %v1948 = vpop.permute.xlu0 %1947
    %1949 = vrot.lane.b32.xlu0 %v1421, 96
    %v1950 = vpop.permute.xlu0 %1949
    %1951 = vrot.lane.b32.xlu0 %v1428, 96
    %v1952 = vpop.permute.xlu0 %1951
    %1953 = vrot.lane.b32.xlu0 %v1435, 96
    %v1954 = vpop.permute.xlu0 %1953
    %v1968 = vmax.f32 %v1351, %v1930
    %v1969 = vmax.f32 %v1358, %v1932
    %v1970 = vmax.f32 %v1365, %v1934
    %v1971 = vmax.f32 %v1372, %v1936
    %v1972 = vmax.f32 %v1379, %v1938
    %v1973 = vmax.f32 %v1386, %v1940
    %v1974 = vmax.f32 %v1393, %v1942
    %v1975 = vmax.f32 %v1400, %v1944
    %v1976 = vmax.f32 %v1407, %v1946
    %v1977 = vmax.f32 %v1414, %v1948
    %v1978 = vmax.f32 %v1421, %v1950
    %v1979 = vmax.f32 %v1428, %v1952
    %v1980 = vmax.f32 %v1435, %v1954
    %v1981 = vadd.f32 %v1968, %v1508
    %v1982 = vadd.f32 %v1969, %v1508
    %v1983 = vadd.f32 %v1970, %v1508
    %v1984 = vadd.f32 %v1971, %v1508
    %v1985 = vadd.f32 %v1972, %v1508
    %v1986 = vadd.f32 %v1973, %v1508
    %v1987 = vadd.f32 %v1974, %v1508
    %v1988 = vadd.f32 %v1975, %v1508
    %v1989 = vadd.f32 %v1976, %v1508
    %v1990 = vadd.f32 %v1977, %v1508
    %v1991 = vadd.f32 %v1978, %v1508
    %v1992 = vadd.f32 %v1979, %v1508
    %v1993 = vadd.f32 %v1980, %v1508
    %v1994 = vmax.f32 %v1981, 0.0
    %v1995 = vmax.f32 %v1982, 0.0
    %v1996 = vmax.f32 %v1983, 0.0
    %v1997 = vmax.f32 %v1984, 0.0
    %v1998 = vmax.f32 %v1985, 0.0
    %v1999 = vmax.f32 %v1986, 0.0
    %v2000 = vmax.f32 %v1987, 0.0
    %v2001 = vmax.f32 %v1988, 0.0
    %v2002 = vmax.f32 %v1989, 0.0
    %v2003 = vmax.f32 %v1990, 0.0
    %v2004 = vmax.f32 %v1991, 0.0
    %v2005 = vmax.f32 %v1992, 0.0
    %v2006 = vmax.f32 %v1993, 0.0
    %v2007 = vadd.f32 %v1968, %v1537
    %v2008 = vadd.f32 %v1969, %v1537
    %v2009 = vadd.f32 %v1970, %v1537
    %v2010 = vadd.f32 %v1971, %v1537
    %v2011 = vadd.f32 %v1972, %v1537
    %v2012 = vadd.f32 %v1973, %v1537
    %v2013 = vadd.f32 %v1974, %v1537
    %v2014 = vadd.f32 %v1975, %v1537
    %v2015 = vadd.f32 %v1976, %v1537
    %v2016 = vadd.f32 %v1977, %v1537
    %v2017 = vadd.f32 %v1978, %v1537
    %v2018 = vadd.f32 %v1979, %v1537
    %v2019 = vadd.f32 %v1980, %v1537
    %v2020 = vmax.f32 %v2007, 0.0
    %v2021 = vmax.f32 %v2008, 0.0
    %v2022 = vmax.f32 %v2009, 0.0
    %v2023 = vmax.f32 %v2010, 0.0
    %v2024 = vmax.f32 %v2011, 0.0
    %v2025 = vmax.f32 %v2012, 0.0
    %v2026 = vmax.f32 %v2013, 0.0
    %v2027 = vmax.f32 %v2014, 0.0
    %v2028 = vmax.f32 %v2015, 0.0
    %v2029 = vmax.f32 %v2016, 0.0
    %v2030 = vmax.f32 %v2017, 0.0
    %v2031 = vmax.f32 %v2018, 0.0
    %v2032 = vmax.f32 %v2019, 0.0
    %2046 = vrot.lane.b32.xlu0 %v1352, 96
    %v2047 = vpop.permute.xlu0 %2046
    %2048 = vrot.lane.b32.xlu0 %v1359, 96
    %v2049 = vpop.permute.xlu0 %2048
    %2050 = vrot.lane.b32.xlu0 %v1366, 96
    %v2051 = vpop.permute.xlu0 %2050
    %2052 = vrot.lane.b32.xlu0 %v1373, 96
    %v2053 = vpop.permute.xlu0 %2052
    %2054 = vrot.lane.b32.xlu0 %v1380, 96
    %v2055 = vpop.permute.xlu0 %2054
    %2056 = vrot.lane.b32.xlu0 %v1387, 96
    %v2057 = vpop.permute.xlu0 %2056
    %2058 = vrot.lane.b32.xlu0 %v1394, 96
    %v2059 = vpop.permute.xlu0 %2058
    %2060 = vrot.lane.b32.xlu0 %v1401, 96
    %v2061 = vpop.permute.xlu0 %2060
    %2062 = vrot.lane.b32.xlu0 %v1408, 96
    %v2063 = vpop.permute.xlu0 %2062
    %2064 = vrot.lane.b32.xlu0 %v1415, 96
    %v2065 = vpop.permute.xlu0 %2064
    %2066 = vrot.lane.b32.xlu0 %v1422, 96
    %v2067 = vpop.permute.xlu0 %2066
    %2068 = vrot.lane.b32.xlu0 %v1429, 96
    %v2069 = vpop.permute.xlu0 %2068
    %2070 = vrot.lane.b32.xlu0 %v1436, 96
    %v2071 = vpop.permute.xlu0 %2070
    %v2085 = vmax.f32 %v1352, %v2047
    %v2086 = vmax.f32 %v1359, %v2049
    %v2087 = vmax.f32 %v1366, %v2051
    %v2088 = vmax.f32 %v1373, %v2053
    %v2089 = vmax.f32 %v1380, %v2055
    %v2090 = vmax.f32 %v1387, %v2057
    %v2091 = vmax.f32 %v1394, %v2059
    %v2092 = vmax.f32 %v1401, %v2061
    %v2093 = vmax.f32 %v1408, %v2063
    %v2094 = vmax.f32 %v1415, %v2065
    %v2095 = vmax.f32 %v1422, %v2067
    %v2096 = vmax.f32 %v1429, %v2069
    %v2097 = vmax.f32 %v1436, %v2071
    %v2098 = vadd.f32 %v2085, %v1508
    %v2099 = vadd.f32 %v2086, %v1508
    %v2100 = vadd.f32 %v2087, %v1508
    %v2101 = vadd.f32 %v2088, %v1508
    %v2102 = vadd.f32 %v2089, %v1508
    %v2103 = vadd.f32 %v2090, %v1508
    %v2104 = vadd.f32 %v2091, %v1508
    %v2105 = vadd.f32 %v2092, %v1508
    %v2106 = vadd.f32 %v2093, %v1508
    %v2107 = vadd.f32 %v2094, %v1508
    %v2108 = vadd.f32 %v2095, %v1508
    %v2109 = vadd.f32 %v2096, %v1508
    %v2110 = vadd.f32 %v2097, %v1508
    %v2111 = vmax.f32 %v2098, 0.0
    %v2112 = vmax.f32 %v2099, 0.0
    %v2113 = vmax.f32 %v2100, 0.0
    %v2114 = vmax.f32 %v2101, 0.0
    %v2115 = vmax.f32 %v2102, 0.0
    %v2116 = vmax.f32 %v2103, 0.0
    %v2117 = vmax.f32 %v2104, 0.0
    %v2118 = vmax.f32 %v2105, 0.0
    %v2119 = vmax.f32 %v2106, 0.0
    %v2120 = vmax.f32 %v2107, 0.0
    %v2121 = vmax.f32 %v2108, 0.0
    %v2122 = vmax.f32 %v2109, 0.0
    %v2123 = vmax.f32 %v2110, 0.0
    %v2124 = vadd.f32 %v2085, %v1537
    %v2125 = vadd.f32 %v2086, %v1537
    %v2126 = vadd.f32 %v2087, %v1537
    %v2127 = vadd.f32 %v2088, %v1537
    %v2128 = vadd.f32 %v2089, %v1537
    %v2129 = vadd.f32 %v2090, %v1537
    %v2130 = vadd.f32 %v2091, %v1537
    %v2131 = vadd.f32 %v2092, %v1537
    %v2132 = vadd.f32 %v2093, %v1537
    %v2133 = vadd.f32 %v2094, %v1537
    %v2134 = vadd.f32 %v2095, %v1537
    %v2135 = vadd.f32 %v2096, %v1537
    %v2136 = vadd.f32 %v2097, %v1537
    %v2137 = vmax.f32 %v2124, 0.0
    %v2138 = vmax.f32 %v2125, 0.0
    %v2139 = vmax.f32 %v2126, 0.0
    %v2140 = vmax.f32 %v2127, 0.0
    %v2141 = vmax.f32 %v2128, 0.0
    %v2142 = vmax.f32 %v2129, 0.0
    %v2143 = vmax.f32 %v2130, 0.0
    %v2144 = vmax.f32 %v2131, 0.0
    %v2145 = vmax.f32 %v2132, 0.0
    %v2146 = vmax.f32 %v2133, 0.0
    %v2147 = vmax.f32 %v2134, 0.0
    %v2148 = vmax.f32 %v2135, 0.0
    %v2149 = vmax.f32 %v2136, 0.0
    %2163 = vrot.lane.b32.xlu0 %v1353, 96
    %v2164 = vpop.permute.xlu0 %2163
    %2165 = vrot.lane.b32.xlu0 %v1360, 96
    %v2166 = vpop.permute.xlu0 %2165
    %2167 = vrot.lane.b32.xlu0 %v1367, 96
    %v2168 = vpop.permute.xlu0 %2167
    %2169 = vrot.lane.b32.xlu0 %v1374, 96
    %v2170 = vpop.permute.xlu0 %2169
    %2171 = vrot.lane.b32.xlu0 %v1381, 96
    %v2172 = vpop.permute.xlu0 %2171
    %2173 = vrot.lane.b32.xlu0 %v1388, 96
    %v2174 = vpop.permute.xlu0 %2173
    %2175 = vrot.lane.b32.xlu0 %v1395, 96
    %v2176 = vpop.permute.xlu0 %2175
    %2177 = vrot.lane.b32.xlu0 %v1402, 96
    %v2178 = vpop.permute.xlu0 %2177
    %2179 = vrot.lane.b32.xlu0 %v1409, 96
    %v2180 = vpop.permute.xlu0 %2179
    %2181 = vrot.lane.b32.xlu0 %v1416, 96
    %v2182 = vpop.permute.xlu0 %2181
    %2183 = vrot.lane.b32.xlu0 %v1423, 96
    %v2184 = vpop.permute.xlu0 %2183
    %2185 = vrot.lane.b32.xlu0 %v1430, 96
    %v2186 = vpop.permute.xlu0 %2185
    %2187 = vrot.lane.b32.xlu0 %v1437, 96
    %v2188 = vpop.permute.xlu0 %2187
    %v2202 = vmax.f32 %v1353, %v2164
    %v2203 = vmax.f32 %v1360, %v2166
    %v2204 = vmax.f32 %v1367, %v2168
    %v2205 = vmax.f32 %v1374, %v2170
    %v2206 = vmax.f32 %v1381, %v2172
    %v2207 = vmax.f32 %v1388, %v2174
    %v2208 = vmax.f32 %v1395, %v2176
    %v2209 = vmax.f32 %v1402, %v2178
    %v2210 = vmax.f32 %v1409, %v2180
    %v2211 = vmax.f32 %v1416, %v2182
    %v2212 = vmax.f32 %v1423, %v2184
    %v2213 = vmax.f32 %v1430, %v2186
    %v2214 = vmax.f32 %v1437, %v2188
    %v2215 = vadd.f32 %v2202, %v1508
    %v2216 = vadd.f32 %v2203, %v1508
    %v2217 = vadd.f32 %v2204, %v1508
    %v2218 = vadd.f32 %v2205, %v1508
    %v2219 = vadd.f32 %v2206, %v1508
    %v2220 = vadd.f32 %v2207, %v1508
    %v2221 = vadd.f32 %v2208, %v1508
    %v2222 = vadd.f32 %v2209, %v1508
    %v2223 = vadd.f32 %v2210, %v1508
    %v2224 = vadd.f32 %v2211, %v1508
    %v2225 = vadd.f32 %v2212, %v1508
    %v2226 = vadd.f32 %v2213, %v1508
    %v2227 = vadd.f32 %v2214, %v1508
    %v2228 = vmax.f32 %v2215, 0.0
    %v2229 = vmax.f32 %v2216, 0.0
    %v2230 = vmax.f32 %v2217, 0.0
    %v2231 = vmax.f32 %v2218, 0.0
    %v2232 = vmax.f32 %v2219, 0.0
    %v2233 = vmax.f32 %v2220, 0.0
    %v2234 = vmax.f32 %v2221, 0.0
    %v2235 = vmax.f32 %v2222, 0.0
    %v2236 = vmax.f32 %v2223, 0.0
    %v2237 = vmax.f32 %v2224, 0.0
    %v2238 = vmax.f32 %v2225, 0.0
    %v2239 = vmax.f32 %v2226, 0.0
    %v2240 = vmax.f32 %v2227, 0.0
    %2254 = vrot.lane.b32.xlu0 %v1552, 64
    %v2255 = vpop.permute.xlu0 %2254
    %2256 = vrot.lane.b32.xlu0 %v1553, 64
    %v2257 = vpop.permute.xlu0 %2256
    %2258 = vrot.lane.b32.xlu0 %v1554, 64
    %v2259 = vpop.permute.xlu0 %2258
    %2260 = vrot.lane.b32.xlu0 %v1555, 64
    %v2261 = vpop.permute.xlu0 %2260
    %2262 = vrot.lane.b32.xlu0 %v1556, 64
    %v2263 = vpop.permute.xlu0 %2262
    %2264 = vrot.lane.b32.xlu0 %v1557, 64
    %v2265 = vpop.permute.xlu0 %2264
    %2266 = vrot.lane.b32.xlu0 %v1558, 64
    %v2267 = vpop.permute.xlu0 %2266
    %2268 = vrot.lane.b32.xlu0 %v1559, 64
    %v2269 = vpop.permute.xlu0 %2268
    %2270 = vrot.lane.b32.xlu0 %v1560, 64
    %v2271 = vpop.permute.xlu0 %2270
    %2272 = vrot.lane.b32.xlu0 %v1561, 64
    %v2273 = vpop.permute.xlu0 %2272
    %2274 = vrot.lane.b32.xlu0 %v1562, 64
    %v2275 = vpop.permute.xlu0 %2274
    %2276 = vrot.lane.b32.xlu0 %v1563, 64
    %v2277 = vpop.permute.xlu0 %2276
    %2278 = vrot.lane.b32.xlu0 %v1564, 64
    %v2279 = vpop.permute.xlu0 %2278
    %2305 = vrot.lane.b32.xlu0 %v1669, 64
    %v2306 = vpop.permute.xlu0 %2305
    %2307 = vrot.lane.b32.xlu0 %v1670, 64
    %v2308 = vpop.permute.xlu0 %2307
    %2309 = vrot.lane.b32.xlu0 %v1671, 64
    %v2310 = vpop.permute.xlu0 %2309
    %2311 = vrot.lane.b32.xlu0 %v1672, 64
    %v2312 = vpop.permute.xlu0 %2311
    %2313 = vrot.lane.b32.xlu0 %v1673, 64
    %v2314 = vpop.permute.xlu0 %2313
    %2315 = vrot.lane.b32.xlu0 %v1674, 64
    %v2316 = vpop.permute.xlu0 %2315
    %2317 = vrot.lane.b32.xlu0 %v1675, 64
    %v2318 = vpop.permute.xlu0 %2317
    %2319 = vrot.lane.b32.xlu0 %v1676, 64
    %v2320 = vpop.permute.xlu0 %2319
    %2321 = vrot.lane.b32.xlu0 %v1677, 64
    %v2322 = vpop.permute.xlu0 %2321
    %2323 = vrot.lane.b32.xlu0 %v1678, 64
    %v2324 = vpop.permute.xlu0 %2323
    %2325 = vrot.lane.b32.xlu0 %v1679, 64
    %v2326 = vpop.permute.xlu0 %2325
    %2327 = vrot.lane.b32.xlu0 %v1680, 64
    %v2328 = vpop.permute.xlu0 %2327
    %2329 = vrot.lane.b32.xlu0 %v1681, 64
    %v2330 = vpop.permute.xlu0 %2329
    %2356 = vrot.lane.b32.xlu0 %v1786, 64
    %v2357 = vpop.permute.xlu0 %2356
    %2358 = vrot.lane.b32.xlu0 %v1787, 64
    %v2359 = vpop.permute.xlu0 %2358
    %2360 = vrot.lane.b32.xlu0 %v1788, 64
    %v2361 = vpop.permute.xlu0 %2360
    %2362 = vrot.lane.b32.xlu0 %v1789, 64
    %v2363 = vpop.permute.xlu0 %2362
    %2364 = vrot.lane.b32.xlu0 %v1790, 64
    %v2365 = vpop.permute.xlu0 %2364
    %2366 = vrot.lane.b32.xlu0 %v1791, 64
    %v2367 = vpop.permute.xlu0 %2366
    %2368 = vrot.lane.b32.xlu0 %v1792, 64
    %v2369 = vpop.permute.xlu0 %2368
    %2370 = vrot.lane.b32.xlu0 %v1793, 64
    %v2371 = vpop.permute.xlu0 %2370
    %2372 = vrot.lane.b32.xlu0 %v1794, 64
    %v2373 = vpop.permute.xlu0 %2372
    %2374 = vrot.lane.b32.xlu0 %v1795, 64
    %v2375 = vpop.permute.xlu0 %2374
    %2376 = vrot.lane.b32.xlu0 %v1796, 64
    %v2377 = vpop.permute.xlu0 %2376
    %2378 = vrot.lane.b32.xlu0 %v1797, 64
    %v2379 = vpop.permute.xlu0 %2378
    %2380 = vrot.lane.b32.xlu0 %v1798, 64
    %v2381 = vpop.permute.xlu0 %2380
    %2407 = vrot.lane.b32.xlu0 %v1903, 64
    %v2408 = vpop.permute.xlu0 %2407
    %2409 = vrot.lane.b32.xlu0 %v1904, 64
    %v2410 = vpop.permute.xlu0 %2409
    %2411 = vrot.lane.b32.xlu0 %v1905, 64
    %v2412 = vpop.permute.xlu0 %2411
    %2413 = vrot.lane.b32.xlu0 %v1906, 64
    %v2414 = vpop.permute.xlu0 %2413
    %2415 = vrot.lane.b32.xlu0 %v1907, 64
    %v2416 = vpop.permute.xlu0 %2415
    %2417 = vrot.lane.b32.xlu0 %v1908, 64
    %v2418 = vpop.permute.xlu0 %2417
    %2419 = vrot.lane.b32.xlu0 %v1909, 64
    %v2420 = vpop.permute.xlu0 %2419
    %2421 = vrot.lane.b32.xlu0 %v1910, 64
    %v2422 = vpop.permute.xlu0 %2421
    %2423 = vrot.lane.b32.xlu0 %v1911, 64
    %v2424 = vpop.permute.xlu0 %2423
    %2425 = vrot.lane.b32.xlu0 %v1912, 64
    %v2426 = vpop.permute.xlu0 %2425
    %2427 = vrot.lane.b32.xlu0 %v1913, 64
    %v2428 = vpop.permute.xlu0 %2427
    %2429 = vrot.lane.b32.xlu0 %v1914, 64
    %v2430 = vpop.permute.xlu0 %2429
    %2431 = vrot.lane.b32.xlu0 %v1915, 64
    %v2432 = vpop.permute.xlu0 %2431
    %2458 = vrot.lane.b32.xlu0 %v2020, 64
    %v2459 = vpop.permute.xlu0 %2458
    %2460 = vrot.lane.b32.xlu0 %v2021, 64
    %v2461 = vpop.permute.xlu0 %2460
    %2462 = vrot.lane.b32.xlu0 %v2022, 64
    %v2463 = vpop.permute.xlu0 %2462
    %2464 = vrot.lane.b32.xlu0 %v2023, 64
    %v2465 = vpop.permute.xlu0 %2464
    %2466 = vrot.lane.b32.xlu0 %v2024, 64
    %v2467 = vpop.permute.xlu0 %2466
    %2468 = vrot.lane.b32.xlu0 %v2025, 64
    %v2469 = vpop.permute.xlu0 %2468
    %2470 = vrot.lane.b32.xlu0 %v2026, 64
    %v2471 = vpop.permute.xlu0 %2470
    %2472 = vrot.lane.b32.xlu0 %v2027, 64
    %v2473 = vpop.permute.xlu0 %2472
    %2474 = vrot.lane.b32.xlu0 %v2028, 64
    %v2475 = vpop.permute.xlu0 %2474
    %2476 = vrot.lane.b32.xlu0 %v2029, 64
    %v2477 = vpop.permute.xlu0 %2476
    %2478 = vrot.lane.b32.xlu0 %v2030, 64
    %v2479 = vpop.permute.xlu0 %2478
    %2480 = vrot.lane.b32.xlu0 %v2031, 64
    %v2481 = vpop.permute.xlu0 %2480
    %2482 = vrot.lane.b32.xlu0 %v2032, 64
    %v2483 = vpop.permute.xlu0 %2482
    %2509 = vrot.lane.b32.xlu0 %v2137, 64
    %v2510 = vpop.permute.xlu0 %2509
    %2511 = vrot.lane.b32.xlu0 %v2138, 64
    %v2512 = vpop.permute.xlu0 %2511
    %2513 = vrot.lane.b32.xlu0 %v2139, 64
    %v2514 = vpop.permute.xlu0 %2513
    %2515 = vrot.lane.b32.xlu0 %v2140, 64
    %v2516 = vpop.permute.xlu0 %2515
    %2517 = vrot.lane.b32.xlu0 %v2141, 64
    %v2518 = vpop.permute.xlu0 %2517
    %2519 = vrot.lane.b32.xlu0 %v2142, 64
    %v2520 = vpop.permute.xlu0 %2519
    %2521 = vrot.lane.b32.xlu0 %v2143, 64
    %v2522 = vpop.permute.xlu0 %2521
    %2523 = vrot.lane.b32.xlu0 %v2144, 64
    %v2524 = vpop.permute.xlu0 %2523
    %2525 = vrot.lane.b32.xlu0 %v2145, 64
    %v2526 = vpop.permute.xlu0 %2525
    %2527 = vrot.lane.b32.xlu0 %v2146, 64
    %v2528 = vpop.permute.xlu0 %2527
    %2529 = vrot.lane.b32.xlu0 %v2147, 64
    %v2530 = vpop.permute.xlu0 %2529
    %2531 = vrot.lane.b32.xlu0 %v2148, 64
    %v2532 = vpop.permute.xlu0 %2531
    %2533 = vrot.lane.b32.xlu0 %v2149, 64
    %v2534 = vpop.permute.xlu0 %2533
    %2601 = vrot.lane.b32.xlu0 %v2255, 32
    %v2602 = vpop.permute.xlu0 %2601
    %2603 = vrot.lane.b32.xlu0 %v1643, 32
    %v2604 = vpop.permute.xlu0 %2603
    %2605 = vrot.lane.b32.xlu0 %v2306, 32
    %v2606 = vpop.permute.xlu0 %2605
    %2607 = vrot.lane.b32.xlu0 %v1760, 32
    %v2608 = vpop.permute.xlu0 %2607
    %2609 = vrot.lane.b32.xlu0 %v2357, 32
    %v2610 = vpop.permute.xlu0 %2609
    %2611 = vrot.lane.b32.xlu0 %v1877, 32
    %v2612 = vpop.permute.xlu0 %2611
    %2613 = vrot.lane.b32.xlu0 %v2408, 32
    %v2614 = vpop.permute.xlu0 %2613
    %2615 = vrot.lane.b32.xlu0 %v1994, 32
    %v2616 = vpop.permute.xlu0 %2615
    %2617 = vrot.lane.b32.xlu0 %v2459, 32
    %v2618 = vpop.permute.xlu0 %2617
    %2619 = vrot.lane.b32.xlu0 %v2111, 32
    %v2620 = vpop.permute.xlu0 %2619
    %2621 = vrot.lane.b32.xlu0 %v2510, 32
    %v2622 = vpop.permute.xlu0 %2621
    %2623 = vrot.lane.b32.xlu0 %v2257, 32
    %v2624 = vpop.permute.xlu0 %2623
    %2625 = vrot.lane.b32.xlu0 %v1644, 32
    %v2626 = vpop.permute.xlu0 %2625
    %2627 = vrot.lane.b32.xlu0 %v2308, 32
    %v2628 = vpop.permute.xlu0 %2627
    %2629 = vrot.lane.b32.xlu0 %v1761, 32
    %v2630 = vpop.permute.xlu0 %2629
    %2631 = vrot.lane.b32.xlu0 %v2359, 32
    %v2632 = vpop.permute.xlu0 %2631
    %2633 = vrot.lane.b32.xlu0 %v1878, 32
    %v2634 = vpop.permute.xlu0 %2633
    %2635 = vrot.lane.b32.xlu0 %v2410, 32
    %v2636 = vpop.permute.xlu0 %2635
    %2637 = vrot.lane.b32.xlu0 %v1995, 32
    %v2638 = vpop.permute.xlu0 %2637
    %2639 = vrot.lane.b32.xlu0 %v2461, 32
    %v2640 = vpop.permute.xlu0 %2639
    %2641 = vrot.lane.b32.xlu0 %v2112, 32
    %v2642 = vpop.permute.xlu0 %2641
    %2643 = vrot.lane.b32.xlu0 %v2512, 32
    %v2644 = vpop.permute.xlu0 %2643
    %2645 = vrot.lane.b32.xlu0 %v2259, 32
    %v2646 = vpop.permute.xlu0 %2645
    %2647 = vrot.lane.b32.xlu0 %v1645, 32
    %v2648 = vpop.permute.xlu0 %2647
    %2649 = vrot.lane.b32.xlu0 %v2310, 32
    %v2650 = vpop.permute.xlu0 %2649
    %2651 = vrot.lane.b32.xlu0 %v1762, 32
    %v2652 = vpop.permute.xlu0 %2651
    %2653 = vrot.lane.b32.xlu0 %v2361, 32
    %v2654 = vpop.permute.xlu0 %2653
    %2655 = vrot.lane.b32.xlu0 %v1879, 32
    %v2656 = vpop.permute.xlu0 %2655
    %2657 = vrot.lane.b32.xlu0 %v2412, 32
    %v2658 = vpop.permute.xlu0 %2657
    %2659 = vrot.lane.b32.xlu0 %v1996, 32
    %v2660 = vpop.permute.xlu0 %2659
    %2661 = vrot.lane.b32.xlu0 %v2463, 32
    %v2662 = vpop.permute.xlu0 %2661
    %2663 = vrot.lane.b32.xlu0 %v2113, 32
    %v2664 = vpop.permute.xlu0 %2663
    %2665 = vrot.lane.b32.xlu0 %v2514, 32
    %v2666 = vpop.permute.xlu0 %2665
    %2667 = vrot.lane.b32.xlu0 %v2261, 32
    %v2668 = vpop.permute.xlu0 %2667
    %2669 = vrot.lane.b32.xlu0 %v1646, 32
    %v2670 = vpop.permute.xlu0 %2669
    %2671 = vrot.lane.b32.xlu0 %v2312, 32
    %v2672 = vpop.permute.xlu0 %2671
    %2673 = vrot.lane.b32.xlu0 %v1763, 32
    %v2674 = vpop.permute.xlu0 %2673
    %2675 = vrot.lane.b32.xlu0 %v2363, 32
    %v2676 = vpop.permute.xlu0 %2675
    %2677 = vrot.lane.b32.xlu0 %v1880, 32
    %v2678 = vpop.permute.xlu0 %2677
    %2679 = vrot.lane.b32.xlu0 %v2414, 32
    %v2680 = vpop.permute.xlu0 %2679
    %2681 = vrot.lane.b32.xlu0 %v1997, 32
    %v2682 = vpop.permute.xlu0 %2681
    %2683 = vrot.lane.b32.xlu0 %v2465, 32
    %v2684 = vpop.permute.xlu0 %2683
    %2685 = vrot.lane.b32.xlu0 %v2114, 32
    %v2686 = vpop.permute.xlu0 %2685
    %2687 = vrot.lane.b32.xlu0 %v2516, 32
    %v2688 = vpop.permute.xlu0 %2687
    %2689 = vrot.lane.b32.xlu0 %v2263, 32
    %v2690 = vpop.permute.xlu0 %2689
    %2691 = vrot.lane.b32.xlu0 %v1647, 32
    %v2692 = vpop.permute.xlu0 %2691
    %2693 = vrot.lane.b32.xlu0 %v2314, 32
    %v2694 = vpop.permute.xlu0 %2693
    %2695 = vrot.lane.b32.xlu0 %v1764, 32
    %v2696 = vpop.permute.xlu0 %2695
    %2697 = vrot.lane.b32.xlu0 %v2365, 32
    %v2698 = vpop.permute.xlu0 %2697
    %2699 = vrot.lane.b32.xlu0 %v1881, 32
    %v2700 = vpop.permute.xlu0 %2699
    %2701 = vrot.lane.b32.xlu0 %v2416, 32
    %v2702 = vpop.permute.xlu0 %2701
    %2703 = vrot.lane.b32.xlu0 %v1998, 32
    %v2704 = vpop.permute.xlu0 %2703
    %2705 = vrot.lane.b32.xlu0 %v2467, 32
    %v2706 = vpop.permute.xlu0 %2705
    %2707 = vrot.lane.b32.xlu0 %v2115, 32
    %v2708 = vpop.permute.xlu0 %2707
    %2709 = vrot.lane.b32.xlu0 %v2518, 32
    %v2710 = vpop.permute.xlu0 %2709
    %2711 = vrot.lane.b32.xlu0 %v2265, 32
    %v2712 = vpop.permute.xlu0 %2711
    %2713 = vrot.lane.b32.xlu0 %v1648, 32
    %v2714 = vpop.permute.xlu0 %2713
    %2715 = vrot.lane.b32.xlu0 %v2316, 32
    %v2716 = vpop.permute.xlu0 %2715
    %2717 = vrot.lane.b32.xlu0 %v1765, 32
    %v2718 = vpop.permute.xlu0 %2717
    %2719 = vrot.lane.b32.xlu0 %v2367, 32
    %v2720 = vpop.permute.xlu0 %2719
    %2721 = vrot.lane.b32.xlu0 %v1882, 32
    %v2722 = vpop.permute.xlu0 %2721
    %2723 = vrot.lane.b32.xlu0 %v2418, 32
    %v2724 = vpop.permute.xlu0 %2723
    %2725 = vrot.lane.b32.xlu0 %v1999, 32
    %v2726 = vpop.permute.xlu0 %2725
    %2727 = vrot.lane.b32.xlu0 %v2469, 32
    %v2728 = vpop.permute.xlu0 %2727
    %2729 = vrot.lane.b32.xlu0 %v2116, 32
    %v2730 = vpop.permute.xlu0 %2729
    %2731 = vrot.lane.b32.xlu0 %v2520, 32
    %v2732 = vpop.permute.xlu0 %2731
    %2733 = vrot.lane.b32.xlu0 %v2267, 32
    %v2734 = vpop.permute.xlu0 %2733
    %2735 = vrot.lane.b32.xlu0 %v1649, 32
    %v2736 = vpop.permute.xlu0 %2735
    %2737 = vrot.lane.b32.xlu0 %v2318, 32
    %v2738 = vpop.permute.xlu0 %2737
    %2739 = vrot.lane.b32.xlu0 %v1766, 32
    %v2740 = vpop.permute.xlu0 %2739
    %2741 = vrot.lane.b32.xlu0 %v2369, 32
    %v2742 = vpop.permute.xlu0 %2741
    %2743 = vrot.lane.b32.xlu0 %v1883, 32
    %v2744 = vpop.permute.xlu0 %2743
    %2745 = vrot.lane.b32.xlu0 %v2420, 32
    %v2746 = vpop.permute.xlu0 %2745
    %2747 = vrot.lane.b32.xlu0 %v2000, 32
    %v2748 = vpop.permute.xlu0 %2747
    %2749 = vrot.lane.b32.xlu0 %v2471, 32
    %v2750 = vpop.permute.xlu0 %2749
    %2751 = vrot.lane.b32.xlu0 %v2117, 32
    %v2752 = vpop.permute.xlu0 %2751
    %2753 = vrot.lane.b32.xlu0 %v2522, 32
    %v2754 = vpop.permute.xlu0 %2753
    %2755 = vrot.lane.b32.xlu0 %v2269, 32
    %v2756 = vpop.permute.xlu0 %2755
    %2757 = vrot.lane.b32.xlu0 %v1650, 32
    %v2758 = vpop.permute.xlu0 %2757
    %2759 = vrot.lane.b32.xlu0 %v2320, 32
    %v2760 = vpop.permute.xlu0 %2759
    %2761 = vrot.lane.b32.xlu0 %v1767, 32
    %v2762 = vpop.permute.xlu0 %2761
    %2763 = vrot.lane.b32.xlu0 %v2371, 32
    %v2764 = vpop.permute.xlu0 %2763
    %2765 = vrot.lane.b32.xlu0 %v1884, 32
    %v2766 = vpop.permute.xlu0 %2765
    %2767 = vrot.lane.b32.xlu0 %v2422, 32
    %v2768 = vpop.permute.xlu0 %2767
    %2769 = vrot.lane.b32.xlu0 %v2001, 32
    %v2770 = vpop.permute.xlu0 %2769
    %2771 = vrot.lane.b32.xlu0 %v2473, 32
    %v2772 = vpop.permute.xlu0 %2771
    %2773 = vrot.lane.b32.xlu0 %v2118, 32
    %v2774 = vpop.permute.xlu0 %2773
    %2775 = vrot.lane.b32.xlu0 %v2524, 32
    %v2776 = vpop.permute.xlu0 %2775
    %2777 = vrot.lane.b32.xlu0 %v2271, 32
    %v2778 = vpop.permute.xlu0 %2777
    %2779 = vrot.lane.b32.xlu0 %v1651, 32
    %v2780 = vpop.permute.xlu0 %2779
    %2781 = vrot.lane.b32.xlu0 %v2322, 32
    %v2782 = vpop.permute.xlu0 %2781
    %2783 = vrot.lane.b32.xlu0 %v1768, 32
    %v2784 = vpop.permute.xlu0 %2783
    %2785 = vrot.lane.b32.xlu0 %v2373, 32
    %v2786 = vpop.permute.xlu0 %2785
    %2787 = vrot.lane.b32.xlu0 %v1885, 32
    %v2788 = vpop.permute.xlu0 %2787
    %2789 = vrot.lane.b32.xlu0 %v2424, 32
    %v2790 = vpop.permute.xlu0 %2789
    %2791 = vrot.lane.b32.xlu0 %v2002, 32
    %v2792 = vpop.permute.xlu0 %2791
    %2793 = vrot.lane.b32.xlu0 %v2475, 32
    %v2794 = vpop.permute.xlu0 %2793
    %2795 = vrot.lane.b32.xlu0 %v2119, 32
    %v2796 = vpop.permute.xlu0 %2795
    %2797 = vrot.lane.b32.xlu0 %v2526, 32
    %v2798 = vpop.permute.xlu0 %2797
    %2799 = vrot.lane.b32.xlu0 %v2273, 32
    %v2800 = vpop.permute.xlu0 %2799
    %2801 = vrot.lane.b32.xlu0 %v1652, 32
    %v2802 = vpop.permute.xlu0 %2801
    %2803 = vrot.lane.b32.xlu0 %v2324, 32
    %v2804 = vpop.permute.xlu0 %2803
    %2805 = vrot.lane.b32.xlu0 %v1769, 32
    %v2806 = vpop.permute.xlu0 %2805
    %2807 = vrot.lane.b32.xlu0 %v2375, 32
    %v2808 = vpop.permute.xlu0 %2807
    %2809 = vrot.lane.b32.xlu0 %v1886, 32
    %v2810 = vpop.permute.xlu0 %2809
    %2811 = vrot.lane.b32.xlu0 %v2426, 32
    %v2812 = vpop.permute.xlu0 %2811
    %2813 = vrot.lane.b32.xlu0 %v2003, 32
    %v2814 = vpop.permute.xlu0 %2813
    %2815 = vrot.lane.b32.xlu0 %v2477, 32
    %v2816 = vpop.permute.xlu0 %2815
    %2817 = vrot.lane.b32.xlu0 %v2120, 32
    %v2818 = vpop.permute.xlu0 %2817
    %2819 = vrot.lane.b32.xlu0 %v2528, 32
    %v2820 = vpop.permute.xlu0 %2819
    %2821 = vrot.lane.b32.xlu0 %v2275, 32
    %v2822 = vpop.permute.xlu0 %2821
    %2823 = vrot.lane.b32.xlu0 %v1653, 32
    %v2824 = vpop.permute.xlu0 %2823
    %2825 = vrot.lane.b32.xlu0 %v2326, 32
    %v2826 = vpop.permute.xlu0 %2825
    %2827 = vrot.lane.b32.xlu0 %v1770, 32
    %v2828 = vpop.permute.xlu0 %2827
    %2829 = vrot.lane.b32.xlu0 %v2377, 32
    %v2830 = vpop.permute.xlu0 %2829
    %2831 = vrot.lane.b32.xlu0 %v1887, 32
    %v2832 = vpop.permute.xlu0 %2831
    %2833 = vrot.lane.b32.xlu0 %v2428, 32
    %v2834 = vpop.permute.xlu0 %2833
    %2835 = vrot.lane.b32.xlu0 %v2004, 32
    %v2836 = vpop.permute.xlu0 %2835
    %2837 = vrot.lane.b32.xlu0 %v2479, 32
    %v2838 = vpop.permute.xlu0 %2837
    %2839 = vrot.lane.b32.xlu0 %v2121, 32
    %v2840 = vpop.permute.xlu0 %2839
    %2841 = vrot.lane.b32.xlu0 %v2530, 32
    %v2842 = vpop.permute.xlu0 %2841
    %2975 = vrot.lane.b32.xlu0 %v1643, 64
    %v2976 = vpop.permute.xlu0 %2975
    %2977 = vrot.lane.b32.xlu0 %v2306, 64
    %v2978 = vpop.permute.xlu0 %2977
    %2979 = vrot.lane.b32.xlu0 %v1760, 64
    %v2980 = vpop.permute.xlu0 %2979
    %2981 = vrot.lane.b32.xlu0 %v2357, 64
    %v2982 = vpop.permute.xlu0 %2981
    %2983 = vrot.lane.b32.xlu0 %v1877, 64
    %v2984 = vpop.permute.xlu0 %2983
    %2985 = vrot.lane.b32.xlu0 %v2408, 64
    %v2986 = vpop.permute.xlu0 %2985
    %2987 = vrot.lane.b32.xlu0 %v1994, 64
    %v2988 = vpop.permute.xlu0 %2987
    %2989 = vrot.lane.b32.xlu0 %v2459, 64
    %v2990 = vpop.permute.xlu0 %2989
    %2991 = vrot.lane.b32.xlu0 %v2111, 64
    %v2992 = vpop.permute.xlu0 %2991
    %2993 = vrot.lane.b32.xlu0 %v2510, 64
    %v2994 = vpop.permute.xlu0 %2993
    %2995 = vrot.lane.b32.xlu0 %v2228, 64
    %v2996 = vpop.permute.xlu0 %2995
    %2997 = vrot.lane.b32.xlu0 %v1644, 64
    %v2998 = vpop.permute.xlu0 %2997
    %2999 = vrot.lane.b32.xlu0 %v2308, 64
    %v3000 = vpop.permute.xlu0 %2999
    %3001 = vrot.lane.b32.xlu0 %v1761, 64
    %v3002 = vpop.permute.xlu0 %3001
    %3003 = vrot.lane.b32.xlu0 %v2359, 64
    %v3004 = vpop.permute.xlu0 %3003
    %3005 = vrot.lane.b32.xlu0 %v1878, 64
    %v3006 = vpop.permute.xlu0 %3005
    %3007 = vrot.lane.b32.xlu0 %v2410, 64
    %v3008 = vpop.permute.xlu0 %3007
    %3009 = vrot.lane.b32.xlu0 %v1995, 64
    %v3010 = vpop.permute.xlu0 %3009
    %3011 = vrot.lane.b32.xlu0 %v2461, 64
    %v3012 = vpop.permute.xlu0 %3011
    %3013 = vrot.lane.b32.xlu0 %v2112, 64
    %v3014 = vpop.permute.xlu0 %3013
    %3015 = vrot.lane.b32.xlu0 %v2512, 64
    %v3016 = vpop.permute.xlu0 %3015
    %3017 = vrot.lane.b32.xlu0 %v2229, 64
    %v3018 = vpop.permute.xlu0 %3017
    %3019 = vrot.lane.b32.xlu0 %v1645, 64
    %v3020 = vpop.permute.xlu0 %3019
    %3021 = vrot.lane.b32.xlu0 %v2310, 64
    %v3022 = vpop.permute.xlu0 %3021
    %3023 = vrot.lane.b32.xlu0 %v1762, 64
    %v3024 = vpop.permute.xlu0 %3023
    %3025 = vrot.lane.b32.xlu0 %v2361, 64
    %v3026 = vpop.permute.xlu0 %3025
    %3027 = vrot.lane.b32.xlu0 %v1879, 64
    %v3028 = vpop.permute.xlu0 %3027
    %3029 = vrot.lane.b32.xlu0 %v2412, 64
    %v3030 = vpop.permute.xlu0 %3029
    %3031 = vrot.lane.b32.xlu0 %v1996, 64
    %v3032 = vpop.permute.xlu0 %3031
    %3033 = vrot.lane.b32.xlu0 %v2463, 64
    %v3034 = vpop.permute.xlu0 %3033
    %3035 = vrot.lane.b32.xlu0 %v2113, 64
    %v3036 = vpop.permute.xlu0 %3035
    %3037 = vrot.lane.b32.xlu0 %v2514, 64
    %v3038 = vpop.permute.xlu0 %3037
    %3039 = vrot.lane.b32.xlu0 %v2230, 64
    %v3040 = vpop.permute.xlu0 %3039
    %3041 = vrot.lane.b32.xlu0 %v1646, 64
    %v3042 = vpop.permute.xlu0 %3041
    %3043 = vrot.lane.b32.xlu0 %v2312, 64
    %v3044 = vpop.permute.xlu0 %3043
    %3045 = vrot.lane.b32.xlu0 %v1763, 64
    %v3046 = vpop.permute.xlu0 %3045
    %3047 = vrot.lane.b32.xlu0 %v2363, 64
    %v3048 = vpop.permute.xlu0 %3047
    %3049 = vrot.lane.b32.xlu0 %v1880, 64
    %v3050 = vpop.permute.xlu0 %3049
    %3051 = vrot.lane.b32.xlu0 %v2414, 64
    %v3052 = vpop.permute.xlu0 %3051
    %3053 = vrot.lane.b32.xlu0 %v1997, 64
    %v3054 = vpop.permute.xlu0 %3053
    %3055 = vrot.lane.b32.xlu0 %v2465, 64
    %v3056 = vpop.permute.xlu0 %3055
    %3057 = vrot.lane.b32.xlu0 %v2114, 64
    %v3058 = vpop.permute.xlu0 %3057
    %3059 = vrot.lane.b32.xlu0 %v2516, 64
    %v3060 = vpop.permute.xlu0 %3059
    %3061 = vrot.lane.b32.xlu0 %v2231, 64
    %v3062 = vpop.permute.xlu0 %3061
    %3063 = vrot.lane.b32.xlu0 %v1647, 64
    %v3064 = vpop.permute.xlu0 %3063
    %3065 = vrot.lane.b32.xlu0 %v2314, 64
    %v3066 = vpop.permute.xlu0 %3065
    %3067 = vrot.lane.b32.xlu0 %v1764, 64
    %v3068 = vpop.permute.xlu0 %3067
    %3069 = vrot.lane.b32.xlu0 %v2365, 64
    %v3070 = vpop.permute.xlu0 %3069
    %3071 = vrot.lane.b32.xlu0 %v1881, 64
    %v3072 = vpop.permute.xlu0 %3071
    %3073 = vrot.lane.b32.xlu0 %v2416, 64
    %v3074 = vpop.permute.xlu0 %3073
    %3075 = vrot.lane.b32.xlu0 %v1998, 64
    %v3076 = vpop.permute.xlu0 %3075
    %3077 = vrot.lane.b32.xlu0 %v2467, 64
    %v3078 = vpop.permute.xlu0 %3077
    %3079 = vrot.lane.b32.xlu0 %v2115, 64
    %v3080 = vpop.permute.xlu0 %3079
    %3081 = vrot.lane.b32.xlu0 %v2518, 64
    %v3082 = vpop.permute.xlu0 %3081
    %3083 = vrot.lane.b32.xlu0 %v2232, 64
    %v3084 = vpop.permute.xlu0 %3083
    %3085 = vrot.lane.b32.xlu0 %v1648, 64
    %v3086 = vpop.permute.xlu0 %3085
    %3087 = vrot.lane.b32.xlu0 %v2316, 64
    %v3088 = vpop.permute.xlu0 %3087
    %3089 = vrot.lane.b32.xlu0 %v1765, 64
    %v3090 = vpop.permute.xlu0 %3089
    %3091 = vrot.lane.b32.xlu0 %v2367, 64
    %v3092 = vpop.permute.xlu0 %3091
    %3093 = vrot.lane.b32.xlu0 %v1882, 64
    %v3094 = vpop.permute.xlu0 %3093
    %3095 = vrot.lane.b32.xlu0 %v2418, 64
    %v3096 = vpop.permute.xlu0 %3095
    %3097 = vrot.lane.b32.xlu0 %v1999, 64
    %v3098 = vpop.permute.xlu0 %3097
    %3099 = vrot.lane.b32.xlu0 %v2469, 64
    %v3100 = vpop.permute.xlu0 %3099
    %3101 = vrot.lane.b32.xlu0 %v2116, 64
    %v3102 = vpop.permute.xlu0 %3101
    %3103 = vrot.lane.b32.xlu0 %v2520, 64
    %v3104 = vpop.permute.xlu0 %3103
    %3105 = vrot.lane.b32.xlu0 %v2233, 64
    %v3106 = vpop.permute.xlu0 %3105
    %3107 = vrot.lane.b32.xlu0 %v1649, 64
    %v3108 = vpop.permute.xlu0 %3107
    %3109 = vrot.lane.b32.xlu0 %v2318, 64
    %v3110 = vpop.permute.xlu0 %3109
    %3111 = vrot.lane.b32.xlu0 %v1766, 64
    %v3112 = vpop.permute.xlu0 %3111
    %3113 = vrot.lane.b32.xlu0 %v2369, 64
    %v3114 = vpop.permute.xlu0 %3113
    %3115 = vrot.lane.b32.xlu0 %v1883, 64
    %v3116 = vpop.permute.xlu0 %3115
    %3117 = vrot.lane.b32.xlu0 %v2420, 64
    %v3118 = vpop.permute.xlu0 %3117
    %3119 = vrot.lane.b32.xlu0 %v2000, 64
    %v3120 = vpop.permute.xlu0 %3119
    %3121 = vrot.lane.b32.xlu0 %v2471, 64
    %v3122 = vpop.permute.xlu0 %3121
    %3123 = vrot.lane.b32.xlu0 %v2117, 64
    %v3124 = vpop.permute.xlu0 %3123
    %3125 = vrot.lane.b32.xlu0 %v2522, 64
    %v3126 = vpop.permute.xlu0 %3125
    %3127 = vrot.lane.b32.xlu0 %v2234, 64
    %v3128 = vpop.permute.xlu0 %3127
    %3129 = vrot.lane.b32.xlu0 %v1650, 64
    %v3130 = vpop.permute.xlu0 %3129
    %3131 = vrot.lane.b32.xlu0 %v2320, 64
    %v3132 = vpop.permute.xlu0 %3131
    %3133 = vrot.lane.b32.xlu0 %v1767, 64
    %v3134 = vpop.permute.xlu0 %3133
    %3135 = vrot.lane.b32.xlu0 %v2371, 64
    %v3136 = vpop.permute.xlu0 %3135
    %3137 = vrot.lane.b32.xlu0 %v1884, 64
    %v3138 = vpop.permute.xlu0 %3137
    %3139 = vrot.lane.b32.xlu0 %v2422, 64
    %v3140 = vpop.permute.xlu0 %3139
    %3141 = vrot.lane.b32.xlu0 %v2001, 64
    %v3142 = vpop.permute.xlu0 %3141
    %3143 = vrot.lane.b32.xlu0 %v2473, 64
    %v3144 = vpop.permute.xlu0 %3143
    %3145 = vrot.lane.b32.xlu0 %v2118, 64
    %v3146 = vpop.permute.xlu0 %3145
    %3147 = vrot.lane.b32.xlu0 %v2524, 64
    %v3148 = vpop.permute.xlu0 %3147
    %3149 = vrot.lane.b32.xlu0 %v2235, 64
    %v3150 = vpop.permute.xlu0 %3149
    %3151 = vrot.lane.b32.xlu0 %v1651, 64
    %v3152 = vpop.permute.xlu0 %3151
    %3153 = vrot.lane.b32.xlu0 %v2322, 64
    %v3154 = vpop.permute.xlu0 %3153
    %3155 = vrot.lane.b32.xlu0 %v1768, 64
    %v3156 = vpop.permute.xlu0 %3155
    %3157 = vrot.lane.b32.xlu0 %v2373, 64
    %v3158 = vpop.permute.xlu0 %3157
    %3159 = vrot.lane.b32.xlu0 %v1885, 64
    %v3160 = vpop.permute.xlu0 %3159
    %3161 = vrot.lane.b32.xlu0 %v2424, 64
    %v3162 = vpop.permute.xlu0 %3161
    %3163 = vrot.lane.b32.xlu0 %v2002, 64
    %v3164 = vpop.permute.xlu0 %3163
    %3165 = vrot.lane.b32.xlu0 %v2475, 64
    %v3166 = vpop.permute.xlu0 %3165
    %3167 = vrot.lane.b32.xlu0 %v2119, 64
    %v3168 = vpop.permute.xlu0 %3167
    %3169 = vrot.lane.b32.xlu0 %v2526, 64
    %v3170 = vpop.permute.xlu0 %3169
    %3171 = vrot.lane.b32.xlu0 %v2236, 64
    %v3172 = vpop.permute.xlu0 %3171
    %3173 = vrot.lane.b32.xlu0 %v1652, 64
    %v3174 = vpop.permute.xlu0 %3173
    %3175 = vrot.lane.b32.xlu0 %v2324, 64
    %v3176 = vpop.permute.xlu0 %3175
    %3177 = vrot.lane.b32.xlu0 %v1769, 64
    %v3178 = vpop.permute.xlu0 %3177
    %3179 = vrot.lane.b32.xlu0 %v2375, 64
    %v3180 = vpop.permute.xlu0 %3179
    %3181 = vrot.lane.b32.xlu0 %v1886, 64
    %v3182 = vpop.permute.xlu0 %3181
    %3183 = vrot.lane.b32.xlu0 %v2426, 64
    %v3184 = vpop.permute.xlu0 %3183
    %3185 = vrot.lane.b32.xlu0 %v2003, 64
    %v3186 = vpop.permute.xlu0 %3185
    %3187 = vrot.lane.b32.xlu0 %v2477, 64
    %v3188 = vpop.permute.xlu0 %3187
    %3189 = vrot.lane.b32.xlu0 %v2120, 64
    %v3190 = vpop.permute.xlu0 %3189
    %3191 = vrot.lane.b32.xlu0 %v2528, 64
    %v3192 = vpop.permute.xlu0 %3191
    %3193 = vrot.lane.b32.xlu0 %v2237, 64
    %v3194 = vpop.permute.xlu0 %3193
    %3195 = vrot.lane.b32.xlu0 %v1653, 64
    %v3196 = vpop.permute.xlu0 %3195
    %3197 = vrot.lane.b32.xlu0 %v2326, 64
    %v3198 = vpop.permute.xlu0 %3197
    %3199 = vrot.lane.b32.xlu0 %v1770, 64
    %v3200 = vpop.permute.xlu0 %3199
    %3201 = vrot.lane.b32.xlu0 %v2377, 64
    %v3202 = vpop.permute.xlu0 %3201
    %3203 = vrot.lane.b32.xlu0 %v1887, 64
    %v3204 = vpop.permute.xlu0 %3203
    %3205 = vrot.lane.b32.xlu0 %v2428, 64
    %v3206 = vpop.permute.xlu0 %3205
    %3207 = vrot.lane.b32.xlu0 %v2004, 64
    %v3208 = vpop.permute.xlu0 %3207
    %3209 = vrot.lane.b32.xlu0 %v2479, 64
    %v3210 = vpop.permute.xlu0 %3209
    %3211 = vrot.lane.b32.xlu0 %v2121, 64
    %v3212 = vpop.permute.xlu0 %3211
    %3213 = vrot.lane.b32.xlu0 %v2530, 64
    %v3214 = vpop.permute.xlu0 %3213
    %3215 = vrot.lane.b32.xlu0 %v2238, 64
    %v3216 = vpop.permute.xlu0 %3215
    %3354 = vrot.lane.b32.xlu0 %v1524, 96
    %v3355 = vpop.permute.xlu0 %3354
    %3356 = vrot.lane.b32.xlu0 %v2257, 96
    %v3357 = vpop.permute.xlu0 %3356
    %3358 = vrot.lane.b32.xlu0 %v1644, 96
    %v3359 = vpop.permute.xlu0 %3358
    %3360 = vrot.lane.b32.xlu0 %v2308, 96
    %v3361 = vpop.permute.xlu0 %3360
    %3362 = vrot.lane.b32.xlu0 %v1761, 96
    %v3363 = vpop.permute.xlu0 %3362
    %3364 = vrot.lane.b32.xlu0 %v2359, 96
    %v3365 = vpop.permute.xlu0 %3364
    %3366 = vrot.lane.b32.xlu0 %v1878, 96
    %v3367 = vpop.permute.xlu0 %3366
    %3368 = vrot.lane.b32.xlu0 %v2410, 96
    %v3369 = vpop.permute.xlu0 %3368
    %3370 = vrot.lane.b32.xlu0 %v1995, 96
    %v3371 = vpop.permute.xlu0 %3370
    %3372 = vrot.lane.b32.xlu0 %v2461, 96
    %v3373 = vpop.permute.xlu0 %3372
    %3374 = vrot.lane.b32.xlu0 %v2112, 96
    %v3375 = vpop.permute.xlu0 %3374
    %3376 = vrot.lane.b32.xlu0 %v1525, 96
    %v3377 = vpop.permute.xlu0 %3376
    %3378 = vrot.lane.b32.xlu0 %v2259, 96
    %v3379 = vpop.permute.xlu0 %3378
    %3380 = vrot.lane.b32.xlu0 %v1645, 96
    %v3381 = vpop.permute.xlu0 %3380
    %3382 = vrot.lane.b32.xlu0 %v2310, 96
    %v3383 = vpop.permute.xlu0 %3382
    %3384 = vrot.lane.b32.xlu0 %v1762, 96
    %v3385 = vpop.permute.xlu0 %3384
    %3386 = vrot.lane.b32.xlu0 %v2361, 96
    %v3387 = vpop.permute.xlu0 %3386
    %3388 = vrot.lane.b32.xlu0 %v1879, 96
    %v3389 = vpop.permute.xlu0 %3388
    %3390 = vrot.lane.b32.xlu0 %v2412, 96
    %v3391 = vpop.permute.xlu0 %3390
    %3392 = vrot.lane.b32.xlu0 %v1996, 96
    %v3393 = vpop.permute.xlu0 %3392
    %3394 = vrot.lane.b32.xlu0 %v2463, 96
    %v3395 = vpop.permute.xlu0 %3394
    %3396 = vrot.lane.b32.xlu0 %v2113, 96
    %v3397 = vpop.permute.xlu0 %3396
    %3398 = vrot.lane.b32.xlu0 %v1526, 96
    %v3399 = vpop.permute.xlu0 %3398
    %3400 = vrot.lane.b32.xlu0 %v2261, 96
    %v3401 = vpop.permute.xlu0 %3400
    %3402 = vrot.lane.b32.xlu0 %v1646, 96
    %v3403 = vpop.permute.xlu0 %3402
    %3404 = vrot.lane.b32.xlu0 %v2312, 96
    %v3405 = vpop.permute.xlu0 %3404
    %3406 = vrot.lane.b32.xlu0 %v1763, 96
    %v3407 = vpop.permute.xlu0 %3406
    %3408 = vrot.lane.b32.xlu0 %v2363, 96
    %v3409 = vpop.permute.xlu0 %3408
    %3410 = vrot.lane.b32.xlu0 %v1880, 96
    %v3411 = vpop.permute.xlu0 %3410
    %3412 = vrot.lane.b32.xlu0 %v2414, 96
    %v3413 = vpop.permute.xlu0 %3412
    %3414 = vrot.lane.b32.xlu0 %v1997, 96
    %v3415 = vpop.permute.xlu0 %3414
    %3416 = vrot.lane.b32.xlu0 %v2465, 96
    %v3417 = vpop.permute.xlu0 %3416
    %3418 = vrot.lane.b32.xlu0 %v2114, 96
    %v3419 = vpop.permute.xlu0 %3418
    %3420 = vrot.lane.b32.xlu0 %v1527, 96
    %v3421 = vpop.permute.xlu0 %3420
    %3422 = vrot.lane.b32.xlu0 %v2263, 96
    %v3423 = vpop.permute.xlu0 %3422
    %3424 = vrot.lane.b32.xlu0 %v1647, 96
    %v3425 = vpop.permute.xlu0 %3424
    %3426 = vrot.lane.b32.xlu0 %v2314, 96
    %v3427 = vpop.permute.xlu0 %3426
    %3428 = vrot.lane.b32.xlu0 %v1764, 96
    %v3429 = vpop.permute.xlu0 %3428
    %3430 = vrot.lane.b32.xlu0 %v2365, 96
    %v3431 = vpop.permute.xlu0 %3430
    %3432 = vrot.lane.b32.xlu0 %v1881, 96
    %v3433 = vpop.permute.xlu0 %3432
    %3434 = vrot.lane.b32.xlu0 %v2416, 96
    %v3435 = vpop.permute.xlu0 %3434
    %3436 = vrot.lane.b32.xlu0 %v1998, 96
    %v3437 = vpop.permute.xlu0 %3436
    %3438 = vrot.lane.b32.xlu0 %v2467, 96
    %v3439 = vpop.permute.xlu0 %3438
    %3440 = vrot.lane.b32.xlu0 %v2115, 96
    %v3441 = vpop.permute.xlu0 %3440
    %3442 = vrot.lane.b32.xlu0 %v1528, 96
    %v3443 = vpop.permute.xlu0 %3442
    %3444 = vrot.lane.b32.xlu0 %v2265, 96
    %v3445 = vpop.permute.xlu0 %3444
    %3446 = vrot.lane.b32.xlu0 %v1648, 96
    %v3447 = vpop.permute.xlu0 %3446
    %3448 = vrot.lane.b32.xlu0 %v2316, 96
    %v3449 = vpop.permute.xlu0 %3448
    %3450 = vrot.lane.b32.xlu0 %v1765, 96
    %v3451 = vpop.permute.xlu0 %3450
    %3452 = vrot.lane.b32.xlu0 %v2367, 96
    %v3453 = vpop.permute.xlu0 %3452
    %3454 = vrot.lane.b32.xlu0 %v1882, 96
    %v3455 = vpop.permute.xlu0 %3454
    %3456 = vrot.lane.b32.xlu0 %v2418, 96
    %v3457 = vpop.permute.xlu0 %3456
    %3458 = vrot.lane.b32.xlu0 %v1999, 96
    %v3459 = vpop.permute.xlu0 %3458
    %3460 = vrot.lane.b32.xlu0 %v2469, 96
    %v3461 = vpop.permute.xlu0 %3460
    %3462 = vrot.lane.b32.xlu0 %v2116, 96
    %v3463 = vpop.permute.xlu0 %3462
    %3464 = vrot.lane.b32.xlu0 %v1529, 96
    %v3465 = vpop.permute.xlu0 %3464
    %3466 = vrot.lane.b32.xlu0 %v2267, 96
    %v3467 = vpop.permute.xlu0 %3466
    %3468 = vrot.lane.b32.xlu0 %v1649, 96
    %v3469 = vpop.permute.xlu0 %3468
    %3470 = vrot.lane.b32.xlu0 %v2318, 96
    %v3471 = vpop.permute.xlu0 %3470
    %3472 = vrot.lane.b32.xlu0 %v1766, 96
    %v3473 = vpop.permute.xlu0 %3472
    %3474 = vrot.lane.b32.xlu0 %v2369, 96
    %v3475 = vpop.permute.xlu0 %3474
    %3476 = vrot.lane.b32.xlu0 %v1883, 96
    %v3477 = vpop.permute.xlu0 %3476
    %3478 = vrot.lane.b32.xlu0 %v2420, 96
    %v3479 = vpop.permute.xlu0 %3478
    %3480 = vrot.lane.b32.xlu0 %v2000, 96
    %v3481 = vpop.permute.xlu0 %3480
    %3482 = vrot.lane.b32.xlu0 %v2471, 96
    %v3483 = vpop.permute.xlu0 %3482
    %3484 = vrot.lane.b32.xlu0 %v2117, 96
    %v3485 = vpop.permute.xlu0 %3484
    %3486 = vrot.lane.b32.xlu0 %v1530, 96
    %v3487 = vpop.permute.xlu0 %3486
    %3488 = vrot.lane.b32.xlu0 %v2269, 96
    %v3489 = vpop.permute.xlu0 %3488
    %3490 = vrot.lane.b32.xlu0 %v1650, 96
    %v3491 = vpop.permute.xlu0 %3490
    %3492 = vrot.lane.b32.xlu0 %v2320, 96
    %v3493 = vpop.permute.xlu0 %3492
    %3494 = vrot.lane.b32.xlu0 %v1767, 96
    %v3495 = vpop.permute.xlu0 %3494
    %3496 = vrot.lane.b32.xlu0 %v2371, 96
    %v3497 = vpop.permute.xlu0 %3496
    %3498 = vrot.lane.b32.xlu0 %v1884, 96
    %v3499 = vpop.permute.xlu0 %3498
    %3500 = vrot.lane.b32.xlu0 %v2422, 96
    %v3501 = vpop.permute.xlu0 %3500
    %3502 = vrot.lane.b32.xlu0 %v2001, 96
    %v3503 = vpop.permute.xlu0 %3502
    %3504 = vrot.lane.b32.xlu0 %v2473, 96
    %v3505 = vpop.permute.xlu0 %3504
    %3506 = vrot.lane.b32.xlu0 %v2118, 96
    %v3507 = vpop.permute.xlu0 %3506
    %3508 = vrot.lane.b32.xlu0 %v1531, 96
    %v3509 = vpop.permute.xlu0 %3508
    %3510 = vrot.lane.b32.xlu0 %v2271, 96
    %v3511 = vpop.permute.xlu0 %3510
    %3512 = vrot.lane.b32.xlu0 %v1651, 96
    %v3513 = vpop.permute.xlu0 %3512
    %3514 = vrot.lane.b32.xlu0 %v2322, 96
    %v3515 = vpop.permute.xlu0 %3514
    %3516 = vrot.lane.b32.xlu0 %v1768, 96
    %v3517 = vpop.permute.xlu0 %3516
    %3518 = vrot.lane.b32.xlu0 %v2373, 96
    %v3519 = vpop.permute.xlu0 %3518
    %3520 = vrot.lane.b32.xlu0 %v1885, 96
    %v3521 = vpop.permute.xlu0 %3520
    %3522 = vrot.lane.b32.xlu0 %v2424, 96
    %v3523 = vpop.permute.xlu0 %3522
    %3524 = vrot.lane.b32.xlu0 %v2002, 96
    %v3525 = vpop.permute.xlu0 %3524
    %3526 = vrot.lane.b32.xlu0 %v2475, 96
    %v3527 = vpop.permute.xlu0 %3526
    %3528 = vrot.lane.b32.xlu0 %v2119, 96
    %v3529 = vpop.permute.xlu0 %3528
    %3530 = vrot.lane.b32.xlu0 %v1532, 96
    %v3531 = vpop.permute.xlu0 %3530
    %3532 = vrot.lane.b32.xlu0 %v2273, 96
    %v3533 = vpop.permute.xlu0 %3532
    %3534 = vrot.lane.b32.xlu0 %v1652, 96
    %v3535 = vpop.permute.xlu0 %3534
    %3536 = vrot.lane.b32.xlu0 %v2324, 96
    %v3537 = vpop.permute.xlu0 %3536
    %3538 = vrot.lane.b32.xlu0 %v1769, 96
    %v3539 = vpop.permute.xlu0 %3538
    %3540 = vrot.lane.b32.xlu0 %v2375, 96
    %v3541 = vpop.permute.xlu0 %3540
    %3542 = vrot.lane.b32.xlu0 %v1886, 96
    %v3543 = vpop.permute.xlu0 %3542
    %3544 = vrot.lane.b32.xlu0 %v2426, 96
    %v3545 = vpop.permute.xlu0 %3544
    %3546 = vrot.lane.b32.xlu0 %v2003, 96
    %v3547 = vpop.permute.xlu0 %3546
    %3548 = vrot.lane.b32.xlu0 %v2477, 96
    %v3549 = vpop.permute.xlu0 %3548
    %3550 = vrot.lane.b32.xlu0 %v2120, 96
    %v3551 = vpop.permute.xlu0 %3550
    %3552 = vrot.lane.b32.xlu0 %v1533, 96
    %v3553 = vpop.permute.xlu0 %3552
    %3554 = vrot.lane.b32.xlu0 %v2275, 96
    %v3555 = vpop.permute.xlu0 %3554
    %3556 = vrot.lane.b32.xlu0 %v1653, 96
    %v3557 = vpop.permute.xlu0 %3556
    %3558 = vrot.lane.b32.xlu0 %v2326, 96
    %v3559 = vpop.permute.xlu0 %3558
    %3560 = vrot.lane.b32.xlu0 %v1770, 96
    %v3561 = vpop.permute.xlu0 %3560
    %3562 = vrot.lane.b32.xlu0 %v2377, 96
    %v3563 = vpop.permute.xlu0 %3562
    %3564 = vrot.lane.b32.xlu0 %v1887, 96
    %v3565 = vpop.permute.xlu0 %3564
    %3566 = vrot.lane.b32.xlu0 %v2428, 96
    %v3567 = vpop.permute.xlu0 %3566
    %3568 = vrot.lane.b32.xlu0 %v2004, 96
    %v3569 = vpop.permute.xlu0 %3568
    %3570 = vrot.lane.b32.xlu0 %v2479, 96
    %v3571 = vpop.permute.xlu0 %3570
    %3572 = vrot.lane.b32.xlu0 %v2121, 96
    %v3573 = vpop.permute.xlu0 %3572
    %3574 = vrot.lane.b32.xlu0 %v1534, 96
    %v3575 = vpop.permute.xlu0 %3574
    %3576 = vrot.lane.b32.xlu0 %v2277, 96
    %v3577 = vpop.permute.xlu0 %3576
    %3578 = vrot.lane.b32.xlu0 %v1654, 96
    %v3579 = vpop.permute.xlu0 %3578
    %3580 = vrot.lane.b32.xlu0 %v2328, 96
    %v3581 = vpop.permute.xlu0 %3580
    %3582 = vrot.lane.b32.xlu0 %v1771, 96
    %v3583 = vpop.permute.xlu0 %3582
    %3584 = vrot.lane.b32.xlu0 %v2379, 96
    %v3585 = vpop.permute.xlu0 %3584
    %3586 = vrot.lane.b32.xlu0 %v1888, 96
    %v3587 = vpop.permute.xlu0 %3586
    %3588 = vrot.lane.b32.xlu0 %v2430, 96
    %v3589 = vpop.permute.xlu0 %3588
    %3590 = vrot.lane.b32.xlu0 %v2005, 96
    %v3591 = vpop.permute.xlu0 %3590
    %3592 = vrot.lane.b32.xlu0 %v2481, 96
    %v3593 = vpop.permute.xlu0 %3592
    %3594 = vrot.lane.b32.xlu0 %v2122, 96
    %v3595 = vpop.permute.xlu0 %3594
    %3718 = vrot.lane.b32.xlu0 %v2229, 32
    %v3719 = vpop.permute.xlu0 %3718
    %3720 = vrot.lane.b32.xlu0 %v2230, 32
    %v3721 = vpop.permute.xlu0 %3720
    %3722 = vrot.lane.b32.xlu0 %v2231, 32
    %v3723 = vpop.permute.xlu0 %3722
    %3724 = vrot.lane.b32.xlu0 %v2232, 32
    %v3725 = vpop.permute.xlu0 %3724
    %3726 = vrot.lane.b32.xlu0 %v2233, 32
    %v3727 = vpop.permute.xlu0 %3726
    %3728 = vrot.lane.b32.xlu0 %v2234, 32
    %v3729 = vpop.permute.xlu0 %3728
    %3730 = vrot.lane.b32.xlu0 %v2235, 32
    %v3731 = vpop.permute.xlu0 %3730
    %3732 = vrot.lane.b32.xlu0 %v2236, 32
    %v3733 = vpop.permute.xlu0 %3732
    %3734 = vrot.lane.b32.xlu0 %v2237, 32
    %v3735 = vpop.permute.xlu0 %3734
    %3736 = vrot.lane.b32.xlu0 %v2238, 32
    %v3737 = vpop.permute.xlu0 %3736
    %3738 = vrot.lane.b32.xlu0 %v1654, 32
    %v3739 = vpop.permute.xlu0 %3738
    %3740 = vrot.lane.b32.xlu0 %v2328, 32
    %v3741 = vpop.permute.xlu0 %3740
    %3742 = vrot.lane.b32.xlu0 %v1771, 32
    %v3743 = vpop.permute.xlu0 %3742
    %3744 = vrot.lane.b32.xlu0 %v2379, 32
    %v3745 = vpop.permute.xlu0 %3744
    %3746 = vrot.lane.b32.xlu0 %v1888, 32
    %v3747 = vpop.permute.xlu0 %3746
    %3748 = vrot.lane.b32.xlu0 %v2430, 32
    %v3749 = vpop.permute.xlu0 %3748
    %3750 = vrot.lane.b32.xlu0 %v2005, 32
    %v3751 = vpop.permute.xlu0 %3750
    %3752 = vrot.lane.b32.xlu0 %v2481, 32
    %v3753 = vpop.permute.xlu0 %3752
    %3754 = vrot.lane.b32.xlu0 %v2122, 32
    %v3755 = vpop.permute.xlu0 %3754
    %3756 = vrot.lane.b32.xlu0 %v2532, 32
    %v3757 = vpop.permute.xlu0 %3756
    %3758 = vrot.lane.b32.xlu0 %v2239, 32
    %v3759 = vpop.permute.xlu0 %3758
    %3787 = vrot.lane.b32.xlu0 %v1525, 64
    %v3788 = vpop.permute.xlu0 %3787
    %3789 = vrot.lane.b32.xlu0 %v2259, 64
    %v3790 = vpop.permute.xlu0 %3789
    %3791 = vrot.lane.b32.xlu0 %v1526, 64
    %v3792 = vpop.permute.xlu0 %3791
    %3793 = vrot.lane.b32.xlu0 %v2261, 64
    %v3794 = vpop.permute.xlu0 %3793
    %3795 = vrot.lane.b32.xlu0 %v1527, 64
    %v3796 = vpop.permute.xlu0 %3795
    %3797 = vrot.lane.b32.xlu0 %v2263, 64
    %v3798 = vpop.permute.xlu0 %3797
    %3799 = vrot.lane.b32.xlu0 %v1528, 64
    %v3800 = vpop.permute.xlu0 %3799
    %3801 = vrot.lane.b32.xlu0 %v2265, 64
    %v3802 = vpop.permute.xlu0 %3801
    %3803 = vrot.lane.b32.xlu0 %v1529, 64
    %v3804 = vpop.permute.xlu0 %3803
    %3805 = vrot.lane.b32.xlu0 %v2267, 64
    %v3806 = vpop.permute.xlu0 %3805
    %3807 = vrot.lane.b32.xlu0 %v1530, 64
    %v3808 = vpop.permute.xlu0 %3807
    %3809 = vrot.lane.b32.xlu0 %v2269, 64
    %v3810 = vpop.permute.xlu0 %3809
    %3811 = vrot.lane.b32.xlu0 %v1531, 64
    %v3812 = vpop.permute.xlu0 %3811
    %3813 = vrot.lane.b32.xlu0 %v2271, 64
    %v3814 = vpop.permute.xlu0 %3813
    %3815 = vrot.lane.b32.xlu0 %v1532, 64
    %v3816 = vpop.permute.xlu0 %3815
    %3817 = vrot.lane.b32.xlu0 %v2273, 64
    %v3818 = vpop.permute.xlu0 %3817
    %3819 = vrot.lane.b32.xlu0 %v1533, 64
    %v3820 = vpop.permute.xlu0 %3819
    %3821 = vrot.lane.b32.xlu0 %v2275, 64
    %v3822 = vpop.permute.xlu0 %3821
    %3823 = vrot.lane.b32.xlu0 %v1534, 64
    %v3824 = vpop.permute.xlu0 %3823
    %3825 = vrot.lane.b32.xlu0 %v2277, 64
    %v3826 = vpop.permute.xlu0 %3825
    %3827 = vrot.lane.b32.xlu0 %v1654, 64
    %v3828 = vpop.permute.xlu0 %3827
    %3829 = vrot.lane.b32.xlu0 %v2328, 64
    %v3830 = vpop.permute.xlu0 %3829
    %3831 = vrot.lane.b32.xlu0 %v1771, 64
    %v3832 = vpop.permute.xlu0 %3831
    %3833 = vrot.lane.b32.xlu0 %v2379, 64
    %v3834 = vpop.permute.xlu0 %3833
    %3835 = vrot.lane.b32.xlu0 %v1888, 64
    %v3836 = vpop.permute.xlu0 %3835
    %3837 = vrot.lane.b32.xlu0 %v2430, 64
    %v3838 = vpop.permute.xlu0 %3837
    %3839 = vrot.lane.b32.xlu0 %v2005, 64
    %v3840 = vpop.permute.xlu0 %3839
    %3841 = vrot.lane.b32.xlu0 %v2481, 64
    %v3842 = vpop.permute.xlu0 %3841
    %3843 = vrot.lane.b32.xlu0 %v2122, 64
    %v3844 = vpop.permute.xlu0 %3843
    %3845 = vrot.lane.b32.xlu0 %v1535, 64
    %v3846 = vpop.permute.xlu0 %3845
    %3847 = vrot.lane.b32.xlu0 %v2279, 64
    %v3848 = vpop.permute.xlu0 %3847
    %3849 = vrot.lane.b32.xlu0 %v1655, 64
    %v3850 = vpop.permute.xlu0 %3849
    %3851 = vrot.lane.b32.xlu0 %v2330, 64
    %v3852 = vpop.permute.xlu0 %3851
    %3853 = vrot.lane.b32.xlu0 %v1772, 64
    %v3854 = vpop.permute.xlu0 %3853
    %3855 = vrot.lane.b32.xlu0 %v2381, 64
    %v3856 = vpop.permute.xlu0 %3855
    %3857 = vrot.lane.b32.xlu0 %v1889, 64
    %v3858 = vpop.permute.xlu0 %3857
    %3859 = vrot.lane.b32.xlu0 %v2432, 64
    %v3860 = vpop.permute.xlu0 %3859
    %3861 = vrot.lane.b32.xlu0 %v2006, 64
    %v3862 = vpop.permute.xlu0 %3861
    %3863 = vrot.lane.b32.xlu0 %v2483, 64
    %v3864 = vpop.permute.xlu0 %3863
    %3865 = vrot.lane.b32.xlu0 %v2123, 64
    %v3866 = vpop.permute.xlu0 %3865
    %3907 = vrot.lane.b32.xlu0 %v2514, 96
    %v3908 = vpop.permute.xlu0 %3907
    %3909 = vrot.lane.b32.xlu0 %v2516, 96
    %v3910 = vpop.permute.xlu0 %3909
    %3911 = vrot.lane.b32.xlu0 %v2518, 96
    %v3912 = vpop.permute.xlu0 %3911
    %3913 = vrot.lane.b32.xlu0 %v2520, 96
    %v3914 = vpop.permute.xlu0 %3913
    %3915 = vrot.lane.b32.xlu0 %v2522, 96
    %v3916 = vpop.permute.xlu0 %3915
    %3917 = vrot.lane.b32.xlu0 %v2524, 96
    %v3918 = vpop.permute.xlu0 %3917
    %3919 = vrot.lane.b32.xlu0 %v2526, 96
    %v3920 = vpop.permute.xlu0 %3919
    %3921 = vrot.lane.b32.xlu0 %v2528, 96
    %v3922 = vpop.permute.xlu0 %3921
    %3923 = vrot.lane.b32.xlu0 %v2530, 96
    %v3924 = vpop.permute.xlu0 %3923
    %3925 = vrot.lane.b32.xlu0 %v2532, 96
    %v3926 = vpop.permute.xlu0 %3925
    %3927 = vrot.lane.b32.xlu0 %v2279, 96
    %v3928 = vpop.permute.xlu0 %3927
    %3929 = vrot.lane.b32.xlu0 %v1655, 96
    %v3930 = vpop.permute.xlu0 %3929
    %3931 = vrot.lane.b32.xlu0 %v2330, 96
    %v3932 = vpop.permute.xlu0 %3931
    %3933 = vrot.lane.b32.xlu0 %v1772, 96
    %v3934 = vpop.permute.xlu0 %3933
    %3935 = vrot.lane.b32.xlu0 %v2381, 96
    %v3936 = vpop.permute.xlu0 %3935
    %3937 = vrot.lane.b32.xlu0 %v1889, 96
    %v3938 = vpop.permute.xlu0 %3937
    %3939 = vrot.lane.b32.xlu0 %v2432, 96
    %v3940 = vpop.permute.xlu0 %3939
    %3941 = vrot.lane.b32.xlu0 %v2006, 96
    %v3942 = vpop.permute.xlu0 %3941
    %3943 = vrot.lane.b32.xlu0 %v2483, 96
    %v3944 = vpop.permute.xlu0 %3943
    %3945 = vrot.lane.b32.xlu0 %v2123, 96
    %v3946 = vpop.permute.xlu0 %3945
    %3947 = vrot.lane.b32.xlu0 %v2534, 96
    %v3948 = vpop.permute.xlu0 %3947
    %vm3970 = vcmask 261120
    %v3971 = vsel %vm3970, %v1523, %v2602
    %v3972 = vsel %vm3970, %v2255, %v2604
    %v3973 = vsel %vm3970, %v1643, %v2606
    %v3974 = vsel %vm3970, %v2306, %v2608
    %v3975 = vsel %vm3970, %v1760, %v2610
    %v3976 = vsel %vm3970, %v2357, %v2612
    %v3977 = vsel %vm3970, %v1877, %v2614
    %v3978 = vsel %vm3970, %v2408, %v2616
    %v3979 = vsel %vm3970, %v1994, %v2618
    %v3980 = vsel %vm3970, %v2459, %v2620
    %v3981 = vsel %vm3970, %v2111, %v2622
    %v3982 = vsel %vm3970, %v1524, %v2624
    %v3983 = vsel %vm3970, %v2257, %v2626
    %v3984 = vsel %vm3970, %v1644, %v2628
    %v3985 = vsel %vm3970, %v2308, %v2630
    %v3986 = vsel %vm3970, %v1761, %v2632
    %v3987 = vsel %vm3970, %v2359, %v2634
    %v3988 = vsel %vm3970, %v1878, %v2636
    %v3989 = vsel %vm3970, %v2410, %v2638
    %v3990 = vsel %vm3970, %v1995, %v2640
    %v3991 = vsel %vm3970, %v2461, %v2642
    %v3992 = vsel %vm3970, %v2112, %v2644
    %v3993 = vsel %vm3970, %v1525, %v2646
    %v3994 = vsel %vm3970, %v2259, %v2648
    %v3995 = vsel %vm3970, %v1645, %v2650
    %v3996 = vsel %vm3970, %v2310, %v2652
    %v3997 = vsel %vm3970, %v1762, %v2654
    %v3998 = vsel %vm3970, %v2361, %v2656
    %v3999 = vsel %vm3970, %v1879, %v2658
    %v4000 = vsel %vm3970, %v2412, %v2660
    %v4001 = vsel %vm3970, %v1996, %v2662
    %v4002 = vsel %vm3970, %v2463, %v2664
    %v4003 = vsel %vm3970, %v2113, %v2666
    %v4004 = vsel %vm3970, %v1526, %v2668
    %v4005 = vsel %vm3970, %v2261, %v2670
    %v4006 = vsel %vm3970, %v1646, %v2672
    %v4007 = vsel %vm3970, %v2312, %v2674
    %v4008 = vsel %vm3970, %v1763, %v2676
    %v4009 = vsel %vm3970, %v2363, %v2678
    %v4010 = vsel %vm3970, %v1880, %v2680
    %v4011 = vsel %vm3970, %v2414, %v2682
    %v4012 = vsel %vm3970, %v1997, %v2684
    %v4013 = vsel %vm3970, %v2465, %v2686
    %v4014 = vsel %vm3970, %v2114, %v2688
    %v4015 = vsel %vm3970, %v1527, %v2690
    %v4016 = vsel %vm3970, %v2263, %v2692
    %v4017 = vsel %vm3970, %v1647, %v2694
    %v4018 = vsel %vm3970, %v2314, %v2696
    %v4019 = vsel %vm3970, %v1764, %v2698
    %v4020 = vsel %vm3970, %v2365, %v2700
    %v4021 = vsel %vm3970, %v1881, %v2702
    %v4022 = vsel %vm3970, %v2416, %v2704
    %v4023 = vsel %vm3970, %v1998, %v2706
    %v4024 = vsel %vm3970, %v2467, %v2708
    %v4025 = vsel %vm3970, %v2115, %v2710
    %v4026 = vsel %vm3970, %v1528, %v2712
    %v4027 = vsel %vm3970, %v2265, %v2714
    %v4028 = vsel %vm3970, %v1648, %v2716
    %v4029 = vsel %vm3970, %v2316, %v2718
    %v4030 = vsel %vm3970, %v1765, %v2720
    %v4031 = vsel %vm3970, %v2367, %v2722
    %v4032 = vsel %vm3970, %v1882, %v2724
    %v4033 = vsel %vm3970, %v2418, %v2726
    %v4034 = vsel %vm3970, %v1999, %v2728
    %v4035 = vsel %vm3970, %v2469, %v2730
    %v4036 = vsel %vm3970, %v2116, %v2732
    %v4037 = vsel %vm3970, %v1529, %v2734
    %v4038 = vsel %vm3970, %v2267, %v2736
    %v4039 = vsel %vm3970, %v1649, %v2738
    %v4040 = vsel %vm3970, %v2318, %v2740
    %v4041 = vsel %vm3970, %v1766, %v2742
    %v4042 = vsel %vm3970, %v2369, %v2744
    %v4043 = vsel %vm3970, %v1883, %v2746
    %v4044 = vsel %vm3970, %v2420, %v2748
    %v4045 = vsel %vm3970, %v2000, %v2750
    %v4046 = vsel %vm3970, %v2471, %v2752
    %v4047 = vsel %vm3970, %v2117, %v2754
    %v4048 = vsel %vm3970, %v1530, %v2756
    %v4049 = vsel %vm3970, %v2269, %v2758
    %v4050 = vsel %vm3970, %v1650, %v2760
    %v4051 = vsel %vm3970, %v2320, %v2762
    %v4052 = vsel %vm3970, %v1767, %v2764
    %v4053 = vsel %vm3970, %v2371, %v2766
    %v4054 = vsel %vm3970, %v1884, %v2768
    %v4055 = vsel %vm3970, %v2422, %v2770
    %v4056 = vsel %vm3970, %v2001, %v2772
    %v4057 = vsel %vm3970, %v2473, %v2774
    %v4058 = vsel %vm3970, %v2118, %v2776
    %v4059 = vsel %vm3970, %v1531, %v2778
    %v4060 = vsel %vm3970, %v2271, %v2780
    %v4061 = vsel %vm3970, %v1651, %v2782
    %v4062 = vsel %vm3970, %v2322, %v2784
    %v4063 = vsel %vm3970, %v1768, %v2786
    %v4064 = vsel %vm3970, %v2373, %v2788
    %v4065 = vsel %vm3970, %v1885, %v2790
    %v4066 = vsel %vm3970, %v2424, %v2792
    %v4067 = vsel %vm3970, %v2002, %v2794
    %v4068 = vsel %vm3970, %v2475, %v2796
    %v4069 = vsel %vm3970, %v2119, %v2798
    %v4070 = vsel %vm3970, %v1532, %v2800
    %v4071 = vsel %vm3970, %v2273, %v2802
    %v4072 = vsel %vm3970, %v1652, %v2804
    %v4073 = vsel %vm3970, %v2324, %v2806
    %v4074 = vsel %vm3970, %v1769, %v2808
    %v4075 = vsel %vm3970, %v2375, %v2810
    %v4076 = vsel %vm3970, %v1886, %v2812
    %v4077 = vsel %vm3970, %v2426, %v2814
    %v4078 = vsel %vm3970, %v2003, %v2816
    %v4079 = vsel %vm3970, %v2477, %v2818
    %v4080 = vsel %vm3970, %v2120, %v2820
    %v4081 = vsel %vm3970, %v1533, %v2822
    %v4082 = vsel %vm3970, %v2275, %v2824
    %v4083 = vsel %vm3970, %v1653, %v2826
    %v4084 = vsel %vm3970, %v2326, %v2828
    %v4085 = vsel %vm3970, %v1770, %v2830
    %v4086 = vsel %vm3970, %v2377, %v2832
    %v4087 = vsel %vm3970, %v1887, %v2834
    %v4088 = vsel %vm3970, %v2428, %v2836
    %v4089 = vsel %vm3970, %v2004, %v2838
    %v4090 = vsel %vm3970, %v2479, %v2840
    %v4091 = vsel %vm3970, %v2121, %v2842
    %vm4092 = vcmask 523264
    %v4093 = vsel %vm4092, %v3971, %v2976
    %v4094 = vsel %vm4092, %v3972, %v2978
    %v4095 = vsel %vm4092, %v3973, %v2980
    %v4096 = vsel %vm4092, %v3974, %v2982
    %v4097 = vsel %vm4092, %v3975, %v2984
    %v4098 = vsel %vm4092, %v3976, %v2986
    %v4099 = vsel %vm4092, %v3977, %v2988
    %v4100 = vsel %vm4092, %v3978, %v2990
    %v4101 = vsel %vm4092, %v3979, %v2992
    %v4102 = vsel %vm4092, %v3980, %v2994
    %v4103 = vsel %vm4092, %v3981, %v2996
    %v4104 = vsel %vm4092, %v3982, %v2998
    %v4105 = vsel %vm4092, %v3983, %v3000
    %v4106 = vsel %vm4092, %v3984, %v3002
    %v4107 = vsel %vm4092, %v3985, %v3004
    %v4108 = vsel %vm4092, %v3986, %v3006
    %v4109 = vsel %vm4092, %v3987, %v3008
    %v4110 = vsel %vm4092, %v3988, %v3010
    %v4111 = vsel %vm4092, %v3989, %v3012
    %v4112 = vsel %vm4092, %v3990, %v3014
    %v4113 = vsel %vm4092, %v3991, %v3016
    %v4114 = vsel %vm4092, %v3992, %v3018
    %v4115 = vsel %vm4092, %v3993, %v3020
    %v4116 = vsel %vm4092, %v3994, %v3022
    %v4117 = vsel %vm4092, %v3995, %v3024
    %v4118 = vsel %vm4092, %v3996, %v3026
    %v4119 = vsel %vm4092, %v3997, %v3028
    %v4120 = vsel %vm4092, %v3998, %v3030
    %v4121 = vsel %vm4092, %v3999, %v3032
    %v4122 = vsel %vm4092, %v4000, %v3034
    %v4123 = vsel %vm4092, %v4001, %v3036
    %v4124 = vsel %vm4092, %v4002, %v3038
    %v4125 = vsel %vm4092, %v4003, %v3040
    %v4126 = vsel %vm4092, %v4004, %v3042
    %v4127 = vsel %vm4092, %v4005, %v3044
    %v4128 = vsel %vm4092, %v4006, %v3046
    %v4129 = vsel %vm4092, %v4007, %v3048
    %v4130 = vsel %vm4092, %v4008, %v3050
    %v4131 = vsel %vm4092, %v4009, %v3052
    %v4132 = vsel %vm4092, %v4010, %v3054
    %v4133 = vsel %vm4092, %v4011, %v3056
    %v4134 = vsel %vm4092, %v4012, %v3058
    %v4135 = vsel %vm4092, %v4013, %v3060
    %v4136 = vsel %vm4092, %v4014, %v3062
    %v4137 = vsel %vm4092, %v4015, %v3064
    %v4138 = vsel %vm4092, %v4016, %v3066
    %v4139 = vsel %vm4092, %v4017, %v3068
    %v4140 = vsel %vm4092, %v4018, %v3070
    %v4141 = vsel %vm4092, %v4019, %v3072
    %v4142 = vsel %vm4092, %v4020, %v3074
    %v4143 = vsel %vm4092, %v4021, %v3076
    %v4144 = vsel %vm4092, %v4022, %v3078
    %v4145 = vsel %vm4092, %v4023, %v3080
    %v4146 = vsel %vm4092, %v4024, %v3082
    %v4147 = vsel %vm4092, %v4025, %v3084
    %v4148 = vsel %vm4092, %v4026, %v3086
    %v4149 = vsel %vm4092, %v4027, %v3088
    %v4150 = vsel %vm4092, %v4028, %v3090
    %v4151 = vsel %vm4092, %v4029, %v3092
    %v4152 = vsel %vm4092, %v4030, %v3094
    %v4153 = vsel %vm4092, %v4031, %v3096
    %v4154 = vsel %vm4092, %v4032, %v3098
    %v4155 = vsel %vm4092, %v4033, %v3100
    %v4156 = vsel %vm4092, %v4034, %v3102
    %v4157 = vsel %vm4092, %v4035, %v3104
    %v4158 = vsel %vm4092, %v4036, %v3106
    %v4159 = vsel %vm4092, %v4037, %v3108
    %v4160 = vsel %vm4092, %v4038, %v3110
    %v4161 = vsel %vm4092, %v4039, %v3112
    %v4162 = vsel %vm4092, %v4040, %v3114
    %v4163 = vsel %vm4092, %v4041, %v3116
    %v4164 = vsel %vm4092, %v4042, %v3118
    %v4165 = vsel %vm4092, %v4043, %v3120
    %v4166 = vsel %vm4092, %v4044, %v3122
    %v4167 = vsel %vm4092, %v4045, %v3124
    %v4168 = vsel %vm4092, %v4046, %v3126
    %v4169 = vsel %vm4092, %v4047, %v3128
    %v4170 = vsel %vm4092, %v4048, %v3130
    %v4171 = vsel %vm4092, %v4049, %v3132
    %v4172 = vsel %vm4092, %v4050, %v3134
    %v4173 = vsel %vm4092, %v4051, %v3136
    %v4174 = vsel %vm4092, %v4052, %v3138
    %v4175 = vsel %vm4092, %v4053, %v3140
    %v4176 = vsel %vm4092, %v4054, %v3142
    %v4177 = vsel %vm4092, %v4055, %v3144
    %v4178 = vsel %vm4092, %v4056, %v3146
    %v4179 = vsel %vm4092, %v4057, %v3148
    %v4180 = vsel %vm4092, %v4058, %v3150
    %v4181 = vsel %vm4092, %v4059, %v3152
    %v4182 = vsel %vm4092, %v4060, %v3154
    %v4183 = vsel %vm4092, %v4061, %v3156
    %v4184 = vsel %vm4092, %v4062, %v3158
    %v4185 = vsel %vm4092, %v4063, %v3160
    %v4186 = vsel %vm4092, %v4064, %v3162
    %v4187 = vsel %vm4092, %v4065, %v3164
    %v4188 = vsel %vm4092, %v4066, %v3166
    %v4189 = vsel %vm4092, %v4067, %v3168
    %v4190 = vsel %vm4092, %v4068, %v3170
    %v4191 = vsel %vm4092, %v4069, %v3172
    %v4192 = vsel %vm4092, %v4070, %v3174
    %v4193 = vsel %vm4092, %v4071, %v3176
    %v4194 = vsel %vm4092, %v4072, %v3178
    %v4195 = vsel %vm4092, %v4073, %v3180
    %v4196 = vsel %vm4092, %v4074, %v3182
    %v4197 = vsel %vm4092, %v4075, %v3184
    %v4198 = vsel %vm4092, %v4076, %v3186
    %v4199 = vsel %vm4092, %v4077, %v3188
    %v4200 = vsel %vm4092, %v4078, %v3190
    %v4201 = vsel %vm4092, %v4079, %v3192
    %v4202 = vsel %vm4092, %v4080, %v3194
    %v4203 = vsel %vm4092, %v4081, %v3196
    %v4204 = vsel %vm4092, %v4082, %v3198
    %v4205 = vsel %vm4092, %v4083, %v3200
    %v4206 = vsel %vm4092, %v4084, %v3202
    %v4207 = vsel %vm4092, %v4085, %v3204
    %v4208 = vsel %vm4092, %v4086, %v3206
    %v4209 = vsel %vm4092, %v4087, %v3208
    %v4210 = vsel %vm4092, %v4088, %v3210
    %v4211 = vsel %vm4092, %v4089, %v3212
    %v4212 = vsel %vm4092, %v4090, %v3214
    %v4213 = vsel %vm4092, %v4091, %v3216
    %vm4214 = vcmask 785408
    %v4215 = vsel %vm4214, %v4093, %v3355
    %v4216 = vsel %vm4214, %v4094, %v3357
    %v4217 = vsel %vm4214, %v4095, %v3359
    %v4218 = vsel %vm4214, %v4096, %v3361
    %v4219 = vsel %vm4214, %v4097, %v3363
    %v4220 = vsel %vm4214, %v4098, %v3365
    %v4221 = vsel %vm4214, %v4099, %v3367
    %v4222 = vsel %vm4214, %v4100, %v3369
    %v4223 = vsel %vm4214, %v4101, %v3371
    %v4224 = vsel %vm4214, %v4102, %v3373
    %v4225 = vsel %vm4214, %v4103, %v3375
    %v4226 = vsel %vm4214, %v4104, %v3377
    %v4227 = vsel %vm4214, %v4105, %v3379
    %v4228 = vsel %vm4214, %v4106, %v3381
    %v4229 = vsel %vm4214, %v4107, %v3383
    %v4230 = vsel %vm4214, %v4108, %v3385
    %v4231 = vsel %vm4214, %v4109, %v3387
    %v4232 = vsel %vm4214, %v4110, %v3389
    %v4233 = vsel %vm4214, %v4111, %v3391
    %v4234 = vsel %vm4214, %v4112, %v3393
    %v4235 = vsel %vm4214, %v4113, %v3395
    %v4236 = vsel %vm4214, %v4114, %v3397
    %v4237 = vsel %vm4214, %v4115, %v3399
    %v4238 = vsel %vm4214, %v4116, %v3401
    %v4239 = vsel %vm4214, %v4117, %v3403
    %v4240 = vsel %vm4214, %v4118, %v3405
    %v4241 = vsel %vm4214, %v4119, %v3407
    %v4242 = vsel %vm4214, %v4120, %v3409
    %v4243 = vsel %vm4214, %v4121, %v3411
    %v4244 = vsel %vm4214, %v4122, %v3413
    %v4245 = vsel %vm4214, %v4123, %v3415
    %v4246 = vsel %vm4214, %v4124, %v3417
    %v4247 = vsel %vm4214, %v4125, %v3419
    %v4248 = vsel %vm4214, %v4126, %v3421
    %v4249 = vsel %vm4214, %v4127, %v3423
    %v4250 = vsel %vm4214, %v4128, %v3425
    %v4251 = vsel %vm4214, %v4129, %v3427
    %v4252 = vsel %vm4214, %v4130, %v3429
    %v4253 = vsel %vm4214, %v4131, %v3431
    %v4254 = vsel %vm4214, %v4132, %v3433
    %v4255 = vsel %vm4214, %v4133, %v3435
    %v4256 = vsel %vm4214, %v4134, %v3437
    %v4257 = vsel %vm4214, %v4135, %v3439
    %v4258 = vsel %vm4214, %v4136, %v3441
    %v4259 = vsel %vm4214, %v4137, %v3443
    %v4260 = vsel %vm4214, %v4138, %v3445
    %v4261 = vsel %vm4214, %v4139, %v3447
    %v4262 = vsel %vm4214, %v4140, %v3449
    %v4263 = vsel %vm4214, %v4141, %v3451
    %v4264 = vsel %vm4214, %v4142, %v3453
    %v4265 = vsel %vm4214, %v4143, %v3455
    %v4266 = vsel %vm4214, %v4144, %v3457
    %v4267 = vsel %vm4214, %v4145, %v3459
    %v4268 = vsel %vm4214, %v4146, %v3461
    %v4269 = vsel %vm4214, %v4147, %v3463
    %v4270 = vsel %vm4214, %v4148, %v3465
    %v4271 = vsel %vm4214, %v4149, %v3467
    %v4272 = vsel %vm4214, %v4150, %v3469
    %v4273 = vsel %vm4214, %v4151, %v3471
    %v4274 = vsel %vm4214, %v4152, %v3473
    %v4275 = vsel %vm4214, %v4153, %v3475
    %v4276 = vsel %vm4214, %v4154, %v3477
    %v4277 = vsel %vm4214, %v4155, %v3479
    %v4278 = vsel %vm4214, %v4156, %v3481
    %v4279 = vsel %vm4214, %v4157, %v3483
    %v4280 = vsel %vm4214, %v4158, %v3485
    %v4281 = vsel %vm4214, %v4159, %v3487
    %v4282 = vsel %vm4214, %v4160, %v3489
    %v4283 = vsel %vm4214, %v4161, %v3491
    %v4284 = vsel %vm4214, %v4162, %v3493
    %v4285 = vsel %vm4214, %v4163, %v3495
    %v4286 = vsel %vm4214, %v4164, %v3497
    %v4287 = vsel %vm4214, %v4165, %v3499
    %v4288 = vsel %vm4214, %v4166, %v3501
    %v4289 = vsel %vm4214, %v4167, %v3503
    %v4290 = vsel %vm4214, %v4168, %v3505
    %v4291 = vsel %vm4214, %v4169, %v3507
    %v4292 = vsel %vm4214, %v4170, %v3509
    %v4293 = vsel %vm4214, %v4171, %v3511
    %v4294 = vsel %vm4214, %v4172, %v3513
    %v4295 = vsel %vm4214, %v4173, %v3515
    %v4296 = vsel %vm4214, %v4174, %v3517
    %v4297 = vsel %vm4214, %v4175, %v3519
    %v4298 = vsel %vm4214, %v4176, %v3521
    %v4299 = vsel %vm4214, %v4177, %v3523
    %v4300 = vsel %vm4214, %v4178, %v3525
    %v4301 = vsel %vm4214, %v4179, %v3527
    %v4302 = vsel %vm4214, %v4180, %v3529
    %v4303 = vsel %vm4214, %v4181, %v3531
    %v4304 = vsel %vm4214, %v4182, %v3533
    %v4305 = vsel %vm4214, %v4183, %v3535
    %v4306 = vsel %vm4214, %v4184, %v3537
    %v4307 = vsel %vm4214, %v4185, %v3539
    %v4308 = vsel %vm4214, %v4186, %v3541
    %v4309 = vsel %vm4214, %v4187, %v3543
    %v4310 = vsel %vm4214, %v4188, %v3545
    %v4311 = vsel %vm4214, %v4189, %v3547
    %v4312 = vsel %vm4214, %v4190, %v3549
    %v4313 = vsel %vm4214, %v4191, %v3551
    %v4314 = vsel %vm4214, %v4192, %v3553
    %v4315 = vsel %vm4214, %v4193, %v3555
    %v4316 = vsel %vm4214, %v4194, %v3557
    %v4317 = vsel %vm4214, %v4195, %v3559
    %v4318 = vsel %vm4214, %v4196, %v3561
    %v4319 = vsel %vm4214, %v4197, %v3563
    %v4320 = vsel %vm4214, %v4198, %v3565
    %v4321 = vsel %vm4214, %v4199, %v3567
    %v4322 = vsel %vm4214, %v4200, %v3569
    %v4323 = vsel %vm4214, %v4201, %v3571
    %v4324 = vsel %vm4214, %v4202, %v3573
    %v4325 = vsel %vm4214, %v4203, %v3575
    %v4326 = vsel %vm4214, %v4204, %v3577
    %v4327 = vsel %vm4214, %v4205, %v3579
    %v4328 = vsel %vm4214, %v4206, %v3581
    %v4329 = vsel %vm4214, %v4207, %v3583
    %v4330 = vsel %vm4214, %v4208, %v3585
    %v4331 = vsel %vm4214, %v4209, %v3587
    %v4332 = vsel %vm4214, %v4210, %v3589
    %v4333 = vsel %vm4214, %v4211, %v3591
    %v4334 = vsel %vm4214, %v4212, %v3593
    %v4335 = vsel %vm4214, %v4213, %v3595
    %v4336 = vsel %vm3970, %v2512, %v3719
    %v4337 = vsel %vm3970, %v2514, %v3721
    %v4338 = vsel %vm3970, %v2516, %v3723
    %v4339 = vsel %vm3970, %v2518, %v3725
    %v4340 = vsel %vm3970, %v2520, %v3727
    %v4341 = vsel %vm3970, %v2522, %v3729
    %v4342 = vsel %vm3970, %v2524, %v3731
    %v4343 = vsel %vm3970, %v2526, %v3733
    %v4344 = vsel %vm3970, %v2528, %v3735
    %v4345 = vsel %vm3970, %v2530, %v3737
    %v4346 = vsel %vm3970, %v2277, %v3739
    %v4347 = vsel %vm3970, %v1654, %v3741
    %v4348 = vsel %vm3970, %v2328, %v3743
    %v4349 = vsel %vm3970, %v1771, %v3745
    %v4350 = vsel %vm3970, %v2379, %v3747
    %v4351 = vsel %vm3970, %v1888, %v3749
    %v4352 = vsel %vm3970, %v2430, %v3751
    %v4353 = vsel %vm3970, %v2005, %v3753
    %v4354 = vsel %vm3970, %v2481, %v3755
    %v4355 = vsel %vm3970, %v2122, %v3757
    %v4356 = vsel %vm3970, %v2532, %v3759
    %v4357 = vsel %vm4092, %v3983, %v3788
    %v4358 = vsel %vm4092, %v3984, %v3790
    %v4359 = vsel %vm4092, %v3985, %v3020
    %v4360 = vsel %vm4092, %v3986, %v3022
    %v4361 = vsel %vm4092, %v3987, %v3024
    %v4362 = vsel %vm4092, %v3988, %v3026
    %v4363 = vsel %vm4092, %v3989, %v3028
    %v4364 = vsel %vm4092, %v3990, %v3030
    %v4365 = vsel %vm4092, %v3991, %v3032
    %v4366 = vsel %vm4092, %v3992, %v3034
    %v4367 = vsel %vm4092, %v4336, %v3036
    %v4368 = vsel %vm4092, %v3994, %v3792
    %v4369 = vsel %vm4092, %v3995, %v3794
    %v4370 = vsel %vm4092, %v3996, %v3042
    %v4371 = vsel %vm4092, %v3997, %v3044
    %v4372 = vsel %vm4092, %v3998, %v3046
    %v4373 = vsel %vm4092, %v3999, %v3048
    %v4374 = vsel %vm4092, %v4000, %v3050
    %v4375 = vsel %vm4092, %v4001, %v3052
    %v4376 = vsel %vm4092, %v4002, %v3054
    %v4377 = vsel %vm4092, %v4003, %v3056
    %v4378 = vsel %vm4092, %v4337, %v3058
    %v4379 = vsel %vm4092, %v4005, %v3796
    %v4380 = vsel %vm4092, %v4006, %v3798
    %v4381 = vsel %vm4092, %v4007, %v3064
    %v4382 = vsel %vm4092, %v4008, %v3066
    %v4383 = vsel %vm4092, %v4009, %v3068
    %v4384 = vsel %vm4092, %v4010, %v3070
    %v4385 = vsel %vm4092, %v4011, %v3072
    %v4386 = vsel %vm4092, %v4012, %v3074
    %v4387 = vsel %vm4092, %v4013, %v3076
    %v4388 = vsel %vm4092, %v4014, %v3078
    %v4389 = vsel %vm4092, %v4338, %v3080
    %v4390 = vsel %vm4092, %v4016, %v3800
    %v4391 = vsel %vm4092, %v4017, %v3802
    %v4392 = vsel %vm4092, %v4018, %v3086
    %v4393 = vsel %vm4092, %v4019, %v3088
    %v4394 = vsel %vm4092, %v4020, %v3090
    %v4395 = vsel %vm4092, %v4021, %v3092
    %v4396 = vsel %vm4092, %v4022, %v3094
    %v4397 = vsel %vm4092, %v4023, %v3096
    %v4398 = vsel %vm4092, %v4024, %v3098
    %v4399 = vsel %vm4092, %v4025, %v3100
    %v4400 = vsel %vm4092, %v4339, %v3102
    %v4401 = vsel %vm4092, %v4027, %v3804
    %v4402 = vsel %vm4092, %v4028, %v3806
    %v4403 = vsel %vm4092, %v4029, %v3108
    %v4404 = vsel %vm4092, %v4030, %v3110
    %v4405 = vsel %vm4092, %v4031, %v3112
    %v4406 = vsel %vm4092, %v4032, %v3114
    %v4407 = vsel %vm4092, %v4033, %v3116
    %v4408 = vsel %vm4092, %v4034, %v3118
    %v4409 = vsel %vm4092, %v4035, %v3120
    %v4410 = vsel %vm4092, %v4036, %v3122
    %v4411 = vsel %vm4092, %v4340, %v3124
    %v4412 = vsel %vm4092, %v4038, %v3808
    %v4413 = vsel %vm4092, %v4039, %v3810
    %v4414 = vsel %vm4092, %v4040, %v3130
    %v4415 = vsel %vm4092, %v4041, %v3132
    %v4416 = vsel %vm4092, %v4042, %v3134
    %v4417 = vsel %vm4092, %v4043, %v3136
    %v4418 = vsel %vm4092, %v4044, %v3138
    %v4419 = vsel %vm4092, %v4045, %v3140
    %v4420 = vsel %vm4092, %v4046, %v3142
    %v4421 = vsel %vm4092, %v4047, %v3144
    %v4422 = vsel %vm4092, %v4341, %v3146
    %v4423 = vsel %vm4092, %v4049, %v3812
    %v4424 = vsel %vm4092, %v4050, %v3814
    %v4425 = vsel %vm4092, %v4051, %v3152
    %v4426 = vsel %vm4092, %v4052, %v3154
    %v4427 = vsel %vm4092, %v4053, %v3156
    %v4428 = vsel %vm4092, %v4054, %v3158
    %v4429 = vsel %vm4092, %v4055, %v3160
    %v4430 = vsel %vm4092, %v4056, %v3162
    %v4431 = vsel %vm4092, %v4057, %v3164
    %v4432 = vsel %vm4092, %v4058, %v3166
    %v4433 = vsel %vm4092, %v4342, %v3168
    %v4434 = vsel %vm4092, %v4060, %v3816
    %v4435 = vsel %vm4092, %v4061, %v3818
    %v4436 = vsel %vm4092, %v4062, %v3174
    %v4437 = vsel %vm4092, %v4063, %v3176
    %v4438 = vsel %vm4092, %v4064, %v3178
    %v4439 = vsel %vm4092, %v4065, %v3180
    %v4440 = vsel %vm4092, %v4066, %v3182
    %v4441 = vsel %vm4092, %v4067, %v3184
    %v4442 = vsel %vm4092, %v4068, %v3186
    %v4443 = vsel %vm4092, %v4069, %v3188
    %v4444 = vsel %vm4092, %v4343, %v3190
    %v4445 = vsel %vm4092, %v4071, %v3820
    %v4446 = vsel %vm4092, %v4072, %v3822
    %v4447 = vsel %vm4092, %v4073, %v3196
    %v4448 = vsel %vm4092, %v4074, %v3198
    %v4449 = vsel %vm4092, %v4075, %v3200
    %v4450 = vsel %vm4092, %v4076, %v3202
    %v4451 = vsel %vm4092, %v4077, %v3204
    %v4452 = vsel %vm4092, %v4078, %v3206
    %v4453 = vsel %vm4092, %v4079, %v3208
    %v4454 = vsel %vm4092, %v4080, %v3210
    %v4455 = vsel %vm4092, %v4344, %v3212
    %v4456 = vsel %vm4092, %v4082, %v3824
    %v4457 = vsel %vm4092, %v4083, %v3826
    %v4458 = vsel %vm4092, %v4084, %v3828
    %v4459 = vsel %vm4092, %v4085, %v3830
    %v4460 = vsel %vm4092, %v4086, %v3832
    %v4461 = vsel %vm4092, %v4087, %v3834
    %v4462 = vsel %vm4092, %v4088, %v3836
    %v4463 = vsel %vm4092, %v4089, %v3838
    %v4464 = vsel %vm4092, %v4090, %v3840
    %v4465 = vsel %vm4092, %v4091, %v3842
    %v4466 = vsel %vm4092, %v4345, %v3844
    %v4467 = vsel %vm4092, %v4346, %v3846
    %v4468 = vsel %vm4092, %v4347, %v3848
    %v4469 = vsel %vm4092, %v4348, %v3850
    %v4470 = vsel %vm4092, %v4349, %v3852
    %v4471 = vsel %vm4092, %v4350, %v3854
    %v4472 = vsel %vm4092, %v4351, %v3856
    %v4473 = vsel %vm4092, %v4352, %v3858
    %v4474 = vsel %vm4092, %v4353, %v3860
    %v4475 = vsel %vm4092, %v4354, %v3862
    %v4476 = vsel %vm4092, %v4355, %v3864
    %v4477 = vsel %vm4092, %v4356, %v3866
    %v4478 = vsel %vm4214, %v4357, %v3379
    %v4479 = vsel %vm4214, %v4358, %v3381
    %v4480 = vsel %vm4214, %v4359, %v3383
    %v4481 = vsel %vm4214, %v4360, %v3385
    %v4482 = vsel %vm4214, %v4361, %v3387
    %v4483 = vsel %vm4214, %v4362, %v3389
    %v4484 = vsel %vm4214, %v4363, %v3391
    %v4485 = vsel %vm4214, %v4364, %v3393
    %v4486 = vsel %vm4214, %v4365, %v3395
    %v4487 = vsel %vm4214, %v4366, %v3397
    %v4488 = vsel %vm4214, %v4367, %v3908
    %v4489 = vsel %vm4214, %v4368, %v3401
    %v4490 = vsel %vm4214, %v4369, %v3403
    %v4491 = vsel %vm4214, %v4370, %v3405
    %v4492 = vsel %vm4214, %v4371, %v3407
    %v4493 = vsel %vm4214, %v4372, %v3409
    %v4494 = vsel %vm4214, %v4373, %v3411
    %v4495 = vsel %vm4214, %v4374, %v3413
    %v4496 = vsel %vm4214, %v4375, %v3415
    %v4497 = vsel %vm4214, %v4376, %v3417
    %v4498 = vsel %vm4214, %v4377, %v3419
    %v4499 = vsel %vm4214, %v4378, %v3910
    %v4500 = vsel %vm4214, %v4379, %v3423
    %v4501 = vsel %vm4214, %v4380, %v3425
    %v4502 = vsel %vm4214, %v4381, %v3427
    %v4503 = vsel %vm4214, %v4382, %v3429
    %v4504 = vsel %vm4214, %v4383, %v3431
    %v4505 = vsel %vm4214, %v4384, %v3433
    %v4506 = vsel %vm4214, %v4385, %v3435
    %v4507 = vsel %vm4214, %v4386, %v3437
    %v4508 = vsel %vm4214, %v4387, %v3439
    %v4509 = vsel %vm4214, %v4388, %v3441
    %v4510 = vsel %vm4214, %v4389, %v3912
    %v4511 = vsel %vm4214, %v4390, %v3445
    %v4512 = vsel %vm4214, %v4391, %v3447
    %v4513 = vsel %vm4214, %v4392, %v3449
    %v4514 = vsel %vm4214, %v4393, %v3451
    %v4515 = vsel %vm4214, %v4394, %v3453
    %v4516 = vsel %vm4214, %v4395, %v3455
    %v4517 = vsel %vm4214, %v4396, %v3457
    %v4518 = vsel %vm4214, %v4397, %v3459
    %v4519 = vsel %vm4214, %v4398, %v3461
    %v4520 = vsel %vm4214, %v4399, %v3463
    %v4521 = vsel %vm4214, %v4400, %v3914
    %v4522 = vsel %vm4214, %v4401, %v3467
    %v4523 = vsel %vm4214, %v4402, %v3469
    %v4524 = vsel %vm4214, %v4403, %v3471
    %v4525 = vsel %vm4214, %v4404, %v3473
    %v4526 = vsel %vm4214, %v4405, %v3475
    %v4527 = vsel %vm4214, %v4406, %v3477
    %v4528 = vsel %vm4214, %v4407, %v3479
    %v4529 = vsel %vm4214, %v4408, %v3481
    %v4530 = vsel %vm4214, %v4409, %v3483
    %v4531 = vsel %vm4214, %v4410, %v3485
    %v4532 = vsel %vm4214, %v4411, %v3916
    %v4533 = vsel %vm4214, %v4412, %v3489
    %v4534 = vsel %vm4214, %v4413, %v3491
    %v4535 = vsel %vm4214, %v4414, %v3493
    %v4536 = vsel %vm4214, %v4415, %v3495
    %v4537 = vsel %vm4214, %v4416, %v3497
    %v4538 = vsel %vm4214, %v4417, %v3499
    %v4539 = vsel %vm4214, %v4418, %v3501
    %v4540 = vsel %vm4214, %v4419, %v3503
    %v4541 = vsel %vm4214, %v4420, %v3505
    %v4542 = vsel %vm4214, %v4421, %v3507
    %v4543 = vsel %vm4214, %v4422, %v3918
    %v4544 = vsel %vm4214, %v4423, %v3511
    %v4545 = vsel %vm4214, %v4424, %v3513
    %v4546 = vsel %vm4214, %v4425, %v3515
    %v4547 = vsel %vm4214, %v4426, %v3517
    %v4548 = vsel %vm4214, %v4427, %v3519
    %v4549 = vsel %vm4214, %v4428, %v3521
    %v4550 = vsel %vm4214, %v4429, %v3523
    %v4551 = vsel %vm4214, %v4430, %v3525
    %v4552 = vsel %vm4214, %v4431, %v3527
    %v4553 = vsel %vm4214, %v4432, %v3529
    %v4554 = vsel %vm4214, %v4433, %v3920
    %v4555 = vsel %vm4214, %v4434, %v3533
    %v4556 = vsel %vm4214, %v4435, %v3535
    %v4557 = vsel %vm4214, %v4436, %v3537
    %v4558 = vsel %vm4214, %v4437, %v3539
    %v4559 = vsel %vm4214, %v4438, %v3541
    %v4560 = vsel %vm4214, %v4439, %v3543
    %v4561 = vsel %vm4214, %v4440, %v3545
    %v4562 = vsel %vm4214, %v4441, %v3547
    %v4563 = vsel %vm4214, %v4442, %v3549
    %v4564 = vsel %vm4214, %v4443, %v3551
    %v4565 = vsel %vm4214, %v4444, %v3922
    %v4566 = vsel %vm4214, %v4445, %v3555
    %v4567 = vsel %vm4214, %v4446, %v3557
    %v4568 = vsel %vm4214, %v4447, %v3559
    %v4569 = vsel %vm4214, %v4448, %v3561
    %v4570 = vsel %vm4214, %v4449, %v3563
    %v4571 = vsel %vm4214, %v4450, %v3565
    %v4572 = vsel %vm4214, %v4451, %v3567
    %v4573 = vsel %vm4214, %v4452, %v3569
    %v4574 = vsel %vm4214, %v4453, %v3571
    %v4575 = vsel %vm4214, %v4454, %v3573
    %v4576 = vsel %vm4214, %v4455, %v3924
    %v4577 = vsel %vm4214, %v4456, %v3577
    %v4578 = vsel %vm4214, %v4457, %v3579
    %v4579 = vsel %vm4214, %v4458, %v3581
    %v4580 = vsel %vm4214, %v4459, %v3583
    %v4581 = vsel %vm4214, %v4460, %v3585
    %v4582 = vsel %vm4214, %v4461, %v3587
    %v4583 = vsel %vm4214, %v4462, %v3589
    %v4584 = vsel %vm4214, %v4463, %v3591
    %v4585 = vsel %vm4214, %v4464, %v3593
    %v4586 = vsel %vm4214, %v4465, %v3595
    %v4587 = vsel %vm4214, %v4466, %v3926
    %v4588 = vsel %vm4214, %v4467, %v3928
    %v4589 = vsel %vm4214, %v4468, %v3930
    %v4590 = vsel %vm4214, %v4469, %v3932
    %v4591 = vsel %vm4214, %v4470, %v3934
    %v4592 = vsel %vm4214, %v4471, %v3936
    %v4593 = vsel %vm4214, %v4472, %v3938
    %v4594 = vsel %vm4214, %v4473, %v3940
    %v4595 = vsel %vm4214, %v4474, %v3942
    %v4596 = vsel %vm4214, %v4475, %v3944
    %v4597 = vsel %vm4214, %v4476, %v3946
    %v4598 = vsel %vm4214, %v4477, %v3948
    %v4599 = vld [vmem:[%s3] sm:$0xff]
    %v4600 = vld [vmem:[%s3 + $0x8] sm:$0xff]
    %v4601 = vld [vmem:[%s3 + $0x10] sm:$0xff]
    %v4602 = vld [vmem:[%s3 + $0x18] sm:$0xff]
    %v4603 = vld [vmem:[%s3 + $0x20] sm:$0xff]
    %v4604 = vld [vmem:[%s3 + $0x28] sm:$0xff]
    %v4605 = vld [vmem:[%s3 + $0x30] sm:$0xff]
    %v4606 = vld [vmem:[%s3 + $0x38] sm:$0xff]
    %v4607 = vld [vmem:[%s3 + $0x40] sm:$0xff]
    %v4608 = vld [vmem:[%s3 + $0x48] sm:$0xff]
    %v4609 = vld [vmem:[%s3 + $0x50] sm:$0xff]
    %v4610 = vld [vmem:[%s3 + $0x58] sm:$0xff]
    %v4611 = vld [vmem:[%s3 + $0x60] sm:$0xff]
    %v4612 = vld [vmem:[%s3 + $0x68] sm:$0xff]
    %v4613 = vld [vmem:[%s3 + $0x70] sm:$0xff]
    %v4614 = vld [vmem:[%s3 + $0x78] sm:$0xff]
    %v4615 = vld [vmem:[%s3 + $0x80] sm:$0xff]
    %v4616 = vld [vmem:[%s3 + $0x88] sm:$0xff]
    %v4617 = vld [vmem:[%s3 + $0x90] sm:$0xff]
    %v4618 = vld [vmem:[%s3 + $0x98] sm:$0xff]
    %v4619 = vld [vmem:[%s3 + $0xa0] sm:$0xff]
    %v4620 = vld [vmem:[%s3 + $0xa8] sm:$0xff]
    %v4621 = vld [vmem:[%s3 + $0xb0] sm:$0xff]
    %v4622 = vld [vmem:[%s3 + $0xb8] sm:$0xff]
    %v4623 = vld [vmem:[%s3 + $0xc0] sm:$0xff]
    %v4624 = vld [vmem:[%s3 + $0xc8] sm:$0xff]
    %v4625 = vld [vmem:[%s3 + $0xd0] sm:$0xff]
    %v4626 = vld [vmem:[%s3 + $0xd8] sm:$0xff]
    %v4627 = vld [vmem:[%s3 + $0xe0] sm:$0xff]
    %v4628 = vld [vmem:[%s3 + $0xe8] sm:$0xff]
    %v4629 = vld [vmem:[%s3 + $0xf0] sm:$0xff]
    %v4630 = vld [vmem:[%s3 + $0xf8] sm:$0xff]
    %v4631 = vld [vmem:[%s3 + $0x100] sm:$0xff]
    %v4632 = vld [vmem:[%s3 + $0x108] sm:$0xff]
    %v4633 = vld [vmem:[%s3 + $0x110] sm:$0xff]
    %v4634 = vld [vmem:[%s3 + $0x118] sm:$0xff]
    %v4635 = vsel %vm3970, %v1645, 0
    %v4637 = vsel %vm3970, %v2310, 0
    %v4639 = vsel %vm3970, %v1762, 0
    %v4641 = vsel %vm3970, %v2361, 0
    %v4643 = vsel %vm3970, %v1879, 0
    %v4645 = vsel %vm3970, %v2412, 0
    %v4647 = vsel %vm3970, %v1996, 0
    %v4649 = vsel %vm3970, %v2463, 0
    %v4651 = vsel %vm3970, %v2113, 0
    %v4653 = vsel %vm3970, %v2514, 0
    %v4655 = vsel %vm3970, %v2230, 0
    %v4657 = vsel %vm3970, %v1646, 0
    %v4659 = vsel %vm3970, %v2312, 0
    %v4661 = vsel %vm3970, %v1763, 0
    %v4663 = vsel %vm3970, %v2363, 0
    %v4665 = vsel %vm3970, %v1880, 0
    %v4667 = vsel %vm3970, %v2414, 0
    %v4669 = vsel %vm3970, %v1997, 0
    %v4671 = vsel %vm3970, %v2465, 0
    %v4673 = vsel %vm3970, %v2114, 0
    %v4675 = vsel %vm3970, %v2516, 0
    %v4677 = vsel %vm3970, %v2231, 0
    %v4679 = vsel %vm3970, %v1647, 0
    %v4681 = vsel %vm3970, %v2314, 0
    %v4683 = vsel %vm3970, %v1764, 0
    %v4685 = vsel %vm3970, %v2365, 0
    %v4687 = vsel %vm3970, %v1881, 0
    %v4689 = vsel %vm3970, %v2416, 0
    %v4691 = vsel %vm3970, %v1998, 0
    %v4693 = vsel %vm3970, %v2467, 0
    %v4695 = vsel %vm3970, %v2115, 0
    %v4697 = vsel %vm3970, %v2518, 0
    %v4699 = vsel %vm3970, %v2232, 0
    %v4701 = vsel %vm3970, %v1648, 0
    %v4703 = vsel %vm3970, %v2316, 0
    %v4705 = vsel %vm3970, %v1765, 0
    %v4707 = vsel %vm3970, %v2367, 0
    %v4709 = vsel %vm3970, %v1882, 0
    %v4711 = vsel %vm3970, %v2418, 0
    %v4713 = vsel %vm3970, %v1999, 0
    %v4715 = vsel %vm3970, %v2469, 0
    %v4717 = vsel %vm3970, %v2116, 0
    %v4719 = vsel %vm3970, %v2520, 0
    %v4721 = vsel %vm3970, %v2233, 0
    %v4723 = vsel %vm3970, %v1649, 0
    %v4725 = vsel %vm3970, %v2318, 0
    %v4727 = vsel %vm3970, %v1766, 0
    %v4729 = vsel %vm3970, %v2369, 0
    %v4731 = vsel %vm3970, %v1883, 0
    %v4733 = vsel %vm3970, %v2420, 0
    %v4735 = vsel %vm3970, %v2000, 0
    %v4737 = vsel %vm3970, %v2471, 0
    %v4739 = vsel %vm3970, %v2117, 0
    %v4741 = vsel %vm3970, %v2522, 0
    %v4743 = vsel %vm3970, %v2234, 0
    %v4745 = vsel %vm3970, %v1650, 0
    %v4747 = vsel %vm3970, %v2320, 0
    %v4749 = vsel %vm3970, %v1767, 0
    %v4751 = vsel %vm3970, %v2371, 0
    %v4753 = vsel %vm3970, %v1884, 0
    %v4755 = vsel %vm3970, %v2422, 0
    %v4757 = vsel %vm3970, %v2001, 0
    %v4759 = vsel %vm3970, %v2473, 0
    %v4761 = vsel %vm3970, %v2118, 0
    %v4763 = vsel %vm3970, %v2524, 0
    %v4765 = vsel %vm3970, %v2235, 0
    %v4767 = vsel %vm3970, %v1651, 0
    %v4769 = vsel %vm3970, %v2322, 0
    %v4771 = vsel %vm3970, %v1768, 0
    %v4773 = vsel %vm3970, %v2373, 0
    %v4775 = vsel %vm3970, %v1885, 0
    %v4777 = vsel %vm3970, %v2424, 0
    %v4779 = vsel %vm3970, %v2002, 0
    %v4781 = vsel %vm3970, %v2475, 0
    %v4783 = vsel %vm3970, %v2119, 0
    %v4785 = vsel %vm3970, %v2526, 0
    %v4787 = vsel %vm3970, %v2236, 0
    %v4789 = vsel %vm3970, %v1652, 0
    %v4791 = vsel %vm3970, %v2324, 0
    %v4793 = vsel %vm3970, %v1769, 0
    %v4795 = vsel %vm3970, %v2375, 0
    %v4797 = vsel %vm3970, %v1886, 0
    %v4799 = vsel %vm3970, %v2426, 0
    %v4801 = vsel %vm3970, %v2003, 0
    %v4803 = vsel %vm3970, %v2477, 0
    %v4805 = vsel %vm3970, %v2120, 0
    %v4807 = vsel %vm3970, %v2528, 0
    %v4809 = vsel %vm3970, %v2237, 0
    %v4811 = vsel %vm3970, %v1653, 0
    %v4813 = vsel %vm3970, %v2326, 0
    %v4815 = vsel %vm3970, %v1770, 0
    %v4817 = vsel %vm3970, %v2377, 0
    %v4819 = vsel %vm3970, %v1887, 0
    %v4821 = vsel %vm3970, %v2428, 0
    %v4823 = vsel %vm3970, %v2004, 0
    %v4825 = vsel %vm3970, %v2479, 0
    %v4827 = vsel %vm3970, %v2121, 0
    %v4829 = vsel %vm3970, %v2530, 0
    %v4831 = vsel %vm3970, %v2238, 0
    %v4833 = vsel %vm3970, %v1654, 0
    %v4835 = vsel %vm3970, %v2328, 0
    %v4837 = vsel %vm3970, %v1771, 0
    %v4839 = vsel %vm3970, %v2379, 0
    %v4841 = vsel %vm3970, %v1888, 0
    %v4843 = vsel %vm3970, %v2430, 0
    %v4845 = vsel %vm3970, %v2005, 0
    %v4847 = vsel %vm3970, %v2481, 0
    %v4849 = vsel %vm3970, %v2122, 0
    %v4851 = vsel %vm3970, %v2532, 0
    %v4853 = vsel %vm3970, %v2239, 0
    %v4855 = vsel %vm3970, %v1655, 0
    %v4857 = vsel %vm3970, %v2330, 0
    %v4859 = vsel %vm3970, %v1772, 0
    %v4861 = vsel %vm3970, %v2381, 0
    %v4863 = vsel %vm3970, %v1889, 0
    %v4865 = vsel %vm3970, %v2432, 0
    %v4867 = vsel %vm3970, %v2006, 0
    %v4869 = vsel %vm3970, %v2483, 0
    %v4871 = vsel %vm3970, %v2123, 0
    %v4873 = vsel %vm3970, %v2534, 0
    %v4876 = vsel %vm3970, %v2240, 0
    %4878 = vmatprep.subr.mxu0 0.0
    %4879 = vmatpush1.msra.mxu0 %v4614
    %4880 = vmatprep.subr.mxu0 0.0
    %4881 = vmatpush1.msra.mxu0 %v4613
    %4882 = vmatprep.subr.mxu0 0.0
    %4883 = vmatpush1.msra.mxu0 %v4612
    %4884 = vmatprep.subr.mxu0 0.0
    %4885 = vmatpush1.msra.mxu0 %v4611
    %4886 = vmatprep.subr.mxu0 0.0
    %4887 = vmatpush1.msra.mxu0 %v4610
    %4888 = vmatprep.subr.mxu0 0.0
    %4889 = vmatpush1.msra.mxu0 %v4609
    %4890 = vmatprep.subr.mxu0 0.0
    %4891 = vmatpush1.msra.mxu0 %v4608
    %4892 = vmatprep.subr.mxu0 0.0
    %4893 = vmatpush1.msra.mxu0 %v4607
    %4894 = vmatprep.subr.mxu0 0.0
    %4895 = vmatpush1.msra.mxu0 %v4606
    %4896 = vmatprep.subr.mxu0 0.0
    %4897 = vmatpush1.msra.mxu0 %v4605
    %4898 = vmatprep.subr.mxu0 0.0
    %4899 = vmatpush1.msra.mxu0 %v4604
    %4900 = vmatprep.subr.mxu0 0.0
    %4901 = vmatpush1.msra.mxu0 %v4603
    %4902 = vmatprep.subr.mxu0 0.0
    %4903 = vmatpush1.msra.mxu0 %v4602
    %4904 = vmatprep.subr.mxu0 0.0
    %4905 = vmatpush1.msra.mxu0 %v4601
    %4906 = vmatprep.subr.mxu0 0.0
    %4907 = vmatpush1.msra.mxu0 %v4600
    %4908 = vmatprep.subr.mxu0 0.0
    %4909 = vmatpush1.msra.mxu0 %v4599
    %4910 = vmatprep.subr.mxu0 0.0
    %4911 = vmatpush2.msra.mxu0 %v4630
    %4912 = vmatprep.subr.mxu0 0.0
    %4913 = vmatpush2.msra.mxu0 %v4629
    %4914 = vmatprep.subr.mxu0 0.0
    %4915 = vmatpush2.msra.mxu0 %v4628
    %4916 = vmatprep.subr.mxu0 0.0
    %4917 = vmatpush2.msra.mxu0 %v4627
    %4918 = vmatprep.subr.mxu0 0.0
    %4919 = vmatpush2.msra.mxu0 %v4626
    %4920 = vmatprep.subr.mxu0 0.0
    %4921 = vmatpush2.msra.mxu0 %v4625
    %4922 = vmatprep.subr.mxu0 0.0
    %4923 = vmatpush2.msra.mxu0 %v4624
    %4924 = vmatprep.subr.mxu0 0.0
    %4925 = vmatpush2.msra.mxu0 %v4623
    %4926 = vmatprep.subr.mxu0 0.0
    %4927 = vmatpush2.msra.mxu0 %v4622
    %4928 = vmatprep.subr.mxu0 0.0
    %4929 = vmatpush2.msra.mxu0 %v4621
    %4930 = vmatprep.subr.mxu0 0.0
    %4931 = vmatpush2.msra.mxu0 %v4620
    %4932 = vmatprep.subr.mxu0 0.0
    %4933 = vmatpush2.msra.mxu0 %v4619
    %4934 = vmatprep.subr.mxu0 0.0
    %4935 = vmatpush2.msra.mxu0 %v4618
    %4936 = vmatprep.subr.mxu0 0.0
    %4937 = vmatpush2.msra.mxu0 %v4617
    %4938 = vmatprep.subr.mxu0 0.0
    %4939 = vmatpush2.msra.mxu0 %v4616
    %4940 = vmatprep.subr.mxu0 0.0
    %4941 = vmatpush2.msra.mxu0 %v4615
    %4942 = vmatprep.mubr.f32.mxu0 %v4478
    %4943 = vmatmul.mubr.f32.gmra.mxu0 %v4215
    %v4944 = vpop.f32.mrf.mxu0
    %v4945 = vadd.f32 0.0, %v4944
    %v4946 = vpop.f32.mrf.mxu0
    %4947 = vmatprep.mubr.f32.mxu0 %v4479
    %4948 = vmatmul.mubr.f32.gmra.mxu0 %v4216
    %v4949 = vpop.f32.mrf.mxu0
    %v4950 = vadd.f32 0.0, %v4949
    %v4951 = vpop.f32.mrf.mxu0
    %4952 = vmatprep.mubr.f32.mxu0 %v4480
    %4953 = vmatmul.mubr.f32.gmra.mxu0 %v4217
    %v4954 = vpop.f32.mrf.mxu0
    %v4955 = vadd.f32 0.0, %v4954
    %v4956 = vpop.f32.mrf.mxu0
    %4957 = vmatprep.mubr.f32.mxu0 %v4481
    %4958 = vmatmul.mubr.f32.gmra.mxu0 %v4218
    %v4959 = vpop.f32.mrf.mxu0
    %v4960 = vadd.f32 0.0, %v4959
    %v4961 = vpop.f32.mrf.mxu0
    %4962 = vmatprep.mubr.f32.mxu0 %v4482
    %4963 = vmatmul.mubr.f32.gmra.mxu0 %v4219
    %v4964 = vpop.f32.mrf.mxu0
    %v4965 = vadd.f32 0.0, %v4964
    %v4966 = vpop.f32.mrf.mxu0
    %4967 = vmatprep.mubr.f32.mxu0 %v4483
    %4968 = vmatmul.mubr.f32.gmra.mxu0 %v4220
    %v4969 = vpop.f32.mrf.mxu0
    %v4970 = vadd.f32 0.0, %v4969
    %v4971 = vpop.f32.mrf.mxu0
    %4972 = vmatprep.mubr.f32.mxu0 %v4484
    %4973 = vmatmul.mubr.f32.gmra.mxu0 %v4221
    %v4974 = vpop.f32.mrf.mxu0
    %v4975 = vadd.f32 0.0, %v4974
    %v4976 = vpop.f32.mrf.mxu0
    %4977 = vmatprep.mubr.f32.mxu0 %v4485
    %4978 = vmatmul.mubr.f32.gmra.mxu0 %v4222
    %v4979 = vpop.f32.mrf.mxu0
    %v4980 = vadd.f32 0.0, %v4979
    %v4981 = vpop.f32.mrf.mxu0
    %4982 = vmatprep.mubr.f32.mxu0 %v4486
    %4983 = vmatmul.mubr.f32.gmra.mxu0 %v4223
    %v4984 = vpop.f32.mrf.mxu0
    %v4985 = vadd.f32 0.0, %v4984
    %v4986 = vpop.f32.mrf.mxu0
    %4987 = vmatprep.mubr.f32.mxu0 %v4487
    %4988 = vmatmul.mubr.f32.gmra.mxu0 %v4224
    %v4989 = vpop.f32.mrf.mxu0
    %v4990 = vadd.f32 0.0, %v4989
    %v4991 = vpop.f32.mrf.mxu0
    %4992 = vmatprep.mubr.f32.mxu0 %v4488
    %4993 = vmatmul.mubr.f32.gmra.mxu0 %v4225
    %v4994 = vpop.f32.mrf.mxu0
    %v4995 = vpop.f32.mrf.mxu0
    %4996 = vmatprep.mubr.f32.mxu0 %v4489
    %4997 = vmatmul.mubr.f32.gmra.mxu0 %v4226
    %v4998 = vpop.f32.mrf.mxu0
    %v4999 = vadd.f32 0.0, %v4998
    %v5000 = vpop.f32.mrf.mxu0
    %5001 = vmatprep.mubr.f32.mxu0 %v4490
    %5002 = vmatmul.mubr.f32.gmra.mxu0 %v4227
    %v5003 = vpop.f32.mrf.mxu0
    %v5004 = vadd.f32 0.0, %v5003
    %v5005 = vpop.f32.mrf.mxu0
    %5006 = vmatprep.mubr.f32.mxu0 %v4491
    %5007 = vmatmul.mubr.f32.gmra.mxu0 %v4228
    %v5008 = vpop.f32.mrf.mxu0
    %v5009 = vadd.f32 0.0, %v5008
    %v5010 = vpop.f32.mrf.mxu0
    %5011 = vmatprep.mubr.f32.mxu0 %v4492
    %5012 = vmatmul.mubr.f32.gmra.mxu0 %v4229
    %v5013 = vpop.f32.mrf.mxu0
    %v5014 = vadd.f32 0.0, %v5013
    %v5015 = vpop.f32.mrf.mxu0
    %5016 = vmatprep.mubr.f32.mxu0 %v4493
    %5017 = vmatmul.mubr.f32.gmra.mxu0 %v4230
    %v5018 = vpop.f32.mrf.mxu0
    %v5019 = vadd.f32 0.0, %v5018
    %v5020 = vpop.f32.mrf.mxu0
    %5021 = vmatprep.mubr.f32.mxu0 %v4494
    %5022 = vmatmul.mubr.f32.gmra.mxu0 %v4231
    %v5023 = vpop.f32.mrf.mxu0
    %v5024 = vadd.f32 0.0, %v5023
    %v5025 = vpop.f32.mrf.mxu0
    %5026 = vmatprep.mubr.f32.mxu0 %v4495
    %5027 = vmatmul.mubr.f32.gmra.mxu0 %v4232
    %v5028 = vpop.f32.mrf.mxu0
    %v5029 = vadd.f32 0.0, %v5028
    %v5030 = vpop.f32.mrf.mxu0
    %5031 = vmatprep.mubr.f32.mxu0 %v4496
    %5032 = vmatmul.mubr.f32.gmra.mxu0 %v4233
    %v5033 = vpop.f32.mrf.mxu0
    %v5034 = vadd.f32 0.0, %v5033
    %v5035 = vpop.f32.mrf.mxu0
    %5036 = vmatprep.mubr.f32.mxu0 %v4497
    %5037 = vmatmul.mubr.f32.gmra.mxu0 %v4234
    %v5038 = vpop.f32.mrf.mxu0
    %v5039 = vadd.f32 0.0, %v5038
    %v5040 = vpop.f32.mrf.mxu0
    %5041 = vmatprep.mubr.f32.mxu0 %v4498
    %5042 = vmatmul.mubr.f32.gmra.mxu0 %v4235
    %v5043 = vpop.f32.mrf.mxu0
    %v5044 = vadd.f32 0.0, %v5043
    %v5045 = vpop.f32.mrf.mxu0
    %5046 = vmatprep.mubr.f32.mxu0 %v4499
    %5047 = vmatmul.mubr.f32.gmra.mxu0 %v4236
    %v5048 = vpop.f32.mrf.mxu0
    %v5049 = vpop.f32.mrf.mxu0
    %5050 = vmatprep.mubr.f32.mxu0 %v4500
    %5051 = vmatmul.mubr.f32.gmra.mxu0 %v4237
    %v5052 = vpop.f32.mrf.mxu0
    %v5053 = vadd.f32 0.0, %v5052
    %v5054 = vpop.f32.mrf.mxu0
    %5055 = vmatprep.mubr.f32.mxu0 %v4501
    %5056 = vmatmul.mubr.f32.gmra.mxu0 %v4238
    %v5057 = vpop.f32.mrf.mxu0
    %v5058 = vadd.f32 0.0, %v5057
    %v5059 = vpop.f32.mrf.mxu0
    %5060 = vmatprep.mubr.f32.mxu0 %v4502
    %5061 = vmatmul.mubr.f32.gmra.mxu0 %v4239
    %v5062 = vpop.f32.mrf.mxu0
    %v5063 = vadd.f32 0.0, %v5062
    %v5064 = vpop.f32.mrf.mxu0
    %5065 = vmatprep.mubr.f32.mxu0 %v4503
    %5066 = vmatmul.mubr.f32.gmra.mxu0 %v4240
    %v5067 = vpop.f32.mrf.mxu0
    %v5068 = vadd.f32 0.0, %v5067
    %v5069 = vpop.f32.mrf.mxu0
    %5070 = vmatprep.mubr.f32.mxu0 %v4504
    %5071 = vmatmul.mubr.f32.gmra.mxu0 %v4241
    %v5072 = vpop.f32.mrf.mxu0
    %v5073 = vadd.f32 0.0, %v5072
    %v5074 = vpop.f32.mrf.mxu0
    %5075 = vmatprep.mubr.f32.mxu0 %v4505
    %5076 = vmatmul.mubr.f32.gmra.mxu0 %v4242
    %v5077 = vpop.f32.mrf.mxu0
    %v5078 = vadd.f32 0.0, %v5077
    %v5079 = vpop.f32.mrf.mxu0
    %5080 = vmatprep.mubr.f32.mxu0 %v4506
    %5081 = vmatmul.mubr.f32.gmra.mxu0 %v4243
    %v5082 = vpop.f32.mrf.mxu0
    %v5083 = vadd.f32 0.0, %v5082
    %v5084 = vpop.f32.mrf.mxu0
    %5085 = vmatprep.mubr.f32.mxu0 %v4507
    %5086 = vmatmul.mubr.f32.gmra.mxu0 %v4244
    %v5087 = vpop.f32.mrf.mxu0
    %v5088 = vadd.f32 0.0, %v5087
    %v5089 = vpop.f32.mrf.mxu0
    %5090 = vmatprep.mubr.f32.mxu0 %v4508
    %5091 = vmatmul.mubr.f32.gmra.mxu0 %v4245
    %v5092 = vpop.f32.mrf.mxu0
    %v5093 = vadd.f32 0.0, %v5092
    %v5094 = vpop.f32.mrf.mxu0
    %5095 = vmatprep.mubr.f32.mxu0 %v4509
    %5096 = vmatmul.mubr.f32.gmra.mxu0 %v4246
    %v5097 = vpop.f32.mrf.mxu0
    %v5098 = vadd.f32 0.0, %v5097
    %v5099 = vpop.f32.mrf.mxu0
    %5100 = vmatprep.mubr.f32.mxu0 %v4510
    %5101 = vmatmul.mubr.f32.gmra.mxu0 %v4247
    %v5102 = vpop.f32.mrf.mxu0
    %v5103 = vpop.f32.mrf.mxu0
    %5104 = vmatprep.mubr.f32.mxu0 %v4511
    %5105 = vmatmul.mubr.f32.gmra.mxu0 %v4248
    %v5106 = vpop.f32.mrf.mxu0
    %v5107 = vadd.f32 0.0, %v5106
    %v5108 = vpop.f32.mrf.mxu0
    %5109 = vmatprep.mubr.f32.mxu0 %v4512
    %5110 = vmatmul.mubr.f32.gmra.mxu0 %v4249
    %v5111 = vpop.f32.mrf.mxu0
    %v5112 = vadd.f32 0.0, %v5111
    %v5113 = vpop.f32.mrf.mxu0
    %5114 = vmatprep.mubr.f32.mxu0 %v4513
    %5115 = vmatmul.mubr.f32.gmra.mxu0 %v4250
    %v5116 = vpop.f32.mrf.mxu0
    %v5117 = vadd.f32 0.0, %v5116
    %v5118 = vpop.f32.mrf.mxu0
    %5119 = vmatprep.mubr.f32.mxu0 %v4514
    %5120 = vmatmul.mubr.f32.gmra.mxu0 %v4251
    %v5121 = vpop.f32.mrf.mxu0
    %v5122 = vadd.f32 0.0, %v5121
    %v5123 = vpop.f32.mrf.mxu0
    %5124 = vmatprep.mubr.f32.mxu0 %v4515
    %5125 = vmatmul.mubr.f32.gmra.mxu0 %v4252
    %v5126 = vpop.f32.mrf.mxu0
    %v5127 = vadd.f32 0.0, %v5126
    %v5128 = vpop.f32.mrf.mxu0
    %5129 = vmatprep.mubr.f32.mxu0 %v4516
    %5130 = vmatmul.mubr.f32.gmra.mxu0 %v4253
    %v5131 = vpop.f32.mrf.mxu0
    %v5132 = vadd.f32 0.0, %v5131
    %v5133 = vpop.f32.mrf.mxu0
    %5134 = vmatprep.mubr.f32.mxu0 %v4517
    %5135 = vmatmul.mubr.f32.gmra.mxu0 %v4254
    %v5136 = vpop.f32.mrf.mxu0
    %v5137 = vadd.f32 0.0, %v5136
    %v5138 = vpop.f32.mrf.mxu0
    %5139 = vmatprep.mubr.f32.mxu0 %v4518
    %5140 = vmatmul.mubr.f32.gmra.mxu0 %v4255
    %v5141 = vpop.f32.mrf.mxu0
    %v5142 = vadd.f32 0.0, %v5141
    %v5143 = vpop.f32.mrf.mxu0
    %5144 = vmatprep.mubr.f32.mxu0 %v4519
    %5145 = vmatmul.mubr.f32.gmra.mxu0 %v4256
    %v5146 = vpop.f32.mrf.mxu0
    %v5147 = vadd.f32 0.0, %v5146
    %v5148 = vpop.f32.mrf.mxu0
    %5149 = vmatprep.mubr.f32.mxu0 %v4520
    %5150 = vmatmul.mubr.f32.gmra.mxu0 %v4257
    %v5151 = vpop.f32.mrf.mxu0
    %v5152 = vadd.f32 0.0, %v5151
    %v5153 = vpop.f32.mrf.mxu0
    %5154 = vmatprep.mubr.f32.mxu0 %v4521
    %5155 = vmatmul.mubr.f32.gmra.mxu0 %v4258
    %v5156 = vpop.f32.mrf.mxu0
    %v5157 = vpop.f32.mrf.mxu0
    %5158 = vmatprep.mubr.f32.mxu0 %v4522
    %5159 = vmatmul.mubr.f32.gmra.mxu0 %v4259
    %v5160 = vpop.f32.mrf.mxu0
    %v5161 = vadd.f32 0.0, %v5160
    %v5162 = vpop.f32.mrf.mxu0
    %5163 = vmatprep.mubr.f32.mxu0 %v4523
    %5164 = vmatmul.mubr.f32.gmra.mxu0 %v4260
    %v5165 = vpop.f32.mrf.mxu0
    %v5166 = vadd.f32 0.0, %v5165
    %v5167 = vpop.f32.mrf.mxu0
    %5168 = vmatprep.mubr.f32.mxu0 %v4524
    %5169 = vmatmul.mubr.f32.gmra.mxu0 %v4261
    %v5170 = vpop.f32.mrf.mxu0
    %v5171 = vadd.f32 0.0, %v5170
    %v5172 = vpop.f32.mrf.mxu0
    %5173 = vmatprep.mubr.f32.mxu0 %v4525
    %5174 = vmatmul.mubr.f32.gmra.mxu0 %v4262
    %v5175 = vpop.f32.mrf.mxu0
    %v5176 = vadd.f32 0.0, %v5175
    %v5177 = vpop.f32.mrf.mxu0
    %5178 = vmatprep.mubr.f32.mxu0 %v4526
    %5179 = vmatmul.mubr.f32.gmra.mxu0 %v4263
    %v5180 = vpop.f32.mrf.mxu0
    %v5181 = vadd.f32 0.0, %v5180
    %v5182 = vpop.f32.mrf.mxu0
    %5183 = vmatprep.mubr.f32.mxu0 %v4527
    %5184 = vmatmul.mubr.f32.gmra.mxu0 %v4264
    %v5185 = vpop.f32.mrf.mxu0
    %v5186 = vadd.f32 0.0, %v5185
    %v5187 = vpop.f32.mrf.mxu0
    %5188 = vmatprep.mubr.f32.mxu0 %v4528
    %5189 = vmatmul.mubr.f32.gmra.mxu0 %v4265
    %v5190 = vpop.f32.mrf.mxu0
    %v5191 = vadd.f32 0.0, %v5190
    %v5192 = vpop.f32.mrf.mxu0
    %5193 = vmatprep.mubr.f32.mxu0 %v4529
    %5194 = vmatmul.mubr.f32.gmra.mxu0 %v4266
    %v5195 = vpop.f32.mrf.mxu0
    %v5196 = vadd.f32 0.0, %v5195
    %v5197 = vpop.f32.mrf.mxu0
    %5198 = vmatprep.mubr.f32.mxu0 %v4530
    %5199 = vmatmul.mubr.f32.gmra.mxu0 %v4267
    %v5200 = vpop.f32.mrf.mxu0
    %v5201 = vadd.f32 0.0, %v5200
    %v5202 = vpop.f32.mrf.mxu0
    %5203 = vmatprep.mubr.f32.mxu0 %v4531
    %5204 = vmatmul.mubr.f32.gmra.mxu0 %v4268
    %v5205 = vpop.f32.mrf.mxu0
    %v5206 = vadd.f32 0.0, %v5205
    %v5207 = vpop.f32.mrf.mxu0
    %5208 = vmatprep.mubr.f32.mxu0 %v4532
    %5209 = vmatmul.mubr.f32.gmra.mxu0 %v4269
    %v5210 = vpop.f32.mrf.mxu0
    %v5211 = vpop.f32.mrf.mxu0
    %5212 = vmatprep.mubr.f32.mxu0 %v4533
    %5213 = vmatmul.mubr.f32.gmra.mxu0 %v4270
    %v5214 = vpop.f32.mrf.mxu0
    %v5215 = vadd.f32 0.0, %v5214
    %v5216 = vpop.f32.mrf.mxu0
    %5217 = vmatprep.mubr.f32.mxu0 %v4534
    %5218 = vmatmul.mubr.f32.gmra.mxu0 %v4271
    %v5219 = vpop.f32.mrf.mxu0
    %v5220 = vadd.f32 0.0, %v5219
    %v5221 = vpop.f32.mrf.mxu0
    %5222 = vmatprep.mubr.f32.mxu0 %v4535
    %5223 = vmatmul.mubr.f32.gmra.mxu0 %v4272
    %v5224 = vpop.f32.mrf.mxu0
    %v5225 = vadd.f32 0.0, %v5224
    %v5226 = vpop.f32.mrf.mxu0
    %5227 = vmatprep.mubr.f32.mxu0 %v4536
    %5228 = vmatmul.mubr.f32.gmra.mxu0 %v4273
    %v5229 = vpop.f32.mrf.mxu0
    %v5230 = vadd.f32 0.0, %v5229
    %v5231 = vpop.f32.mrf.mxu0
    %5232 = vmatprep.mubr.f32.mxu0 %v4537
    %5233 = vmatmul.mubr.f32.gmra.mxu0 %v4274
    %v5234 = vpop.f32.mrf.mxu0
    %v5235 = vadd.f32 0.0, %v5234
    %v5236 = vpop.f32.mrf.mxu0
    %5237 = vmatprep.mubr.f32.mxu0 %v4538
    %5238 = vmatmul.mubr.f32.gmra.mxu0 %v4275
    %v5239 = vpop.f32.mrf.mxu0
    %v5240 = vadd.f32 0.0, %v5239
    %v5241 = vpop.f32.mrf.mxu0
    %5242 = vmatprep.mubr.f32.mxu0 %v4539
    %5243 = vmatmul.mubr.f32.gmra.mxu0 %v4276
    %v5244 = vpop.f32.mrf.mxu0
    %v5245 = vadd.f32 0.0, %v5244
    %v5246 = vpop.f32.mrf.mxu0
    %5247 = vmatprep.mubr.f32.mxu0 %v4540
    %5248 = vmatmul.mubr.f32.gmra.mxu0 %v4277
    %v5249 = vpop.f32.mrf.mxu0
    %v5250 = vadd.f32 0.0, %v5249
    %v5251 = vpop.f32.mrf.mxu0
    %5252 = vmatprep.mubr.f32.mxu0 %v4541
    %5253 = vmatmul.mubr.f32.gmra.mxu0 %v4278
    %v5254 = vpop.f32.mrf.mxu0
    %v5255 = vadd.f32 0.0, %v5254
    %v5256 = vpop.f32.mrf.mxu0
    %5257 = vmatprep.mubr.f32.mxu0 %v4542
    %5258 = vmatmul.mubr.f32.gmra.mxu0 %v4279
    %v5259 = vpop.f32.mrf.mxu0
    %v5260 = vadd.f32 0.0, %v5259
    %v5261 = vpop.f32.mrf.mxu0
    %5262 = vmatprep.mubr.f32.mxu0 %v4543
    %5263 = vmatmul.mubr.f32.gmra.mxu0 %v4280
    %v5264 = vpop.f32.mrf.mxu0
    %v5265 = vpop.f32.mrf.mxu0
    %5266 = vmatprep.mubr.f32.mxu0 %v4544
    %5267 = vmatmul.mubr.f32.gmra.mxu0 %v4281
    %v5268 = vpop.f32.mrf.mxu0
    %v5269 = vadd.f32 0.0, %v5268
    %v5270 = vpop.f32.mrf.mxu0
    %5271 = vmatprep.mubr.f32.mxu0 %v4545
    %5272 = vmatmul.mubr.f32.gmra.mxu0 %v4282
    %v5273 = vpop.f32.mrf.mxu0
    %v5274 = vadd.f32 0.0, %v5273
    %v5275 = vpop.f32.mrf.mxu0
    %5276 = vmatprep.mubr.f32.mxu0 %v4546
    %5277 = vmatmul.mubr.f32.gmra.mxu0 %v4283
    %v5278 = vpop.f32.mrf.mxu0
    %v5279 = vadd.f32 0.0, %v5278
    %v5280 = vpop.f32.mrf.mxu0
    %5281 = vmatprep.mubr.f32.mxu0 %v4547
    %5282 = vmatmul.mubr.f32.gmra.mxu0 %v4284
    %v5283 = vpop.f32.mrf.mxu0
    %v5284 = vadd.f32 0.0, %v5283
    %v5285 = vpop.f32.mrf.mxu0
    %5286 = vmatprep.mubr.f32.mxu0 %v4548
    %5287 = vmatmul.mubr.f32.gmra.mxu0 %v4285
    %v5288 = vpop.f32.mrf.mxu0
    %v5289 = vadd.f32 0.0, %v5288
    %v5290 = vpop.f32.mrf.mxu0
    %5291 = vmatprep.mubr.f32.mxu0 %v4549
    %5292 = vmatmul.mubr.f32.gmra.mxu0 %v4286
    %v5293 = vpop.f32.mrf.mxu0
    %v5294 = vadd.f32 0.0, %v5293
    %v5295 = vpop.f32.mrf.mxu0
    %5296 = vmatprep.mubr.f32.mxu0 %v4550
    %5297 = vmatmul.mubr.f32.gmra.mxu0 %v4287
    %v5298 = vpop.f32.mrf.mxu0
    %v5299 = vadd.f32 0.0, %v5298
    %v5300 = vpop.f32.mrf.mxu0
    %5301 = vmatprep.mubr.f32.mxu0 %v4551
    %5302 = vmatmul.mubr.f32.gmra.mxu0 %v4288
    %v5303 = vpop.f32.mrf.mxu0
    %v5304 = vadd.f32 0.0, %v5303
    %v5305 = vpop.f32.mrf.mxu0
    %5306 = vmatprep.mubr.f32.mxu0 %v4552
    %5307 = vmatmul.mubr.f32.gmra.mxu0 %v4289
    %v5308 = vpop.f32.mrf.mxu0
    %v5309 = vadd.f32 0.0, %v5308
    %v5310 = vpop.f32.mrf.mxu0
    %5311 = vmatprep.mubr.f32.mxu0 %v4553
    %5312 = vmatmul.mubr.f32.gmra.mxu0 %v4290
    %v5313 = vpop.f32.mrf.mxu0
    %v5314 = vadd.f32 0.0, %v5313
    %v5315 = vpop.f32.mrf.mxu0
    %5316 = vmatprep.mubr.f32.mxu0 %v4554
    %5317 = vmatmul.mubr.f32.gmra.mxu0 %v4291
    %v5318 = vpop.f32.mrf.mxu0
    %v5319 = vpop.f32.mrf.mxu0
    %5320 = vmatprep.mubr.f32.mxu0 %v4555
    %5321 = vmatmul.mubr.f32.gmra.mxu0 %v4292
    %v5322 = vpop.f32.mrf.mxu0
    %v5323 = vadd.f32 0.0, %v5322
    %v5324 = vpop.f32.mrf.mxu0
    %5325 = vmatprep.mubr.f32.mxu0 %v4556
    %5326 = vmatmul.mubr.f32.gmra.mxu0 %v4293
    %v5327 = vpop.f32.mrf.mxu0
    %v5328 = vadd.f32 0.0, %v5327
    %v5329 = vpop.f32.mrf.mxu0
    %5330 = vmatprep.mubr.f32.mxu0 %v4557
    %5331 = vmatmul.mubr.f32.gmra.mxu0 %v4294
    %v5332 = vpop.f32.mrf.mxu0
    %v5333 = vadd.f32 0.0, %v5332
    %v5334 = vpop.f32.mrf.mxu0
    %5335 = vmatprep.mubr.f32.mxu0 %v4558
    %5336 = vmatmul.mubr.f32.gmra.mxu0 %v4295
    %v5337 = vpop.f32.mrf.mxu0
    %v5338 = vadd.f32 0.0, %v5337
    %v5339 = vpop.f32.mrf.mxu0
    %5340 = vmatprep.mubr.f32.mxu0 %v4559
    %5341 = vmatmul.mubr.f32.gmra.mxu0 %v4296
    %v5342 = vpop.f32.mrf.mxu0
    %v5343 = vadd.f32 0.0, %v5342
    %v5344 = vpop.f32.mrf.mxu0
    %5345 = vmatprep.mubr.f32.mxu0 %v4560
    %5346 = vmatmul.mubr.f32.gmra.mxu0 %v4297
    %v5347 = vpop.f32.mrf.mxu0
    %v5348 = vadd.f32 0.0, %v5347
    %v5349 = vpop.f32.mrf.mxu0
    %5350 = vmatprep.mubr.f32.mxu0 %v4561
    %5351 = vmatmul.mubr.f32.gmra.mxu0 %v4298
    %v5352 = vpop.f32.mrf.mxu0
    %v5353 = vadd.f32 0.0, %v5352
    %v5354 = vpop.f32.mrf.mxu0
    %5355 = vmatprep.mubr.f32.mxu0 %v4562
    %5356 = vmatmul.mubr.f32.gmra.mxu0 %v4299
    %v5357 = vpop.f32.mrf.mxu0
    %v5358 = vadd.f32 0.0, %v5357
    %v5359 = vpop.f32.mrf.mxu0
    %5360 = vmatprep.mubr.f32.mxu0 %v4563
    %5361 = vmatmul.mubr.f32.gmra.mxu0 %v4300
    %v5362 = vpop.f32.mrf.mxu0
    %v5363 = vadd.f32 0.0, %v5362
    %v5364 = vpop.f32.mrf.mxu0
    %5365 = vmatprep.mubr.f32.mxu0 %v4564
    %5366 = vmatmul.mubr.f32.gmra.mxu0 %v4301
    %v5367 = vpop.f32.mrf.mxu0
    %v5368 = vadd.f32 0.0, %v5367
    %v5369 = vpop.f32.mrf.mxu0
    %5370 = vmatprep.mubr.f32.mxu0 %v4565
    %5371 = vmatmul.mubr.f32.gmra.mxu0 %v4302
    %v5372 = vpop.f32.mrf.mxu0
    %v5373 = vpop.f32.mrf.mxu0
    %5374 = vmatprep.mubr.f32.mxu0 %v4566
    %5375 = vmatmul.mubr.f32.gmra.mxu0 %v4303
    %v5376 = vpop.f32.mrf.mxu0
    %v5377 = vadd.f32 0.0, %v5376
    %v5378 = vpop.f32.mrf.mxu0
    %5379 = vmatprep.mubr.f32.mxu0 %v4567
    %5380 = vmatmul.mubr.f32.gmra.mxu0 %v4304
    %v5381 = vpop.f32.mrf.mxu0
    %v5382 = vadd.f32 0.0, %v5381
    %v5383 = vpop.f32.mrf.mxu0
    %5384 = vmatprep.mubr.f32.mxu0 %v4568
    %5385 = vmatmul.mubr.f32.gmra.mxu0 %v4305
    %v5386 = vpop.f32.mrf.mxu0
    %v5387 = vadd.f32 0.0, %v5386
    %v5388 = vpop.f32.mrf.mxu0
    %5389 = vmatprep.mubr.f32.mxu0 %v4569
    %5390 = vmatmul.mubr.f32.gmra.mxu0 %v4306
    %v5391 = vpop.f32.mrf.mxu0
    %v5392 = vadd.f32 0.0, %v5391
    %v5393 = vpop.f32.mrf.mxu0
    %5394 = vmatprep.mubr.f32.mxu0 %v4570
    %5395 = vmatmul.mubr.f32.gmra.mxu0 %v4307
    %v5396 = vpop.f32.mrf.mxu0
    %v5397 = vadd.f32 0.0, %v5396
    %v5398 = vpop.f32.mrf.mxu0
    %5399 = vmatprep.mubr.f32.mxu0 %v4571
    %5400 = vmatmul.mubr.f32.gmra.mxu0 %v4308
    %v5401 = vpop.f32.mrf.mxu0
    %v5402 = vadd.f32 0.0, %v5401
    %v5403 = vpop.f32.mrf.mxu0
    %5404 = vmatprep.mubr.f32.mxu0 %v4572
    %5405 = vmatmul.mubr.f32.gmra.mxu0 %v4309
    %v5406 = vpop.f32.mrf.mxu0
    %v5407 = vadd.f32 0.0, %v5406
    %v5408 = vpop.f32.mrf.mxu0
    %5409 = vmatprep.mubr.f32.mxu0 %v4573
    %5410 = vmatmul.mubr.f32.gmra.mxu0 %v4310
    %v5411 = vpop.f32.mrf.mxu0
    %v5412 = vadd.f32 0.0, %v5411
    %v5413 = vpop.f32.mrf.mxu0
    %5414 = vmatprep.mubr.f32.mxu0 %v4574
    %5415 = vmatmul.mubr.f32.gmra.mxu0 %v4311
    %v5416 = vpop.f32.mrf.mxu0
    %v5417 = vadd.f32 0.0, %v5416
    %v5418 = vpop.f32.mrf.mxu0
    %5419 = vmatprep.mubr.f32.mxu0 %v4575
    %5420 = vmatmul.mubr.f32.gmra.mxu0 %v4312
    %v5421 = vpop.f32.mrf.mxu0
    %v5422 = vadd.f32 0.0, %v5421
    %v5423 = vpop.f32.mrf.mxu0
    %5424 = vmatprep.mubr.f32.mxu0 %v4576
    %5425 = vmatmul.mubr.f32.gmra.mxu0 %v4313
    %v5426 = vpop.f32.mrf.mxu0
    %v5427 = vpop.f32.mrf.mxu0
    %5428 = vmatprep.mubr.f32.mxu0 %v4577
    %5429 = vmatmul.mubr.f32.gmra.mxu0 %v4314
    %v5430 = vpop.f32.mrf.mxu0
    %v5431 = vadd.f32 0.0, %v5430
    %v5432 = vpop.f32.mrf.mxu0
    %5433 = vmatprep.mubr.f32.mxu0 %v4578
    %5434 = vmatmul.mubr.f32.gmra.mxu0 %v4315
    %v5435 = vpop.f32.mrf.mxu0
    %v5436 = vadd.f32 0.0, %v5435
    %v5437 = vpop.f32.mrf.mxu0
    %5438 = vmatprep.mubr.f32.mxu0 %v4579
    %5439 = vmatmul.mubr.f32.gmra.mxu0 %v4316
    %v5440 = vpop.f32.mrf.mxu0
    %v5441 = vadd.f32 0.0, %v5440
    %v5442 = vpop.f32.mrf.mxu0
    %5443 = vmatprep.mubr.f32.mxu0 %v4580
    %5444 = vmatmul.mubr.f32.gmra.mxu0 %v4317
    %v5445 = vpop.f32.mrf.mxu0
    %v5446 = vadd.f32 0.0, %v5445
    %v5447 = vpop.f32.mrf.mxu0
    %5448 = vmatprep.mubr.f32.mxu0 %v4581
    %5449 = vmatmul.mubr.f32.gmra.mxu0 %v4318
    %v5450 = vpop.f32.mrf.mxu0
    %v5451 = vadd.f32 0.0, %v5450
    %v5452 = vpop.f32.mrf.mxu0
    %5453 = vmatprep.mubr.f32.mxu0 %v4582
    %5454 = vmatmul.mubr.f32.gmra.mxu0 %v4319
    %v5455 = vpop.f32.mrf.mxu0
    %v5456 = vadd.f32 0.0, %v5455
    %v5457 = vpop.f32.mrf.mxu0
    %5458 = vmatprep.mubr.f32.mxu0 %v4583
    %5459 = vmatmul.mubr.f32.gmra.mxu0 %v4320
    %v5460 = vpop.f32.mrf.mxu0
    %v5461 = vadd.f32 0.0, %v5460
    %v5462 = vpop.f32.mrf.mxu0
    %5463 = vmatprep.mubr.f32.mxu0 %v4584
    %5464 = vmatmul.mubr.f32.gmra.mxu0 %v4321
    %v5465 = vpop.f32.mrf.mxu0
    %v5466 = vadd.f32 0.0, %v5465
    %v5467 = vpop.f32.mrf.mxu0
    %5468 = vmatprep.mubr.f32.mxu0 %v4585
    %5469 = vmatmul.mubr.f32.gmra.mxu0 %v4322
    %v5470 = vpop.f32.mrf.mxu0
    %v5471 = vadd.f32 0.0, %v5470
    %v5472 = vpop.f32.mrf.mxu0
    %5473 = vmatprep.mubr.f32.mxu0 %v4586
    %5474 = vmatmul.mubr.f32.gmra.mxu0 %v4323
    %v5475 = vpop.f32.mrf.mxu0
    %v5476 = vadd.f32 0.0, %v5475
    %v5477 = vpop.f32.mrf.mxu0
    %5478 = vmatprep.mubr.f32.mxu0 %v4587
    %5479 = vmatmul.mubr.f32.gmra.mxu0 %v4324
    %v5480 = vpop.f32.mrf.mxu0
    %v5481 = vpop.f32.mrf.mxu0
    %5482 = vmatprep.mubr.f32.mxu0 %v4588
    %5483 = vmatmul.mubr.f32.gmra.mxu0 %v4325
    %v5484 = vpop.f32.mrf.mxu0
    %v5485 = vpop.f32.mrf.mxu0
    %5486 = vmatprep.mubr.f32.mxu0 %v4589
    %5487 = vmatmul.mubr.f32.gmra.mxu0 %v4326
    %v5488 = vpop.f32.mrf.mxu0
    %v5489 = vpop.f32.mrf.mxu0
    %5490 = vmatprep.mubr.f32.mxu0 %v4590
    %5491 = vmatmul.mubr.f32.gmra.mxu0 %v4327
    %v5492 = vpop.f32.mrf.mxu0
    %v5493 = vpop.f32.mrf.mxu0
    %5494 = vmatprep.mubr.f32.mxu0 %v4591
    %5495 = vmatmul.mubr.f32.gmra.mxu0 %v4328
    %v5496 = vpop.f32.mrf.mxu0
    %v5497 = vpop.f32.mrf.mxu0
    %5498 = vmatprep.mubr.f32.mxu0 %v4592
    %5499 = vmatmul.mubr.f32.gmra.mxu0 %v4329
    %v5500 = vpop.f32.mrf.mxu0
    %v5501 = vpop.f32.mrf.mxu0
    %5502 = vmatprep.mubr.f32.mxu0 %v4593
    %5503 = vmatmul.mubr.f32.gmra.mxu0 %v4330
    %v5504 = vpop.f32.mrf.mxu0
    %v5505 = vpop.f32.mrf.mxu0
    %5506 = vmatprep.mubr.f32.mxu0 %v4594
    %5507 = vmatmul.mubr.f32.gmra.mxu0 %v4331
    %v5508 = vpop.f32.mrf.mxu0
    %v5509 = vpop.f32.mrf.mxu0
    %5510 = vmatprep.mubr.f32.mxu0 %v4595
    %5511 = vmatmul.mubr.f32.gmra.mxu0 %v4332
    %v5512 = vpop.f32.mrf.mxu0
    %v5513 = vpop.f32.mrf.mxu0
    %5514 = vmatprep.mubr.f32.mxu0 %v4596
    %5515 = vmatmul.mubr.f32.gmra.mxu0 %v4333
    %v5516 = vpop.f32.mrf.mxu0
    %v5517 = vpop.f32.mrf.mxu0
    %5518 = vmatprep.mubr.f32.mxu0 %v4597
    %5519 = vmatmul.mubr.f32.gmra.mxu0 %v4334
    %v5520 = vpop.f32.mrf.mxu0
    %v5521 = vpop.f32.mrf.mxu0
    %5522 = vmatprep.mubr.f32.mxu0 %v4598
    %5523 = vmatmul.mubr.f32.gmra.mxu0 %v4335
    %v5524 = vpop.f32.mrf.mxu0
    %v5525 = vpop.f32.mrf.mxu0
    %5526 = vdwg.mxu0
    %5527 = vmatprep.subr.mxu0 0.0
    %5528 = vmatpush1.msra.mxu0 0.0
    %5529 = vmatprep.subr.mxu0 0.0
    %5530 = vmatpush1.msra.mxu0 0.0
    %5531 = vmatprep.subr.mxu0 0.0
    %5532 = vmatpush1.msra.mxu0 0.0
    %5533 = vmatprep.subr.mxu0 0.0
    %5534 = vmatpush1.msra.mxu0 0.0
    %5535 = vmatprep.subr.mxu0 0.0
    %5536 = vmatpush1.msra.mxu0 0.0
    %5537 = vmatprep.subr.mxu0 0.0
    %5538 = vmatpush1.msra.mxu0 0.0
    %5539 = vmatprep.subr.mxu0 0.0
    %5540 = vmatpush1.msra.mxu0 0.0
    %5541 = vmatprep.subr.mxu0 0.0
    %5542 = vmatpush1.msra.mxu0 0.0
    %5543 = vmatprep.subr.mxu0 0.0
    %5544 = vmatpush1.msra.mxu0 0.0
    %5545 = vmatprep.subr.mxu0 0.0
    %5546 = vmatpush1.msra.mxu0 0.0
    %5547 = vmatprep.subr.mxu0 0.0
    %5548 = vmatpush1.msra.mxu0 0.0
    %5549 = vmatprep.subr.mxu0 0.0
    %5550 = vmatpush1.msra.mxu0 0.0
    %5551 = vmatprep.subr.mxu0 0.0
    %5552 = vmatpush1.msra.mxu0 %v4634
    %5553 = vmatprep.subr.mxu0 0.0
    %5554 = vmatpush1.msra.mxu0 %v4633
    %5555 = vmatprep.subr.mxu0 0.0
    %5556 = vmatpush1.msra.mxu0 %v4632
    %5557 = vmatprep.subr.mxu0 0.0
    %5558 = vmatpush1.msra.mxu0 %v4631
    %5559 = vmatprep.subr.mxu0 0.0
    %5560 = vmatpush2.msra.mxu0 0.0
    %5561 = vmatprep.subr.mxu0 0.0
    %5562 = vmatpush2.msra.mxu0 0.0
    %5563 = vmatprep.subr.mxu0 0.0
    %5564 = vmatpush2.msra.mxu0 0.0
    %5565 = vmatprep.subr.mxu0 0.0
    %5566 = vmatpush2.msra.mxu0 0.0
    %5567 = vmatprep.subr.mxu0 0.0
    %5568 = vmatpush2.msra.mxu0 0.0
    %5569 = vmatprep.subr.mxu0 0.0
    %5570 = vmatpush2.msra.mxu0 0.0
    %5571 = vmatprep.subr.mxu0 0.0
    %5572 = vmatpush2.msra.mxu0 0.0
    %5573 = vmatprep.subr.mxu0 0.0
    %5574 = vmatpush2.msra.mxu0 0.0
    %5575 = vmatprep.subr.mxu0 0.0
    %5576 = vmatpush2.msra.mxu0 0.0
    %5577 = vmatprep.subr.mxu0 0.0
    %5578 = vmatpush2.msra.mxu0 0.0
    %5579 = vmatprep.subr.mxu0 0.0
    %5580 = vmatpush2.msra.mxu0 0.0
    %5581 = vmatprep.subr.mxu0 0.0
    %5582 = vmatpush2.msra.mxu0 0.0
    %5583 = vmatprep.subr.mxu0 0.0
    %5584 = vmatpush2.msra.mxu0 0.0
    %5585 = vmatprep.subr.mxu0 0.0
    %5586 = vmatpush2.msra.mxu0 0.0
    %5587 = vmatprep.subr.mxu0 0.0
    %5588 = vmatpush2.msra.mxu0 0.0
    %5589 = vmatprep.subr.mxu0 0.0
    %5590 = vmatpush2.msra.mxu0 0.0
    %5591 = vmatprep.mubr.f32.mxu0 0.0
    %5592 = vmatmul.mubr.f32.gmra.mxu0 %v4635
    %v5593 = vpop.f32.mrf.mxu0
    %v5594 = vadd.f32 %v4945, %v5593
    %v5595 = vpop.f32.mrf.mxu0
    %5596 = vmatprep.mubr.f32.mxu0 0.0
    %5597 = vmatmul.mubr.f32.gmra.mxu0 %v4637
    %v5598 = vpop.f32.mrf.mxu0
    %v5599 = vadd.f32 %v4950, %v5598
    %v5600 = vpop.f32.mrf.mxu0
    %5601 = vmatprep.mubr.f32.mxu0 0.0
    %5602 = vmatmul.mubr.f32.gmra.mxu0 %v4639
    %v5603 = vpop.f32.mrf.mxu0
    %v5604 = vadd.f32 %v4955, %v5603
    %v5605 = vpop.f32.mrf.mxu0
    %5606 = vmatprep.mubr.f32.mxu0 0.0
    %5607 = vmatmul.mubr.f32.gmra.mxu0 %v4641
    %v5608 = vpop.f32.mrf.mxu0
    %v5609 = vadd.f32 %v4960, %v5608
    %v5610 = vpop.f32.mrf.mxu0
    %5611 = vmatprep.mubr.f32.mxu0 0.0
    %5612 = vmatmul.mubr.f32.gmra.mxu0 %v4643
    %v5613 = vpop.f32.mrf.mxu0
    %v5614 = vadd.f32 %v4965, %v5613
    %v5615 = vpop.f32.mrf.mxu0
    %5616 = vmatprep.mubr.f32.mxu0 0.0
    %5617 = vmatmul.mubr.f32.gmra.mxu0 %v4645
    %v5618 = vpop.f32.mrf.mxu0
    %v5619 = vadd.f32 %v4970, %v5618
    %v5620 = vpop.f32.mrf.mxu0
    %5621 = vmatprep.mubr.f32.mxu0 0.0
    %5622 = vmatmul.mubr.f32.gmra.mxu0 %v4647
    %v5623 = vpop.f32.mrf.mxu0
    %v5624 = vadd.f32 %v4975, %v5623
    %v5625 = vpop.f32.mrf.mxu0
    %5626 = vmatprep.mubr.f32.mxu0 0.0
    %5627 = vmatmul.mubr.f32.gmra.mxu0 %v4649
    %v5628 = vpop.f32.mrf.mxu0
    %v5629 = vadd.f32 %v4980, %v5628
    %v5630 = vpop.f32.mrf.mxu0
    %5631 = vmatprep.mubr.f32.mxu0 0.0
    %5632 = vmatmul.mubr.f32.gmra.mxu0 %v4651
    %v5633 = vpop.f32.mrf.mxu0
    %v5634 = vadd.f32 %v4985, %v5633
    %v5635 = vpop.f32.mrf.mxu0
    %5636 = vmatprep.mubr.f32.mxu0 0.0
    %5637 = vmatmul.mubr.f32.gmra.mxu0 %v4653
    %v5638 = vpop.f32.mrf.mxu0
    %v5639 = vadd.f32 %v4990, %v5638
    %v5640 = vpop.f32.mrf.mxu0
    %5641 = vmatprep.mubr.f32.mxu0 0.0
    %5642 = vmatmul.mubr.f32.gmra.mxu0 %v4655
    %v5643 = vpop.f32.mrf.mxu0
    %v5644 = vpop.f32.mrf.mxu0
    %5645 = vmatprep.mubr.f32.mxu0 0.0
    %5646 = vmatmul.mubr.f32.gmra.mxu0 %v4657
    %v5647 = vpop.f32.mrf.mxu0
    %v5648 = vadd.f32 %v4999, %v5647
    %v5649 = vpop.f32.mrf.mxu0
    %5650 = vmatprep.mubr.f32.mxu0 0.0
    %5651 = vmatmul.mubr.f32.gmra.mxu0 %v4659
    %v5652 = vpop.f32.mrf.mxu0
    %v5653 = vadd.f32 %v5004, %v5652
    %v5654 = vpop.f32.mrf.mxu0
    %5655 = vmatprep.mubr.f32.mxu0 0.0
    %5656 = vmatmul.mubr.f32.gmra.mxu0 %v4661
    %v5657 = vpop.f32.mrf.mxu0
    %v5658 = vadd.f32 %v5009, %v5657
    %v5659 = vpop.f32.mrf.mxu0
    %5660 = vmatprep.mubr.f32.mxu0 0.0
    %5661 = vmatmul.mubr.f32.gmra.mxu0 %v4663
    %v5662 = vpop.f32.mrf.mxu0
    %v5663 = vadd.f32 %v5014, %v5662
    %v5664 = vpop.f32.mrf.mxu0
    %5665 = vmatprep.mubr.f32.mxu0 0.0
    %5666 = vmatmul.mubr.f32.gmra.mxu0 %v4665
    %v5667 = vpop.f32.mrf.mxu0
    %v5668 = vadd.f32 %v5019, %v5667
    %v5669 = vpop.f32.mrf.mxu0
    %5670 = vmatprep.mubr.f32.mxu0 0.0
    %5671 = vmatmul.mubr.f32.gmra.mxu0 %v4667
    %v5672 = vpop.f32.mrf.mxu0
    %v5673 = vadd.f32 %v5024, %v5672
    %v5674 = vpop.f32.mrf.mxu0
    %5675 = vmatprep.mubr.f32.mxu0 0.0
    %5676 = vmatmul.mubr.f32.gmra.mxu0 %v4669
    %v5677 = vpop.f32.mrf.mxu0
    %v5678 = vadd.f32 %v5029, %v5677
    %v5679 = vpop.f32.mrf.mxu0
    %5680 = vmatprep.mubr.f32.mxu0 0.0
    %5681 = vmatmul.mubr.f32.gmra.mxu0 %v4671
    %v5682 = vpop.f32.mrf.mxu0
    %v5683 = vadd.f32 %v5034, %v5682
    %v5684 = vpop.f32.mrf.mxu0
    %5685 = vmatprep.mubr.f32.mxu0 0.0
    %5686 = vmatmul.mubr.f32.gmra.mxu0 %v4673
    %v5687 = vpop.f32.mrf.mxu0
    %v5688 = vadd.f32 %v5039, %v5687
    %v5689 = vpop.f32.mrf.mxu0
    %5690 = vmatprep.mubr.f32.mxu0 0.0
    %5691 = vmatmul.mubr.f32.gmra.mxu0 %v4675
    %v5692 = vpop.f32.mrf.mxu0
    %v5693 = vadd.f32 %v5044, %v5692
    %v5694 = vpop.f32.mrf.mxu0
    %5695 = vmatprep.mubr.f32.mxu0 0.0
    %5696 = vmatmul.mubr.f32.gmra.mxu0 %v4677
    %v5697 = vpop.f32.mrf.mxu0
    %v5698 = vpop.f32.mrf.mxu0
    %5699 = vmatprep.mubr.f32.mxu0 0.0
    %5700 = vmatmul.mubr.f32.gmra.mxu0 %v4679
    %v5701 = vpop.f32.mrf.mxu0
    %v5702 = vadd.f32 %v5053, %v5701
    %v5703 = vpop.f32.mrf.mxu0
    %5704 = vmatprep.mubr.f32.mxu0 0.0
    %5705 = vmatmul.mubr.f32.gmra.mxu0 %v4681
    %v5706 = vpop.f32.mrf.mxu0
    %v5707 = vadd.f32 %v5058, %v5706
    %v5708 = vpop.f32.mrf.mxu0
    %5709 = vmatprep.mubr.f32.mxu0 0.0
    %5710 = vmatmul.mubr.f32.gmra.mxu0 %v4683
    %v5711 = vpop.f32.mrf.mxu0
    %v5712 = vadd.f32 %v5063, %v5711
    %v5713 = vpop.f32.mrf.mxu0
    %5714 = vmatprep.mubr.f32.mxu0 0.0
    %5715 = vmatmul.mubr.f32.gmra.mxu0 %v4685
    %v5716 = vpop.f32.mrf.mxu0
    %v5717 = vadd.f32 %v5068, %v5716
    %v5718 = vpop.f32.mrf.mxu0
    %5719 = vmatprep.mubr.f32.mxu0 0.0
    %5720 = vmatmul.mubr.f32.gmra.mxu0 %v4687
    %v5721 = vpop.f32.mrf.mxu0
    %v5722 = vadd.f32 %v5073, %v5721
    %v5723 = vpop.f32.mrf.mxu0
    %5724 = vmatprep.mubr.f32.mxu0 0.0
    %5725 = vmatmul.mubr.f32.gmra.mxu0 %v4689
    %v5726 = vpop.f32.mrf.mxu0
    %v5727 = vadd.f32 %v5078, %v5726
    %v5728 = vpop.f32.mrf.mxu0
    %5729 = vmatprep.mubr.f32.mxu0 0.0
    %5730 = vmatmul.mubr.f32.gmra.mxu0 %v4691
    %v5731 = vpop.f32.mrf.mxu0
    %v5732 = vadd.f32 %v5083, %v5731
    %v5733 = vpop.f32.mrf.mxu0
    %5734 = vmatprep.mubr.f32.mxu0 0.0
    %5735 = vmatmul.mubr.f32.gmra.mxu0 %v4693
    %v5736 = vpop.f32.mrf.mxu0
    %v5737 = vadd.f32 %v5088, %v5736
    %v5738 = vpop.f32.mrf.mxu0
    %5739 = vmatprep.mubr.f32.mxu0 0.0
    %5740 = vmatmul.mubr.f32.gmra.mxu0 %v4695
    %v5741 = vpop.f32.mrf.mxu0
    %v5742 = vadd.f32 %v5093, %v5741
    %v5743 = vpop.f32.mrf.mxu0
    %5744 = vmatprep.mubr.f32.mxu0 0.0
    %5745 = vmatmul.mubr.f32.gmra.mxu0 %v4697
    %v5746 = vpop.f32.mrf.mxu0
    %v5747 = vadd.f32 %v5098, %v5746
    %v5748 = vpop.f32.mrf.mxu0
    %5749 = vmatprep.mubr.f32.mxu0 0.0
    %5750 = vmatmul.mubr.f32.gmra.mxu0 %v4699
    %v5751 = vpop.f32.mrf.mxu0
    %v5752 = vpop.f32.mrf.mxu0
    %5753 = vmatprep.mubr.f32.mxu0 0.0
    %5754 = vmatmul.mubr.f32.gmra.mxu0 %v4701
    %v5755 = vpop.f32.mrf.mxu0
    %v5756 = vadd.f32 %v5107, %v5755
    %v5757 = vpop.f32.mrf.mxu0
    %5758 = vmatprep.mubr.f32.mxu0 0.0
    %5759 = vmatmul.mubr.f32.gmra.mxu0 %v4703
    %v5760 = vpop.f32.mrf.mxu0
    %v5761 = vadd.f32 %v5112, %v5760
    %v5762 = vpop.f32.mrf.mxu0
    %5763 = vmatprep.mubr.f32.mxu0 0.0
    %5764 = vmatmul.mubr.f32.gmra.mxu0 %v4705
    %v5765 = vpop.f32.mrf.mxu0
    %v5766 = vadd.f32 %v5117, %v5765
    %v5767 = vpop.f32.mrf.mxu0
    %5768 = vmatprep.mubr.f32.mxu0 0.0
    %5769 = vmatmul.mubr.f32.gmra.mxu0 %v4707
    %v5770 = vpop.f32.mrf.mxu0
    %v5771 = vadd.f32 %v5122, %v5770
    %v5772 = vpop.f32.mrf.mxu0
    %5773 = vmatprep.mubr.f32.mxu0 0.0
    %5774 = vmatmul.mubr.f32.gmra.mxu0 %v4709
    %v5775 = vpop.f32.mrf.mxu0
    %v5776 = vadd.f32 %v5127, %v5775
    %v5777 = vpop.f32.mrf.mxu0
    %5778 = vmatprep.mubr.f32.mxu0 0.0
    %5779 = vmatmul.mubr.f32.gmra.mxu0 %v4711
    %v5780 = vpop.f32.mrf.mxu0
    %v5781 = vadd.f32 %v5132, %v5780
    %v5782 = vpop.f32.mrf.mxu0
    %5783 = vmatprep.mubr.f32.mxu0 0.0
    %5784 = vmatmul.mubr.f32.gmra.mxu0 %v4713
    %v5785 = vpop.f32.mrf.mxu0
    %v5786 = vadd.f32 %v5137, %v5785
    %v5787 = vpop.f32.mrf.mxu0
    %5788 = vmatprep.mubr.f32.mxu0 0.0
    %5789 = vmatmul.mubr.f32.gmra.mxu0 %v4715
    %v5790 = vpop.f32.mrf.mxu0
    %v5791 = vadd.f32 %v5142, %v5790
    %v5792 = vpop.f32.mrf.mxu0
    %5793 = vmatprep.mubr.f32.mxu0 0.0
    %5794 = vmatmul.mubr.f32.gmra.mxu0 %v4717
    %v5795 = vpop.f32.mrf.mxu0
    %v5796 = vadd.f32 %v5147, %v5795
    %v5797 = vpop.f32.mrf.mxu0
    %5798 = vmatprep.mubr.f32.mxu0 0.0
    %5799 = vmatmul.mubr.f32.gmra.mxu0 %v4719
    %v5800 = vpop.f32.mrf.mxu0
    %v5801 = vadd.f32 %v5152, %v5800
    %v5802 = vpop.f32.mrf.mxu0
    %5803 = vmatprep.mubr.f32.mxu0 0.0
    %5804 = vmatmul.mubr.f32.gmra.mxu0 %v4721
    %v5805 = vpop.f32.mrf.mxu0
    %v5806 = vpop.f32.mrf.mxu0
    %5807 = vmatprep.mubr.f32.mxu0 0.0
    %5808 = vmatmul.mubr.f32.gmra.mxu0 %v4723
    %v5809 = vpop.f32.mrf.mxu0
    %v5810 = vadd.f32 %v5161, %v5809
    %v5811 = vpop.f32.mrf.mxu0
    %5812 = vmatprep.mubr.f32.mxu0 0.0
    %5813 = vmatmul.mubr.f32.gmra.mxu0 %v4725
    %v5814 = vpop.f32.mrf.mxu0
    %v5815 = vadd.f32 %v5166, %v5814
    %v5816 = vpop.f32.mrf.mxu0
    %5817 = vmatprep.mubr.f32.mxu0 0.0
    %5818 = vmatmul.mubr.f32.gmra.mxu0 %v4727
    %v5819 = vpop.f32.mrf.mxu0
    %v5820 = vadd.f32 %v5171, %v5819
    %v5821 = vpop.f32.mrf.mxu0
    %5822 = vmatprep.mubr.f32.mxu0 0.0
    %5823 = vmatmul.mubr.f32.gmra.mxu0 %v4729
    %v5824 = vpop.f32.mrf.mxu0
    %v5825 = vadd.f32 %v5176, %v5824
    %v5826 = vpop.f32.mrf.mxu0
    %5827 = vmatprep.mubr.f32.mxu0 0.0
    %5828 = vmatmul.mubr.f32.gmra.mxu0 %v4731
    %v5829 = vpop.f32.mrf.mxu0
    %v5830 = vadd.f32 %v5181, %v5829
    %v5831 = vpop.f32.mrf.mxu0
    %5832 = vmatprep.mubr.f32.mxu0 0.0
    %5833 = vmatmul.mubr.f32.gmra.mxu0 %v4733
    %v5834 = vpop.f32.mrf.mxu0
    %v5835 = vadd.f32 %v5186, %v5834
    %v5836 = vpop.f32.mrf.mxu0
    %5837 = vmatprep.mubr.f32.mxu0 0.0
    %5838 = vmatmul.mubr.f32.gmra.mxu0 %v4735
    %v5839 = vpop.f32.mrf.mxu0
    %v5840 = vadd.f32 %v5191, %v5839
    %v5841 = vpop.f32.mrf.mxu0
    %5842 = vmatprep.mubr.f32.mxu0 0.0
    %5843 = vmatmul.mubr.f32.gmra.mxu0 %v4737
    %v5844 = vpop.f32.mrf.mxu0
    %v5845 = vadd.f32 %v5196, %v5844
    %v5846 = vpop.f32.mrf.mxu0
    %5847 = vmatprep.mubr.f32.mxu0 0.0
    %5848 = vmatmul.mubr.f32.gmra.mxu0 %v4739
    %v5849 = vpop.f32.mrf.mxu0
    %v5850 = vadd.f32 %v5201, %v5849
    %v5851 = vpop.f32.mrf.mxu0
    %5852 = vmatprep.mubr.f32.mxu0 0.0
    %5853 = vmatmul.mubr.f32.gmra.mxu0 %v4741
    %v5854 = vpop.f32.mrf.mxu0
    %v5855 = vadd.f32 %v5206, %v5854
    %v5856 = vpop.f32.mrf.mxu0
    %5857 = vmatprep.mubr.f32.mxu0 0.0
    %5858 = vmatmul.mubr.f32.gmra.mxu0 %v4743
    %v5859 = vpop.f32.mrf.mxu0
    %v5860 = vpop.f32.mrf.mxu0
    %5861 = vmatprep.mubr.f32.mxu0 0.0
    %5862 = vmatmul.mubr.f32.gmra.mxu0 %v4745
    %v5863 = vpop.f32.mrf.mxu0
    %v5864 = vadd.f32 %v5215, %v5863
    %v5865 = vpop.f32.mrf.mxu0
    %5866 = vmatprep.mubr.f32.mxu0 0.0
    %5867 = vmatmul.mubr.f32.gmra.mxu0 %v4747
    %v5868 = vpop.f32.mrf.mxu0
    %v5869 = vadd.f32 %v5220, %v5868
    %v5870 = vpop.f32.mrf.mxu0
    %5871 = vmatprep.mubr.f32.mxu0 0.0
    %5872 = vmatmul.mubr.f32.gmra.mxu0 %v4749
    %v5873 = vpop.f32.mrf.mxu0
    %v5874 = vadd.f32 %v5225, %v5873
    %v5875 = vpop.f32.mrf.mxu0
    %5876 = vmatprep.mubr.f32.mxu0 0.0
    %5877 = vmatmul.mubr.f32.gmra.mxu0 %v4751
    %v5878 = vpop.f32.mrf.mxu0
    %v5879 = vadd.f32 %v5230, %v5878
    %v5880 = vpop.f32.mrf.mxu0
    %5881 = vmatprep.mubr.f32.mxu0 0.0
    %5882 = vmatmul.mubr.f32.gmra.mxu0 %v4753
    %v5883 = vpop.f32.mrf.mxu0
    %v5884 = vadd.f32 %v5235, %v5883
    %v5885 = vpop.f32.mrf.mxu0
    %5886 = vmatprep.mubr.f32.mxu0 0.0
    %5887 = vmatmul.mubr.f32.gmra.mxu0 %v4755
    %v5888 = vpop.f32.mrf.mxu0
    %v5889 = vadd.f32 %v5240, %v5888
    %v5890 = vpop.f32.mrf.mxu0
    %5891 = vmatprep.mubr.f32.mxu0 0.0
    %5892 = vmatmul.mubr.f32.gmra.mxu0 %v4757
    %v5893 = vpop.f32.mrf.mxu0
    %v5894 = vadd.f32 %v5245, %v5893
    %v5895 = vpop.f32.mrf.mxu0
    %5896 = vmatprep.mubr.f32.mxu0 0.0
    %5897 = vmatmul.mubr.f32.gmra.mxu0 %v4759
    %v5898 = vpop.f32.mrf.mxu0
    %v5899 = vadd.f32 %v5250, %v5898
    %v5900 = vpop.f32.mrf.mxu0
    %5901 = vmatprep.mubr.f32.mxu0 0.0
    %5902 = vmatmul.mubr.f32.gmra.mxu0 %v4761
    %v5903 = vpop.f32.mrf.mxu0
    %v5904 = vadd.f32 %v5255, %v5903
    %v5905 = vpop.f32.mrf.mxu0
    %5906 = vmatprep.mubr.f32.mxu0 0.0
    %5907 = vmatmul.mubr.f32.gmra.mxu0 %v4763
    %v5908 = vpop.f32.mrf.mxu0
    %v5909 = vadd.f32 %v5260, %v5908
    %v5910 = vpop.f32.mrf.mxu0
    %5911 = vmatprep.mubr.f32.mxu0 0.0
    %5912 = vmatmul.mubr.f32.gmra.mxu0 %v4765
    %v5913 = vpop.f32.mrf.mxu0
    %v5914 = vpop.f32.mrf.mxu0
    %5915 = vmatprep.mubr.f32.mxu0 0.0
    %5916 = vmatmul.mubr.f32.gmra.mxu0 %v4767
    %v5917 = vpop.f32.mrf.mxu0
    %v5918 = vadd.f32 %v5269, %v5917
    %v5919 = vpop.f32.mrf.mxu0
    %5920 = vmatprep.mubr.f32.mxu0 0.0
    %5921 = vmatmul.mubr.f32.gmra.mxu0 %v4769
    %v5922 = vpop.f32.mrf.mxu0
    %v5923 = vadd.f32 %v5274, %v5922
    %v5924 = vpop.f32.mrf.mxu0
    %5925 = vmatprep.mubr.f32.mxu0 0.0
    %5926 = vmatmul.mubr.f32.gmra.mxu0 %v4771
    %v5927 = vpop.f32.mrf.mxu0
    %v5928 = vadd.f32 %v5279, %v5927
    %v5929 = vpop.f32.mrf.mxu0
    %5930 = vmatprep.mubr.f32.mxu0 0.0
    %5931 = vmatmul.mubr.f32.gmra.mxu0 %v4773
    %v5932 = vpop.f32.mrf.mxu0
    %v5933 = vadd.f32 %v5284, %v5932
    %v5934 = vpop.f32.mrf.mxu0
    %5935 = vmatprep.mubr.f32.mxu0 0.0
    %5936 = vmatmul.mubr.f32.gmra.mxu0 %v4775
    %v5937 = vpop.f32.mrf.mxu0
    %v5938 = vadd.f32 %v5289, %v5937
    %v5939 = vpop.f32.mrf.mxu0
    %5940 = vmatprep.mubr.f32.mxu0 0.0
    %5941 = vmatmul.mubr.f32.gmra.mxu0 %v4777
    %v5942 = vpop.f32.mrf.mxu0
    %v5943 = vadd.f32 %v5294, %v5942
    %v5944 = vpop.f32.mrf.mxu0
    %5945 = vmatprep.mubr.f32.mxu0 0.0
    %5946 = vmatmul.mubr.f32.gmra.mxu0 %v4779
    %v5947 = vpop.f32.mrf.mxu0
    %v5948 = vadd.f32 %v5299, %v5947
    %v5949 = vpop.f32.mrf.mxu0
    %5950 = vmatprep.mubr.f32.mxu0 0.0
    %5951 = vmatmul.mubr.f32.gmra.mxu0 %v4781
    %v5952 = vpop.f32.mrf.mxu0
    %v5953 = vadd.f32 %v5304, %v5952
    %v5954 = vpop.f32.mrf.mxu0
    %5955 = vmatprep.mubr.f32.mxu0 0.0
    %5956 = vmatmul.mubr.f32.gmra.mxu0 %v4783
    %v5957 = vpop.f32.mrf.mxu0
    %v5958 = vadd.f32 %v5309, %v5957
    %v5959 = vpop.f32.mrf.mxu0
    %5960 = vmatprep.mubr.f32.mxu0 0.0
    %5961 = vmatmul.mubr.f32.gmra.mxu0 %v4785
    %v5962 = vpop.f32.mrf.mxu0
    %v5963 = vadd.f32 %v5314, %v5962
    %v5964 = vpop.f32.mrf.mxu0
    %5965 = vmatprep.mubr.f32.mxu0 0.0
    %5966 = vmatmul.mubr.f32.gmra.mxu0 %v4787
    %v5967 = vpop.f32.mrf.mxu0
    %v5968 = vpop.f32.mrf.mxu0
    %5969 = vmatprep.mubr.f32.mxu0 0.0
    %5970 = vmatmul.mubr.f32.gmra.mxu0 %v4789
    %v5971 = vpop.f32.mrf.mxu0
    %v5972 = vadd.f32 %v5323, %v5971
    %v5973 = vpop.f32.mrf.mxu0
    %5974 = vmatprep.mubr.f32.mxu0 0.0
    %5975 = vmatmul.mubr.f32.gmra.mxu0 %v4791
    %v5976 = vpop.f32.mrf.mxu0
    %v5977 = vadd.f32 %v5328, %v5976
    %v5978 = vpop.f32.mrf.mxu0
    %5979 = vmatprep.mubr.f32.mxu0 0.0
    %5980 = vmatmul.mubr.f32.gmra.mxu0 %v4793
    %v5981 = vpop.f32.mrf.mxu0
    %v5982 = vadd.f32 %v5333, %v5981
    %v5983 = vpop.f32.mrf.mxu0
    %5984 = vmatprep.mubr.f32.mxu0 0.0
    %5985 = vmatmul.mubr.f32.gmra.mxu0 %v4795
    %v5986 = vpop.f32.mrf.mxu0
    %v5987 = vadd.f32 %v5338, %v5986
    %v5988 = vpop.f32.mrf.mxu0
    %5989 = vmatprep.mubr.f32.mxu0 0.0
    %5990 = vmatmul.mubr.f32.gmra.mxu0 %v4797
    %v5991 = vpop.f32.mrf.mxu0
    %v5992 = vadd.f32 %v5343, %v5991
    %v5993 = vpop.f32.mrf.mxu0
    %5994 = vmatprep.mubr.f32.mxu0 0.0
    %5995 = vmatmul.mubr.f32.gmra.mxu0 %v4799
    %v5996 = vpop.f32.mrf.mxu0
    %v5997 = vadd.f32 %v5348, %v5996
    %v5998 = vpop.f32.mrf.mxu0
    %5999 = vmatprep.mubr.f32.mxu0 0.0
    %6000 = vmatmul.mubr.f32.gmra.mxu0 %v4801
    %v6001 = vpop.f32.mrf.mxu0
    %v6002 = vadd.f32 %v5353, %v6001
    %v6003 = vpop.f32.mrf.mxu0
    %6004 = vmatprep.mubr.f32.mxu0 0.0
    %6005 = vmatmul.mubr.f32.gmra.mxu0 %v4803
    %v6006 = vpop.f32.mrf.mxu0
    %v6007 = vadd.f32 %v5358, %v6006
    %v6008 = vpop.f32.mrf.mxu0
    %6009 = vmatprep.mubr.f32.mxu0 0.0
    %6010 = vmatmul.mubr.f32.gmra.mxu0 %v4805
    %v6011 = vpop.f32.mrf.mxu0
    %v6012 = vadd.f32 %v5363, %v6011
    %v6013 = vpop.f32.mrf.mxu0
    %6014 = vmatprep.mubr.f32.mxu0 0.0
    %6015 = vmatmul.mubr.f32.gmra.mxu0 %v4807
    %v6016 = vpop.f32.mrf.mxu0
    %v6017 = vadd.f32 %v5368, %v6016
    %v6018 = vpop.f32.mrf.mxu0
    %6019 = vmatprep.mubr.f32.mxu0 0.0
    %6020 = vmatmul.mubr.f32.gmra.mxu0 %v4809
    %v6021 = vpop.f32.mrf.mxu0
    %v6022 = vpop.f32.mrf.mxu0
    %6023 = vmatprep.mubr.f32.mxu0 0.0
    %6024 = vmatmul.mubr.f32.gmra.mxu0 %v4811
    %v6025 = vpop.f32.mrf.mxu0
    %v6026 = vadd.f32 %v5377, %v6025
    %v6027 = vpop.f32.mrf.mxu0
    %6028 = vmatprep.mubr.f32.mxu0 0.0
    %6029 = vmatmul.mubr.f32.gmra.mxu0 %v4813
    %v6030 = vpop.f32.mrf.mxu0
    %v6031 = vadd.f32 %v5382, %v6030
    %v6032 = vpop.f32.mrf.mxu0
    %6033 = vmatprep.mubr.f32.mxu0 0.0
    %6034 = vmatmul.mubr.f32.gmra.mxu0 %v4815
    %v6035 = vpop.f32.mrf.mxu0
    %v6036 = vadd.f32 %v5387, %v6035
    %v6037 = vpop.f32.mrf.mxu0
    %6038 = vmatprep.mubr.f32.mxu0 0.0
    %6039 = vmatmul.mubr.f32.gmra.mxu0 %v4817
    %v6040 = vpop.f32.mrf.mxu0
    %v6041 = vadd.f32 %v5392, %v6040
    %v6042 = vpop.f32.mrf.mxu0
    %6043 = vmatprep.mubr.f32.mxu0 0.0
    %6044 = vmatmul.mubr.f32.gmra.mxu0 %v4819
    %v6045 = vpop.f32.mrf.mxu0
    %v6046 = vadd.f32 %v5397, %v6045
    %v6047 = vpop.f32.mrf.mxu0
    %6048 = vmatprep.mubr.f32.mxu0 0.0
    %6049 = vmatmul.mubr.f32.gmra.mxu0 %v4821
    %v6050 = vpop.f32.mrf.mxu0
    %v6051 = vadd.f32 %v5402, %v6050
    %v6052 = vpop.f32.mrf.mxu0
    %6053 = vmatprep.mubr.f32.mxu0 0.0
    %6054 = vmatmul.mubr.f32.gmra.mxu0 %v4823
    %v6055 = vpop.f32.mrf.mxu0
    %v6056 = vadd.f32 %v5407, %v6055
    %v6057 = vpop.f32.mrf.mxu0
    %6058 = vmatprep.mubr.f32.mxu0 0.0
    %6059 = vmatmul.mubr.f32.gmra.mxu0 %v4825
    %v6060 = vpop.f32.mrf.mxu0
    %v6061 = vadd.f32 %v5412, %v6060
    %v6062 = vpop.f32.mrf.mxu0
    %6063 = vmatprep.mubr.f32.mxu0 0.0
    %6064 = vmatmul.mubr.f32.gmra.mxu0 %v4827
    %v6065 = vpop.f32.mrf.mxu0
    %v6066 = vadd.f32 %v5417, %v6065
    %v6067 = vpop.f32.mrf.mxu0
    %6068 = vmatprep.mubr.f32.mxu0 0.0
    %6069 = vmatmul.mubr.f32.gmra.mxu0 %v4829
    %v6070 = vpop.f32.mrf.mxu0
    %v6071 = vadd.f32 %v5422, %v6070
    %v6072 = vpop.f32.mrf.mxu0
    %6073 = vmatprep.mubr.f32.mxu0 0.0
    %6074 = vmatmul.mubr.f32.gmra.mxu0 %v4831
    %v6075 = vpop.f32.mrf.mxu0
    %v6076 = vpop.f32.mrf.mxu0
    %6077 = vmatprep.mubr.f32.mxu0 0.0
    %6078 = vmatmul.mubr.f32.gmra.mxu0 %v4833
    %v6079 = vpop.f32.mrf.mxu0
    %v6080 = vadd.f32 %v5431, %v6079
    %v6081 = vpop.f32.mrf.mxu0
    %6082 = vmatprep.mubr.f32.mxu0 0.0
    %6083 = vmatmul.mubr.f32.gmra.mxu0 %v4835
    %v6084 = vpop.f32.mrf.mxu0
    %v6085 = vadd.f32 %v5436, %v6084
    %v6086 = vpop.f32.mrf.mxu0
    %6087 = vmatprep.mubr.f32.mxu0 0.0
    %6088 = vmatmul.mubr.f32.gmra.mxu0 %v4837
    %v6089 = vpop.f32.mrf.mxu0
    %v6090 = vadd.f32 %v5441, %v6089
    %v6091 = vpop.f32.mrf.mxu0
    %6092 = vmatprep.mubr.f32.mxu0 0.0
    %6093 = vmatmul.mubr.f32.gmra.mxu0 %v4839
    %v6094 = vpop.f32.mrf.mxu0
    %v6095 = vadd.f32 %v5446, %v6094
    %v6096 = vpop.f32.mrf.mxu0
    %6097 = vmatprep.mubr.f32.mxu0 0.0
    %6098 = vmatmul.mubr.f32.gmra.mxu0 %v4841
    %v6099 = vpop.f32.mrf.mxu0
    %v6100 = vadd.f32 %v5451, %v6099
    %v6101 = vpop.f32.mrf.mxu0
    %6102 = vmatprep.mubr.f32.mxu0 0.0
    %6103 = vmatmul.mubr.f32.gmra.mxu0 %v4843
    %v6104 = vpop.f32.mrf.mxu0
    %v6105 = vadd.f32 %v5456, %v6104
    %v6106 = vpop.f32.mrf.mxu0
    %6107 = vmatprep.mubr.f32.mxu0 0.0
    %6108 = vmatmul.mubr.f32.gmra.mxu0 %v4845
    %v6109 = vpop.f32.mrf.mxu0
    %v6110 = vadd.f32 %v5461, %v6109
    %v6111 = vpop.f32.mrf.mxu0
    %6112 = vmatprep.mubr.f32.mxu0 0.0
    %6113 = vmatmul.mubr.f32.gmra.mxu0 %v4847
    %v6114 = vpop.f32.mrf.mxu0
    %v6115 = vadd.f32 %v5466, %v6114
    %v6116 = vpop.f32.mrf.mxu0
    %6117 = vmatprep.mubr.f32.mxu0 0.0
    %6118 = vmatmul.mubr.f32.gmra.mxu0 %v4849
    %v6119 = vpop.f32.mrf.mxu0
    %v6120 = vadd.f32 %v5471, %v6119
    %v6121 = vpop.f32.mrf.mxu0
    %6122 = vmatprep.mubr.f32.mxu0 0.0
    %6123 = vmatmul.mubr.f32.gmra.mxu0 %v4851
    %v6124 = vpop.f32.mrf.mxu0
    %v6125 = vadd.f32 %v5476, %v6124
    %v6126 = vpop.f32.mrf.mxu0
    %6127 = vmatprep.mubr.f32.mxu0 0.0
    %6128 = vmatmul.mubr.f32.gmra.mxu0 %v4853
    %v6129 = vpop.f32.mrf.mxu0
    %v6130 = vpop.f32.mrf.mxu0
    %6131 = vmatprep.mubr.f32.mxu0 0.0
    %6132 = vmatmul.mubr.f32.gmra.mxu0 %v4855
    %v6133 = vpop.f32.mrf.mxu0
    %v6134 = vpop.f32.mrf.mxu0
    %6135 = vmatprep.mubr.f32.mxu0 0.0
    %6136 = vmatmul.mubr.f32.gmra.mxu0 %v4857
    %v6137 = vpop.f32.mrf.mxu0
    %v6138 = vpop.f32.mrf.mxu0
    %6139 = vmatprep.mubr.f32.mxu0 0.0
    %6140 = vmatmul.mubr.f32.gmra.mxu0 %v4859
    %v6141 = vpop.f32.mrf.mxu0
    %v6142 = vpop.f32.mrf.mxu0
    %6143 = vmatprep.mubr.f32.mxu0 0.0
    %6144 = vmatmul.mubr.f32.gmra.mxu0 %v4861
    %v6145 = vpop.f32.mrf.mxu0
    %v6146 = vpop.f32.mrf.mxu0
    %6147 = vmatprep.mubr.f32.mxu0 0.0
    %6148 = vmatmul.mubr.f32.gmra.mxu0 %v4863
    %v6149 = vpop.f32.mrf.mxu0
    %v6150 = vpop.f32.mrf.mxu0
    %6151 = vmatprep.mubr.f32.mxu0 0.0
    %6152 = vmatmul.mubr.f32.gmra.mxu0 %v4865
    %v6153 = vpop.f32.mrf.mxu0
    %v6154 = vpop.f32.mrf.mxu0
    %6155 = vmatprep.mubr.f32.mxu0 0.0
    %6156 = vmatmul.mubr.f32.gmra.mxu0 %v4867
    %v6157 = vpop.f32.mrf.mxu0
    %v6158 = vpop.f32.mrf.mxu0
    %6159 = vmatprep.mubr.f32.mxu0 0.0
    %6160 = vmatmul.mubr.f32.gmra.mxu0 %v4869
    %v6161 = vpop.f32.mrf.mxu0
    %v6162 = vpop.f32.mrf.mxu0
    %6163 = vmatprep.mubr.f32.mxu0 0.0
    %6164 = vmatmul.mubr.f32.gmra.mxu0 %v4871
    %v6165 = vpop.f32.mrf.mxu0
    %v6166 = vpop.f32.mrf.mxu0
    %6167 = vmatprep.mubr.f32.mxu0 0.0
    %6168 = vmatmul.mubr.f32.gmra.mxu0 %v4873
    %v6169 = vpop.f32.mrf.mxu0
    %v6170 = vpop.f32.mrf.mxu0
    %6171 = vmatprep.mubr.f32.mxu0 0.0
    %6172 = vmatmul.mubr.f32.gmra.mxu0 %v4876
    %v6173 = vpop.f32.mrf.mxu0
    %v6174 = vpop.f32.mrf.mxu0
    %6175 = vdwg.mxu0
    %v6176 = vmax.f32 %v5594, %v5648
    %v6177 = vmax.f32 %v5599, %v5653
    %v6178 = vmax.f32 %v5604, %v5658
    %v6179 = vmax.f32 %v5609, %v5663
    %v6180 = vmax.f32 %v5614, %v5668
    %v6181 = vmax.f32 %v5619, %v5673
    %v6182 = vmax.f32 %v5624, %v5678
    %v6183 = vmax.f32 %v5629, %v5683
    %v6184 = vmax.f32 %v5634, %v5688
    %v6185 = vmax.f32 %v5639, %v5693
    %v6186 = vmax.f32 %v5702, %v5756
    %v6187 = vmax.f32 %v5707, %v5761
    %v6188 = vmax.f32 %v5712, %v5766
    %v6189 = vmax.f32 %v5717, %v5771
    %v6190 = vmax.f32 %v5722, %v5776
    %v6191 = vmax.f32 %v5727, %v5781
    %v6192 = vmax.f32 %v5732, %v5786
    %v6193 = vmax.f32 %v5737, %v5791
    %v6194 = vmax.f32 %v5742, %v5796
    %v6195 = vmax.f32 %v5747, %v5801
    %v6196 = vmax.f32 %v5810, %v5864
    %v6197 = vmax.f32 %v5815, %v5869
    %v6198 = vmax.f32 %v5820, %v5874
    %v6199 = vmax.f32 %v5825, %v5879
    %v6200 = vmax.f32 %v5830, %v5884
    %v6201 = vmax.f32 %v5835, %v5889
    %v6202 = vmax.f32 %v5840, %v5894
    %v6203 = vmax.f32 %v5845, %v5899
    %v6204 = vmax.f32 %v5850, %v5904
    %v6205 = vmax.f32 %v5855, %v5909
    %v6206 = vmax.f32 %v5918, %v5972
    %v6207 = vmax.f32 %v5923, %v5977
    %v6208 = vmax.f32 %v5928, %v5982
    %v6209 = vmax.f32 %v5933, %v5987
    %v6210 = vmax.f32 %v5938, %v5992
    %v6211 = vmax.f32 %v5943, %v5997
    %v6212 = vmax.f32 %v5948, %v6002
    %v6213 = vmax.f32 %v5953, %v6007
    %v6214 = vmax.f32 %v5958, %v6012
    %v6215 = vmax.f32 %v5963, %v6017
    %v6216 = vmax.f32 %v6026, %v6080
    %v6217 = vmax.f32 %v6031, %v6085
    %v6218 = vmax.f32 %v6036, %v6090
    %v6219 = vmax.f32 %v6041, %v6095
    %v6220 = vmax.f32 %v6046, %v6100
    %v6221 = vmax.f32 %v6051, %v6105
    %v6222 = vmax.f32 %v6056, %v6110
    %v6223 = vmax.f32 %v6061, %v6115
    %v6224 = vmax.f32 %v6066, %v6120
    %v6225 = vmax.f32 %v6071, %v6125
    %v6226 = vmax.f32 %v6176, %v6177
    %v6227 = vmax.f32 %v6178, %v6179
    %v6228 = vmax.f32 %v6180, %v6181
    %v6229 = vmax.f32 %v6182, %v6183
    %v6230 = vmax.f32 %v6184, %v6185
    %v6231 = vmax.f32 %v6186, %v6187
    %v6232 = vmax.f32 %v6188, %v6189
    %v6233 = vmax.f32 %v6190, %v6191
    %v6234 = vmax.f32 %v6192, %v6193
    %v6235 = vmax.f32 %v6194, %v6195
    %v6236 = vmax.f32 %v6196, %v6197
    %v6237 = vmax.f32 %v6198, %v6199
    %v6238 = vmax.f32 %v6200, %v6201
    %v6239 = vmax.f32 %v6202, %v6203
    %v6240 = vmax.f32 %v6204, %v6205
    %v6241 = vmax.f32 %v6206, %v6207
    %v6242 = vmax.f32 %v6208, %v6209
    %v6243 = vmax.f32 %v6210, %v6211
    %v6244 = vmax.f32 %v6212, %v6213
    %v6245 = vmax.f32 %v6214, %v6215
    %v6246 = vmax.f32 %v6216, %v6217
    %v6247 = vmax.f32 %v6218, %v6219
    %v6248 = vmax.f32 %v6220, %v6221
    %v6249 = vmax.f32 %v6222, %v6223
    %v6250 = vmax.f32 %v6224, %v6225
    %v6251 = vld [vmem:[%s4] sm:$0x1]
    %v6253 = vlaneseq
    %v6254 = vshrl.u32 %v6253, 7
    %v6255 = vsub.s32 0, %v6254
    %v6256 = vrot.slane %v6251, %v6255
    %v6258 = vadd.f32 %v6226, %v6256
    %v6259 = vadd.f32 %v6227, %v6256
    %v6260 = vadd.f32 %v6228, %v6256
    %v6261 = vadd.f32 %v6229, %v6256
    %v6262 = vadd.f32 %v6230, %v6256
    %v6263 = vadd.f32 %v6231, %v6256
    %v6264 = vadd.f32 %v6232, %v6256
    %v6265 = vadd.f32 %v6233, %v6256
    %v6266 = vadd.f32 %v6234, %v6256
    %v6267 = vadd.f32 %v6235, %v6256
    %v6268 = vadd.f32 %v6236, %v6256
    %v6269 = vadd.f32 %v6237, %v6256
    %v6270 = vadd.f32 %v6238, %v6256
    %v6271 = vadd.f32 %v6239, %v6256
    %v6272 = vadd.f32 %v6240, %v6256
    %v6273 = vadd.f32 %v6241, %v6256
    %v6274 = vadd.f32 %v6242, %v6256
    %v6275 = vadd.f32 %v6243, %v6256
    %v6276 = vadd.f32 %v6244, %v6256
    %v6277 = vadd.f32 %v6245, %v6256
    %v6278 = vadd.f32 %v6246, %v6256
    %v6279 = vadd.f32 %v6247, %v6256
    %v6280 = vadd.f32 %v6248, %v6256
    %v6281 = vadd.f32 %v6249, %v6256
    %v6282 = vadd.f32 %v6250, %v6256
    %v6283 = vmax.f32 %v6258, 0.0
    %v6284 = vmax.f32 %v6259, 0.0
    %v6285 = vmax.f32 %v6260, 0.0
    %v6286 = vmax.f32 %v6261, 0.0
    %v6287 = vmax.f32 %v6262, 0.0
    %v6288 = vmax.f32 %v6263, 0.0
    %v6289 = vmax.f32 %v6264, 0.0
    %v6290 = vmax.f32 %v6265, 0.0
    %v6291 = vmax.f32 %v6266, 0.0
    %v6292 = vmax.f32 %v6267, 0.0
    %v6293 = vmax.f32 %v6268, 0.0
    %v6294 = vmax.f32 %v6269, 0.0
    %v6295 = vmax.f32 %v6270, 0.0
    %v6296 = vmax.f32 %v6271, 0.0
    %v6297 = vmax.f32 %v6272, 0.0
    %v6298 = vmax.f32 %v6273, 0.0
    %v6299 = vmax.f32 %v6274, 0.0
    %v6300 = vmax.f32 %v6275, 0.0
    %v6301 = vmax.f32 %v6276, 0.0
    %v6302 = vmax.f32 %v6277, 0.0
    %v6303 = vmax.f32 %v6278, 0.0
    %v6304 = vmax.f32 %v6279, 0.0
    %v6305 = vmax.f32 %v6280, 0.0
    %v6306 = vmax.f32 %v6281, 0.0
    %v6307 = vmax.f32 %v6282, 0.0
    %6309 = vrot.lane.b32.xlu0 %v6284, 64
    %v6310 = vpop.permute.xlu0 %6309
    %6313 = vrot.lane.b32.xlu0 %v6286, 64
    %v6314 = vpop.permute.xlu0 %6313
    %6317 = vrot.lane.b32.xlu0 %v6288, 64
    %v6318 = vpop.permute.xlu0 %6317
    %6321 = vrot.lane.b32.xlu0 %v6290, 64
    %v6322 = vpop.permute.xlu0 %6321
    %6325 = vrot.lane.b32.xlu0 %v6292, 64
    %v6326 = vpop.permute.xlu0 %6325
    %6329 = vrot.lane.b32.xlu0 %v6294, 64
    %v6330 = vpop.permute.xlu0 %6329
    %6333 = vrot.lane.b32.xlu0 %v6296, 64
    %v6334 = vpop.permute.xlu0 %6333
    %6337 = vrot.lane.b32.xlu0 %v6298, 64
    %v6338 = vpop.permute.xlu0 %6337
    %v6340 = vsel %vm4092, %v6283, %v6310
    %v6341 = vsel %vm4092, %v6285, %v6314
    %v6342 = vsel %vm4092, %v6287, %v6318
    %v6343 = vsel %vm4092, %v6289, %v6322
    %v6344 = vsel %vm4092, %v6291, %v6326
    %v6345 = vsel %vm4092, %v6293, %v6330
    %v6346 = vsel %vm4092, %v6295, %v6334
    %v6347 = vsel %vm4092, %v6297, %v6338
    %6349 = vrot.lane.b32.xlu0 %v6300, 64
    %v6350 = vpop.permute.xlu0 %6349
    %6353 = vrot.lane.b32.xlu0 %v6302, 64
    %v6354 = vpop.permute.xlu0 %6353
    %6357 = vrot.lane.b32.xlu0 %v6304, 64
    %v6358 = vpop.permute.xlu0 %6357
    %6361 = vrot.lane.b32.xlu0 %v6306, 64
    %v6362 = vpop.permute.xlu0 %6361
    %v6364 = vsel %vm4092, %v6299, %v6350
    %v6365 = vsel %vm4092, %v6301, %v6354
    %v6366 = vsel %vm4092, %v6303, %v6358
    %v6367 = vsel %vm4092, %v6305, %v6362
    %v6368 = vld [vmem:[#allocation2] sm:$0xff]
    %v6369 = vld [vmem:[#allocation2 + $0x8] sm:$0xff]
    %v6370 = vld [vmem:[#allocation2 + $0x10] sm:$0xff]
    %v6371 = vld [vmem:[#allocation2 + $0x18] sm:$0xff]
    %v6372 = vld [vmem:[#allocation2 + $0x20] sm:$0xff]
    %v6373 = vld [vmem:[#allocation2 + $0x28] sm:$0xff]
    %v6374 = vld [vmem:[#allocation2 + $0x30] sm:$0xff]
    %v6375 = vld [vmem:[#allocation2 + $0x38] sm:$0xff]
    %v6376 = vld [vmem:[#allocation2 + $0x40] sm:$0xff]
    %v6377 = vld [vmem:[#allocation2 + $0x48] sm:$0xff]
    %v6378 = vld [vmem:[#allocation2 + $0x50] sm:$0xff]
    %v6379 = vld [vmem:[#allocation2 + $0x58] sm:$0xff]
    %v6380 = vld [vmem:[#allocation2 + $0x60] sm:$0xff]
    %v6381 = vld [vmem:[#allocation2 + $0x68] sm:$0xff]
    %v6382 = vld [vmem:[#allocation2 + $0x70] sm:$0xff]
    %v6383 = vld [vmem:[#allocation2 + $0x78] sm:$0xff]
    %v6384 = vld [vmem:[#allocation2 + $0x80] sm:$0xff]
    %v6385 = vld [vmem:[#allocation2 + $0x88] sm:$0xff]
    %v6386 = vld [vmem:[#allocation2 + $0x90] sm:$0xff]
    %v6387 = vld [vmem:[#allocation2 + $0x98] sm:$0xff]
    %v6388 = vld [vmem:[#allocation2 + $0xa0] sm:$0xff]
    %v6389 = vld [vmem:[#allocation2 + $0xa8] sm:$0xff]
    %v6390 = vld [vmem:[#allocation2 + $0xb0] sm:$0xff]
    %v6391 = vld [vmem:[#allocation2 + $0xb8] sm:$0xff]
    %v6392 = vld [vmem:[#allocation2 + $0xc0] sm:$0xff]
    %v6393 = vld [vmem:[#allocation2 + $0xc8] sm:$0xff]
    %v6394 = vld [vmem:[#allocation2 + $0xd0] sm:$0xff]
    %v6395 = vld [vmem:[#allocation2 + $0xd8] sm:$0xff]
    %v6396 = vld [vmem:[#allocation2 + $0xe0] sm:$0xff]
    %v6397 = vld [vmem:[#allocation2 + $0xe8] sm:$0xff]
    %v6398 = vld [vmem:[#allocation2 + $0xf0] sm:$0xff]
    %v6399 = vld [vmem:[#allocation2 + $0xf8] sm:$0xff]
    %v6400 = vld [vmem:[#allocation2 + $0x100] sm:$0xff]
    %v6401 = vld [vmem:[#allocation2 + $0x108] sm:$0xff]
    %v6402 = vld [vmem:[#allocation2 + $0x110] sm:$0xff]
    %v6403 = vld [vmem:[#allocation2 + $0x118] sm:$0xff]
    %v6404 = vld [vmem:[#allocation2 + $0x120] sm:$0xff]
    %v6405 = vld [vmem:[#allocation2 + $0x128] sm:$0xff]
    %v6406 = vld [vmem:[#allocation2 + $0x130] sm:$0xff]
    %v6407 = vld [vmem:[#allocation2 + $0x138] sm:$0xff]
    %v6408 = vld [vmem:[#allocation2 + $0x140] sm:$0xff]
    %v6409 = vld [vmem:[#allocation2 + $0x148] sm:$0xff]
    %v6410 = vld [vmem:[#allocation2 + $0x150] sm:$0xff]
    %v6411 = vld [vmem:[#allocation2 + $0x158] sm:$0xff]
    %v6412 = vld [vmem:[#allocation2 + $0x160] sm:$0xff]
    %v6413 = vld [vmem:[#allocation2 + $0x168] sm:$0xff]
    %v6414 = vld [vmem:[#allocation2 + $0x170] sm:$0xff]
    %v6415 = vld [vmem:[#allocation2 + $0x178] sm:$0xff]
    %v6416 = vld [vmem:[#allocation2 + $0x180] sm:$0xff]
    %v6417 = vld [vmem:[#allocation2 + $0x188] sm:$0xff]
    %v6418 = vld [vmem:[#allocation2 + $0x190] sm:$0xff]
    %v6419 = vld [vmem:[#allocation2 + $0x198] sm:$0xff]
    %v6420 = vld [vmem:[#allocation2 + $0x1a0] sm:$0xff]
    %v6421 = vld [vmem:[#allocation2 + $0x1a8] sm:$0xff]
    %v6422 = vld [vmem:[#allocation2 + $0x1b0] sm:$0xff]
    %v6423 = vld [vmem:[#allocation2 + $0x1b8] sm:$0xff]
    %v6424 = vld [vmem:[#allocation2 + $0x1c0] sm:$0xff]
    %v6425 = vld [vmem:[#allocation2 + $0x1c8] sm:$0xff]
    %v6426 = vld [vmem:[#allocation2 + $0x1d0] sm:$0xff]
    %v6427 = vld [vmem:[#allocation2 + $0x1d8] sm:$0xff]
    %v6428 = vld [vmem:[#allocation2 + $0x1e0] sm:$0xff]
    %v6429 = vld [vmem:[#allocation2 + $0x1e8] sm:$0xff]
    %v6430 = vld [vmem:[#allocation2 + $0x1f0] sm:$0xff]
    %v6431 = vld [vmem:[#allocation2 + $0x1f8] sm:$0xff]
    %v6432 = vld [vmem:[#allocation2 + $0x200] sm:$0xff]
    %v6433 = vld [vmem:[#allocation2 + $0x208] sm:$0xff]
    %v6434 = vld [vmem:[#allocation2 + $0x210] sm:$0xff]
    %v6435 = vld [vmem:[#allocation2 + $0x218] sm:$0xff]
    %v6436 = vld [vmem:[#allocation2 + $0x220] sm:$0xff]
    %v6437 = vld [vmem:[#allocation2 + $0x228] sm:$0xff]
    %v6438 = vld [vmem:[#allocation2 + $0x230] sm:$0xff]
    %v6439 = vld [vmem:[#allocation2 + $0x238] sm:$0xff]
    %v6440 = vld [vmem:[#allocation2 + $0x240] sm:$0xff]
    %v6441 = vld [vmem:[#allocation2 + $0x248] sm:$0xff]
    %v6442 = vld [vmem:[#allocation2 + $0x250] sm:$0xff]
    %v6443 = vld [vmem:[#allocation2 + $0x258] sm:$0xff]
    %v6444 = vld [vmem:[#allocation2 + $0x260] sm:$0xff]
    %v6445 = vld [vmem:[#allocation2 + $0x268] sm:$0xff]
    %v6446 = vld [vmem:[#allocation2 + $0x270] sm:$0xff]
    %v6447 = vld [vmem:[#allocation2 + $0x278] sm:$0xff]
    %v6448 = vld [vmem:[#allocation2 + $0x280] sm:$0xff]
    %v6449 = vld [vmem:[#allocation2 + $0x288] sm:$0xff]
    %v6450 = vld [vmem:[#allocation2 + $0x290] sm:$0xff]
    %v6451 = vld [vmem:[#allocation2 + $0x298] sm:$0xff]
    %v6452 = vld [vmem:[#allocation2 + $0x2a0] sm:$0xff]
    %v6453 = vld [vmem:[#allocation2 + $0x2a8] sm:$0xff]
    %v6454 = vld [vmem:[#allocation2 + $0x2b0] sm:$0xff]
    %v6455 = vld [vmem:[#allocation2 + $0x2b8] sm:$0xff]
    %v6456 = vld [vmem:[#allocation2 + $0x2c0] sm:$0xff]
    %v6457 = vld [vmem:[#allocation2 + $0x2c8] sm:$0xff]
    %v6458 = vld [vmem:[#allocation2 + $0x2d0] sm:$0xff]
    %v6459 = vld [vmem:[#allocation2 + $0x2d8] sm:$0xff]
    %v6460 = vld [vmem:[#allocation2 + $0x2e0] sm:$0xff]
    %v6461 = vld [vmem:[#allocation2 + $0x2e8] sm:$0xff]
    %v6462 = vld [vmem:[#allocation2 + $0x2f0] sm:$0xff]
    %v6463 = vld [vmem:[#allocation2 + $0x2f8] sm:$0xff]
    %v6464 = vld [vmem:[#allocation2 + $0x300] sm:$0xff]
    %v6465 = vld [vmem:[#allocation2 + $0x308] sm:$0xff]
    %v6466 = vld [vmem:[#allocation2 + $0x310] sm:$0xff]
    %v6467 = vld [vmem:[#allocation2 + $0x318] sm:$0xff]
    %v6468 = vld [vmem:[#allocation2 + $0x320] sm:$0xff]
    %v6469 = vld [vmem:[#allocation2 + $0x328] sm:$0xff]
    %v6470 = vld [vmem:[#allocation2 + $0x330] sm:$0xff]
    %v6471 = vld [vmem:[#allocation2 + $0x338] sm:$0xff]
    %v6472 = vld [vmem:[#allocation2 + $0x340] sm:$0xff]
    %v6473 = vld [vmem:[#allocation2 + $0x348] sm:$0xff]
    %v6474 = vld [vmem:[#allocation2 + $0x350] sm:$0xff]
    %v6475 = vld [vmem:[#allocation2 + $0x358] sm:$0xff]
    %v6476 = vld [vmem:[#allocation2 + $0x360] sm:$0xff]
    %v6477 = vld [vmem:[#allocation2 + $0x368] sm:$0xff]
    %v6478 = vld [vmem:[#allocation2 + $0x370] sm:$0xff]
    %v6479 = vld [vmem:[#allocation2 + $0x378] sm:$0xff]
    %v6480 = vld [vmem:[#allocation2 + $0x380] sm:$0xff]
    %v6481 = vld [vmem:[#allocation2 + $0x388] sm:$0xff]
    %v6482 = vld [vmem:[#allocation2 + $0x390] sm:$0xff]
    %v6483 = vld [vmem:[#allocation2 + $0x398] sm:$0xff]
    %v6484 = vld [vmem:[#allocation2 + $0x3a0] sm:$0xff]
    %v6485 = vld [vmem:[#allocation2 + $0x3a8] sm:$0xff]
    %v6486 = vld [vmem:[#allocation2 + $0x3b0] sm:$0xff]
    %v6487 = vld [vmem:[#allocation2 + $0x3b8] sm:$0xff]
    %v6488 = vld [vmem:[#allocation2 + $0x3c0] sm:$0xff]
    %v6489 = vld [vmem:[#allocation2 + $0x3c8] sm:$0xff]
    %v6490 = vld [vmem:[#allocation2 + $0x3d0] sm:$0xff]
    %v6491 = vld [vmem:[#allocation2 + $0x3d8] sm:$0xff]
    %v6492 = vld [vmem:[#allocation2 + $0x3e0] sm:$0xff]
    %v6493 = vld [vmem:[#allocation2 + $0x3e8] sm:$0xff]
    %v6494 = vld [vmem:[#allocation2 + $0x3f0] sm:$0xff]
    %v6495 = vld [vmem:[#allocation2 + $0x3f8] sm:$0xff]
    %v6496 = vld [vmem:[#allocation2 + $0x400] sm:$0xff]
    %v6497 = vld [vmem:[#allocation2 + $0x408] sm:$0xff]
    %v6498 = vld [vmem:[#allocation2 + $0x410] sm:$0xff]
    %v6499 = vld [vmem:[#allocation2 + $0x418] sm:$0xff]
    %v6500 = vld [vmem:[#allocation2 + $0x420] sm:$0xff]
    %v6501 = vld [vmem:[#allocation2 + $0x428] sm:$0xff]
    %v6502 = vld [vmem:[#allocation2 + $0x430] sm:$0xff]
    %v6503 = vld [vmem:[#allocation2 + $0x438] sm:$0xff]
    %v6504 = vld [vmem:[#allocation2 + $0x440] sm:$0xff]
    %v6505 = vld [vmem:[#allocation2 + $0x448] sm:$0xff]
    %v6506 = vld [vmem:[#allocation2 + $0x450] sm:$0xff]
    %v6507 = vld [vmem:[#allocation2 + $0x458] sm:$0xff]
    %v6508 = vld [vmem:[#allocation2 + $0x460] sm:$0xff]
    %v6509 = vld [vmem:[#allocation2 + $0x468] sm:$0xff]
    %v6510 = vld [vmem:[#allocation2 + $0x470] sm:$0xff]
    %v6511 = vld [vmem:[#allocation2 + $0x478] sm:$0xff]
    %v6512 = vld [vmem:[#allocation2 + $0x480] sm:$0xff]
    %v6513 = vld [vmem:[#allocation2 + $0x488] sm:$0xff]
    %v6514 = vld [vmem:[#allocation2 + $0x490] sm:$0xff]
    %v6515 = vld [vmem:[#allocation2 + $0x498] sm:$0xff]
    %v6516 = vld [vmem:[#allocation2 + $0x4a0] sm:$0xff]
    %v6517 = vld [vmem:[#allocation2 + $0x4a8] sm:$0xff]
    %v6518 = vld [vmem:[#allocation2 + $0x4b0] sm:$0xff]
    %v6519 = vld [vmem:[#allocation2 + $0x4b8] sm:$0xff]
    %v6520 = vld [vmem:[#allocation2 + $0x4c0] sm:$0xff]
    %v6521 = vld [vmem:[#allocation2 + $0x4c8] sm:$0xff]
    %v6522 = vld [vmem:[#allocation2 + $0x4d0] sm:$0xff]
    %v6523 = vld [vmem:[#allocation2 + $0x4d8] sm:$0xff]
    %v6524 = vld [vmem:[#allocation2 + $0x4e0] sm:$0xff]
    %v6525 = vld [vmem:[#allocation2 + $0x4e8] sm:$0xff]
    %v6526 = vld [vmem:[#allocation2 + $0x4f0] sm:$0xff]
    %v6527 = vld [vmem:[#allocation2 + $0x4f8] sm:$0xff]
    %v6528 = vld [vmem:[#allocation2 + $0x500] sm:$0xff]
    %v6529 = vld [vmem:[#allocation2 + $0x508] sm:$0xff]
    %v6530 = vld [vmem:[#allocation2 + $0x510] sm:$0xff]
    %v6531 = vld [vmem:[#allocation2 + $0x518] sm:$0xff]
    %v6532 = vld [vmem:[#allocation2 + $0x520] sm:$0xff]
    %v6533 = vld [vmem:[#allocation2 + $0x528] sm:$0xff]
    %v6534 = vld [vmem:[#allocation2 + $0x530] sm:$0xff]
    %v6535 = vld [vmem:[#allocation2 + $0x538] sm:$0xff]
    %v6536 = vld [vmem:[#allocation2 + $0x540] sm:$0xff]
    %v6537 = vld [vmem:[#allocation2 + $0x548] sm:$0xff]
    %v6538 = vld [vmem:[#allocation2 + $0x550] sm:$0xff]
    %v6539 = vld [vmem:[#allocation2 + $0x558] sm:$0xff]
    %v6540 = vld [vmem:[#allocation2 + $0x560] sm:$0xff]
    %v6541 = vld [vmem:[#allocation2 + $0x568] sm:$0xff]
    %v6542 = vld [vmem:[#allocation2 + $0x570] sm:$0xff]
    %v6543 = vld [vmem:[#allocation2 + $0x578] sm:$0xff]
    %v6544 = vld [vmem:[#allocation2 + $0x580] sm:$0xff]
    %v6545 = vld [vmem:[#allocation2 + $0x588] sm:$0xff]
    %v6546 = vld [vmem:[#allocation2 + $0x590] sm:$0xff]
    %v6547 = vld [vmem:[#allocation2 + $0x598] sm:$0xff]
    %v6548 = vld [vmem:[#allocation2 + $0x5a0] sm:$0xff]
    %v6549 = vld [vmem:[#allocation2 + $0x5a8] sm:$0xff]
    %v6550 = vld [vmem:[#allocation2 + $0x5b0] sm:$0xff]
    %v6551 = vld [vmem:[#allocation2 + $0x5b8] sm:$0xff]
    %v6552 = vld [vmem:[#allocation2 + $0x5c0] sm:$0xff]
    %v6553 = vld [vmem:[#allocation2 + $0x5c8] sm:$0xff]
    %v6554 = vld [vmem:[#allocation2 + $0x5d0] sm:$0xff]
    %v6555 = vld [vmem:[#allocation2 + $0x5d8] sm:$0xff]
    %v6556 = vld [vmem:[#allocation2 + $0x5e0] sm:$0xff]
    %v6557 = vld [vmem:[#allocation2 + $0x5e8] sm:$0xff]
    %v6558 = vld [vmem:[#allocation2 + $0x5f0] sm:$0xff]
    %v6559 = vld [vmem:[#allocation2 + $0x5f8] sm:$0xff]
    %v6560 = vld [vmem:[#allocation2 + $0x600] sm:$0xff]
    %v6561 = vld [vmem:[#allocation2 + $0x608] sm:$0xff]
    %v6562 = vld [vmem:[#allocation2 + $0x610] sm:$0xff]
    %v6563 = vld [vmem:[#allocation2 + $0x618] sm:$0xff]
    %v6564 = vld [vmem:[#allocation2 + $0x620] sm:$0xff]
    %v6565 = vld [vmem:[#allocation2 + $0x628] sm:$0xff]
    %v6566 = vld [vmem:[#allocation2 + $0x630] sm:$0xff]
    %v6567 = vld [vmem:[#allocation2 + $0x638] sm:$0xff]
    %v6568 = vld [vmem:[%s6] sm:$0x1]
    %v6570 = vlaneseq
    %v6571 = vshrl.u32 %v6570, 7
    %v6572 = vsub.s32 0, %v6571
    %v6573 = vrot.slane %v6568, %v6572
    %v6576 = vsel %vm4092, %v6307, 0
    %6578 = vmatprep.subr.mxu0 0.0
    %6579 = vmatpush1.msra.mxu0 %v6383
    %6580 = vmatprep.subr.mxu0 0.0
    %6581 = vmatpush1.msra.mxu0 %v6382
    %6582 = vmatprep.subr.mxu0 0.0
    %6583 = vmatpush1.msra.mxu0 %v6381
    %6584 = vmatprep.subr.mxu0 0.0
    %6585 = vmatpush1.msra.mxu0 %v6380
    %6586 = vmatprep.subr.mxu0 0.0
    %6587 = vmatpush1.msra.mxu0 %v6379
    %6588 = vmatprep.subr.mxu0 0.0
    %6589 = vmatpush1.msra.mxu0 %v6378
    %6590 = vmatprep.subr.mxu0 0.0
    %6591 = vmatpush1.msra.mxu0 %v6377
    %6592 = vmatprep.subr.mxu0 0.0
    %6593 = vmatpush1.msra.mxu0 %v6376
    %6594 = vmatprep.subr.mxu0 0.0
    %6595 = vmatpush1.msra.mxu0 %v6375
    %6596 = vmatprep.subr.mxu0 0.0
    %6597 = vmatpush1.msra.mxu0 %v6374
    %6598 = vmatprep.subr.mxu0 0.0
    %6599 = vmatpush1.msra.mxu0 %v6373
    %6600 = vmatprep.subr.mxu0 0.0
    %6601 = vmatpush1.msra.mxu0 %v6372
    %6602 = vmatprep.subr.mxu0 0.0
    %6603 = vmatpush1.msra.mxu0 %v6371
    %6604 = vmatprep.subr.mxu0 0.0
    %6605 = vmatpush1.msra.mxu0 %v6370
    %6606 = vmatprep.subr.mxu0 0.0
    %6607 = vmatpush1.msra.mxu0 %v6369
    %6608 = vmatprep.subr.mxu0 0.0
    %6609 = vmatpush1.msra.mxu0 %v6368
    %6610 = vmatprep.subr.mxu0 0.0
    %6611 = vmatpush2.msra.mxu0 %v6399
    %6612 = vmatprep.subr.mxu0 0.0
    %6613 = vmatpush2.msra.mxu0 %v6398
    %6614 = vmatprep.subr.mxu0 0.0
    %6615 = vmatpush2.msra.mxu0 %v6397
    %6616 = vmatprep.subr.mxu0 0.0
    %6617 = vmatpush2.msra.mxu0 %v6396
    %6618 = vmatprep.subr.mxu0 0.0
    %6619 = vmatpush2.msra.mxu0 %v6395
    %6620 = vmatprep.subr.mxu0 0.0
    %6621 = vmatpush2.msra.mxu0 %v6394
    %6622 = vmatprep.subr.mxu0 0.0
    %6623 = vmatpush2.msra.mxu0 %v6393
    %6624 = vmatprep.subr.mxu0 0.0
    %6625 = vmatpush2.msra.mxu0 %v6392
    %6626 = vmatprep.subr.mxu0 0.0
    %6627 = vmatpush2.msra.mxu0 %v6391
    %6628 = vmatprep.subr.mxu0 0.0
    %6629 = vmatpush2.msra.mxu0 %v6390
    %6630 = vmatprep.subr.mxu0 0.0
    %6631 = vmatpush2.msra.mxu0 %v6389
    %6632 = vmatprep.subr.mxu0 0.0
    %6633 = vmatpush2.msra.mxu0 %v6388
    %6634 = vmatprep.subr.mxu0 0.0
    %6635 = vmatpush2.msra.mxu0 %v6387
    %6636 = vmatprep.subr.mxu0 0.0
    %6637 = vmatpush2.msra.mxu0 %v6386
    %6638 = vmatprep.subr.mxu0 0.0
    %6639 = vmatpush2.msra.mxu0 %v6385
    %6640 = vmatprep.subr.mxu0 0.0
    %6641 = vmatpush2.msra.mxu0 %v6384
    %6642 = vmatprep.mubr.f32.mxu0 %v6341
    %6643 = vmatmul.mubr.f32.gmra.mxu0 %v6340
    %v6644 = vpop.f32.mrf.mxu0
    %v6645 = vadd.f32 %v6573, %v6644
    %v6646 = vpop.f32.mrf.mxu0
    %6647 = vdwg.mxu0
    %6648 = vmatprep.subr.mxu0 0.0
    %6649 = vmatpush1.msra.mxu0 %v6415
    %6650 = vmatprep.subr.mxu0 0.0
    %6651 = vmatpush1.msra.mxu0 %v6414
    %6652 = vmatprep.subr.mxu0 0.0
    %6653 = vmatpush1.msra.mxu0 %v6413
    %6654 = vmatprep.subr.mxu0 0.0
    %6655 = vmatpush1.msra.mxu0 %v6412
    %6656 = vmatprep.subr.mxu0 0.0
    %6657 = vmatpush1.msra.mxu0 %v6411
    %6658 = vmatprep.subr.mxu0 0.0
    %6659 = vmatpush1.msra.mxu0 %v6410
    %6660 = vmatprep.subr.mxu0 0.0
    %6661 = vmatpush1.msra.mxu0 %v6409
    %6662 = vmatprep.subr.mxu0 0.0
    %6663 = vmatpush1.msra.mxu0 %v6408
    %6664 = vmatprep.subr.mxu0 0.0
    %6665 = vmatpush1.msra.mxu0 %v6407
    %6666 = vmatprep.subr.mxu0 0.0
    %6667 = vmatpush1.msra.mxu0 %v6406
    %6668 = vmatprep.subr.mxu0 0.0
    %6669 = vmatpush1.msra.mxu0 %v6405
    %6670 = vmatprep.subr.mxu0 0.0
    %6671 = vmatpush1.msra.mxu0 %v6404
    %6672 = vmatprep.subr.mxu0 0.0
    %6673 = vmatpush1.msra.mxu0 %v6403
    %6674 = vmatprep.subr.mxu0 0.0
    %6675 = vmatpush1.msra.mxu0 %v6402
    %6676 = vmatprep.subr.mxu0 0.0
    %6677 = vmatpush1.msra.mxu0 %v6401
    %6678 = vmatprep.subr.mxu0 0.0
    %6679 = vmatpush1.msra.mxu0 %v6400
    %6680 = vmatprep.subr.mxu0 0.0
    %6681 = vmatpush2.msra.mxu0 %v6431
    %6682 = vmatprep.subr.mxu0 0.0
    %6683 = vmatpush2.msra.mxu0 %v6430
    %6684 = vmatprep.subr.mxu0 0.0
    %6685 = vmatpush2.msra.mxu0 %v6429
    %6686 = vmatprep.subr.mxu0 0.0
    %6687 = vmatpush2.msra.mxu0 %v6428
    %6688 = vmatprep.subr.mxu0 0.0
    %6689 = vmatpush2.msra.mxu0 %v6427
    %6690 = vmatprep.subr.mxu0 0.0
    %6691 = vmatpush2.msra.mxu0 %v6426
    %6692 = vmatprep.subr.mxu0 0.0
    %6693 = vmatpush2.msra.mxu0 %v6425
    %6694 = vmatprep.subr.mxu0 0.0
    %6695 = vmatpush2.msra.mxu0 %v6424
    %6696 = vmatprep.subr.mxu0 0.0
    %6697 = vmatpush2.msra.mxu0 %v6423
    %6698 = vmatprep.subr.mxu0 0.0
    %6699 = vmatpush2.msra.mxu0 %v6422
    %6700 = vmatprep.subr.mxu0 0.0
    %6701 = vmatpush2.msra.mxu0 %v6421
    %6702 = vmatprep.subr.mxu0 0.0
    %6703 = vmatpush2.msra.mxu0 %v6420
    %6704 = vmatprep.subr.mxu0 0.0
    %6705 = vmatpush2.msra.mxu0 %v6419
    %6706 = vmatprep.subr.mxu0 0.0
    %6707 = vmatpush2.msra.mxu0 %v6418
    %6708 = vmatprep.subr.mxu0 0.0
    %6709 = vmatpush2.msra.mxu0 %v6417
    %6710 = vmatprep.subr.mxu0 0.0
    %6711 = vmatpush2.msra.mxu0 %v6416
    %6712 = vmatprep.mubr.f32.mxu0 %v6343
    %6713 = vmatmul.mubr.f32.gmra.mxu0 %v6342
    %v6714 = vpop.f32.mrf.mxu0
    %v6715 = vadd.f32 %v6645, %v6714
    %v6716 = vpop.f32.mrf.mxu0
    %6717 = vdwg.mxu0
    %6718 = vmatprep.subr.mxu0 0.0
    %6719 = vmatpush1.msra.mxu0 %v6447
    %6720 = vmatprep.subr.mxu0 0.0
    %6721 = vmatpush1.msra.mxu0 %v6446
    %6722 = vmatprep.subr.mxu0 0.0
    %6723 = vmatpush1.msra.mxu0 %v6445
    %6724 = vmatprep.subr.mxu0 0.0
    %6725 = vmatpush1.msra.mxu0 %v6444
    %6726 = vmatprep.subr.mxu0 0.0
    %6727 = vmatpush1.msra.mxu0 %v6443
    %6728 = vmatprep.subr.mxu0 0.0
    %6729 = vmatpush1.msra.mxu0 %v6442
    %6730 = vmatprep.subr.mxu0 0.0
    %6731 = vmatpush1.msra.mxu0 %v6441
    %6732 = vmatprep.subr.mxu0 0.0
    %6733 = vmatpush1.msra.mxu0 %v6440
    %6734 = vmatprep.subr.mxu0 0.0
    %6735 = vmatpush1.msra.mxu0 %v6439
    %6736 = vmatprep.subr.mxu0 0.0
    %6737 = vmatpush1.msra.mxu0 %v6438
    %6738 = vmatprep.subr.mxu0 0.0
    %6739 = vmatpush1.msra.mxu0 %v6437
    %6740 = vmatprep.subr.mxu0 0.0
    %6741 = vmatpush1.msra.mxu0 %v6436
    %6742 = vmatprep.subr.mxu0 0.0
    %6743 = vmatpush1.msra.mxu0 %v6435
    %6744 = vmatprep.subr.mxu0 0.0
    %6745 = vmatpush1.msra.mxu0 %v6434
    %6746 = vmatprep.subr.mxu0 0.0
    %6747 = vmatpush1.msra.mxu0 %v6433
    %6748 = vmatprep.subr.mxu0 0.0
    %6749 = vmatpush1.msra.mxu0 %v6432
    %6750 = vmatprep.subr.mxu0 0.0
    %6751 = vmatpush2.msra.mxu0 %v6463
    %6752 = vmatprep.subr.mxu0 0.0
    %6753 = vmatpush2.msra.mxu0 %v6462
    %6754 = vmatprep.subr.mxu0 0.0
    %6755 = vmatpush2.msra.mxu0 %v6461
    %6756 = vmatprep.subr.mxu0 0.0
    %6757 = vmatpush2.msra.mxu0 %v6460
    %6758 = vmatprep.subr.mxu0 0.0
    %6759 = vmatpush2.msra.mxu0 %v6459
    %6760 = vmatprep.subr.mxu0 0.0
    %6761 = vmatpush2.msra.mxu0 %v6458
    %6762 = vmatprep.subr.mxu0 0.0
    %6763 = vmatpush2.msra.mxu0 %v6457
    %6764 = vmatprep.subr.mxu0 0.0
    %6765 = vmatpush2.msra.mxu0 %v6456
    %6766 = vmatprep.subr.mxu0 0.0
    %6767 = vmatpush2.msra.mxu0 %v6455
    %6768 = vmatprep.subr.mxu0 0.0
    %6769 = vmatpush2.msra.mxu0 %v6454
    %6770 = vmatprep.subr.mxu0 0.0
    %6771 = vmatpush2.msra.mxu0 %v6453
    %6772 = vmatprep.subr.mxu0 0.0
    %6773 = vmatpush2.msra.mxu0 %v6452
    %6774 = vmatprep.subr.mxu0 0.0
    %6775 = vmatpush2.msra.mxu0 %v6451
    %6776 = vmatprep.subr.mxu0 0.0
    %6777 = vmatpush2.msra.mxu0 %v6450
    %6778 = vmatprep.subr.mxu0 0.0
    %6779 = vmatpush2.msra.mxu0 %v6449
    %6780 = vmatprep.subr.mxu0 0.0
    %6781 = vmatpush2.msra.mxu0 %v6448
    %6782 = vmatprep.mubr.f32.mxu0 %v6345
    %6783 = vmatmul.mubr.f32.gmra.mxu0 %v6344
    %v6784 = vpop.f32.mrf.mxu0
    %v6785 = vadd.f32 %v6715, %v6784
    %v6786 = vpop.f32.mrf.mxu0
    %6787 = vdwg.mxu0
    %6788 = vmatprep.subr.mxu0 0.0
    %6789 = vmatpush1.msra.mxu0 %v6479
    %6790 = vmatprep.subr.mxu0 0.0
    %6791 = vmatpush1.msra.mxu0 %v6478
    %6792 = vmatprep.subr.mxu0 0.0
    %6793 = vmatpush1.msra.mxu0 %v6477
    %6794 = vmatprep.subr.mxu0 0.0
    %6795 = vmatpush1.msra.mxu0 %v6476
    %6796 = vmatprep.subr.mxu0 0.0
    %6797 = vmatpush1.msra.mxu0 %v6475
    %6798 = vmatprep.subr.mxu0 0.0
    %6799 = vmatpush1.msra.mxu0 %v6474
    %6800 = vmatprep.subr.mxu0 0.0
    %6801 = vmatpush1.msra.mxu0 %v6473
    %6802 = vmatprep.subr.mxu0 0.0
    %6803 = vmatpush1.msra.mxu0 %v6472
    %6804 = vmatprep.subr.mxu0 0.0
    %6805 = vmatpush1.msra.mxu0 %v6471
    %6806 = vmatprep.subr.mxu0 0.0
    %6807 = vmatpush1.msra.mxu0 %v6470
    %6808 = vmatprep.subr.mxu0 0.0
    %6809 = vmatpush1.msra.mxu0 %v6469
    %6810 = vmatprep.subr.mxu0 0.0
    %6811 = vmatpush1.msra.mxu0 %v6468
    %6812 = vmatprep.subr.mxu0 0.0
    %6813 = vmatpush1.msra.mxu0 %v6467
    %6814 = vmatprep.subr.mxu0 0.0
    %6815 = vmatpush1.msra.mxu0 %v6466
    %6816 = vmatprep.subr.mxu0 0.0
    %6817 = vmatpush1.msra.mxu0 %v6465
    %6818 = vmatprep.subr.mxu0 0.0
    %6819 = vmatpush1.msra.mxu0 %v6464
    %6820 = vmatprep.subr.mxu0 0.0
    %6821 = vmatpush2.msra.mxu0 %v6495
    %6822 = vmatprep.subr.mxu0 0.0
    %6823 = vmatpush2.msra.mxu0 %v6494
    %6824 = vmatprep.subr.mxu0 0.0
    %6825 = vmatpush2.msra.mxu0 %v6493
    %6826 = vmatprep.subr.mxu0 0.0
    %6827 = vmatpush2.msra.mxu0 %v6492
    %6828 = vmatprep.subr.mxu0 0.0
    %6829 = vmatpush2.msra.mxu0 %v6491
    %6830 = vmatprep.subr.mxu0 0.0
    %6831 = vmatpush2.msra.mxu0 %v6490
    %6832 = vmatprep.subr.mxu0 0.0
    %6833 = vmatpush2.msra.mxu0 %v6489
    %6834 = vmatprep.subr.mxu0 0.0
    %6835 = vmatpush2.msra.mxu0 %v6488
    %6836 = vmatprep.subr.mxu0 0.0
    %6837 = vmatpush2.msra.mxu0 %v6487
    %6838 = vmatprep.subr.mxu0 0.0
    %6839 = vmatpush2.msra.mxu0 %v6486
    %6840 = vmatprep.subr.mxu0 0.0
    %6841 = vmatpush2.msra.mxu0 %v6485
    %6842 = vmatprep.subr.mxu0 0.0
    %6843 = vmatpush2.msra.mxu0 %v6484
    %6844 = vmatprep.subr.mxu0 0.0
    %6845 = vmatpush2.msra.mxu0 %v6483
    %6846 = vmatprep.subr.mxu0 0.0
    %6847 = vmatpush2.msra.mxu0 %v6482
    %6848 = vmatprep.subr.mxu0 0.0
    %6849 = vmatpush2.msra.mxu0 %v6481
    %6850 = vmatprep.subr.mxu0 0.0
    %6851 = vmatpush2.msra.mxu0 %v6480
    %6852 = vmatprep.mubr.f32.mxu0 %v6347
    %6853 = vmatmul.mubr.f32.gmra.mxu0 %v6346
    %v6854 = vpop.f32.mrf.mxu0
    %v6855 = vadd.f32 %v6785, %v6854
    %v6856 = vpop.f32.mrf.mxu0
    %6857 = vdwg.mxu0
    %6858 = vmatprep.subr.mxu0 0.0
    %6859 = vmatpush1.msra.mxu0 %v6511
    %6860 = vmatprep.subr.mxu0 0.0
    %6861 = vmatpush1.msra.mxu0 %v6510
    %6862 = vmatprep.subr.mxu0 0.0
    %6863 = vmatpush1.msra.mxu0 %v6509
    %6864 = vmatprep.subr.mxu0 0.0
    %6865 = vmatpush1.msra.mxu0 %v6508
    %6866 = vmatprep.subr.mxu0 0.0
    %6867 = vmatpush1.msra.mxu0 %v6507
    %6868 = vmatprep.subr.mxu0 0.0
    %6869 = vmatpush1.msra.mxu0 %v6506
    %6870 = vmatprep.subr.mxu0 0.0
    %6871 = vmatpush1.msra.mxu0 %v6505
    %6872 = vmatprep.subr.mxu0 0.0
    %6873 = vmatpush1.msra.mxu0 %v6504
    %6874 = vmatprep.subr.mxu0 0.0
    %6875 = vmatpush1.msra.mxu0 %v6503
    %6876 = vmatprep.subr.mxu0 0.0
    %6877 = vmatpush1.msra.mxu0 %v6502
    %6878 = vmatprep.subr.mxu0 0.0
    %6879 = vmatpush1.msra.mxu0 %v6501
    %6880 = vmatprep.subr.mxu0 0.0
    %6881 = vmatpush1.msra.mxu0 %v6500
    %6882 = vmatprep.subr.mxu0 0.0
    %6883 = vmatpush1.msra.mxu0 %v6499
    %6884 = vmatprep.subr.mxu0 0.0
    %6885 = vmatpush1.msra.mxu0 %v6498
    %6886 = vmatprep.subr.mxu0 0.0
    %6887 = vmatpush1.msra.mxu0 %v6497
    %6888 = vmatprep.subr.mxu0 0.0
    %6889 = vmatpush1.msra.mxu0 %v6496
    %6890 = vmatprep.subr.mxu0 0.0
    %6891 = vmatpush2.msra.mxu0 %v6527
    %6892 = vmatprep.subr.mxu0 0.0
    %6893 = vmatpush2.msra.mxu0 %v6526
    %6894 = vmatprep.subr.mxu0 0.0
    %6895 = vmatpush2.msra.mxu0 %v6525
    %6896 = vmatprep.subr.mxu0 0.0
    %6897 = vmatpush2.msra.mxu0 %v6524
    %6898 = vmatprep.subr.mxu0 0.0
    %6899 = vmatpush2.msra.mxu0 %v6523
    %6900 = vmatprep.subr.mxu0 0.0
    %6901 = vmatpush2.msra.mxu0 %v6522
    %6902 = vmatprep.subr.mxu0 0.0
    %6903 = vmatpush2.msra.mxu0 %v6521
    %6904 = vmatprep.subr.mxu0 0.0
    %6905 = vmatpush2.msra.mxu0 %v6520
    %6906 = vmatprep.subr.mxu0 0.0
    %6907 = vmatpush2.msra.mxu0 %v6519
    %6908 = vmatprep.subr.mxu0 0.0
    %6909 = vmatpush2.msra.mxu0 %v6518
    %6910 = vmatprep.subr.mxu0 0.0
    %6911 = vmatpush2.msra.mxu0 %v6517
    %6912 = vmatprep.subr.mxu0 0.0
    %6913 = vmatpush2.msra.mxu0 %v6516
    %6914 = vmatprep.subr.mxu0 0.0
    %6915 = vmatpush2.msra.mxu0 %v6515
    %6916 = vmatprep.subr.mxu0 0.0
    %6917 = vmatpush2.msra.mxu0 %v6514
    %6918 = vmatprep.subr.mxu0 0.0
    %6919 = vmatpush2.msra.mxu0 %v6513
    %6920 = vmatprep.subr.mxu0 0.0
    %6921 = vmatpush2.msra.mxu0 %v6512
    %6922 = vmatprep.mubr.f32.mxu0 %v6365
    %6923 = vmatmul.mubr.f32.gmra.mxu0 %v6364
    %v6924 = vpop.f32.mrf.mxu0
    %v6925 = vadd.f32 %v6855, %v6924
    %v6926 = vpop.f32.mrf.mxu0
    %6927 = vdwg.mxu0
    %6928 = vmatprep.subr.mxu0 0.0
    %6929 = vmatpush1.msra.mxu0 %v6543
    %6930 = vmatprep.subr.mxu0 0.0
    %6931 = vmatpush1.msra.mxu0 %v6542
    %6932 = vmatprep.subr.mxu0 0.0
    %6933 = vmatpush1.msra.mxu0 %v6541
    %6934 = vmatprep.subr.mxu0 0.0
    %6935 = vmatpush1.msra.mxu0 %v6540
    %6936 = vmatprep.subr.mxu0 0.0
    %6937 = vmatpush1.msra.mxu0 %v6539
    %6938 = vmatprep.subr.mxu0 0.0
    %6939 = vmatpush1.msra.mxu0 %v6538
    %6940 = vmatprep.subr.mxu0 0.0
    %6941 = vmatpush1.msra.mxu0 %v6537
    %6942 = vmatprep.subr.mxu0 0.0
    %6943 = vmatpush1.msra.mxu0 %v6536
    %6944 = vmatprep.subr.mxu0 0.0
    %6945 = vmatpush1.msra.mxu0 %v6535
    %6946 = vmatprep.subr.mxu0 0.0
    %6947 = vmatpush1.msra.mxu0 %v6534
    %6948 = vmatprep.subr.mxu0 0.0
    %6949 = vmatpush1.msra.mxu0 %v6533
    %6950 = vmatprep.subr.mxu0 0.0
    %6951 = vmatpush1.msra.mxu0 %v6532
    %6952 = vmatprep.subr.mxu0 0.0
    %6953 = vmatpush1.msra.mxu0 %v6531
    %6954 = vmatprep.subr.mxu0 0.0
    %6955 = vmatpush1.msra.mxu0 %v6530
    %6956 = vmatprep.subr.mxu0 0.0
    %6957 = vmatpush1.msra.mxu0 %v6529
    %6958 = vmatprep.subr.mxu0 0.0
    %6959 = vmatpush1.msra.mxu0 %v6528
    %6960 = vmatprep.subr.mxu0 0.0
    %6961 = vmatpush2.msra.mxu0 %v6559
    %6962 = vmatprep.subr.mxu0 0.0
    %6963 = vmatpush2.msra.mxu0 %v6558
    %6964 = vmatprep.subr.mxu0 0.0
    %6965 = vmatpush2.msra.mxu0 %v6557
    %6966 = vmatprep.subr.mxu0 0.0
    %6967 = vmatpush2.msra.mxu0 %v6556
    %6968 = vmatprep.subr.mxu0 0.0
    %6969 = vmatpush2.msra.mxu0 %v6555
    %6970 = vmatprep.subr.mxu0 0.0
    %6971 = vmatpush2.msra.mxu0 %v6554
    %6972 = vmatprep.subr.mxu0 0.0
    %6973 = vmatpush2.msra.mxu0 %v6553
    %6974 = vmatprep.subr.mxu0 0.0
    %6975 = vmatpush2.msra.mxu0 %v6552
    %6976 = vmatprep.subr.mxu0 0.0
    %6977 = vmatpush2.msra.mxu0 %v6551
    %6978 = vmatprep.subr.mxu0 0.0
    %6979 = vmatpush2.msra.mxu0 %v6550
    %6980 = vmatprep.subr.mxu0 0.0
    %6981 = vmatpush2.msra.mxu0 %v6549
    %6982 = vmatprep.subr.mxu0 0.0
    %6983 = vmatpush2.msra.mxu0 %v6548
    %6984 = vmatprep.subr.mxu0 0.0
    %6985 = vmatpush2.msra.mxu0 %v6547
    %6986 = vmatprep.subr.mxu0 0.0
    %6987 = vmatpush2.msra.mxu0 %v6546
    %6988 = vmatprep.subr.mxu0 0.0
    %6989 = vmatpush2.msra.mxu0 %v6545
    %6990 = vmatprep.subr.mxu0 0.0
    %6991 = vmatpush2.msra.mxu0 %v6544
    %6992 = vmatprep.mubr.f32.mxu0 %v6367
    %6993 = vmatmul.mubr.f32.gmra.mxu0 %v6366
    %v6994 = vpop.f32.mrf.mxu0
    %v6995 = vadd.f32 %v6925, %v6994
    %v6996 = vpop.f32.mrf.mxu0
    %6997 = vdwg.mxu0
    %6998 = vmatprep.subr.mxu0 0.0
    %6999 = vmatpush1.msra.mxu0 0.0
    %7000 = vmatprep.subr.mxu0 0.0
    %7001 = vmatpush1.msra.mxu0 0.0
    %7002 = vmatprep.subr.mxu0 0.0
    %7003 = vmatpush1.msra.mxu0 0.0
    %7004 = vmatprep.subr.mxu0 0.0
    %7005 = vmatpush1.msra.mxu0 0.0
    %7006 = vmatprep.subr.mxu0 0.0
    %7007 = vmatpush1.msra.mxu0 0.0
    %7008 = vmatprep.subr.mxu0 0.0
    %7009 = vmatpush1.msra.mxu0 0.0
    %7010 = vmatprep.subr.mxu0 0.0
    %7011 = vmatpush1.msra.mxu0 0.0
    %7012 = vmatprep.subr.mxu0 0.0
    %7013 = vmatpush1.msra.mxu0 0.0
    %7014 = vmatprep.subr.mxu0 0.0
    %7015 = vmatpush1.msra.mxu0 %v6567
    %7016 = vmatprep.subr.mxu0 0.0
    %7017 = vmatpush1.msra.mxu0 %v6566
    %7018 = vmatprep.subr.mxu0 0.0
    %7019 = vmatpush1.msra.mxu0 %v6565
    %7020 = vmatprep.subr.mxu0 0.0
    %7021 = vmatpush1.msra.mxu0 %v6564
    %7022 = vmatprep.subr.mxu0 0.0
    %7023 = vmatpush1.msra.mxu0 %v6563
    %7024 = vmatprep.subr.mxu0 0.0
    %7025 = vmatpush1.msra.mxu0 %v6562
    %7026 = vmatprep.subr.mxu0 0.0
    %7027 = vmatpush1.msra.mxu0 %v6561
    %7028 = vmatprep.subr.mxu0 0.0
    %7029 = vmatpush1.msra.mxu0 %v6560
    %7030 = vmatprep.subr.mxu0 0.0
    %7031 = vmatpush2.msra.mxu0 0.0
    %7032 = vmatprep.subr.mxu0 0.0
    %7033 = vmatpush2.msra.mxu0 0.0
    %7034 = vmatprep.subr.mxu0 0.0
    %7035 = vmatpush2.msra.mxu0 0.0
    %7036 = vmatprep.subr.mxu0 0.0
    %7037 = vmatpush2.msra.mxu0 0.0
    %7038 = vmatprep.subr.mxu0 0.0
    %7039 = vmatpush2.msra.mxu0 0.0
    %7040 = vmatprep.subr.mxu0 0.0
    %7041 = vmatpush2.msra.mxu0 0.0
    %7042 = vmatprep.subr.mxu0 0.0
    %7043 = vmatpush2.msra.mxu0 0.0
    %7044 = vmatprep.subr.mxu0 0.0
    %7045 = vmatpush2.msra.mxu0 0.0
    %7046 = vmatprep.subr.mxu0 0.0
    %7047 = vmatpush2.msra.mxu0 0.0
    %7048 = vmatprep.subr.mxu0 0.0
    %7049 = vmatpush2.msra.mxu0 0.0
    %7050 = vmatprep.subr.mxu0 0.0
    %7051 = vmatpush2.msra.mxu0 0.0
    %7052 = vmatprep.subr.mxu0 0.0
    %7053 = vmatpush2.msra.mxu0 0.0
    %7054 = vmatprep.subr.mxu0 0.0
    %7055 = vmatpush2.msra.mxu0 0.0
    %7056 = vmatprep.subr.mxu0 0.0
    %7057 = vmatpush2.msra.mxu0 0.0
    %7058 = vmatprep.subr.mxu0 0.0
    %7059 = vmatpush2.msra.mxu0 0.0
    %7060 = vmatprep.subr.mxu0 0.0
    %7061 = vmatpush2.msra.mxu0 0.0
    %7062 = vmatprep.mubr.f32.mxu0 0.0
    %7063 = vmatmul.mubr.f32.gmra.mxu0 %v6576
    %v7064 = vpop.f32.mrf.mxu0
    %v7065 = vadd.f32 %v6995, %v7064
    %v7066 = vpop.f32.mrf.mxu0
    %7067 = vdwg.mxu0
    %v7068 = vmax.f32 %v7065, 0.0
    %v7069 = vld [vmem:[%s7] sm:$0xff]
    %v7070 = vld [vmem:[%s7 + $0x8] sm:$0xff]
    %v7071 = vld [vmem:[%s7 + $0x10] sm:$0xff]
    %v7072 = vld [vmem:[%s7 + $0x18] sm:$0xff]
    %v7073 = vld [vmem:[%s7 + $0x20] sm:$0xff]
    %v7074 = vld [vmem:[%s7 + $0x28] sm:$0xff]
    %v7075 = vld [vmem:[%s7 + $0x30] sm:$0xff]
    %v7076 = vld [vmem:[%s7 + $0x38] sm:$0xff]
    %v7077 = vld [vmem:[%s7 + $0x40] sm:$0xff]
    %v7078 = vld [vmem:[%s7 + $0x48] sm:$0xff]
    %v7079 = vld [vmem:[%s7 + $0x50] sm:$0xff]
    %v7080 = vld [vmem:[%s7 + $0x58] sm:$0xff]
    %v7081 = vld [vmem:[%s7 + $0x60] sm:$0xff]
    %v7082 = vld [vmem:[%s7 + $0x68] sm:$0xff]
    %v7083 = vld [vmem:[%s7 + $0x70] sm:$0xff]
    %v7084 = vld [vmem:[%s7 + $0x78] sm:$0xff]
    %v7085 = vld [vmem:[%s8] sm:$0x1]
    %v7087 = vlaneseq
    %v7088 = vshrl.u32 %v7087, 7
    %v7089 = vsub.s32 0, %v7088
    %v7090 = vrot.slane %v7085, %v7089
    %7092 = vmatprep.subr.mxu0 0.0
    %7093 = vmatpush1.msra.mxu0 %v7084
    %7094 = vmatprep.subr.mxu0 0.0
    %7095 = vmatpush1.msra.mxu0 %v7083
    %7096 = vmatprep.subr.mxu0 0.0
    %7097 = vmatpush1.msra.mxu0 %v7082
    %7098 = vmatprep.subr.mxu0 0.0
    %7099 = vmatpush1.msra.mxu0 %v7081
    %7100 = vmatprep.subr.mxu0 0.0
    %7101 = vmatpush1.msra.mxu0 %v7080
    %7102 = vmatprep.subr.mxu0 0.0
    %7103 = vmatpush1.msra.mxu0 %v7079
    %7104 = vmatprep.subr.mxu0 0.0
    %7105 = vmatpush1.msra.mxu0 %v7078
    %7106 = vmatprep.subr.mxu0 0.0
    %7107 = vmatpush1.msra.mxu0 %v7077
    %7108 = vmatprep.subr.mxu0 0.0
    %7109 = vmatpush1.msra.mxu0 %v7076
    %7110 = vmatprep.subr.mxu0 0.0
    %7111 = vmatpush1.msra.mxu0 %v7075
    %7112 = vmatprep.subr.mxu0 0.0
    %7113 = vmatpush1.msra.mxu0 %v7074
    %7114 = vmatprep.subr.mxu0 0.0
    %7115 = vmatpush1.msra.mxu0 %v7073
    %7116 = vmatprep.subr.mxu0 0.0
    %7117 = vmatpush1.msra.mxu0 %v7072
    %7118 = vmatprep.subr.mxu0 0.0
    %7119 = vmatpush1.msra.mxu0 %v7071
    %7120 = vmatprep.subr.mxu0 0.0
    %7121 = vmatpush1.msra.mxu0 %v7070
    %7122 = vmatprep.subr.mxu0 0.0
    %7123 = vmatpush1.msra.mxu0 %v7069
    %7124 = vmatprep.subr.mxu0 0.0
    %7125 = vmatpush2.msra.mxu0 0.0
    %7126 = vmatprep.subr.mxu0 0.0
    %7127 = vmatpush2.msra.mxu0 0.0
    %7128 = vmatprep.subr.mxu0 0.0
    %7129 = vmatpush2.msra.mxu0 0.0
    %7130 = vmatprep.subr.mxu0 0.0
    %7131 = vmatpush2.msra.mxu0 0.0
    %7132 = vmatprep.subr.mxu0 0.0
    %7133 = vmatpush2.msra.mxu0 0.0
    %7134 = vmatprep.subr.mxu0 0.0
    %7135 = vmatpush2.msra.mxu0 0.0
    %7136 = vmatprep.subr.mxu0 0.0
    %7137 = vmatpush2.msra.mxu0 0.0
    %7138 = vmatprep.subr.mxu0 0.0
    %7139 = vmatpush2.msra.mxu0 0.0
    %7140 = vmatprep.subr.mxu0 0.0
    %7141 = vmatpush2.msra.mxu0 0.0
    %7142 = vmatprep.subr.mxu0 0.0
    %7143 = vmatpush2.msra.mxu0 0.0
    %7144 = vmatprep.subr.mxu0 0.0
    %7145 = vmatpush2.msra.mxu0 0.0
    %7146 = vmatprep.subr.mxu0 0.0
    %7147 = vmatpush2.msra.mxu0 0.0
    %7148 = vmatprep.subr.mxu0 0.0
    %7149 = vmatpush2.msra.mxu0 0.0
    %7150 = vmatprep.subr.mxu0 0.0
    %7151 = vmatpush2.msra.mxu0 0.0
    %7152 = vmatprep.subr.mxu0 0.0
    %7153 = vmatpush2.msra.mxu0 0.0
    %7154 = vmatprep.subr.mxu0 0.0
    %7155 = vmatpush2.msra.mxu0 0.0
    %7156 = vmatprep.mubr.f32.mxu0 0.0
    %7157 = vmatmul.mubr.f32.gmra.mxu0 %v7068
    %v7158 = vpop.f32.mrf.mxu0
    %v7159 = vadd.f32 %v7090, %v7158
    %v7160 = vpop.f32.mrf.mxu0
    %7161 = vdwg.mxu0
    %vm7162 = vcmask 80896
    %7163 = vst.msk [vmem:[%s9] sm:$0xff] %vm7162, %v7159
    // Predicated region
    $region42: #{custom_model_forward.1} parent=1 // pred_check
      _
    $region43: #{custom_model_forward.1} parent=1 // pred_check_branch
      %7165 = sbr.rel (0) target = $region45
    $region44: #{custom_model_forward.1} parent=1 // pred_region
      _
    $region45: #{custom_model_forward.1} parent=1 // pred_fallthru
      _
    // Predicated region
    $region46: #{custom_model_forward.1} parent=1 // pred_check
      _
    $region47: #{custom_model_forward.1} parent=1 // pred_check_branch
      %7167 = sbr.rel (0) target = $region49
    $region48: #{custom_model_forward.1} parent=1 // pred_region
      _
    $region49: #{custom_model_forward.1} parent=1 // pred_fallthru
      _
    %7168 = vsyncpa [#allocation3], 1

</llo_original>
